<compile_context>
chip_gen: v7x
topology: tpu7x:2x2x1
jax: 0.10.0
libtpu: 0.0.40
codegen_flags: <defaults>
</compile_context>

<pallas_src>
import numpy as np
import jax
import jax.numpy as jnp
from jax.experimental import pallas as pl
from jax.experimental.pallas import tpu as pltpu


# ----------------------------------------------------------------------------
# In-kernel helpers (traced inside the single fused kernel).
# A (H, W, C) image is stored as (H, W*C) with channel fastest ("row layout"),
# so the lane axis is W*C (dense) and image rows map to sublanes.
# ----------------------------------------------------------------------------
def _store_padded(buf, val, s, cin, relu):
    """Write a (s, s*cin) f32 activation into `buf` as a zero-padded bf16 image of
    shape (s+2, (s+2)*cin).  ReLU + the bf16 cast are fused into this one store
    (relu(0) == 0, so the zero border stays exact)."""
    wp = (s + 2) * cin
    buf[0:1, 0:wp] = jnp.zeros((1, wp), jnp.bfloat16)
    buf[s + 1:s + 2, 0:wp] = jnp.zeros((1, wp), jnp.bfloat16)
    buf[1:s + 1, 0:cin] = jnp.zeros((s, cin), jnp.bfloat16)
    buf[1:s + 1, (s + 1) * cin:wp] = jnp.zeros((s, cin), jnp.bfloat16)
    if relu:
        val = jnp.maximum(val, 0.0)
    buf[1:s + 1, cin:(s + 1) * cin] = val.astype(jnp.bfloat16)


def _conv3x3(buf, s, w_ref):
    """3x3 same-conv as 3 row-Toeplitz bf16 matmuls over the padded image rows."""
    k = w_ref.shape[1]                              # (s+2)*cin
    acc = jnp.dot(buf[0:s, 0:k], w_ref[0], preferred_element_type=jnp.float32)
    acc = acc + jnp.dot(buf[1:s + 1, 0:k], w_ref[1],
                        preferred_element_type=jnp.float32)
    acc = acc + jnp.dot(buf[2:s + 2, 0:k], w_ref[2],
                        preferred_element_type=jnp.float32)
    return acc


def _conv_block(x, cfg, prm, pad_a, pad_b, pre_act):
    """(Optimized)Block: avg_pool2d( c2(relu(c1(act(x)))) + c_sc(x), 2 ).

    Horizontal half of the 2x2 pool is folded into w2p / wscp host-side; vertical
    half is the tiny `pv` (s/2, s) matmul; biases are added exactly post-pool."""
    s, cin, hch, cout = cfg
    w1, b1, w2p, wscp, pv, bo = prm

    _store_padded(pad_a, x, s, cin, relu=pre_act)
    h1 = _conv3x3(pad_a, s, w1) + b1[...]                       # (s, s*hch)      f32
    _store_padded(pad_b, h1, s, hch, relu=True)
    h2 = _conv3x3(pad_b, s, w2p)                                # (s, s/2*cout)   f32
    sc = jnp.dot(x.astype(jnp.bfloat16), wscp[...],
                 preferred_element_type=jnp.float32)            # (s, s/2*cout)
    pooled = jnp.dot(pv[...], h2 + sc,
                     preferred_element_type=jnp.float32)        # vertical pool half
    return pooled + bo[...]                                     # (s/2, s/2*cout)


def _attn(x, cfg, prm):
    """Self_Attn on an (s, s*c) row-layout activation."""
    s, c = cfg
    w_ref, b_ref, g_ref = prm
    dk = (w_ref.shape[1] - c) // 2
    if s == 1:
        # 1x1 spatial: softmax over a single key is exactly 1 -> out = value conv.
        v = jnp.dot(x.astype(jnp.bfloat16), w_ref[:, 2 * dk:2 * dk + c],
                    preferred_element_type=jnp.float32) + b_ref[:, 2 * dk:2 * dk + c]
        return g_ref[0, 0] * v + x
    n = s * s
    # Flatten spatial positions (column-major order; inverted consistently below --
    # attention is permutation-consistent, so values land at the right pixels).
    xf = jnp.concatenate([x[:, j * c:(j + 1) * c] for j in range(s)], axis=0)    # (n, c)
    qkv = jnp.dot(xf.astype(jnp.bfloat16), w_ref[...],
                  preferred_element_type=jnp.float32) + b_ref[...]               # (n, 2dk+c)
    q = qkv[:, 0:dk]
    k = qkv[:, dk:2 * dk]
    v = qkv[:, 2 * dk:2 * dk + c]
    e = jax.lax.dot_general(q, k, (((1,), (1,)), ((), ())),
                            preferred_element_type=jnp.float32)                  # (n, n)
    e = e - jnp.max(e, axis=-1, keepdims=True)
    p = jnp.exp(e)
    attn = p / jnp.sum(p, axis=-1, keepdims=True)
    o = jnp.dot(attn, v, preferred_element_type=jnp.float32)                     # (n, c)
    y = g_ref[0, 0] * o + xf
    return jnp.concatenate([y[j * s:(j + 1) * s, :] for j in range(s)], axis=1)  # (s, s*c)


def _head(x, cfg, wl4_ref, bl4_ref):
    """relu -> sum over spatial -> spectral-norm Linear(c, 1)."""
    s, c = cfg
    h = jnp.maximum(x, 0.0)
    h = jnp.sum(h, axis=0, keepdims=True)           # (1, s*c): sum over image rows
    tot = h[:, 0:c]
    for j in range(1, s):                           # sum over the s column blocks
        tot = tot + h[:, j * c:(j + 1) * c]
    return (jnp.dot(tot, wl4_ref[...], preferred_element_type=jnp.float32)
            + bl4_ref[0, 0])


def _make_kernel(convs, attns):
    """Build the fused forward kernel for a static (spatial, channel) configuration."""
    def kernel(x_ref, *refs):
        prm = refs[:-3]
        o_ref, pad_a, pad_b = refs[-3], refs[-2], refs[-1]
        h = x_ref[0]                                # (H, W*3) row layout, f32
        idx = 0
        for bi in range(4):                         # block1 (Optimized) .. block4
            h = _conv_block(h, convs[bi], prm[idx:idx + 6], pad_a, pad_b,
                            pre_act=(bi > 0))
            idx += 6
        h = _attn(h, attns[0], prm[idx:idx + 3])    # block5
        idx += 3
        h = _conv_block(h, convs[4], prm[idx:idx + 6], pad_a, pad_b, pre_act=True)
        idx += 6                                    # block6
        h = _attn(h, attns[1], prm[idx:idx + 3])    # block7 (1x1 -> specialized)
        idx += 3
        o_ref[0] = _head(h, attns[1], prm[idx], prm[idx + 1])
    return kernel


# ----------------------------------------------------------------------------
# Host-side wrapper.
# ----------------------------------------------------------------------------
def _derive_cfg(x_shape, flat_params):
    """Static per-block (spatial, channels) config from the packed param shapes."""
    _, cimg, H, W = x_shape
    assert H == W and H % 32 == 0, "spatial size must be square and divisible by 32"
    sizes = [H, H // 2, H // 4, H // 8, H // 16]
    offs = [0, 6, 12, 18, 27]                       # flat offsets of the 5 conv blocks
    convs, cin = [], cimg
    for off, s in zip(offs, sizes):
        hch = flat_params[off + 1].shape[1] // s            # b1vec is (1, s*hch)
        cout = flat_params[off + 5].shape[1] // (s // 2)     # bovec is (1, s/2*cout)
        convs.append((s, cin, hch, cout))
        cin = cout
    attns = [(sizes[4], convs[3][3]),               # block5: after block4
             (sizes[4] // 2, convs[4][3])]          # block7: after block6
    return convs, attns


def vgg_discriminator_forward(x_nchw, flat_params):
    B, cimg, H, W = x_nchw.shape
    convs, attns = _derive_cfg(x_nchw.shape, flat_params)
    # NCHW -> row layout (B, H, W*C), channel fastest within a row.
    x_row = jnp.transpose(x_nchw, (0, 2, 3, 1)).reshape(B, H, W * cimg)
    x_row = x_row.astype(jnp.float32)

    max_rows = max(s for s, _, _, _ in convs) + 2
    pa_cols = max((s + 2) * cin for s, cin, _, _ in convs)
    pb_cols = max((s + 2) * hch for s, _, hch, _ in convs)

    in_specs = [pl.BlockSpec((1, H, W * cimg), lambda b: (b, 0, 0))]
    for p in flat_params:
        if p.shape == (1, 1):       # attention gammas / head bias -> SMEM scalars
            in_specs.append(pl.BlockSpec(memory_space=pltpu.MemorySpace.SMEM))
        else:                       # packed weight resident in VMEM (loaded once)
            in_specs.append(pl.BlockSpec(p.shape, lambda b, _n=p.ndim: (0,) * _n))

    out = pl.pallas_call(
        _make_kernel(convs, attns),
        out_shape=jax.ShapeDtypeStruct((B, 1, 1), jnp.float32),
        grid=(B,),
        in_specs=in_specs,
        out_specs=pl.BlockSpec((1, 1, 1), lambda b: (b, 0, 0)),
        scratch_shapes=[
            pltpu.VMEM((max_rows, pa_cols), jnp.bfloat16),   # padded block input
            pltpu.VMEM((max_rows, pb_cols), jnp.bfloat16),   # padded conv1 output
        ],
        compiler_params=pltpu.CompilerParams(
            dimension_semantics=("parallel",)),
    )(x_row, *flat_params)
    return out.reshape(B, 1)


# ----------------------------------------------------------------------------
# Parameter packing (done ONCE, outside jit).
# ----------------------------------------------------------------------------
def prepare_params(params, img_size):
    """Pack PyTorch-layout params into kernel layout.

    3x3 convs become per-row-tap Toeplitz matrices W[di] ((W+2)*Cin, W*Cout) so a
    conv is 3 matmuls over padded image rows; the horizontal half of the 2x2 avg-pool
    is folded into conv2/shortcut weights, the vertical half is the small `pv`
    matrix; 1x1 convs become block-diagonal matrices in row layout."""
    f32, bf16 = jnp.float32, jnp.bfloat16

    def toeplitz3(w, W):
        w = np.asarray(w, np.float32)                   # (Cout, Cin, 3, 3)
        cout, cin = w.shape[0], w.shape[1]
        T = np.zeros((3, (W + 2) * cin, W * cout), np.float32)
        for di in range(3):
            for dj in range(3):
                blk = w[:, :, di, dj].T                 # (Cin, Cout)
                for j in range(W):
                    T[di, (j + dj) * cin:(j + dj + 1) * cin,
                      j * cout:(j + 1) * cout] = blk
        return T

    def blockdiag1x1(w, W):
        w = np.asarray(w, np.float32)                   # (Cout, Cin, 1, 1)
        cout, cin = w.shape[0], w.shape[1]
        blk = w[:, :, 0, 0].T
        S = np.zeros((W * cin, W * cout), np.float32)
        for j in range(W):
            S[j * cin:(j + 1) * cin, j * cout:(j + 1) * cout] = blk
        return S

    def pool_h(W, C):                                   # x0.5 horizontal 2->1 average
        P = np.zeros((W * C, (W // 2) * C), np.float32)
        eye = 0.5 * np.eye(C, dtype=np.float32)
        for j in range(W // 2):
            P[(2 * j) * C:(2 * j + 1) * C, j * C:(j + 1) * C] = eye
            P[(2 * j + 1) * C:(2 * j + 2) * C, j * C:(j + 1) * C] = eye
        return P

    def pool_v(H):                                      # x0.5 vertical 2->1 average
        P = np.zeros((H // 2, H), np.float32)
        for i in range(H // 2):
            P[i, 2 * i] = 0.5
            P[i, 2 * i + 1] = 0.5
        return P

    def conv_block(bp, W):
        cout = int(np.asarray(bp["c2_w"]).shape[0])
        Ph = pool_h(W, cout)
        w1 = toeplitz3(bp["c1_w"], W)
        b1 = np.tile(np.asarray(bp["c1_b"], np.float32), W)[None]
        w2 = toeplitz3(bp["c2_w"], W) @ Ph
        wsc = blockdiag1x1(bp["csc_w"], W) @ Ph
        pv = pool_v(W)
        bo = np.tile(np.asarray(bp["c2_b"], np.float32)
                     + np.asarray(bp["csc_b"], np.float32), W // 2)[None]
        return [jnp.asarray(w1, bf16), jnp.asarray(b1, f32),
                jnp.asarray(w2, bf16), jnp.asarray(wsc, bf16),
                jnp.asarray(pv, f32), jnp.asarray(bo, f32)]

    def attn_block(bp):
        wq = np.asarray(bp["wq"], np.float32)[:, :, 0, 0].T
        wk = np.asarray(bp["wk"], np.float32)[:, :, 0, 0].T
        wv = np.asarray(bp["wv"], np.float32)[:, :, 0, 0].T
        w = np.concatenate([wq, wk, wv], axis=1)                   # (C, 2*dk + C)
        b = np.concatenate([np.asarray(bp["bq"], np.float32),
                            np.asarray(bp["bk"], np.float32),
                            np.asarray(bp["bv"], np.float32)])[None]
        g = np.asarray(bp["gamma"], np.float32).reshape(1, 1)
        return [jnp.asarray(w, bf16), jnp.asarray(b, f32), jnp.asarray(g, f32)]

    flat, s = [], img_size
    for name in ("block1", "block2", "block3", "block4"):
        flat += conv_block(params[name], s)
        s //= 2
    flat += attn_block(params["block5"])
    flat += conv_block(params["block6"], s)
    flat += attn_block(params["block7"])
    flat += [jnp.asarray(np.asarray(params["l4_w"], np.float32), f32),
             jnp.asarray(np.asarray(params["l4_b"], np.float32).reshape(1, 1), f32)]
    return tuple(flat)


# ----------------------------------------------------------------------------
# Deterministic synthetic parameters (shapes follow the module's __init__).
# ----------------------------------------------------------------------------
def init_params(key, nf=16):
    keys = iter(jax.random.split(key, 64))

    def w(shape, scale=0.1):
        return (scale * jax.random.normal(next(keys), shape)).astype(jnp.float32)

    def conv_block(cin, cout, hch):
        return {
            "c1_w": w((hch, cin, 3, 3)), "c1_b": w((hch,)),
            "c2_w": w((cout, hch, 3, 3)), "c2_b": w((cout,)),
            "csc_w": w((cout, cin, 1, 1)), "csc_b": w((cout,)),
        }

    def attn_block(c):
        dk = c // 8
        return {
            "wq": w((dk, c, 1, 1)), "bq": w((dk,)),
            "wk": w((dk, c, 1, 1)), "bk": w((dk,)),
            "wv": w((c, c, 1, 1)), "bv": w((c,)),
            # module inits gamma=0; nonzero so the attention path is exercised
            "gamma": jnp.full((1, 1), 0.1, jnp.float32),
        }

    return {
        "block1": conv_block(3, nf // 4, nf // 4),        # OptimizedBlock(3, nf//4)
        "block2": conv_block(nf // 4, nf // 2, nf // 4),  # Block(nf//4, nf//2), h_ch=in_ch
        "block3": conv_block(nf // 2, nf, nf // 2),
        "block4": conv_block(nf, nf * 2, nf),
        "block5": attn_block(nf * 2),
        "block6": conv_block(nf * 2, nf * 4, nf * 2),
        "block7": attn_block(nf * 4),
        "l4_w": w((nf * 4, 1)),                           # Linear(nf*4, 1).weight.T
        "l4_b": w((1,)),
    }


if __name__ == "__main__":
    key = jax.random.PRNGKey(0)
    k_param, k_x = jax.random.split(key)
    nf = 16                                               # small num_features
    params = init_params(k_param, nf=nf)
    flat = prepare_params(params, img_size=32)            # packed once, outside jit
    x = jax.random.normal(k_x, (2, 3, 32, 32), dtype=jnp.float32)   # NCHW like PyTorch

    fwd = jax.jit(vgg_discriminator_forward)
    out = jax.block_until_ready(fwd(x, flat))
    assert out.shape == (2, 1) and out.dtype == jnp.float32
    print("KERNEL_OK")
</pallas_src>

<mosaic_0001>
module attributes {stable_mosaic.version = 11 : i64} {
  func.func @kernel(%arg0: i32, %arg1: memref<1x32x96xf32, #tpu.memory_space<vmem>>, %arg2: memref<3x102x128xbf16, #tpu.memory_space<vmem>>, %arg3: memref<1x128xf32, #tpu.memory_space<vmem>>, %arg4: memref<3x136x64xbf16, #tpu.memory_space<vmem>>, %arg5: memref<96x64xbf16, #tpu.memory_space<vmem>>, %arg6: memref<16x32xf32, #tpu.memory_space<vmem>>, %arg7: memref<1x64xf32, #tpu.memory_space<vmem>>, %arg8: memref<3x72x64xbf16, #tpu.memory_space<vmem>>, %arg9: memref<1x64xf32, #tpu.memory_space<vmem>>, %arg10: memref<3x72x64xbf16, #tpu.memory_space<vmem>>, %arg11: memref<64x64xbf16, #tpu.memory_space<vmem>>, %arg12: memref<8x16xf32, #tpu.memory_space<vmem>>, %arg13: memref<1x64xf32, #tpu.memory_space<vmem>>, %arg14: memref<3x80x64xbf16, #tpu.memory_space<vmem>>, %arg15: memref<1x64xf32, #tpu.memory_space<vmem>>, %arg16: memref<3x80x64xbf16, #tpu.memory_space<vmem>>, %arg17: memref<64x64xbf16, #tpu.memory_space<vmem>>, %arg18: memref<4x8xf32, #tpu.memory_space<vmem>>, %arg19: memref<1x64xf32, #tpu.memory_space<vmem>>, %arg20: memref<3x96x64xbf16, #tpu.memory_space<vmem>>, %arg21: memref<1x64xf32, #tpu.memory_space<vmem>>, %arg22: memref<3x96x64xbf16, #tpu.memory_space<vmem>>, %arg23: memref<64x64xbf16, #tpu.memory_space<vmem>>, %arg24: memref<2x4xf32, #tpu.memory_space<vmem>>, %arg25: memref<1x64xf32, #tpu.memory_space<vmem>>, %arg26: memref<32x40xbf16, #tpu.memory_space<vmem>>, %arg27: memref<1x40xf32, #tpu.memory_space<vmem>>, %arg28: memref<1x1xf32, #tpu.memory_space<smem>>, %arg29: memref<3x128x64xbf16, #tpu.memory_space<vmem>>, %arg30: memref<1x64xf32, #tpu.memory_space<vmem>>, %arg31: memref<3x128x64xbf16, #tpu.memory_space<vmem>>, %arg32: memref<64x64xbf16, #tpu.memory_space<vmem>>, %arg33: memref<1x2xf32, #tpu.memory_space<vmem>>, %arg34: memref<1x64xf32, #tpu.memory_space<vmem>>, %arg35: memref<64x80xbf16, #tpu.memory_space<vmem>>, %arg36: memref<1x80xf32, #tpu.memory_space<vmem>>, %arg37: memref<1x1xf32, #tpu.memory_space<smem>>, %arg38: memref<64x1xf32, #tpu.memory_space<vmem>>, %arg39: memref<1x1xf32, #tpu.memory_space<smem>>, %arg40: memref<1x1x1xf32, #tpu.memory_space<vmem>>, %arg41: memref<34x128xbf16, #tpu.memory_space<vmem>>, %arg42: memref<34x136xbf16, #tpu.memory_space<vmem>>) attributes {dimension_semantics = [#tpu.dimension_semantics<parallel>], iteration_bounds = array<i64: 2>, scalar_prefetch = 0 : i64, scratch_operands = 2 : i64, tpu.core_type = #tpu.core_type<tc>, window_params = [{transform_indices = @transform_0, window_bounds = array<i64: 1, 32, 96>}, {pipeline_mode = #tpu.pipeline_mode<synchronous>, transform_indices = @transform_1, window_bounds = array<i64: 3, 102, 128>}, {pipeline_mode = #tpu.pipeline_mode<synchronous>, transform_indices = @transform_2, window_bounds = array<i64: 1, 128>}, {pipeline_mode = #tpu.pipeline_mode<synchronous>, transform_indices = @transform_3, window_bounds = array<i64: 3, 136, 64>}, {pipeline_mode = #tpu.pipeline_mode<synchronous>, transform_indices = @transform_4, window_bounds = array<i64: 96, 64>}, {pipeline_mode = #tpu.pipeline_mode<synchronous>, transform_indices = @transform_5, window_bounds = array<i64: 16, 32>}, {pipeline_mode = #tpu.pipeline_mode<synchronous>, transform_indices = @transform_6, window_bounds = array<i64: 1, 64>}, {pipeline_mode = #tpu.pipeline_mode<synchronous>, transform_indices = @transform_7, window_bounds = array<i64: 3, 72, 64>}, {pipeline_mode = #tpu.pipeline_mode<synchronous>, transform_indices = @transform_8, window_bounds = array<i64: 1, 64>}, {pipeline_mode = #tpu.pipeline_mode<synchronous>, transform_indices = @transform_9, window_bounds = array<i64: 3, 72, 64>}, {pipeline_mode = #tpu.pipeline_mode<synchronous>, transform_indices = @transform_10, window_bounds = array<i64: 64, 64>}, {pipeline_mode = #tpu.pipeline_mode<synchronous>, transform_indices = @transform_11, window_bounds = array<i64: 8, 16>}, {pipeline_mode = #tpu.pipeline_mode<synchronous>, transform_indices = @transform_12, window_bounds = array<i64: 1, 64>}, {pipeline_mode = #tpu.pipeline_mode<synchronous>, transform_indices = @transform_13, window_bounds = array<i64: 3, 80, 64>}, {pipeline_mode = #tpu.pipeline_mode<synchronous>, transform_indices = @transform_14, window_bounds = array<i64: 1, 64>}, {pipeline_mode = #tpu.pipeline_mode<synchronous>, transform_indices = @transform_15, window_bounds = array<i64: 3, 80, 64>}, {pipeline_mode = #tpu.pipeline_mode<synchronous>, transform_indices = @transform_16, window_bounds = array<i64: 64, 64>}, {pipeline_mode = #tpu.pipeline_mode<synchronous>, transform_indices = @transform_17, window_bounds = array<i64: 4, 8>}, {pipeline_mode = #tpu.pipeline_mode<synchronous>, transform_indices = @transform_18, window_bounds = array<i64: 1, 64>}, {pipeline_mode = #tpu.pipeline_mode<synchronous>, transform_indices = @transform_19, window_bounds = array<i64: 3, 96, 64>}, {pipeline_mode = #tpu.pipeline_mode<synchronous>, transform_indices = @transform_20, window_bounds = array<i64: 1, 64>}, {pipeline_mode = #tpu.pipeline_mode<synchronous>, transform_indices = @transform_21, window_bounds = array<i64: 3, 96, 64>}, {pipeline_mode = #tpu.pipeline_mode<synchronous>, transform_indices = @transform_22, window_bounds = array<i64: 64, 64>}, {pipeline_mode = #tpu.pipeline_mode<synchronous>, transform_indices = @transform_23, window_bounds = array<i64: 2, 4>}, {pipeline_mode = #tpu.pipeline_mode<synchronous>, transform_indices = @transform_24, window_bounds = array<i64: 1, 64>}, {pipeline_mode = #tpu.pipeline_mode<synchronous>, transform_indices = @transform_25, window_bounds = array<i64: 32, 40>}, {pipeline_mode = #tpu.pipeline_mode<synchronous>, transform_indices = @transform_26, window_bounds = array<i64: 1, 40>}, {transform_indices = @transform_27, window_bounds = array<i64: 1, 1>}, {pipeline_mode = #tpu.pipeline_mode<synchronous>, transform_indices = @transform_28, window_bounds = array<i64: 3, 128, 64>}, {pipeline_mode = #tpu.pipeline_mode<synchronous>, transform_indices = @transform_29, window_bounds = array<i64: 1, 64>}, {pipeline_mode = #tpu.pipeline_mode<synchronous>, transform_indices = @transform_30, window_bounds = array<i64: 3, 128, 64>}, {pipeline_mode = #tpu.pipeline_mode<synchronous>, transform_indices = @transform_31, window_bounds = array<i64: 64, 64>}, {pipeline_mode = #tpu.pipeline_mode<synchronous>, transform_indices = @transform_32, window_bounds = array<i64: 1, 2>}, {pipeline_mode = #tpu.pipeline_mode<synchronous>, transform_indices = @transform_33, window_bounds = array<i64: 1, 64>}, {pipeline_mode = #tpu.pipeline_mode<synchronous>, transform_indices = @transform_34, window_bounds = array<i64: 64, 80>}, {pipeline_mode = #tpu.pipeline_mode<synchronous>, transform_indices = @transform_35, window_bounds = array<i64: 1, 80>}, {transform_indices = @transform_36, window_bounds = array<i64: 1, 1>}, {pipeline_mode = #tpu.pipeline_mode<synchronous>, transform_indices = @transform_37, window_bounds = array<i64: 64, 1>}, {transform_indices = @transform_38, window_bounds = array<i64: 1, 1>}, {transform_indices = @transform_39, window_bounds = array<i64: 1, 1, 1>}]} {
    %c0 = arith.constant 0 : index
    %c0_0 = arith.constant 0 : index
    %c0_1 = arith.constant 0 : index
    %0 = vector.load %arg1[%c0, %c0_0, %c0_1] : memref<1x32x96xf32, #tpu.memory_space<vmem>>, vector<1x32x96xf32>
    %1 = vector.shape_cast %0 : vector<1x32x96xf32> to vector<32x96xf32>
    %cst = arith.constant 0.000000e+00 : bf16
    %2 = vector.broadcast %cst : bf16 to vector<1x102xbf16>
    %c0_2 = arith.constant 0 : index
    %c0_3 = arith.constant 0 : index
    %3 = vector.load %arg41[%c0_2, %c0_3] : memref<34x128xbf16, #tpu.memory_space<vmem>>, vector<1x102xbf16>
    tpu.vector_store %arg41[%c0_2, %c0_3], %2 {strides = array<i32>} : memref<34x128xbf16, #tpu.memory_space<vmem>>, vector<1x102xbf16>,
    %cst_4 = arith.constant 0.000000e+00 : bf16
    %4 = vector.broadcast %cst_4 : bf16 to vector<1x102xbf16>
    %c33 = arith.constant 33 : index
    %c0_5 = arith.constant 0 : index
    %5 = vector.load %arg41[%c33, %c0_5] : memref<34x128xbf16, #tpu.memory_space<vmem>>, vector<1x102xbf16>
    tpu.vector_store %arg41[%c33, %c0_5], %4 {strides = array<i32>} : memref<34x128xbf16, #tpu.memory_space<vmem>>, vector<1x102xbf16>,
    %cst_6 = arith.constant 0.000000e+00 : bf16
    %6 = vector.broadcast %cst_6 : bf16 to vector<32x3xbf16>
    %c1 = arith.constant 1 : index
    %c0_7 = arith.constant 0 : index
    %7 = vector.load %arg41[%c1, %c0_7] : memref<34x128xbf16, #tpu.memory_space<vmem>>, vector<32x3xbf16>
    tpu.vector_store %arg41[%c1, %c0_7], %6 {strides = array<i32>} : memref<34x128xbf16, #tpu.memory_space<vmem>>, vector<32x3xbf16>,
    %cst_8 = arith.constant 0.000000e+00 : bf16
    %8 = vector.broadcast %cst_8 : bf16 to vector<32x3xbf16>
    %c1_9 = arith.constant 1 : index
    %c99 = arith.constant 99 : index
    %9 = vector.load %arg41[%c1_9, %c99] : memref<34x128xbf16, #tpu.memory_space<vmem>>, vector<32x3xbf16>
    tpu.vector_store %arg41[%c1_9, %c99], %8 {strides = array<i32>} : memref<34x128xbf16, #tpu.memory_space<vmem>>, vector<32x3xbf16>,
    %10 = arith.truncf %1 : vector<32x96xf32> to vector<32x96xbf16>
    %c1_10 = arith.constant 1 : index
    %c3 = arith.constant 3 : index
    %11 = vector.load %arg41[%c1_10, %c3] : memref<34x128xbf16, #tpu.memory_space<vmem>>, vector<32x96xbf16>
    tpu.vector_store %arg41[%c1_10, %c3], %10 {strides = array<i32>} : memref<34x128xbf16, #tpu.memory_space<vmem>>, vector<32x96xbf16>,
    %c0_11 = arith.constant 0 : index
    %c0_12 = arith.constant 0 : index
    %12 = vector.load %arg41[%c0_11, %c0_12] : memref<34x128xbf16, #tpu.memory_space<vmem>>, vector<32x102xbf16>
    %c0_13 = arith.constant 0 : index
    %c0_14 = arith.constant 0 : index
    %c0_15 = arith.constant 0 : index
    %13 = vector.load %arg2[%c0_13, %c0_14, %c0_15] : memref<3x102x128xbf16, #tpu.memory_space<vmem>>, vector<1x102x128xbf16>
    %14 = vector.shape_cast %13 : vector<1x102x128xbf16> to vector<102x128xbf16>
    %cst_16 = arith.constant dense<0.000000e+00> : vector<32x128xf32>
    %15 = tpu.matmul %12, %14, %cst_16 {dimension_numbers = #tpu.dot_dimension_numbers<[1], [0], [0], [1], [0, 0, 1, 1], [], []>} : vector<32x102xbf16>, vector<102x128xbf16>, vector<32x128xf32> -> vector<32x128xf32>
    %c1_17 = arith.constant 1 : index
    %c0_18 = arith.constant 0 : index
    %16 = vector.load %arg41[%c1_17, %c0_18] : memref<34x128xbf16, #tpu.memory_space<vmem>>, vector<32x102xbf16>
    %c1_19 = arith.constant 1 : index
    %c0_20 = arith.constant 0 : index
    %c0_21 = arith.constant 0 : index
    %17 = vector.load %arg2[%c1_19, %c0_20, %c0_21] : memref<3x102x128xbf16, #tpu.memory_space<vmem>>, vector<1x102x128xbf16>
    %18 = vector.shape_cast %17 : vector<1x102x128xbf16> to vector<102x128xbf16>
    %cst_22 = arith.constant dense<0.000000e+00> : vector<32x128xf32>
    %19 = tpu.matmul %16, %18, %cst_22 {dimension_numbers = #tpu.dot_dimension_numbers<[1], [0], [0], [1], [0, 0, 1, 1], [], []>} : vector<32x102xbf16>, vector<102x128xbf16>, vector<32x128xf32> -> vector<32x128xf32>
    %20 = arith.addf %15, %19 : vector<32x128xf32>
    %c2 = arith.constant 2 : index
    %c0_23 = arith.constant 0 : index
    %21 = vector.load %arg41[%c2, %c0_23] : memref<34x128xbf16, #tpu.memory_space<vmem>>, vector<32x102xbf16>
    %c2_24 = arith.constant 2 : index
    %c0_25 = arith.constant 0 : index
    %c0_26 = arith.constant 0 : index
    %22 = vector.load %arg2[%c2_24, %c0_25, %c0_26] : memref<3x102x128xbf16, #tpu.memory_space<vmem>>, vector<1x102x128xbf16>
    %23 = vector.shape_cast %22 : vector<1x102x128xbf16> to vector<102x128xbf16>
    %cst_27 = arith.constant dense<0.000000e+00> : vector<32x128xf32>
    %24 = tpu.matmul %21, %23, %cst_27 {dimension_numbers = #tpu.dot_dimension_numbers<[1], [0], [0], [1], [0, 0, 1, 1], [], []>} : vector<32x102xbf16>, vector<102x128xbf16>, vector<32x128xf32> -> vector<32x128xf32>
    %25 = arith.addf %20, %24 : vector<32x128xf32>
    %c0_28 = arith.constant 0 : index
    %c0_29 = arith.constant 0 : index
    %26 = vector.load %arg3[%c0_28, %c0_29] : memref<1x128xf32, #tpu.memory_space<vmem>>, vector<1x128xf32>
    %27 = vector.broadcast %26 : vector<1x128xf32> to vector<32x128xf32>
    %28 = arith.addf %25, %27 : vector<32x128xf32>
    %cst_30 = arith.constant 0.000000e+00 : bf16
    %29 = vector.broadcast %cst_30 : bf16 to vector<1x136xbf16>
    %c0_31 = arith.constant 0 : index
    %c0_32 = arith.constant 0 : index
    %30 = vector.load %arg42[%c0_31, %c0_32] : memref<34x136xbf16, #tpu.memory_space<vmem>>, vector<1x136xbf16>
    tpu.vector_store %arg42[%c0_31, %c0_32], %29 {strides = array<i32>} : memref<34x136xbf16, #tpu.memory_space<vmem>>, vector<1x136xbf16>,
    %cst_33 = arith.constant 0.000000e+00 : bf16
    %31 = vector.broadcast %cst_33 : bf16 to vector<1x136xbf16>
    %c33_34 = arith.constant 33 : index
    %c0_35 = arith.constant 0 : index
    %32 = vector.load %arg42[%c33_34, %c0_35] : memref<34x136xbf16, #tpu.memory_space<vmem>>, vector<1x136xbf16>
    tpu.vector_store %arg42[%c33_34, %c0_35], %31 {strides = array<i32>} : memref<34x136xbf16, #tpu.memory_space<vmem>>, vector<1x136xbf16>,
    %cst_36 = arith.constant 0.000000e+00 : bf16
    %33 = vector.broadcast %cst_36 : bf16 to vector<32x4xbf16>
    %c1_37 = arith.constant 1 : index
    %c0_38 = arith.constant 0 : index
    %34 = vector.load %arg42[%c1_37, %c0_38] : memref<34x136xbf16, #tpu.memory_space<vmem>>, vector<32x4xbf16>
    tpu.vector_store %arg42[%c1_37, %c0_38], %33 {strides = array<i32>} : memref<34x136xbf16, #tpu.memory_space<vmem>>, vector<32x4xbf16>,
    %cst_39 = arith.constant 0.000000e+00 : bf16
    %35 = vector.broadcast %cst_39 : bf16 to vector<32x4xbf16>
    %c1_40 = arith.constant 1 : index
    %c132 = arith.constant 132 : index
    %36 = vector.load %arg42[%c1_40, %c132] : memref<34x136xbf16, #tpu.memory_space<vmem>>, vector<32x4xbf16>
    tpu.vector_store %arg42[%c1_40, %c132], %35 {strides = array<i32>} : memref<34x136xbf16, #tpu.memory_space<vmem>>, vector<32x4xbf16>,
    %cst_41 = arith.constant 0.000000e+00 : f32
    %37 = vector.broadcast %cst_41 : f32 to vector<32x128xf32>
    %38 = arith.maximumf %28, %37 : vector<32x128xf32>
    %39 = arith.truncf %38 : vector<32x128xf32> to vector<32x128xbf16>
    %c1_42 = arith.constant 1 : index
    %c4 = arith.constant 4 : index
    %40 = vector.load %arg42[%c1_42, %c4] : memref<34x136xbf16, #tpu.memory_space<vmem>>, vector<32x128xbf16>
    tpu.vector_store %arg42[%c1_42, %c4], %39 {strides = array<i32>} : memref<34x136xbf16, #tpu.memory_space<vmem>>, vector<32x128xbf16>,
    %c0_43 = arith.constant 0 : index
    %c0_44 = arith.constant 0 : index
    %41 = vector.load %arg42[%c0_43, %c0_44] : memref<34x136xbf16, #tpu.memory_space<vmem>>, vector<32x136xbf16>
    %c0_45 = arith.constant 0 : index
    %c0_46 = arith.constant 0 : index
    %c0_47 = arith.constant 0 : index
    %42 = vector.load %arg4[%c0_45, %c0_46, %c0_47] : memref<3x136x64xbf16, #tpu.memory_space<vmem>>, vector<1x136x64xbf16>
    %43 = vector.shape_cast %42 : vector<1x136x64xbf16> to vector<136x64xbf16>
    %cst_48 = arith.constant dense<0.000000e+00> : vector<32x64xf32>
    %44 = tpu.matmul %41, %43, %cst_48 {dimension_numbers = #tpu.dot_dimension_numbers<[1], [0], [0], [1], [0, 0, 1, 1], [], []>} : vector<32x136xbf16>, vector<136x64xbf16>, vector<32x64xf32> -> vector<32x64xf32>
    %c1_49 = arith.constant 1 : index
    %c0_50 = arith.constant 0 : index
    %45 = vector.load %arg42[%c1_49, %c0_50] : memref<34x136xbf16, #tpu.memory_space<vmem>>, vector<32x136xbf16>
    %c1_51 = arith.constant 1 : index
    %c0_52 = arith.constant 0 : index
    %c0_53 = arith.constant 0 : index
    %46 = vector.load %arg4[%c1_51, %c0_52, %c0_53] : memref<3x136x64xbf16, #tpu.memory_space<vmem>>, vector<1x136x64xbf16>
    %47 = vector.shape_cast %46 : vector<1x136x64xbf16> to vector<136x64xbf16>
    %cst_54 = arith.constant dense<0.000000e+00> : vector<32x64xf32>
    %48 = tpu.matmul %45, %47, %cst_54 {dimension_numbers = #tpu.dot_dimension_numbers<[1], [0], [0], [1], [0, 0, 1, 1], [], []>} : vector<32x136xbf16>, vector<136x64xbf16>, vector<32x64xf32> -> vector<32x64xf32>
    %49 = arith.addf %44, %48 : vector<32x64xf32>
    %c2_55 = arith.constant 2 : index
    %c0_56 = arith.constant 0 : index
    %50 = vector.load %arg42[%c2_55, %c0_56] : memref<34x136xbf16, #tpu.memory_space<vmem>>, vector<32x136xbf16>
    %c2_57 = arith.constant 2 : index
    %c0_58 = arith.constant 0 : index
    %c0_59 = arith.constant 0 : index
    %51 = vector.load %arg4[%c2_57, %c0_58, %c0_59] : memref<3x136x64xbf16, #tpu.memory_space<vmem>>, vector<1x136x64xbf16>
    %52 = vector.shape_cast %51 : vector<1x136x64xbf16> to vector<136x64xbf16>
    %cst_60 = arith.constant dense<0.000000e+00> : vector<32x64xf32>
    %53 = tpu.matmul %50, %52, %cst_60 {dimension_numbers = #tpu.dot_dimension_numbers<[1], [0], [0], [1], [0, 0, 1, 1], [], []>} : vector<32x136xbf16>, vector<136x64xbf16>, vector<32x64xf32> -> vector<32x64xf32>
    %54 = arith.addf %49, %53 : vector<32x64xf32>
    %55 = arith.truncf %1 : vector<32x96xf32> to vector<32x96xbf16>
    %c0_61 = arith.constant 0 : index
    %c0_62 = arith.constant 0 : index
    %56 = vector.load %arg5[%c0_61, %c0_62] : memref<96x64xbf16, #tpu.memory_space<vmem>>, vector<96x64xbf16>
    %cst_63 = arith.constant dense<0.000000e+00> : vector<32x64xf32>
    %57 = tpu.matmul %55, %56, %cst_63 {dimension_numbers = #tpu.dot_dimension_numbers<[1], [0], [0], [1], [0, 0, 1, 1], [], []>} : vector<32x96xbf16>, vector<96x64xbf16>, vector<32x64xf32> -> vector<32x64xf32>
    %c0_64 = arith.constant 0 : index
    %c0_65 = arith.constant 0 : index
    %58 = vector.load %arg6[%c0_64, %c0_65] : memref<16x32xf32, #tpu.memory_space<vmem>>, vector<16x32xf32>
    %59 = arith.addf %54, %57 : vector<32x64xf32>
    %cst_66 = arith.constant dense<0.000000e+00> : vector<16x64xf32>
    %60 = tpu.matmul %58, %59, %cst_66 {dimension_numbers = #tpu.dot_dimension_numbers<[1], [0], [0], [1], [0, 0, 1, 1], [], []>} : vector<16x32xf32>, vector<32x64xf32>, vector<16x64xf32> -> vector<16x64xf32>
    %c0_67 = arith.constant 0 : index
    %c0_68 = arith.constant 0 : index
    %61 = vector.load %arg7[%c0_67, %c0_68] : memref<1x64xf32, #tpu.memory_space<vmem>>, vector<1x64xf32>
    %62 = vector.broadcast %61 : vector<1x64xf32> to vector<16x64xf32>
    %63 = arith.addf %60, %62 : vector<16x64xf32>
    %cst_69 = arith.constant 0.000000e+00 : bf16
    %64 = vector.broadcast %cst_69 : bf16 to vector<1x72xbf16>
    %c0_70 = arith.constant 0 : index
    %c0_71 = arith.constant 0 : index
    %65 = vector.load %arg41[%c0_70, %c0_71] : memref<34x128xbf16, #tpu.memory_space<vmem>>, vector<1x72xbf16>
    tpu.vector_store %arg41[%c0_70, %c0_71], %64 {strides = array<i32>} : memref<34x128xbf16, #tpu.memory_space<vmem>>, vector<1x72xbf16>,
    %cst_72 = arith.constant 0.000000e+00 : bf16
    %66 = vector.broadcast %cst_72 : bf16 to vector<1x72xbf16>
    %c17 = arith.constant 17 : index
    %c0_73 = arith.constant 0 : index
    %67 = vector.load %arg41[%c17, %c0_73] : memref<34x128xbf16, #tpu.memory_space<vmem>>, vector<1x72xbf16>
    tpu.vector_store %arg41[%c17, %c0_73], %66 {strides = array<i32>} : memref<34x128xbf16, #tpu.memory_space<vmem>>, vector<1x72xbf16>,
    %cst_74 = arith.constant 0.000000e+00 : bf16
    %68 = vector.broadcast %cst_74 : bf16 to vector<16x4xbf16>
    %c1_75 = arith.constant 1 : index
    %c0_76 = arith.constant 0 : index
    %69 = vector.load %arg41[%c1_75, %c0_76] : memref<34x128xbf16, #tpu.memory_space<vmem>>, vector<16x4xbf16>
    tpu.vector_store %arg41[%c1_75, %c0_76], %68 {strides = array<i32>} : memref<34x128xbf16, #tpu.memory_space<vmem>>, vector<16x4xbf16>,
    %cst_77 = arith.constant 0.000000e+00 : bf16
    %70 = vector.broadcast %cst_77 : bf16 to vector<16x4xbf16>
    %c1_78 = arith.constant 1 : index
    %c68 = arith.constant 68 : index
    %71 = vector.load %arg41[%c1_78, %c68] : memref<34x128xbf16, #tpu.memory_space<vmem>>, vector<16x4xbf16>
    tpu.vector_store %arg41[%c1_78, %c68], %70 {strides = array<i32>} : memref<34x128xbf16, #tpu.memory_space<vmem>>, vector<16x4xbf16>,
    %cst_79 = arith.constant 0.000000e+00 : f32
    %72 = vector.broadcast %cst_79 : f32 to vector<16x64xf32>
    %73 = arith.maximumf %63, %72 : vector<16x64xf32>
    %74 = arith.truncf %73 : vector<16x64xf32> to vector<16x64xbf16>
    %c1_80 = arith.constant 1 : index
    %c4_81 = arith.constant 4 : index
    %75 = vector.load %arg41[%c1_80, %c4_81] : memref<34x128xbf16, #tpu.memory_space<vmem>>, vector<16x64xbf16>
    tpu.vector_store %arg41[%c1_80, %c4_81], %74 {strides = array<i32>} : memref<34x128xbf16, #tpu.memory_space<vmem>>, vector<16x64xbf16>,
    %c0_82 = arith.constant 0 : index
    %c0_83 = arith.constant 0 : index
    %76 = vector.load %arg41[%c0_82, %c0_83] : memref<34x128xbf16, #tpu.memory_space<vmem>>, vector<16x72xbf16>
    %c0_84 = arith.constant 0 : index
    %c0_85 = arith.constant 0 : index
    %c0_86 = arith.constant 0 : index
    %77 = vector.load %arg8[%c0_84, %c0_85, %c0_86] : memref<3x72x64xbf16, #tpu.memory_space<vmem>>, vector<1x72x64xbf16>
    %78 = vector.shape_cast %77 : vector<1x72x64xbf16> to vector<72x64xbf16>
    %cst_87 = arith.constant dense<0.000000e+00> : vector<16x64xf32>
    %79 = tpu.matmul %76, %78, %cst_87 {dimension_numbers = #tpu.dot_dimension_numbers<[1], [0], [0], [1], [0, 0, 1, 1], [], []>} : vector<16x72xbf16>, vector<72x64xbf16>, vector<16x64xf32> -> vector<16x64xf32>
    %c1_88 = arith.constant 1 : index
    %c0_89 = arith.constant 0 : index
    %80 = vector.load %arg41[%c1_88, %c0_89] : memref<34x128xbf16, #tpu.memory_space<vmem>>, vector<16x72xbf16>
    %c1_90 = arith.constant 1 : index
    %c0_91 = arith.constant 0 : index
    %c0_92 = arith.constant 0 : index
    %81 = vector.load %arg8[%c1_90, %c0_91, %c0_92] : memref<3x72x64xbf16, #tpu.memory_space<vmem>>, vector<1x72x64xbf16>
    %82 = vector.shape_cast %81 : vector<1x72x64xbf16> to vector<72x64xbf16>
    %cst_93 = arith.constant dense<0.000000e+00> : vector<16x64xf32>
    %83 = tpu.matmul %80, %82, %cst_93 {dimension_numbers = #tpu.dot_dimension_numbers<[1], [0], [0], [1], [0, 0, 1, 1], [], []>} : vector<16x72xbf16>, vector<72x64xbf16>, vector<16x64xf32> -> vector<16x64xf32>
    %84 = arith.addf %79, %83 : vector<16x64xf32>
    %c2_94 = arith.constant 2 : index
    %c0_95 = arith.constant 0 : index
    %85 = vector.load %arg41[%c2_94, %c0_95] : memref<34x128xbf16, #tpu.memory_space<vmem>>, vector<16x72xbf16>
    %c2_96 = arith.constant 2 : index
    %c0_97 = arith.constant 0 : index
    %c0_98 = arith.constant 0 : index
    %86 = vector.load %arg8[%c2_96, %c0_97, %c0_98] : memref<3x72x64xbf16, #tpu.memory_space<vmem>>, vector<1x72x64xbf16>
    %87 = vector.shape_cast %86 : vector<1x72x64xbf16> to vector<72x64xbf16>
    %cst_99 = arith.constant dense<0.000000e+00> : vector<16x64xf32>
    %88 = tpu.matmul %85, %87, %cst_99 {dimension_numbers = #tpu.dot_dimension_numbers<[1], [0], [0], [1], [0, 0, 1, 1], [], []>} : vector<16x72xbf16>, vector<72x64xbf16>, vector<16x64xf32> -> vector<16x64xf32>
    %89 = arith.addf %84, %88 : vector<16x64xf32>
    %c0_100 = arith.constant 0 : index
    %c0_101 = arith.constant 0 : index
    %90 = vector.load %arg9[%c0_100, %c0_101] : memref<1x64xf32, #tpu.memory_space<vmem>>, vector<1x64xf32>
    %91 = vector.broadcast %90 : vector<1x64xf32> to vector<16x64xf32>
    %92 = arith.addf %89, %91 : vector<16x64xf32>
    %cst_102 = arith.constant 0.000000e+00 : bf16
    %93 = vector.broadcast %cst_102 : bf16 to vector<1x72xbf16>
    %c0_103 = arith.constant 0 : index
    %c0_104 = arith.constant 0 : index
    %94 = vector.load %arg42[%c0_103, %c0_104] : memref<34x136xbf16, #tpu.memory_space<vmem>>, vector<1x72xbf16>
    tpu.vector_store %arg42[%c0_103, %c0_104], %93 {strides = array<i32>} : memref<34x136xbf16, #tpu.memory_space<vmem>>, vector<1x72xbf16>,
    %cst_105 = arith.constant 0.000000e+00 : bf16
    %95 = vector.broadcast %cst_105 : bf16 to vector<1x72xbf16>
    %c17_106 = arith.constant 17 : index
    %c0_107 = arith.constant 0 : index
    %96 = vector.load %arg42[%c17_106, %c0_107] : memref<34x136xbf16, #tpu.memory_space<vmem>>, vector<1x72xbf16>
    tpu.vector_store %arg42[%c17_106, %c0_107], %95 {strides = array<i32>} : memref<34x136xbf16, #tpu.memory_space<vmem>>, vector<1x72xbf16>,
    %cst_108 = arith.constant 0.000000e+00 : bf16
    %97 = vector.broadcast %cst_108 : bf16 to vector<16x4xbf16>
    %c1_109 = arith.constant 1 : index
    %c0_110 = arith.constant 0 : index
    %98 = vector.load %arg42[%c1_109, %c0_110] : memref<34x136xbf16, #tpu.memory_space<vmem>>, vector<16x4xbf16>
    tpu.vector_store %arg42[%c1_109, %c0_110], %97 {strides = array<i32>} : memref<34x136xbf16, #tpu.memory_space<vmem>>, vector<16x4xbf16>,
    %cst_111 = arith.constant 0.000000e+00 : bf16
    %99 = vector.broadcast %cst_111 : bf16 to vector<16x4xbf16>
    %c1_112 = arith.constant 1 : index
    %c68_113 = arith.constant 68 : index
    %100 = vector.load %arg42[%c1_112, %c68_113] : memref<34x136xbf16, #tpu.memory_space<vmem>>, vector<16x4xbf16>
    tpu.vector_store %arg42[%c1_112, %c68_113], %99 {strides = array<i32>} : memref<34x136xbf16, #tpu.memory_space<vmem>>, vector<16x4xbf16>,
    %cst_114 = arith.constant 0.000000e+00 : f32
    %101 = vector.broadcast %cst_114 : f32 to vector<16x64xf32>
    %102 = arith.maximumf %92, %101 : vector<16x64xf32>
    %103 = arith.truncf %102 : vector<16x64xf32> to vector<16x64xbf16>
    %c1_115 = arith.constant 1 : index
    %c4_116 = arith.constant 4 : index
    %104 = vector.load %arg42[%c1_115, %c4_116] : memref<34x136xbf16, #tpu.memory_space<vmem>>, vector<16x64xbf16>
    tpu.vector_store %arg42[%c1_115, %c4_116], %103 {strides = array<i32>} : memref<34x136xbf16, #tpu.memory_space<vmem>>, vector<16x64xbf16>,
    %c0_117 = arith.constant 0 : index
    %c0_118 = arith.constant 0 : index
    %105 = vector.load %arg42[%c0_117, %c0_118] : memref<34x136xbf16, #tpu.memory_space<vmem>>, vector<16x72xbf16>
    %c0_119 = arith.constant 0 : index
    %c0_120 = arith.constant 0 : index
    %c0_121 = arith.constant 0 : index
    %106 = vector.load %arg10[%c0_119, %c0_120, %c0_121] : memref<3x72x64xbf16, #tpu.memory_space<vmem>>, vector<1x72x64xbf16>
    %107 = vector.shape_cast %106 : vector<1x72x64xbf16> to vector<72x64xbf16>
    %cst_122 = arith.constant dense<0.000000e+00> : vector<16x64xf32>
    %108 = tpu.matmul %105, %107, %cst_122 {dimension_numbers = #tpu.dot_dimension_numbers<[1], [0], [0], [1], [0, 0, 1, 1], [], []>} : vector<16x72xbf16>, vector<72x64xbf16>, vector<16x64xf32> -> vector<16x64xf32>
    %c1_123 = arith.constant 1 : index
    %c0_124 = arith.constant 0 : index
    %109 = vector.load %arg42[%c1_123, %c0_124] : memref<34x136xbf16, #tpu.memory_space<vmem>>, vector<16x72xbf16>
    %c1_125 = arith.constant 1 : index
    %c0_126 = arith.constant 0 : index
    %c0_127 = arith.constant 0 : index
    %110 = vector.load %arg10[%c1_125, %c0_126, %c0_127] : memref<3x72x64xbf16, #tpu.memory_space<vmem>>, vector<1x72x64xbf16>
    %111 = vector.shape_cast %110 : vector<1x72x64xbf16> to vector<72x64xbf16>
    %cst_128 = arith.constant dense<0.000000e+00> : vector<16x64xf32>
    %112 = tpu.matmul %109, %111, %cst_128 {dimension_numbers = #tpu.dot_dimension_numbers<[1], [0], [0], [1], [0, 0, 1, 1], [], []>} : vector<16x72xbf16>, vector<72x64xbf16>, vector<16x64xf32> -> vector<16x64xf32>
    %113 = arith.addf %108, %112 : vector<16x64xf32>
    %c2_129 = arith.constant 2 : index
    %c0_130 = arith.constant 0 : index
    %114 = vector.load %arg42[%c2_129, %c0_130] : memref<34x136xbf16, #tpu.memory_space<vmem>>, vector<16x72xbf16>
    %c2_131 = arith.constant 2 : index
    %c0_132 = arith.constant 0 : index
    %c0_133 = arith.constant 0 : index
    %115 = vector.load %arg10[%c2_131, %c0_132, %c0_133] : memref<3x72x64xbf16, #tpu.memory_space<vmem>>, vector<1x72x64xbf16>
    %116 = vector.shape_cast %115 : vector<1x72x64xbf16> to vector<72x64xbf16>
    %cst_134 = arith.constant dense<0.000000e+00> : vector<16x64xf32>
    %117 = tpu.matmul %114, %116, %cst_134 {dimension_numbers = #tpu.dot_dimension_numbers<[1], [0], [0], [1], [0, 0, 1, 1], [], []>} : vector<16x72xbf16>, vector<72x64xbf16>, vector<16x64xf32> -> vector<16x64xf32>
    %118 = arith.addf %113, %117 : vector<16x64xf32>
    %119 = arith.truncf %63 : vector<16x64xf32> to vector<16x64xbf16>
    %c0_135 = arith.constant 0 : index
    %c0_136 = arith.constant 0 : index
    %120 = vector.load %arg11[%c0_135, %c0_136] : memref<64x64xbf16, #tpu.memory_space<vmem>>, vector<64x64xbf16>
    %cst_137 = arith.constant dense<0.000000e+00> : vector<16x64xf32>
    %121 = tpu.matmul %119, %120, %cst_137 {dimension_numbers = #tpu.dot_dimension_numbers<[1], [0], [0], [1], [0, 0, 1, 1], [], []>} : vector<16x64xbf16>, vector<64x64xbf16>, vector<16x64xf32> -> vector<16x64xf32>
    %c0_138 = arith.constant 0 : index
    %c0_139 = arith.constant 0 : index
    %122 = vector.load %arg12[%c0_138, %c0_139] : memref<8x16xf32, #tpu.memory_space<vmem>>, vector<8x16xf32>
    %123 = arith.addf %118, %121 : vector<16x64xf32>
    %cst_140 = arith.constant dense<0.000000e+00> : vector<8x64xf32>
    %124 = tpu.matmul %122, %123, %cst_140 {dimension_numbers = #tpu.dot_dimension_numbers<[1], [0], [0], [1], [0, 0, 1, 1], [], []>} : vector<8x16xf32>, vector<16x64xf32>, vector<8x64xf32> -> vector<8x64xf32>
    %c0_141 = arith.constant 0 : index
    %c0_142 = arith.constant 0 : index
    %125 = vector.load %arg13[%c0_141, %c0_142] : memref<1x64xf32, #tpu.memory_space<vmem>>, vector<1x64xf32>
    %126 = vector.broadcast %125 : vector<1x64xf32> to vector<8x64xf32>
    %127 = arith.addf %124, %126 : vector<8x64xf32>
    %cst_143 = arith.constant 0.000000e+00 : bf16
    %128 = vector.broadcast %cst_143 : bf16 to vector<1x80xbf16>
    %c0_144 = arith.constant 0 : index
    %c0_145 = arith.constant 0 : index
    %129 = vector.load %arg41[%c0_144, %c0_145] : memref<34x128xbf16, #tpu.memory_space<vmem>>, vector<1x80xbf16>
    tpu.vector_store %arg41[%c0_144, %c0_145], %128 {strides = array<i32>} : memref<34x128xbf16, #tpu.memory_space<vmem>>, vector<1x80xbf16>,
    %cst_146 = arith.constant 0.000000e+00 : bf16
    %130 = vector.broadcast %cst_146 : bf16 to vector<1x80xbf16>
    %c9 = arith.constant 9 : index
    %c0_147 = arith.constant 0 : index
    %131 = vector.load %arg41[%c9, %c0_147] : memref<34x128xbf16, #tpu.memory_space<vmem>>, vector<1x80xbf16>
    tpu.vector_store %arg41[%c9, %c0_147], %130 {strides = array<i32>} : memref<34x128xbf16, #tpu.memory_space<vmem>>, vector<1x80xbf16>,
    %cst_148 = arith.constant 0.000000e+00 : bf16
    %132 = vector.broadcast %cst_148 : bf16 to vector<8x8xbf16>
    %c1_149 = arith.constant 1 : index
    %c0_150 = arith.constant 0 : index
    %133 = vector.load %arg41[%c1_149, %c0_150] : memref<34x128xbf16, #tpu.memory_space<vmem>>, vector<8x8xbf16>
    tpu.vector_store %arg41[%c1_149, %c0_150], %132 {strides = array<i32>} : memref<34x128xbf16, #tpu.memory_space<vmem>>, vector<8x8xbf16>,
    %cst_151 = arith.constant 0.000000e+00 : bf16
    %134 = vector.broadcast %cst_151 : bf16 to vector<8x8xbf16>
    %c1_152 = arith.constant 1 : index
    %c72 = arith.constant 72 : index
    %135 = vector.load %arg41[%c1_152, %c72] : memref<34x128xbf16, #tpu.memory_space<vmem>>, vector<8x8xbf16>
    tpu.vector_store %arg41[%c1_152, %c72], %134 {strides = array<i32>} : memref<34x128xbf16, #tpu.memory_space<vmem>>, vector<8x8xbf16>,
    %cst_153 = arith.constant 0.000000e+00 : f32
    %136 = vector.broadcast %cst_153 : f32 to vector<8x64xf32>
    %137 = arith.maximumf %127, %136 : vector<8x64xf32>
    %138 = arith.truncf %137 : vector<8x64xf32> to vector<8x64xbf16>
    %c1_154 = arith.constant 1 : index
    %c8 = arith.constant 8 : index
    %139 = vector.load %arg41[%c1_154, %c8] : memref<34x128xbf16, #tpu.memory_space<vmem>>, vector<8x64xbf16>
    tpu.vector_store %arg41[%c1_154, %c8], %138 {strides = array<i32>} : memref<34x128xbf16, #tpu.memory_space<vmem>>, vector<8x64xbf16>,
    %c0_155 = arith.constant 0 : index
    %c0_156 = arith.constant 0 : index
    %140 = vector.load %arg41[%c0_155, %c0_156] : memref<34x128xbf16, #tpu.memory_space<vmem>>, vector<8x80xbf16>
    %c0_157 = arith.constant 0 : index
    %c0_158 = arith.constant 0 : index
    %c0_159 = arith.constant 0 : index
    %141 = vector.load %arg14[%c0_157, %c0_158, %c0_159] : memref<3x80x64xbf16, #tpu.memory_space<vmem>>, vector<1x80x64xbf16>
    %142 = vector.shape_cast %141 : vector<1x80x64xbf16> to vector<80x64xbf16>
    %cst_160 = arith.constant dense<0.000000e+00> : vector<8x64xf32>
    %143 = tpu.matmul %140, %142, %cst_160 {dimension_numbers = #tpu.dot_dimension_numbers<[1], [0], [0], [1], [0, 0, 1, 1], [], []>} : vector<8x80xbf16>, vector<80x64xbf16>, vector<8x64xf32> -> vector<8x64xf32>
    %c1_161 = arith.constant 1 : index
    %c0_162 = arith.constant 0 : index
    %144 = vector.load %arg41[%c1_161, %c0_162] : memref<34x128xbf16, #tpu.memory_space<vmem>>, vector<8x80xbf16>
    %c1_163 = arith.constant 1 : index
    %c0_164 = arith.constant 0 : index
    %c0_165 = arith.constant 0 : index
    %145 = vector.load %arg14[%c1_163, %c0_164, %c0_165] : memref<3x80x64xbf16, #tpu.memory_space<vmem>>, vector<1x80x64xbf16>
    %146 = vector.shape_cast %145 : vector<1x80x64xbf16> to vector<80x64xbf16>
    %cst_166 = arith.constant dense<0.000000e+00> : vector<8x64xf32>
    %147 = tpu.matmul %144, %146, %cst_166 {dimension_numbers = #tpu.dot_dimension_numbers<[1], [0], [0], [1], [0, 0, 1, 1], [], []>} : vector<8x80xbf16>, vector<80x64xbf16>, vector<8x64xf32> -> vector<8x64xf32>
    %148 = arith.addf %143, %147 : vector<8x64xf32>
    %c2_167 = arith.constant 2 : index
    %c0_168 = arith.constant 0 : index
    %149 = vector.load %arg41[%c2_167, %c0_168] : memref<34x128xbf16, #tpu.memory_space<vmem>>, vector<8x80xbf16>
    %c2_169 = arith.constant 2 : index
    %c0_170 = arith.constant 0 : index
    %c0_171 = arith.constant 0 : index
    %150 = vector.load %arg14[%c2_169, %c0_170, %c0_171] : memref<3x80x64xbf16, #tpu.memory_space<vmem>>, vector<1x80x64xbf16>
    %151 = vector.shape_cast %150 : vector<1x80x64xbf16> to vector<80x64xbf16>
    %cst_172 = arith.constant dense<0.000000e+00> : vector<8x64xf32>
    %152 = tpu.matmul %149, %151, %cst_172 {dimension_numbers = #tpu.dot_dimension_numbers<[1], [0], [0], [1], [0, 0, 1, 1], [], []>} : vector<8x80xbf16>, vector<80x64xbf16>, vector<8x64xf32> -> vector<8x64xf32>
    %153 = arith.addf %148, %152 : vector<8x64xf32>
    %c0_173 = arith.constant 0 : index
    %c0_174 = arith.constant 0 : index
    %154 = vector.load %arg15[%c0_173, %c0_174] : memref<1x64xf32, #tpu.memory_space<vmem>>, vector<1x64xf32>
    %155 = vector.broadcast %154 : vector<1x64xf32> to vector<8x64xf32>
    %156 = arith.addf %153, %155 : vector<8x64xf32>
    %cst_175 = arith.constant 0.000000e+00 : bf16
    %157 = vector.broadcast %cst_175 : bf16 to vector<1x80xbf16>
    %c0_176 = arith.constant 0 : index
    %c0_177 = arith.constant 0 : index
    %158 = vector.load %arg42[%c0_176, %c0_177] : memref<34x136xbf16, #tpu.memory_space<vmem>>, vector<1x80xbf16>
    tpu.vector_store %arg42[%c0_176, %c0_177], %157 {strides = array<i32>} : memref<34x136xbf16, #tpu.memory_space<vmem>>, vector<1x80xbf16>,
    %cst_178 = arith.constant 0.000000e+00 : bf16
    %159 = vector.broadcast %cst_178 : bf16 to vector<1x80xbf16>
    %c9_179 = arith.constant 9 : index
    %c0_180 = arith.constant 0 : index
    %160 = vector.load %arg42[%c9_179, %c0_180] : memref<34x136xbf16, #tpu.memory_space<vmem>>, vector<1x80xbf16>
    tpu.vector_store %arg42[%c9_179, %c0_180], %159 {strides = array<i32>} : memref<34x136xbf16, #tpu.memory_space<vmem>>, vector<1x80xbf16>,
    %cst_181 = arith.constant 0.000000e+00 : bf16
    %161 = vector.broadcast %cst_181 : bf16 to vector<8x8xbf16>
    %c1_182 = arith.constant 1 : index
    %c0_183 = arith.constant 0 : index
    %162 = vector.load %arg42[%c1_182, %c0_183] : memref<34x136xbf16, #tpu.memory_space<vmem>>, vector<8x8xbf16>
    tpu.vector_store %arg42[%c1_182, %c0_183], %161 {strides = array<i32>} : memref<34x136xbf16, #tpu.memory_space<vmem>>, vector<8x8xbf16>,
    %cst_184 = arith.constant 0.000000e+00 : bf16
    %163 = vector.broadcast %cst_184 : bf16 to vector<8x8xbf16>
    %c1_185 = arith.constant 1 : index
    %c72_186 = arith.constant 72 : index
    %164 = vector.load %arg42[%c1_185, %c72_186] : memref<34x136xbf16, #tpu.memory_space<vmem>>, vector<8x8xbf16>
    tpu.vector_store %arg42[%c1_185, %c72_186], %163 {strides = array<i32>} : memref<34x136xbf16, #tpu.memory_space<vmem>>, vector<8x8xbf16>,
    %cst_187 = arith.constant 0.000000e+00 : f32
    %165 = vector.broadcast %cst_187 : f32 to vector<8x64xf32>
    %166 = arith.maximumf %156, %165 : vector<8x64xf32>
    %167 = arith.truncf %166 : vector<8x64xf32> to vector<8x64xbf16>
    %c1_188 = arith.constant 1 : index
    %c8_189 = arith.constant 8 : index
    %168 = vector.load %arg42[%c1_188, %c8_189] : memref<34x136xbf16, #tpu.memory_space<vmem>>, vector<8x64xbf16>
    tpu.vector_store %arg42[%c1_188, %c8_189], %167 {strides = array<i32>} : memref<34x136xbf16, #tpu.memory_space<vmem>>, vector<8x64xbf16>,
    %c0_190 = arith.constant 0 : index
    %c0_191 = arith.constant 0 : index
    %169 = vector.load %arg42[%c0_190, %c0_191] : memref<34x136xbf16, #tpu.memory_space<vmem>>, vector<8x80xbf16>
    %c0_192 = arith.constant 0 : index
    %c0_193 = arith.constant 0 : index
    %c0_194 = arith.constant 0 : index
    %170 = vector.load %arg16[%c0_192, %c0_193, %c0_194] : memref<3x80x64xbf16, #tpu.memory_space<vmem>>, vector<1x80x64xbf16>
    %171 = vector.shape_cast %170 : vector<1x80x64xbf16> to vector<80x64xbf16>
    %cst_195 = arith.constant dense<0.000000e+00> : vector<8x64xf32>
    %172 = tpu.matmul %169, %171, %cst_195 {dimension_numbers = #tpu.dot_dimension_numbers<[1], [0], [0], [1], [0, 0, 1, 1], [], []>} : vector<8x80xbf16>, vector<80x64xbf16>, vector<8x64xf32> -> vector<8x64xf32>
    %c1_196 = arith.constant 1 : index
    %c0_197 = arith.constant 0 : index
    %173 = vector.load %arg42[%c1_196, %c0_197] : memref<34x136xbf16, #tpu.memory_space<vmem>>, vector<8x80xbf16>
    %c1_198 = arith.constant 1 : index
    %c0_199 = arith.constant 0 : index
    %c0_200 = arith.constant 0 : index
    %174 = vector.load %arg16[%c1_198, %c0_199, %c0_200] : memref<3x80x64xbf16, #tpu.memory_space<vmem>>, vector<1x80x64xbf16>
    %175 = vector.shape_cast %174 : vector<1x80x64xbf16> to vector<80x64xbf16>
    %cst_201 = arith.constant dense<0.000000e+00> : vector<8x64xf32>
    %176 = tpu.matmul %173, %175, %cst_201 {dimension_numbers = #tpu.dot_dimension_numbers<[1], [0], [0], [1], [0, 0, 1, 1], [], []>} : vector<8x80xbf16>, vector<80x64xbf16>, vector<8x64xf32> -> vector<8x64xf32>
    %177 = arith.addf %172, %176 : vector<8x64xf32>
    %c2_202 = arith.constant 2 : index
    %c0_203 = arith.constant 0 : index
    %178 = vector.load %arg42[%c2_202, %c0_203] : memref<34x136xbf16, #tpu.memory_space<vmem>>, vector<8x80xbf16>
    %c2_204 = arith.constant 2 : index
    %c0_205 = arith.constant 0 : index
    %c0_206 = arith.constant 0 : index
    %179 = vector.load %arg16[%c2_204, %c0_205, %c0_206] : memref<3x80x64xbf16, #tpu.memory_space<vmem>>, vector<1x80x64xbf16>
    %180 = vector.shape_cast %179 : vector<1x80x64xbf16> to vector<80x64xbf16>
    %cst_207 = arith.constant dense<0.000000e+00> : vector<8x64xf32>
    %181 = tpu.matmul %178, %180, %cst_207 {dimension_numbers = #tpu.dot_dimension_numbers<[1], [0], [0], [1], [0, 0, 1, 1], [], []>} : vector<8x80xbf16>, vector<80x64xbf16>, vector<8x64xf32> -> vector<8x64xf32>
    %182 = arith.addf %177, %181 : vector<8x64xf32>
    %183 = arith.truncf %127 : vector<8x64xf32> to vector<8x64xbf16>
    %c0_208 = arith.constant 0 : index
    %c0_209 = arith.constant 0 : index
    %184 = vector.load %arg17[%c0_208, %c0_209] : memref<64x64xbf16, #tpu.memory_space<vmem>>, vector<64x64xbf16>
    %cst_210 = arith.constant dense<0.000000e+00> : vector<8x64xf32>
    %185 = tpu.matmul %183, %184, %cst_210 {dimension_numbers = #tpu.dot_dimension_numbers<[1], [0], [0], [1], [0, 0, 1, 1], [], []>} : vector<8x64xbf16>, vector<64x64xbf16>, vector<8x64xf32> -> vector<8x64xf32>
    %c0_211 = arith.constant 0 : index
    %c0_212 = arith.constant 0 : index
    %186 = vector.load %arg18[%c0_211, %c0_212] : memref<4x8xf32, #tpu.memory_space<vmem>>, vector<4x8xf32>
    %187 = arith.addf %182, %185 : vector<8x64xf32>
    %cst_213 = arith.constant dense<0.000000e+00> : vector<4x64xf32>
    %188 = tpu.matmul %186, %187, %cst_213 {dimension_numbers = #tpu.dot_dimension_numbers<[1], [0], [0], [1], [0, 0, 1, 1], [], []>} : vector<4x8xf32>, vector<8x64xf32>, vector<4x64xf32> -> vector<4x64xf32>
    %c0_214 = arith.constant 0 : index
    %c0_215 = arith.constant 0 : index
    %189 = vector.load %arg19[%c0_214, %c0_215] : memref<1x64xf32, #tpu.memory_space<vmem>>, vector<1x64xf32>
    %190 = vector.broadcast %189 : vector<1x64xf32> to vector<4x64xf32>
    %191 = arith.addf %188, %190 : vector<4x64xf32>
    %cst_216 = arith.constant 0.000000e+00 : bf16
    %192 = vector.broadcast %cst_216 : bf16 to vector<1x96xbf16>
    %c0_217 = arith.constant 0 : index
    %c0_218 = arith.constant 0 : index
    %193 = vector.load %arg41[%c0_217, %c0_218] : memref<34x128xbf16, #tpu.memory_space<vmem>>, vector<1x96xbf16>
    tpu.vector_store %arg41[%c0_217, %c0_218], %192 {strides = array<i32>} : memref<34x128xbf16, #tpu.memory_space<vmem>>, vector<1x96xbf16>,
    %cst_219 = arith.constant 0.000000e+00 : bf16
    %194 = vector.broadcast %cst_219 : bf16 to vector<1x96xbf16>
    %c5 = arith.constant 5 : index
    %c0_220 = arith.constant 0 : index
    %195 = vector.load %arg41[%c5, %c0_220] : memref<34x128xbf16, #tpu.memory_space<vmem>>, vector<1x96xbf16>
    tpu.vector_store %arg41[%c5, %c0_220], %194 {strides = array<i32>} : memref<34x128xbf16, #tpu.memory_space<vmem>>, vector<1x96xbf16>,
    %cst_221 = arith.constant 0.000000e+00 : bf16
    %196 = vector.broadcast %cst_221 : bf16 to vector<4x16xbf16>
    %c1_222 = arith.constant 1 : index
    %c0_223 = arith.constant 0 : index
    %197 = vector.load %arg41[%c1_222, %c0_223] : memref<34x128xbf16, #tpu.memory_space<vmem>>, vector<4x16xbf16>
    tpu.vector_store %arg41[%c1_222, %c0_223], %196 {strides = array<i32>} : memref<34x128xbf16, #tpu.memory_space<vmem>>, vector<4x16xbf16>,
    %cst_224 = arith.constant 0.000000e+00 : bf16
    %198 = vector.broadcast %cst_224 : bf16 to vector<4x16xbf16>
    %c1_225 = arith.constant 1 : index
    %c80 = arith.constant 80 : index
    %199 = vector.load %arg41[%c1_225, %c80] : memref<34x128xbf16, #tpu.memory_space<vmem>>, vector<4x16xbf16>
    tpu.vector_store %arg41[%c1_225, %c80], %198 {strides = array<i32>} : memref<34x128xbf16, #tpu.memory_space<vmem>>, vector<4x16xbf16>,
    %cst_226 = arith.constant 0.000000e+00 : f32
    %200 = vector.broadcast %cst_226 : f32 to vector<4x64xf32>
    %201 = arith.maximumf %191, %200 : vector<4x64xf32>
    %202 = arith.truncf %201 : vector<4x64xf32> to vector<4x64xbf16>
    %c1_227 = arith.constant 1 : index
    %c16 = arith.constant 16 : index
    %203 = vector.load %arg41[%c1_227, %c16] : memref<34x128xbf16, #tpu.memory_space<vmem>>, vector<4x64xbf16>
    tpu.vector_store %arg41[%c1_227, %c16], %202 {strides = array<i32>} : memref<34x128xbf16, #tpu.memory_space<vmem>>, vector<4x64xbf16>,
    %c0_228 = arith.constant 0 : index
    %c0_229 = arith.constant 0 : index
    %204 = vector.load %arg41[%c0_228, %c0_229] : memref<34x128xbf16, #tpu.memory_space<vmem>>, vector<4x96xbf16>
    %c0_230 = arith.constant 0 : index
    %c0_231 = arith.constant 0 : index
    %c0_232 = arith.constant 0 : index
    %205 = vector.load %arg20[%c0_230, %c0_231, %c0_232] : memref<3x96x64xbf16, #tpu.memory_space<vmem>>, vector<1x96x64xbf16>
    %206 = vector.shape_cast %205 : vector<1x96x64xbf16> to vector<96x64xbf16>
    %cst_233 = arith.constant dense<0.000000e+00> : vector<4x64xf32>
    %207 = tpu.matmul %204, %206, %cst_233 {dimension_numbers = #tpu.dot_dimension_numbers<[1], [0], [0], [1], [0, 0, 1, 1], [], []>} : vector<4x96xbf16>, vector<96x64xbf16>, vector<4x64xf32> -> vector<4x64xf32>
    %c1_234 = arith.constant 1 : index
    %c0_235 = arith.constant 0 : index
    %208 = vector.load %arg41[%c1_234, %c0_235] : memref<34x128xbf16, #tpu.memory_space<vmem>>, vector<4x96xbf16>
    %c1_236 = arith.constant 1 : index
    %c0_237 = arith.constant 0 : index
    %c0_238 = arith.constant 0 : index
    %209 = vector.load %arg20[%c1_236, %c0_237, %c0_238] : memref<3x96x64xbf16, #tpu.memory_space<vmem>>, vector<1x96x64xbf16>
    %210 = vector.shape_cast %209 : vector<1x96x64xbf16> to vector<96x64xbf16>
    %cst_239 = arith.constant dense<0.000000e+00> : vector<4x64xf32>
    %211 = tpu.matmul %208, %210, %cst_239 {dimension_numbers = #tpu.dot_dimension_numbers<[1], [0], [0], [1], [0, 0, 1, 1], [], []>} : vector<4x96xbf16>, vector<96x64xbf16>, vector<4x64xf32> -> vector<4x64xf32>
    %212 = arith.addf %207, %211 : vector<4x64xf32>
    %c2_240 = arith.constant 2 : index
    %c0_241 = arith.constant 0 : index
    %213 = vector.load %arg41[%c2_240, %c0_241] : memref<34x128xbf16, #tpu.memory_space<vmem>>, vector<4x96xbf16>
    %c2_242 = arith.constant 2 : index
    %c0_243 = arith.constant 0 : index
    %c0_244 = arith.constant 0 : index
    %214 = vector.load %arg20[%c2_242, %c0_243, %c0_244] : memref<3x96x64xbf16, #tpu.memory_space<vmem>>, vector<1x96x64xbf16>
    %215 = vector.shape_cast %214 : vector<1x96x64xbf16> to vector<96x64xbf16>
    %cst_245 = arith.constant dense<0.000000e+00> : vector<4x64xf32>
    %216 = tpu.matmul %213, %215, %cst_245 {dimension_numbers = #tpu.dot_dimension_numbers<[1], [0], [0], [1], [0, 0, 1, 1], [], []>} : vector<4x96xbf16>, vector<96x64xbf16>, vector<4x64xf32> -> vector<4x64xf32>
    %217 = arith.addf %212, %216 : vector<4x64xf32>
    %c0_246 = arith.constant 0 : index
    %c0_247 = arith.constant 0 : index
    %218 = vector.load %arg21[%c0_246, %c0_247] : memref<1x64xf32, #tpu.memory_space<vmem>>, vector<1x64xf32>
    %219 = vector.broadcast %218 : vector<1x64xf32> to vector<4x64xf32>
    %220 = arith.addf %217, %219 : vector<4x64xf32>
    %cst_248 = arith.constant 0.000000e+00 : bf16
    %221 = vector.broadcast %cst_248 : bf16 to vector<1x96xbf16>
    %c0_249 = arith.constant 0 : index
    %c0_250 = arith.constant 0 : index
    %222 = vector.load %arg42[%c0_249, %c0_250] : memref<34x136xbf16, #tpu.memory_space<vmem>>, vector<1x96xbf16>
    tpu.vector_store %arg42[%c0_249, %c0_250], %221 {strides = array<i32>} : memref<34x136xbf16, #tpu.memory_space<vmem>>, vector<1x96xbf16>,
    %cst_251 = arith.constant 0.000000e+00 : bf16
    %223 = vector.broadcast %cst_251 : bf16 to vector<1x96xbf16>
    %c5_252 = arith.constant 5 : index
    %c0_253 = arith.constant 0 : index
    %224 = vector.load %arg42[%c5_252, %c0_253] : memref<34x136xbf16, #tpu.memory_space<vmem>>, vector<1x96xbf16>
    tpu.vector_store %arg42[%c5_252, %c0_253], %223 {strides = array<i32>} : memref<34x136xbf16, #tpu.memory_space<vmem>>, vector<1x96xbf16>,
    %cst_254 = arith.constant 0.000000e+00 : bf16
    %225 = vector.broadcast %cst_254 : bf16 to vector<4x16xbf16>
    %c1_255 = arith.constant 1 : index
    %c0_256 = arith.constant 0 : index
    %226 = vector.load %arg42[%c1_255, %c0_256] : memref<34x136xbf16, #tpu.memory_space<vmem>>, vector<4x16xbf16>
    tpu.vector_store %arg42[%c1_255, %c0_256], %225 {strides = array<i32>} : memref<34x136xbf16, #tpu.memory_space<vmem>>, vector<4x16xbf16>,
    %cst_257 = arith.constant 0.000000e+00 : bf16
    %227 = vector.broadcast %cst_257 : bf16 to vector<4x16xbf16>
    %c1_258 = arith.constant 1 : index
    %c80_259 = arith.constant 80 : index
    %228 = vector.load %arg42[%c1_258, %c80_259] : memref<34x136xbf16, #tpu.memory_space<vmem>>, vector<4x16xbf16>
    tpu.vector_store %arg42[%c1_258, %c80_259], %227 {strides = array<i32>} : memref<34x136xbf16, #tpu.memory_space<vmem>>, vector<4x16xbf16>,
    %cst_260 = arith.constant 0.000000e+00 : f32
    %229 = vector.broadcast %cst_260 : f32 to vector<4x64xf32>
    %230 = arith.maximumf %220, %229 : vector<4x64xf32>
    %231 = arith.truncf %230 : vector<4x64xf32> to vector<4x64xbf16>
    %c1_261 = arith.constant 1 : index
    %c16_262 = arith.constant 16 : index
    %232 = vector.load %arg42[%c1_261, %c16_262] : memref<34x136xbf16, #tpu.memory_space<vmem>>, vector<4x64xbf16>
    tpu.vector_store %arg42[%c1_261, %c16_262], %231 {strides = array<i32>} : memref<34x136xbf16, #tpu.memory_space<vmem>>, vector<4x64xbf16>,
    %c0_263 = arith.constant 0 : index
    %c0_264 = arith.constant 0 : index
    %233 = vector.load %arg42[%c0_263, %c0_264] : memref<34x136xbf16, #tpu.memory_space<vmem>>, vector<4x96xbf16>
    %c0_265 = arith.constant 0 : index
    %c0_266 = arith.constant 0 : index
    %c0_267 = arith.constant 0 : index
    %234 = vector.load %arg22[%c0_265, %c0_266, %c0_267] : memref<3x96x64xbf16, #tpu.memory_space<vmem>>, vector<1x96x64xbf16>
    %235 = vector.shape_cast %234 : vector<1x96x64xbf16> to vector<96x64xbf16>
    %cst_268 = arith.constant dense<0.000000e+00> : vector<4x64xf32>
    %236 = tpu.matmul %233, %235, %cst_268 {dimension_numbers = #tpu.dot_dimension_numbers<[1], [0], [0], [1], [0, 0, 1, 1], [], []>} : vector<4x96xbf16>, vector<96x64xbf16>, vector<4x64xf32> -> vector<4x64xf32>
    %c1_269 = arith.constant 1 : index
    %c0_270 = arith.constant 0 : index
    %237 = vector.load %arg42[%c1_269, %c0_270] : memref<34x136xbf16, #tpu.memory_space<vmem>>, vector<4x96xbf16>
    %c1_271 = arith.constant 1 : index
    %c0_272 = arith.constant 0 : index
    %c0_273 = arith.constant 0 : index
    %238 = vector.load %arg22[%c1_271, %c0_272, %c0_273] : memref<3x96x64xbf16, #tpu.memory_space<vmem>>, vector<1x96x64xbf16>
    %239 = vector.shape_cast %238 : vector<1x96x64xbf16> to vector<96x64xbf16>
    %cst_274 = arith.constant dense<0.000000e+00> : vector<4x64xf32>
    %240 = tpu.matmul %237, %239, %cst_274 {dimension_numbers = #tpu.dot_dimension_numbers<[1], [0], [0], [1], [0, 0, 1, 1], [], []>} : vector<4x96xbf16>, vector<96x64xbf16>, vector<4x64xf32> -> vector<4x64xf32>
    %241 = arith.addf %236, %240 : vector<4x64xf32>
    %c2_275 = arith.constant 2 : index
    %c0_276 = arith.constant 0 : index
    %242 = vector.load %arg42[%c2_275, %c0_276] : memref<34x136xbf16, #tpu.memory_space<vmem>>, vector<4x96xbf16>
    %c2_277 = arith.constant 2 : index
    %c0_278 = arith.constant 0 : index
    %c0_279 = arith.constant 0 : index
    %243 = vector.load %arg22[%c2_277, %c0_278, %c0_279] : memref<3x96x64xbf16, #tpu.memory_space<vmem>>, vector<1x96x64xbf16>
    %244 = vector.shape_cast %243 : vector<1x96x64xbf16> to vector<96x64xbf16>
    %cst_280 = arith.constant dense<0.000000e+00> : vector<4x64xf32>
    %245 = tpu.matmul %242, %244, %cst_280 {dimension_numbers = #tpu.dot_dimension_numbers<[1], [0], [0], [1], [0, 0, 1, 1], [], []>} : vector<4x96xbf16>, vector<96x64xbf16>, vector<4x64xf32> -> vector<4x64xf32>
    %246 = arith.addf %241, %245 : vector<4x64xf32>
    %247 = arith.truncf %191 : vector<4x64xf32> to vector<4x64xbf16>
    %c0_281 = arith.constant 0 : index
    %c0_282 = arith.constant 0 : index
    %248 = vector.load %arg23[%c0_281, %c0_282] : memref<64x64xbf16, #tpu.memory_space<vmem>>, vector<64x64xbf16>
    %cst_283 = arith.constant dense<0.000000e+00> : vector<4x64xf32>
    %249 = tpu.matmul %247, %248, %cst_283 {dimension_numbers = #tpu.dot_dimension_numbers<[1], [0], [0], [1], [0, 0, 1, 1], [], []>} : vector<4x64xbf16>, vector<64x64xbf16>, vector<4x64xf32> -> vector<4x64xf32>
    %c0_284 = arith.constant 0 : index
    %c0_285 = arith.constant 0 : index
    %250 = vector.load %arg24[%c0_284, %c0_285] : memref<2x4xf32, #tpu.memory_space<vmem>>, vector<2x4xf32>
    %251 = arith.addf %246, %249 : vector<4x64xf32>
    %cst_286 = arith.constant dense<0.000000e+00> : vector<2x64xf32>
    %252 = tpu.matmul %250, %251, %cst_286 {dimension_numbers = #tpu.dot_dimension_numbers<[1], [0], [0], [1], [0, 0, 1, 1], [], []>} : vector<2x4xf32>, vector<4x64xf32>, vector<2x64xf32> -> vector<2x64xf32>
    %c0_287 = arith.constant 0 : index
    %c0_288 = arith.constant 0 : index
    %253 = vector.load %arg25[%c0_287, %c0_288] : memref<1x64xf32, #tpu.memory_space<vmem>>, vector<1x64xf32>
    %254 = vector.broadcast %253 : vector<1x64xf32> to vector<2x64xf32>
    %255 = arith.addf %252, %254 : vector<2x64xf32>
    %256 = vector.extract_strided_slice %255 {offsets = [0, 0], sizes = [2, 32], strides = [1, 1]} : vector<2x64xf32> to vector<2x32xf32>
    %257 = vector.extract_strided_slice %255 {offsets = [0, 32], sizes = [2, 32], strides = [1, 1]} : vector<2x64xf32> to vector<2x32xf32>
    %258 = tpu.concatenate %256, %257 in 0 : vector<2x32xf32>, vector<2x32xf32> -> vector<4x32xf32>
    %259 = arith.truncf %258 : vector<4x32xf32> to vector<4x32xbf16>
    %c0_289 = arith.constant 0 : index
    %c0_290 = arith.constant 0 : index
    %260 = vector.load %arg26[%c0_289, %c0_290] : memref<32x40xbf16, #tpu.memory_space<vmem>>, vector<32x40xbf16>
    %cst_291 = arith.constant dense<0.000000e+00> : vector<4x40xf32>
    %261 = tpu.matmul %259, %260, %cst_291 {dimension_numbers = #tpu.dot_dimension_numbers<[1], [0], [0], [1], [0, 0, 1, 1], [], []>} : vector<4x32xbf16>, vector<32x40xbf16>, vector<4x40xf32> -> vector<4x40xf32>
    %c0_292 = arith.constant 0 : index
    %c0_293 = arith.constant 0 : index
    %262 = vector.load %arg27[%c0_292, %c0_293] : memref<1x40xf32, #tpu.memory_space<vmem>>, vector<1x40xf32>
    %263 = vector.broadcast %262 : vector<1x40xf32> to vector<4x40xf32>
    %264 = arith.addf %261, %263 : vector<4x40xf32>
    %265 = vector.extract_strided_slice %264 {offsets = [0, 0], sizes = [4, 4], strides = [1, 1]} : vector<4x40xf32> to vector<4x4xf32>
    %266 = vector.extract_strided_slice %264 {offsets = [0, 4], sizes = [4, 4], strides = [1, 1]} : vector<4x40xf32> to vector<4x4xf32>
    %267 = vector.extract_strided_slice %264 {offsets = [0, 8], sizes = [4, 32], strides = [1, 1]} : vector<4x40xf32> to vector<4x32xf32>
    %cst_294 = arith.constant dense<0.000000e+00> : vector<4x4xf32>
    %268 = tpu.matmul %265, %266, %cst_294 {dimension_numbers = #tpu.dot_dimension_numbers<[1], [1], [0], [0], [0, 0, 1, 0], [], []>} : vector<4x4xf32>, vector<4x4xf32>, vector<4x4xf32> -> vector<4x4xf32>
    %cst_295 = arith.constant dense<0xFF800000> : vector<4xf32>
    %269 = vector.multi_reduction <maximumf>, %268, %cst_295 [1] : vector<4x4xf32> to vector<4xf32>
    %270 = vector.shape_cast %269 : vector<4xf32> to vector<4x1xf32>
    %271 = vector.broadcast %270 : vector<4x1xf32> to vector<4x4xf32>
    %272 = arith.subf %268, %271 : vector<4x4xf32>
    %273 = math.exp %272 : vector<4x4xf32>
    %cst_296 = arith.constant dense<0.000000e+00> : vector<4xf32>
    %274 = vector.multi_reduction <add>, %273, %cst_296 [1] : vector<4x4xf32> to vector<4xf32>
    %275 = vector.shape_cast %274 : vector<4xf32> to vector<4x1xf32>
    %276 = vector.broadcast %275 : vector<4x1xf32> to vector<4x4xf32>
    %277 = arith.divf %273, %276 : vector<4x4xf32>
    %cst_297 = arith.constant dense<0.000000e+00> : vector<4x32xf32>
    %278 = tpu.matmul %277, %267, %cst_297 {dimension_numbers = #tpu.dot_dimension_numbers<[1], [0], [0], [1], [0, 0, 1, 1], [], []>} : vector<4x4xf32>, vector<4x32xf32>, vector<4x32xf32> -> vector<4x32xf32>
    %c0_298 = arith.constant 0 : index
    %c0_299 = arith.constant 0 : index
    %279 = memref.load %arg28[%c0_298, %c0_299] : memref<1x1xf32, #tpu.memory_space<smem>>
    %280 = vector.broadcast %279 : f32 to vector<4x32xf32>
    %281 = arith.mulf %280, %278 : vector<4x32xf32>
    %282 = arith.addf %281, %258 : vector<4x32xf32>
    %283 = vector.extract_strided_slice %282 {offsets = [0, 0], sizes = [2, 32], strides = [1, 1]} : vector<4x32xf32> to vector<2x32xf32>
    %284 = vector.extract_strided_slice %282 {offsets = [2, 0], sizes = [2, 32], strides = [1, 1]} : vector<4x32xf32> to vector<2x32xf32>
    %285 = tpu.concatenate %283, %284 in 1 : vector<2x32xf32>, vector<2x32xf32> -> vector<2x64xf32>
    %cst_300 = arith.constant 0.000000e+00 : bf16
    %286 = vector.broadcast %cst_300 : bf16 to vector<1x128xbf16>
    %c0_301 = arith.constant 0 : index
    %c0_302 = arith.constant 0 : index
    %287 = vector.load %arg41[%c0_301, %c0_302] : memref<34x128xbf16, #tpu.memory_space<vmem>>, vector<1x128xbf16>
    tpu.vector_store %arg41[%c0_301, %c0_302], %286 {strides = array<i32>} : memref<34x128xbf16, #tpu.memory_space<vmem>>, vector<1x128xbf16>,
    %cst_303 = arith.constant 0.000000e+00 : bf16
    %288 = vector.broadcast %cst_303 : bf16 to vector<1x128xbf16>
    %c3_304 = arith.constant 3 : index
    %c0_305 = arith.constant 0 : index
    %289 = vector.load %arg41[%c3_304, %c0_305] : memref<34x128xbf16, #tpu.memory_space<vmem>>, vector<1x128xbf16>
    tpu.vector_store %arg41[%c3_304, %c0_305], %288 {strides = array<i32>} : memref<34x128xbf16, #tpu.memory_space<vmem>>, vector<1x128xbf16>,
    %cst_306 = arith.constant 0.000000e+00 : bf16
    %290 = vector.broadcast %cst_306 : bf16 to vector<2x32xbf16>
    %c1_307 = arith.constant 1 : index
    %c0_308 = arith.constant 0 : index
    %291 = vector.load %arg41[%c1_307, %c0_308] : memref<34x128xbf16, #tpu.memory_space<vmem>>, vector<2x32xbf16>
    tpu.vector_store %arg41[%c1_307, %c0_308], %290 {strides = array<i32>} : memref<34x128xbf16, #tpu.memory_space<vmem>>, vector<2x32xbf16>,
    %cst_309 = arith.constant 0.000000e+00 : bf16
    %292 = vector.broadcast %cst_309 : bf16 to vector<2x32xbf16>
    %c1_310 = arith.constant 1 : index
    %c96 = arith.constant 96 : index
    %293 = vector.load %arg41[%c1_310, %c96] : memref<34x128xbf16, #tpu.memory_space<vmem>>, vector<2x32xbf16>
    tpu.vector_store %arg41[%c1_310, %c96], %292 {strides = array<i32>} : memref<34x128xbf16, #tpu.memory_space<vmem>>, vector<2x32xbf16>,
    %cst_311 = arith.constant 0.000000e+00 : f32
    %294 = vector.broadcast %cst_311 : f32 to vector<2x64xf32>
    %295 = arith.maximumf %285, %294 : vector<2x64xf32>
    %296 = arith.truncf %295 : vector<2x64xf32> to vector<2x64xbf16>
    %c1_312 = arith.constant 1 : index
    %c32 = arith.constant 32 : index
    %297 = vector.load %arg41[%c1_312, %c32] : memref<34x128xbf16, #tpu.memory_space<vmem>>, vector<2x64xbf16>
    tpu.vector_store %arg41[%c1_312, %c32], %296 {strides = array<i32>} : memref<34x128xbf16, #tpu.memory_space<vmem>>, vector<2x64xbf16>,
    %c0_313 = arith.constant 0 : index
    %c0_314 = arith.constant 0 : index
    %298 = vector.load %arg41[%c0_313, %c0_314] : memref<34x128xbf16, #tpu.memory_space<vmem>>, vector<2x128xbf16>
    %c0_315 = arith.constant 0 : index
    %c0_316 = arith.constant 0 : index
    %c0_317 = arith.constant 0 : index
    %299 = vector.load %arg29[%c0_315, %c0_316, %c0_317] : memref<3x128x64xbf16, #tpu.memory_space<vmem>>, vector<1x128x64xbf16>
    %300 = vector.shape_cast %299 : vector<1x128x64xbf16> to vector<128x64xbf16>
    %cst_318 = arith.constant dense<0.000000e+00> : vector<2x64xf32>
    %301 = tpu.matmul %298, %300, %cst_318 {dimension_numbers = #tpu.dot_dimension_numbers<[1], [0], [0], [1], [0, 0, 1, 1], [], []>} : vector<2x128xbf16>, vector<128x64xbf16>, vector<2x64xf32> -> vector<2x64xf32>
    %c1_319 = arith.constant 1 : index
    %c0_320 = arith.constant 0 : index
    %302 = vector.load %arg41[%c1_319, %c0_320] : memref<34x128xbf16, #tpu.memory_space<vmem>>, vector<2x128xbf16>
    %c1_321 = arith.constant 1 : index
    %c0_322 = arith.constant 0 : index
    %c0_323 = arith.constant 0 : index
    %303 = vector.load %arg29[%c1_321, %c0_322, %c0_323] : memref<3x128x64xbf16, #tpu.memory_space<vmem>>, vector<1x128x64xbf16>
    %304 = vector.shape_cast %303 : vector<1x128x64xbf16> to vector<128x64xbf16>
    %cst_324 = arith.constant dense<0.000000e+00> : vector<2x64xf32>
    %305 = tpu.matmul %302, %304, %cst_324 {dimension_numbers = #tpu.dot_dimension_numbers<[1], [0], [0], [1], [0, 0, 1, 1], [], []>} : vector<2x128xbf16>, vector<128x64xbf16>, vector<2x64xf32> -> vector<2x64xf32>
    %306 = arith.addf %301, %305 : vector<2x64xf32>
    %c2_325 = arith.constant 2 : index
    %c0_326 = arith.constant 0 : index
    %307 = vector.load %arg41[%c2_325, %c0_326] : memref<34x128xbf16, #tpu.memory_space<vmem>>, vector<2x128xbf16>
    %c2_327 = arith.constant 2 : index
    %c0_328 = arith.constant 0 : index
    %c0_329 = arith.constant 0 : index
    %308 = vector.load %arg29[%c2_327, %c0_328, %c0_329] : memref<3x128x64xbf16, #tpu.memory_space<vmem>>, vector<1x128x64xbf16>
    %309 = vector.shape_cast %308 : vector<1x128x64xbf16> to vector<128x64xbf16>
    %cst_330 = arith.constant dense<0.000000e+00> : vector<2x64xf32>
    %310 = tpu.matmul %307, %309, %cst_330 {dimension_numbers = #tpu.dot_dimension_numbers<[1], [0], [0], [1], [0, 0, 1, 1], [], []>} : vector<2x128xbf16>, vector<128x64xbf16>, vector<2x64xf32> -> vector<2x64xf32>
    %311 = arith.addf %306, %310 : vector<2x64xf32>
    %c0_331 = arith.constant 0 : index
    %c0_332 = arith.constant 0 : index
    %312 = vector.load %arg30[%c0_331, %c0_332] : memref<1x64xf32, #tpu.memory_space<vmem>>, vector<1x64xf32>
    %313 = vector.broadcast %312 : vector<1x64xf32> to vector<2x64xf32>
    %314 = arith.addf %311, %313 : vector<2x64xf32>
    %cst_333 = arith.constant 0.000000e+00 : bf16
    %315 = vector.broadcast %cst_333 : bf16 to vector<1x128xbf16>
    %c0_334 = arith.constant 0 : index
    %c0_335 = arith.constant 0 : index
    %316 = vector.load %arg42[%c0_334, %c0_335] : memref<34x136xbf16, #tpu.memory_space<vmem>>, vector<1x128xbf16>
    tpu.vector_store %arg42[%c0_334, %c0_335], %315 {strides = array<i32>} : memref<34x136xbf16, #tpu.memory_space<vmem>>, vector<1x128xbf16>,
    %cst_336 = arith.constant 0.000000e+00 : bf16
    %317 = vector.broadcast %cst_336 : bf16 to vector<1x128xbf16>
    %c3_337 = arith.constant 3 : index
    %c0_338 = arith.constant 0 : index
    %318 = vector.load %arg42[%c3_337, %c0_338] : memref<34x136xbf16, #tpu.memory_space<vmem>>, vector<1x128xbf16>
    tpu.vector_store %arg42[%c3_337, %c0_338], %317 {strides = array<i32>} : memref<34x136xbf16, #tpu.memory_space<vmem>>, vector<1x128xbf16>,
    %cst_339 = arith.constant 0.000000e+00 : bf16
    %319 = vector.broadcast %cst_339 : bf16 to vector<2x32xbf16>
    %c1_340 = arith.constant 1 : index
    %c0_341 = arith.constant 0 : index
    %320 = vector.load %arg42[%c1_340, %c0_341] : memref<34x136xbf16, #tpu.memory_space<vmem>>, vector<2x32xbf16>
    tpu.vector_store %arg42[%c1_340, %c0_341], %319 {strides = array<i32>} : memref<34x136xbf16, #tpu.memory_space<vmem>>, vector<2x32xbf16>,
    %cst_342 = arith.constant 0.000000e+00 : bf16
    %321 = vector.broadcast %cst_342 : bf16 to vector<2x32xbf16>
    %c1_343 = arith.constant 1 : index
    %c96_344 = arith.constant 96 : index
    %322 = vector.load %arg42[%c1_343, %c96_344] : memref<34x136xbf16, #tpu.memory_space<vmem>>, vector<2x32xbf16>
    tpu.vector_store %arg42[%c1_343, %c96_344], %321 {strides = array<i32>} : memref<34x136xbf16, #tpu.memory_space<vmem>>, vector<2x32xbf16>,
    %cst_345 = arith.constant 0.000000e+00 : f32
    %323 = vector.broadcast %cst_345 : f32 to vector<2x64xf32>
    %324 = arith.maximumf %314, %323 : vector<2x64xf32>
    %325 = arith.truncf %324 : vector<2x64xf32> to vector<2x64xbf16>
    %c1_346 = arith.constant 1 : index
    %c32_347 = arith.constant 32 : index
    %326 = vector.load %arg42[%c1_346, %c32_347] : memref<34x136xbf16, #tpu.memory_space<vmem>>, vector<2x64xbf16>
    tpu.vector_store %arg42[%c1_346, %c32_347], %325 {strides = array<i32>} : memref<34x136xbf16, #tpu.memory_space<vmem>>, vector<2x64xbf16>,
    %c0_348 = arith.constant 0 : index
    %c0_349 = arith.constant 0 : index
    %327 = vector.load %arg42[%c0_348, %c0_349] : memref<34x136xbf16, #tpu.memory_space<vmem>>, vector<2x128xbf16>
    %c0_350 = arith.constant 0 : index
    %c0_351 = arith.constant 0 : index
    %c0_352 = arith.constant 0 : index
    %328 = vector.load %arg31[%c0_350, %c0_351, %c0_352] : memref<3x128x64xbf16, #tpu.memory_space<vmem>>, vector<1x128x64xbf16>
    %329 = vector.shape_cast %328 : vector<1x128x64xbf16> to vector<128x64xbf16>
    %cst_353 = arith.constant dense<0.000000e+00> : vector<2x64xf32>
    %330 = tpu.matmul %327, %329, %cst_353 {dimension_numbers = #tpu.dot_dimension_numbers<[1], [0], [0], [1], [0, 0, 1, 1], [], []>} : vector<2x128xbf16>, vector<128x64xbf16>, vector<2x64xf32> -> vector<2x64xf32>
    %c1_354 = arith.constant 1 : index
    %c0_355 = arith.constant 0 : index
    %331 = vector.load %arg42[%c1_354, %c0_355] : memref<34x136xbf16, #tpu.memory_space<vmem>>, vector<2x128xbf16>
    %c1_356 = arith.constant 1 : index
    %c0_357 = arith.constant 0 : index
    %c0_358 = arith.constant 0 : index
    %332 = vector.load %arg31[%c1_356, %c0_357, %c0_358] : memref<3x128x64xbf16, #tpu.memory_space<vmem>>, vector<1x128x64xbf16>
    %333 = vector.shape_cast %332 : vector<1x128x64xbf16> to vector<128x64xbf16>
    %cst_359 = arith.constant dense<0.000000e+00> : vector<2x64xf32>
    %334 = tpu.matmul %331, %333, %cst_359 {dimension_numbers = #tpu.dot_dimension_numbers<[1], [0], [0], [1], [0, 0, 1, 1], [], []>} : vector<2x128xbf16>, vector<128x64xbf16>, vector<2x64xf32> -> vector<2x64xf32>
    %335 = arith.addf %330, %334 : vector<2x64xf32>
    %c2_360 = arith.constant 2 : index
    %c0_361 = arith.constant 0 : index
    %336 = vector.load %arg42[%c2_360, %c0_361] : memref<34x136xbf16, #tpu.memory_space<vmem>>, vector<2x128xbf16>
    %c2_362 = arith.constant 2 : index
    %c0_363 = arith.constant 0 : index
    %c0_364 = arith.constant 0 : index
    %337 = vector.load %arg31[%c2_362, %c0_363, %c0_364] : memref<3x128x64xbf16, #tpu.memory_space<vmem>>, vector<1x128x64xbf16>
    %338 = vector.shape_cast %337 : vector<1x128x64xbf16> to vector<128x64xbf16>
    %cst_365 = arith.constant dense<0.000000e+00> : vector<2x64xf32>
    %339 = tpu.matmul %336, %338, %cst_365 {dimension_numbers = #tpu.dot_dimension_numbers<[1], [0], [0], [1], [0, 0, 1, 1], [], []>} : vector<2x128xbf16>, vector<128x64xbf16>, vector<2x64xf32> -> vector<2x64xf32>
    %340 = arith.addf %335, %339 : vector<2x64xf32>
    %341 = arith.truncf %285 : vector<2x64xf32> to vector<2x64xbf16>
    %c0_366 = arith.constant 0 : index
    %c0_367 = arith.constant 0 : index
    %342 = vector.load %arg32[%c0_366, %c0_367] : memref<64x64xbf16, #tpu.memory_space<vmem>>, vector<64x64xbf16>
    %cst_368 = arith.constant dense<0.000000e+00> : vector<2x64xf32>
    %343 = tpu.matmul %341, %342, %cst_368 {dimension_numbers = #tpu.dot_dimension_numbers<[1], [0], [0], [1], [0, 0, 1, 1], [], []>} : vector<2x64xbf16>, vector<64x64xbf16>, vector<2x64xf32> -> vector<2x64xf32>
    %c0_369 = arith.constant 0 : index
    %c0_370 = arith.constant 0 : index
    %344 = vector.load %arg33[%c0_369, %c0_370] : memref<1x2xf32, #tpu.memory_space<vmem>>, vector<1x2xf32>
    %345 = arith.addf %340, %343 : vector<2x64xf32>
    %cst_371 = arith.constant dense<0.000000e+00> : vector<1x64xf32>
    %346 = tpu.matmul %344, %345, %cst_371 {dimension_numbers = #tpu.dot_dimension_numbers<[1], [0], [0], [1], [0, 0, 1, 1], [], []>} : vector<1x2xf32>, vector<2x64xf32>, vector<1x64xf32> -> vector<1x64xf32>
    %c0_372 = arith.constant 0 : index
    %c0_373 = arith.constant 0 : index
    %347 = vector.load %arg34[%c0_372, %c0_373] : memref<1x64xf32, #tpu.memory_space<vmem>>, vector<1x64xf32>
    %348 = arith.addf %346, %347 : vector<1x64xf32>
    %349 = arith.truncf %348 : vector<1x64xf32> to vector<1x64xbf16>
    %c0_374 = arith.constant 0 : index
    %c16_375 = arith.constant 16 : index
    %350 = vector.load %arg35[%c0_374, %c16_375] : memref<64x80xbf16, #tpu.memory_space<vmem>>, vector<64x64xbf16>
    %cst_376 = arith.constant dense<0.000000e+00> : vector<1x64xf32>
    %351 = tpu.matmul %349, %350, %cst_376 {dimension_numbers = #tpu.dot_dimension_numbers<[1], [0], [0], [1], [0, 0, 1, 1], [], []>} : vector<1x64xbf16>, vector<64x64xbf16>, vector<1x64xf32> -> vector<1x64xf32>
    %c0_377 = arith.constant 0 : index
    %c16_378 = arith.constant 16 : index
    %352 = vector.load %arg36[%c0_377, %c16_378] : memref<1x80xf32, #tpu.memory_space<vmem>>, vector<1x64xf32>
    %353 = arith.addf %351, %352 : vector<1x64xf32>
    %c0_379 = arith.constant 0 : index
    %c0_380 = arith.constant 0 : index
    %354 = memref.load %arg37[%c0_379, %c0_380] : memref<1x1xf32, #tpu.memory_space<smem>>
    %355 = vector.broadcast %354 : f32 to vector<1x64xf32>
    %356 = arith.mulf %355, %353 : vector<1x64xf32>
    %357 = arith.addf %356, %348 : vector<1x64xf32>
    %cst_381 = arith.constant 0.000000e+00 : f32
    %358 = vector.broadcast %cst_381 : f32 to vector<1x64xf32>
    %359 = arith.maximumf %357, %358 : vector<1x64xf32>
    %cst_382 = arith.constant dense<0.000000e+00> : vector<64xf32>
    %360 = vector.multi_reduction <add>, %359, %cst_382 [0] : vector<1x64xf32> to vector<64xf32>
    %361 = vector.shape_cast %360 : vector<64xf32> to vector<1x64xf32>
    %c0_383 = arith.constant 0 : index
    %c0_384 = arith.constant 0 : index
    %362 = vector.load %arg38[%c0_383, %c0_384] : memref<64x1xf32, #tpu.memory_space<vmem>>, vector<64x1xf32>
    %cst_385 = arith.constant dense<0.000000e+00> : vector<1x1xf32>
    %363 = tpu.matmul %361, %362, %cst_385 {dimension_numbers = #tpu.dot_dimension_numbers<[1], [0], [0], [1], [0, 0, 1, 1], [], []>} : vector<1x64xf32>, vector<64x1xf32>, vector<1x1xf32> -> vector<1x1xf32>
    %c0_386 = arith.constant 0 : index
    %c0_387 = arith.constant 0 : index
    %364 = memref.load %arg39[%c0_386, %c0_387] : memref<1x1xf32, #tpu.memory_space<smem>>
    %365 = vector.broadcast %364 : f32 to vector<1x1xf32>
    %366 = arith.addf %363, %365 : vector<1x1xf32>
    %c0_388 = arith.constant 0 : index
    %c0_389 = arith.constant 0 : index
    %c0_390 = arith.constant 0 : index
    %367 = vector.load %arg40[%c0_388, %c0_389, %c0_390] : memref<1x1x1xf32, #tpu.memory_space<vmem>>, vector<1x1x1xf32>
    %368 = vector.shape_cast %367 : vector<1x1x1xf32> to vector<1x1xf32>
    %369 = vector.shape_cast %366 : vector<1x1xf32> to vector<1x1x1xf32>
    tpu.vector_store %arg40[%c0_388, %c0_389, %c0_390], %369 {strides = array<i32>} : memref<1x1x1xf32, #tpu.memory_space<vmem>>, vector<1x1x1xf32>,
    return
  }
  func.func @transform_0(%arg0: i32) -> (i32, i32, i32) {
    %c0_i32 = arith.constant 0 : i32
    %c0_i32_0 = arith.constant 0 : i32
    %c0_i32_1 = arith.constant 0 : i32
    return %arg0, %c0_i32, %c0_i32_0 : i32, i32, i32
  }
  func.func @transform_1(%arg0: i32) -> (i32, i32, i32) {
    %c0_i32 = arith.constant 0 : i32
    %c0_i32_0 = arith.constant 0 : i32
    %c0_i32_1 = arith.constant 0 : i32
    %c0_i32_2 = arith.constant 0 : i32
    return %c0_i32, %c0_i32_0, %c0_i32_1 : i32, i32, i32
  }
  func.func @transform_2(%arg0: i32) -> (i32, i32) {
    %c0_i32 = arith.constant 0 : i32
    %c0_i32_0 = arith.constant 0 : i32
    %c0_i32_1 = arith.constant 0 : i32
    return %c0_i32, %c0_i32_0 : i32, i32
  }
  func.func @transform_3(%arg0: i32) -> (i32, i32, i32) {
    %c0_i32 = arith.constant 0 : i32
    %c0_i32_0 = arith.constant 0 : i32
    %c0_i32_1 = arith.constant 0 : i32
    %c0_i32_2 = arith.constant 0 : i32
    return %c0_i32, %c0_i32_0, %c0_i32_1 : i32, i32, i32
  }
  func.func @transform_4(%arg0: i32) -> (i32, i32) {
    %c0_i32 = arith.constant 0 : i32
    %c0_i32_0 = arith.constant 0 : i32
    %c0_i32_1 = arith.constant 0 : i32
    return %c0_i32, %c0_i32_0 : i32, i32
  }
  func.func @transform_5(%arg0: i32) -> (i32, i32) {
    %c0_i32 = arith.constant 0 : i32
    %c0_i32_0 = arith.constant 0 : i32
    %c0_i32_1 = arith.constant 0 : i32
    return %c0_i32, %c0_i32_0 : i32, i32
  }
  func.func @transform_6(%arg0: i32) -> (i32, i32) {
    %c0_i32 = arith.constant 0 : i32
    %c0_i32_0 = arith.constant 0 : i32
    %c0_i32_1 = arith.constant 0 : i32
    return %c0_i32, %c0_i32_0 : i32, i32
  }
  func.func @transform_7(%arg0: i32) -> (i32, i32, i32) {
    %c0_i32 = arith.constant 0 : i32
    %c0_i32_0 = arith.constant 0 : i32
    %c0_i32_1 = arith.constant 0 : i32
    %c0_i32_2 = arith.constant 0 : i32
    return %c0_i32, %c0_i32_0, %c0_i32_1 : i32, i32, i32
  }
  func.func @transform_8(%arg0: i32) -> (i32, i32) {
    %c0_i32 = arith.constant 0 : i32
    %c0_i32_0 = arith.constant 0 : i32
    %c0_i32_1 = arith.constant 0 : i32
    return %c0_i32, %c0_i32_0 : i32, i32
  }
  func.func @transform_9(%arg0: i32) -> (i32, i32, i32) {
    %c0_i32 = arith.constant 0 : i32
    %c0_i32_0 = arith.constant 0 : i32
    %c0_i32_1 = arith.constant 0 : i32
    %c0_i32_2 = arith.constant 0 : i32
    return %c0_i32, %c0_i32_0, %c0_i32_1 : i32, i32, i32
  }
  func.func @transform_10(%arg0: i32) -> (i32, i32) {
    %c0_i32 = arith.constant 0 : i32
    %c0_i32_0 = arith.constant 0 : i32
    %c0_i32_1 = arith.constant 0 : i32
    return %c0_i32, %c0_i32_0 : i32, i32
  }
  func.func @transform_11(%arg0: i32) -> (i32, i32) {
    %c0_i32 = arith.constant 0 : i32
    %c0_i32_0 = arith.constant 0 : i32
    %c0_i32_1 = arith.constant 0 : i32
    return %c0_i32, %c0_i32_0 : i32, i32
  }
  func.func @transform_12(%arg0: i32) -> (i32, i32) {
    %c0_i32 = arith.constant 0 : i32
    %c0_i32_0 = arith.constant 0 : i32
    %c0_i32_1 = arith.constant 0 : i32
    return %c0_i32, %c0_i32_0 : i32, i32
  }
  func.func @transform_13(%arg0: i32) -> (i32, i32, i32) {
    %c0_i32 = arith.constant 0 : i32
    %c0_i32_0 = arith.constant 0 : i32
    %c0_i32_1 = arith.constant 0 : i32
    %c0_i32_2 = arith.constant 0 : i32
    return %c0_i32, %c0_i32_0, %c0_i32_1 : i32, i32, i32
  }
  func.func @transform_14(%arg0: i32) -> (i32, i32) {
    %c0_i32 = arith.constant 0 : i32
    %c0_i32_0 = arith.constant 0 : i32
    %c0_i32_1 = arith.constant 0 : i32
    return %c0_i32, %c0_i32_0 : i32, i32
  }
  func.func @transform_15(%arg0: i32) -> (i32, i32, i32) {
    %c0_i32 = arith.constant 0 : i32
    %c0_i32_0 = arith.constant 0 : i32
    %c0_i32_1 = arith.constant 0 : i32
    %c0_i32_2 = arith.constant 0 : i32
    return %c0_i32, %c0_i32_0, %c0_i32_1 : i32, i32, i32
  }
  func.func @transform_16(%arg0: i32) -> (i32, i32) {
    %c0_i32 = arith.constant 0 : i32
    %c0_i32_0 = arith.constant 0 : i32
    %c0_i32_1 = arith.constant 0 : i32
    return %c0_i32, %c0_i32_0 : i32, i32
  }
  func.func @transform_17(%arg0: i32) -> (i32, i32) {
    %c0_i32 = arith.constant 0 : i32
    %c0_i32_0 = arith.constant 0 : i32
    %c0_i32_1 = arith.constant 0 : i32
    return %c0_i32, %c0_i32_0 : i32, i32
  }
  func.func @transform_18(%arg0: i32) -> (i32, i32) {
    %c0_i32 = arith.constant 0 : i32
    %c0_i32_0 = arith.constant 0 : i32
    %c0_i32_1 = arith.constant 0 : i32
    return %c0_i32, %c0_i32_0 : i32, i32
  }
  func.func @transform_19(%arg0: i32) -> (i32, i32, i32) {
    %c0_i32 = arith.constant 0 : i32
    %c0_i32_0 = arith.constant 0 : i32
    %c0_i32_1 = arith.constant 0 : i32
    %c0_i32_2 = arith.constant 0 : i32
    return %c0_i32, %c0_i32_0, %c0_i32_1 : i32, i32, i32
  }
  func.func @transform_20(%arg0: i32) -> (i32, i32) {
    %c0_i32 = arith.constant 0 : i32
    %c0_i32_0 = arith.constant 0 : i32
    %c0_i32_1 = arith.constant 0 : i32
    return %c0_i32, %c0_i32_0 : i32, i32
  }
  func.func @transform_21(%arg0: i32) -> (i32, i32, i32) {
    %c0_i32 = arith.constant 0 : i32
    %c0_i32_0 = arith.constant 0 : i32
    %c0_i32_1 = arith.constant 0 : i32
    %c0_i32_2 = arith.constant 0 : i32
    return %c0_i32, %c0_i32_0, %c0_i32_1 : i32, i32, i32
  }
  func.func @transform_22(%arg0: i32) -> (i32, i32) {
    %c0_i32 = arith.constant 0 : i32
    %c0_i32_0 = arith.constant 0 : i32
    %c0_i32_1 = arith.constant 0 : i32
    return %c0_i32, %c0_i32_0 : i32, i32
  }
  func.func @transform_23(%arg0: i32) -> (i32, i32) {
    %c0_i32 = arith.constant 0 : i32
    %c0_i32_0 = arith.constant 0 : i32
    %c0_i32_1 = arith.constant 0 : i32
    return %c0_i32, %c0_i32_0 : i32, i32
  }
  func.func @transform_24(%arg0: i32) -> (i32, i32) {
    %c0_i32 = arith.constant 0 : i32
    %c0_i32_0 = arith.constant 0 : i32
    %c0_i32_1 = arith.constant 0 : i32
    return %c0_i32, %c0_i32_0 : i32, i32
  }
  func.func @transform_25(%arg0: i32) -> (i32, i32) {
    %c0_i32 = arith.constant 0 : i32
    %c0_i32_0 = arith.constant 0 : i32
    %c0_i32_1 = arith.constant 0 : i32
    return %c0_i32, %c0_i32_0 : i32, i32
  }
  func.func @transform_26(%arg0: i32) -> (i32, i32) {
    %c0_i32 = arith.constant 0 : i32
    %c0_i32_0 = arith.constant 0 : i32
    %c0_i32_1 = arith.constant 0 : i32
    return %c0_i32, %c0_i32_0 : i32, i32
  }
  func.func @transform_27(%arg0: i32) -> (i32, i32) {
    %c0_i32 = arith.constant 0 : i32
    %c0_i32_0 = arith.constant 0 : i32
    %c0_i32_1 = arith.constant 0 : i32
    return %c0_i32, %c0_i32_0 : i32, i32
  }
  func.func @transform_28(%arg0: i32) -> (i32, i32, i32) {
    %c0_i32 = arith.constant 0 : i32
    %c0_i32_0 = arith.constant 0 : i32
    %c0_i32_1 = arith.constant 0 : i32
    %c0_i32_2 = arith.constant 0 : i32
    return %c0_i32, %c0_i32_0, %c0_i32_1 : i32, i32, i32
  }
  func.func @transform_29(%arg0: i32) -> (i32, i32) {
    %c0_i32 = arith.constant 0 : i32
    %c0_i32_0 = arith.constant 0 : i32
    %c0_i32_1 = arith.constant 0 : i32
    return %c0_i32, %c0_i32_0 : i32, i32
  }
  func.func @transform_30(%arg0: i32) -> (i32, i32, i32) {
    %c0_i32 = arith.constant 0 : i32
    %c0_i32_0 = arith.constant 0 : i32
    %c0_i32_1 = arith.constant 0 : i32
    %c0_i32_2 = arith.constant 0 : i32
    return %c0_i32, %c0_i32_0, %c0_i32_1 : i32, i32, i32
  }
  func.func @transform_31(%arg0: i32) -> (i32, i32) {
    %c0_i32 = arith.constant 0 : i32
    %c0_i32_0 = arith.constant 0 : i32
    %c0_i32_1 = arith.constant 0 : i32
    return %c0_i32, %c0_i32_0 : i32, i32
  }
  func.func @transform_32(%arg0: i32) -> (i32, i32) {
    %c0_i32 = arith.constant 0 : i32
    %c0_i32_0 = arith.constant 0 : i32
    %c0_i32_1 = arith.constant 0 : i32
    return %c0_i32, %c0_i32_0 : i32, i32
  }
  func.func @transform_33(%arg0: i32) -> (i32, i32) {
    %c0_i32 = arith.constant 0 : i32
    %c0_i32_0 = arith.constant 0 : i32
    %c0_i32_1 = arith.constant 0 : i32
    return %c0_i32, %c0_i32_0 : i32, i32
  }
  func.func @transform_34(%arg0: i32) -> (i32, i32) {
    %c0_i32 = arith.constant 0 : i32
    %c0_i32_0 = arith.constant 0 : i32
    %c0_i32_1 = arith.constant 0 : i32
    return %c0_i32, %c0_i32_0 : i32, i32
  }
  func.func @transform_35(%arg0: i32) -> (i32, i32) {
    %c0_i32 = arith.constant 0 : i32
    %c0_i32_0 = arith.constant 0 : i32
    %c0_i32_1 = arith.constant 0 : i32
    return %c0_i32, %c0_i32_0 : i32, i32
  }
  func.func @transform_36(%arg0: i32) -> (i32, i32) {
    %c0_i32 = arith.constant 0 : i32
    %c0_i32_0 = arith.constant 0 : i32
    %c0_i32_1 = arith.constant 0 : i32
    return %c0_i32, %c0_i32_0 : i32, i32
  }
  func.func @transform_37(%arg0: i32) -> (i32, i32) {
    %c0_i32 = arith.constant 0 : i32
    %c0_i32_0 = arith.constant 0 : i32
    %c0_i32_1 = arith.constant 0 : i32
    return %c0_i32, %c0_i32_0 : i32, i32
  }
  func.func @transform_38(%arg0: i32) -> (i32, i32) {
    %c0_i32 = arith.constant 0 : i32
    %c0_i32_0 = arith.constant 0 : i32
    %c0_i32_1 = arith.constant 0 : i32
    return %c0_i32, %c0_i32_0 : i32, i32
  }
  func.func @transform_39(%arg0: i32) -> (i32, i32, i32) {
    %c0_i32 = arith.constant 0 : i32
    %c0_i32_0 = arith.constant 0 : i32
    %c0_i32_1 = arith.constant 0 : i32
    return %arg0, %c0_i32, %c0_i32_0 : i32, i32, i32
  }
}

</mosaic_0001>

<llo_original>
// kernel: vgg_discriminator_forward.1
$region0: #{vgg_discriminator_forward.1}
  #allocation0 [shape = 'u32[]', space=smem, size = 0x4, offset = 0x4, fixed_abs, tag = 'smem constant byte address 0x4 - core index']
  #allocation1 [shape = 'u32[144,128]{1,0:T(1,128)}', space=vmem, size = 0x12000, scoped, tag = 'internal scratch']
  #allocation2 [shape = 'bf16[34,128]{1,0:T(8,128)(2,1)}', space=vmem, size = 0x2800, scoped, tag = 'scratch operand']
  #allocation3 [shape = 'bf16[34,136]{1,0:T(8,128)(2,1)}', space=vmem, size = 0x5000, scoped, tag = 'scratch operand']
  #allocation4 [shape = 'f32[1,1]{1,0:T(1,128)S(6)}', space=smem, size = 0x200, scoped, tag = 'scoped memory for vgg_discriminator_forward.1']
  #allocation5 [shape = 'f32[1,1]{1,0:T(1,128)S(6)}', space=smem, size = 0x200, scoped, tag = 'scoped memory for vgg_discriminator_forward.1']
  #allocation6 [shape = 'f32[1,1]{1,0:T(1,128)S(6)}', space=smem, size = 0x200, scoped, tag = 'scoped memory for vgg_discriminator_forward.1']
  %s0 = inlined_call_operand.smem [shape: u32[40], index: -1, kind: input, shape index: {}]
  %s1 = sld [smem:[%s0]]
  %s2 = scalar_lea.smem %s0, 1
  %s3 = sld [smem:[%s2]]
  %s4 = scalar_lea.smem %s0, 2
  %s5 = sld [smem:[%s4]]
  %s6 = scalar_lea.smem %s0, 3
  %s7 = sld [smem:[%s6]]
  %s8 = scalar_lea.smem %s0, 4
  %s9 = sld [smem:[%s8]]
  %s10 = scalar_lea.smem %s0, 5
  %s11 = sld [smem:[%s10]]
  %s12 = scalar_lea.smem %s0, 6
  %s13 = sld [smem:[%s12]]
  %s14 = scalar_lea.smem %s0, 7
  %s15 = sld [smem:[%s14]]
  %s16 = scalar_lea.smem %s0, 8
  %s17 = sld [smem:[%s16]]
  %s18 = scalar_lea.smem %s0, 9
  %s19 = sld [smem:[%s18]]
  %s20 = scalar_lea.smem %s0, 10
  %s21 = sld [smem:[%s20]]
  %s22 = scalar_lea.smem %s0, 11
  %s23 = sld [smem:[%s22]]
  %s24 = scalar_lea.smem %s0, 12
  %s25 = sld [smem:[%s24]]
  %s26 = scalar_lea.smem %s0, 13
  %s27 = sld [smem:[%s26]]
  %s28 = scalar_lea.smem %s0, 14
  %s29 = sld [smem:[%s28]]
  %s30 = scalar_lea.smem %s0, 15
  %s31 = sld [smem:[%s30]]
  %s32 = scalar_lea.smem %s0, 16
  %s33 = sld [smem:[%s32]]
  %s34 = scalar_lea.smem %s0, 17
  %s35 = sld [smem:[%s34]]
  %s36 = scalar_lea.smem %s0, 18
  %s37 = sld [smem:[%s36]]
  %s38 = scalar_lea.smem %s0, 19
  %s39 = sld [smem:[%s38]]
  %s40 = scalar_lea.smem %s0, 20
  %s41 = sld [smem:[%s40]]
  %s42 = scalar_lea.smem %s0, 21
  %s43 = sld [smem:[%s42]]
  %s44 = scalar_lea.smem %s0, 22
  %s45 = sld [smem:[%s44]]
  %s46 = scalar_lea.smem %s0, 23
  %s47 = sld [smem:[%s46]]
  %s48 = scalar_lea.smem %s0, 24
  %s49 = sld [smem:[%s48]]
  %s50 = scalar_lea.smem %s0, 25
  %s51 = sld [smem:[%s50]]
  %s52 = scalar_lea.smem %s0, 26
  %s53 = sld [smem:[%s52]]
  %s54 = scalar_lea.smem %s0, 27
  %s55 = sld [smem:[%s54]]
  %s56 = scalar_lea.smem %s0, 28
  %s57 = sld [smem:[%s56]]
  %s58 = scalar_lea.smem %s0, 29
  %s59 = sld [smem:[%s58]]
  %s60 = scalar_lea.smem %s0, 30
  %s61 = sld [smem:[%s60]]
  %s62 = scalar_lea.smem %s0, 31
  %s63 = sld [smem:[%s62]]
  %s64 = scalar_lea.smem %s0, 32
  %s65 = sld [smem:[%s64]]
  %s66 = scalar_lea.smem %s0, 33
  %s67 = sld [smem:[%s66]]
  %s68 = scalar_lea.smem %s0, 34
  %s69 = sld [smem:[%s68]]
  %s70 = scalar_lea.smem %s0, 35
  %s71 = sld [smem:[%s70]]
  %s72 = scalar_lea.smem %s0, 36
  %s73 = sld [smem:[%s72]]
  %s74 = scalar_lea.smem %s0, 37
  %s75 = sld [smem:[%s74]]
  %s76 = scalar_lea.smem %s0, 38
  %s77 = sld [smem:[%s76]]
  %s78 = scalar_lea.smem %s0, 39
  %s79 = sld [smem:[%s78]]
  %s80 = sld [smem:[#allocation0]]
  $region189: #{vgg_discriminator_forward.1} parent=0
    _
  %s82 = ssub.s32 1, %s80
  %s83 = scalar_select 0, %s82, %s80
  %84 = sst [smem:[#allocation4]] %s55
  %85 = sst [smem:[#allocation5]] %s73
  %86 = sst [smem:[#allocation6]] %s77
  loop: start=0, step=1, limit=4
  $region2: #{vgg_discriminator_forward.1} parent=0 // loop_pre_header
    _
  $region3: #{vgg_discriminator_forward.1} parent=0 // loop_header
    %s88 = sphi 0, %s92
    %p89 = scmp.ge.s32.totalorder %s88, 4
    %s98 = sphi 0, %s100
    %s101 = sphi 0, %s98
    %s102 = sphi 0, %s101
    %s118 = sphi 0, %s102
    %s122 = sphi 0, %s122
    %s124 = sphi 0, %s122
    %s125 = sphi 0, %s124
    %s139 = sphi 0, %s125
    %s143 = sphi 0, %s143
    %s145 = sphi 0, %s143
    %s146 = sphi 0, %s145
    %s160 = sphi 0, %s146
    %s164 = sphi 0, %s164
    %s166 = sphi 0, %s164
    %s167 = sphi 0, %s166
    %s181 = sphi 0, %s167
    %s185 = sphi 0, %s185
    %s187 = sphi 0, %s185
    %s188 = sphi 0, %s187
    %s202 = sphi 0, %s188
    %s206 = sphi 0, %s206
    %s208 = sphi 0, %s206
    %s209 = sphi 0, %s208
    %s223 = sphi 0, %s209
    %s227 = sphi 0, %s227
    %s229 = sphi 0, %s227
    %s230 = sphi 0, %s229
    %s244 = sphi 0, %s230
    %s248 = sphi 0, %s248
    %s250 = sphi 0, %s248
    %s251 = sphi 0, %s250
    %s265 = sphi 0, %s251
    %s269 = sphi 0, %s269
    %s271 = sphi 0, %s269
    %s272 = sphi 0, %s271
    %s286 = sphi 0, %s272
    %s290 = sphi 0, %s290
    %s292 = sphi 0, %s290
    %s293 = sphi 0, %s292
    %s307 = sphi 0, %s293
    %s311 = sphi 0, %s311
    %s313 = sphi 0, %s311
    %s314 = sphi 0, %s313
    %s328 = sphi 0, %s314
    %s332 = sphi 0, %s332
    %s334 = sphi 0, %s332
    %s335 = sphi 0, %s334
    %s349 = sphi 0, %s335
    %s353 = sphi 0, %s353
    %s355 = sphi 0, %s353
    %s356 = sphi 0, %s355
    %s370 = sphi 0, %s356
    %s374 = sphi 0, %s374
    %s376 = sphi 0, %s374
    %s377 = sphi 0, %s376
    %s391 = sphi 0, %s377
    %s395 = sphi 0, %s395
    %s397 = sphi 0, %s395
    %s398 = sphi 0, %s397
    %s412 = sphi 0, %s398
    %s416 = sphi 0, %s416
    %s418 = sphi 0, %s416
    %s419 = sphi 0, %s418
    %s433 = sphi 0, %s419
    %s437 = sphi 0, %s437
    %s439 = sphi 0, %s437
    %s440 = sphi 0, %s439
    %s454 = sphi 0, %s440
    %s458 = sphi 0, %s458
    %s460 = sphi 0, %s458
    %s461 = sphi 0, %s460
    %s475 = sphi 0, %s461
    %s479 = sphi 0, %s479
    %s481 = sphi 0, %s479
    %s482 = sphi 0, %s481
    %s496 = sphi 0, %s482
    %s500 = sphi 0, %s500
    %s502 = sphi 0, %s500
    %s503 = sphi 0, %s502
    %s517 = sphi 0, %s503
    %s521 = sphi 0, %s521
    %s523 = sphi 0, %s521
    %s524 = sphi 0, %s523
    %s538 = sphi 0, %s524
    %s542 = sphi 0, %s542
    %s544 = sphi 0, %s542
    %s545 = sphi 0, %s544
    %s559 = sphi 0, %s545
    %s563 = sphi 0, %s563
    %s565 = sphi 0, %s563
    %s566 = sphi 0, %s565
    %s580 = sphi 0, %s566
    %s584 = sphi 0, %s584
    %s586 = sphi 0, %s584
    %s587 = sphi 0, %s586
    %s601 = sphi 0, %s587
    %s605 = sphi 0, %s605
    %s607 = sphi 0, %s605
    %s608 = sphi 0, %s607
    %s622 = sphi 0, %s608
    %s626 = sphi 0, %s626
    %s628 = sphi 0, %s626
    %s629 = sphi 0, %s628
    %s643 = sphi 0, %s629
    %s647 = sphi 0, %s647
    %s649 = sphi 0, %s647
    %s650 = sphi 0, %s649
    %s664 = sphi 0, %s650
    %s668 = sphi 0, %s668
    %s670 = sphi 0, %s668
    %s671 = sphi 0, %s670
    %s685 = sphi 0, %s671
    %s689 = sphi 0, %s689
    %s691 = sphi 0, %s689
    %s692 = sphi 0, %s691
    %s706 = sphi 0, %s692
    %s710 = sphi 0, %s710
    %s712 = sphi 0, %s710
    %s713 = sphi 0, %s712
    %s727 = sphi 0, %s713
    %s731 = sphi 0, %s731
    %s733 = sphi 0, %s731
    %s734 = sphi 0, %s733
    %s748 = sphi 0, %s734
    %s752 = sphi 0, %s752
    %s754 = sphi 0, %s752
    %s755 = sphi 0, %s754
    %s769 = sphi 0, %s755
    %s773 = sphi 0, %s773
    %s775 = sphi 0, %s773
    %s776 = sphi 0, %s775
    %s790 = sphi 0, %s776
    %s794 = sphi 0, %s794
    %s796 = sphi 0, %s794
    %s797 = sphi 0, %s796
    %s811 = sphi 0, %s797
    %s815 = sphi 0, %s815
    %s817 = sphi 0, %s815
    %s818 = sphi 0, %s817
    %s832 = sphi 0, %s818
    %s836 = sphi 0, %s836
    %s838 = sphi 0, %s836
    %s839 = sphi 0, %s838
    %s853 = sphi 0, %s839
    %s857 = sphi 0, %s857
    %s859 = sphi 0, %s857
    %s860 = sphi 0, %s859
    %s874 = sphi 0, %s860
    %s878 = sphi 0, %s878
    %s880 = sphi 0, %s878
    %s881 = sphi 0, %s880
    %s895 = sphi 0, %s881
    %s899 = sphi 0, %s899
    %s901 = sphi 0, %s899
    %s902 = sphi 0, %s901
    %s916 = sphi 0, %s902
    %s922 = sphi 0, %s924
    %s925 = sphi 0, %s922
    %s926 = sphi 0, %s925
    %s942 = sphi 0, %s926
  $region4: #{vgg_discriminator_forward.1} parent=0 // loop_header_branch
    %91 = sbr.rel (%p89) target = $region8
  $region5: #{vgg_discriminator_forward.1} parent=0 // loop_body
    %s93 = ssub.s32 %s88, 1
    %s94 = ssub.s32 %s88, 2
    %s95 = sadd.s32 %s88, 1
    %s96 = ssub.s32 %s88, %s95
    %p97 = scmp.eq.s32.totalorder %s96, 0
    %s99 = sadd.s32 %s98, 1
    %s100 = scalar_select %p97, %s98, %s99
    %p103 = pneg %p97
    %p104 = scmp.eq.s32.totalorder %s88, 1
    %p105 = por %p103, %p104
    %p106 = scmp.ne.s32.totalorder %s98, %s101
    %p107 = scmp.eq.s32.totalorder %s88, 0
    %p108 = por %p106, %p107
    %p109 = scmp.ne.s32.totalorder %s98, %s101
    %p110 = scmp.eq.s32.totalorder %s93, 1
    %p111 = por %p109, %p110
    %p112 = scmp.ne.s32.totalorder %s101, %s102
    %p113 = scmp.eq.s32.totalorder %s93, 0
    %p114 = por %p112, %p113
    %p115 = scmp.ne.s32.totalorder %s101, %s102
    %p116 = scmp.eq.s32.totalorder %s94, 1
    %p117 = por %p115, %p116
    %p119 = scmp.ne.s32.totalorder %s102, %s118
    %p120 = scmp.eq.s32.totalorder %s94, 0
    %p121 = por %p119, %p120
    %s123 = sadd.s32 %s122, 1
    %p126 = scmp.eq.s32.totalorder %s88, 1
    %p127 = scmp.ne.s32.totalorder %s122, %s124
    %p128 = scmp.eq.s32.totalorder %s88, 0
    %p129 = por %p127, %p128
    %p130 = scmp.ne.s32.totalorder %s122, %s124
    %p131 = scmp.eq.s32.totalorder %s93, 1
    %p132 = por %p130, %p131
    %p133 = scmp.ne.s32.totalorder %s124, %s125
    %p134 = scmp.eq.s32.totalorder %s93, 0
    %p135 = por %p133, %p134
    %p136 = scmp.ne.s32.totalorder %s124, %s125
    %p137 = scmp.eq.s32.totalorder %s94, 1
    %p138 = por %p136, %p137
    %p140 = scmp.ne.s32.totalorder %s125, %s139
    %p141 = scmp.eq.s32.totalorder %s94, 0
    %p142 = por %p140, %p141
    %s144 = sadd.s32 %s143, 1
    %p147 = scmp.eq.s32.totalorder %s88, 1
    %p148 = scmp.ne.s32.totalorder %s143, %s145
    %p149 = scmp.eq.s32.totalorder %s88, 0
    %p150 = por %p148, %p149
    %p151 = scmp.ne.s32.totalorder %s143, %s145
    %p152 = scmp.eq.s32.totalorder %s93, 1
    %p153 = por %p151, %p152
    %p154 = scmp.ne.s32.totalorder %s145, %s146
    %p155 = scmp.eq.s32.totalorder %s93, 0
    %p156 = por %p154, %p155
    %p157 = scmp.ne.s32.totalorder %s145, %s146
    %p158 = scmp.eq.s32.totalorder %s94, 1
    %p159 = por %p157, %p158
    %p161 = scmp.ne.s32.totalorder %s146, %s160
    %p162 = scmp.eq.s32.totalorder %s94, 0
    %p163 = por %p161, %p162
    %s165 = sadd.s32 %s164, 1
    %p168 = scmp.eq.s32.totalorder %s88, 1
    %p169 = scmp.ne.s32.totalorder %s164, %s166
    %p170 = scmp.eq.s32.totalorder %s88, 0
    %p171 = por %p169, %p170
    %p172 = scmp.ne.s32.totalorder %s164, %s166
    %p173 = scmp.eq.s32.totalorder %s93, 1
    %p174 = por %p172, %p173
    %p175 = scmp.ne.s32.totalorder %s166, %s167
    %p176 = scmp.eq.s32.totalorder %s93, 0
    %p177 = por %p175, %p176
    %p178 = scmp.ne.s32.totalorder %s166, %s167
    %p179 = scmp.eq.s32.totalorder %s94, 1
    %p180 = por %p178, %p179
    %p182 = scmp.ne.s32.totalorder %s167, %s181
    %p183 = scmp.eq.s32.totalorder %s94, 0
    %p184 = por %p182, %p183
    %s186 = sadd.s32 %s185, 1
    %p189 = scmp.eq.s32.totalorder %s88, 1
    %p190 = scmp.ne.s32.totalorder %s185, %s187
    %p191 = scmp.eq.s32.totalorder %s88, 0
    %p192 = por %p190, %p191
    %p193 = scmp.ne.s32.totalorder %s185, %s187
    %p194 = scmp.eq.s32.totalorder %s93, 1
    %p195 = por %p193, %p194
    %p196 = scmp.ne.s32.totalorder %s187, %s188
    %p197 = scmp.eq.s32.totalorder %s93, 0
    %p198 = por %p196, %p197
    %p199 = scmp.ne.s32.totalorder %s187, %s188
    %p200 = scmp.eq.s32.totalorder %s94, 1
    %p201 = por %p199, %p200
    %p203 = scmp.ne.s32.totalorder %s188, %s202
    %p204 = scmp.eq.s32.totalorder %s94, 0
    %p205 = por %p203, %p204
    %s207 = sadd.s32 %s206, 1
    %p210 = scmp.eq.s32.totalorder %s88, 1
    %p211 = scmp.ne.s32.totalorder %s206, %s208
    %p212 = scmp.eq.s32.totalorder %s88, 0
    %p213 = por %p211, %p212
    %p214 = scmp.ne.s32.totalorder %s206, %s208
    %p215 = scmp.eq.s32.totalorder %s93, 1
    %p216 = por %p214, %p215
    %p217 = scmp.ne.s32.totalorder %s208, %s209
    %p218 = scmp.eq.s32.totalorder %s93, 0
    %p219 = por %p217, %p218
    %p220 = scmp.ne.s32.totalorder %s208, %s209
    %p221 = scmp.eq.s32.totalorder %s94, 1
    %p222 = por %p220, %p221
    %p224 = scmp.ne.s32.totalorder %s209, %s223
    %p225 = scmp.eq.s32.totalorder %s94, 0
    %p226 = por %p224, %p225
    %s228 = sadd.s32 %s227, 1
    %p231 = scmp.eq.s32.totalorder %s88, 1
    %p232 = scmp.ne.s32.totalorder %s227, %s229
    %p233 = scmp.eq.s32.totalorder %s88, 0
    %p234 = por %p232, %p233
    %p235 = scmp.ne.s32.totalorder %s227, %s229
    %p236 = scmp.eq.s32.totalorder %s93, 1
    %p237 = por %p235, %p236
    %p238 = scmp.ne.s32.totalorder %s229, %s230
    %p239 = scmp.eq.s32.totalorder %s93, 0
    %p240 = por %p238, %p239
    %p241 = scmp.ne.s32.totalorder %s229, %s230
    %p242 = scmp.eq.s32.totalorder %s94, 1
    %p243 = por %p241, %p242
    %p245 = scmp.ne.s32.totalorder %s230, %s244
    %p246 = scmp.eq.s32.totalorder %s94, 0
    %p247 = por %p245, %p246
    %s249 = sadd.s32 %s248, 1
    %p252 = scmp.eq.s32.totalorder %s88, 1
    %p253 = scmp.ne.s32.totalorder %s248, %s250
    %p254 = scmp.eq.s32.totalorder %s88, 0
    %p255 = por %p253, %p254
    %p256 = scmp.ne.s32.totalorder %s248, %s250
    %p257 = scmp.eq.s32.totalorder %s93, 1
    %p258 = por %p256, %p257
    %p259 = scmp.ne.s32.totalorder %s250, %s251
    %p260 = scmp.eq.s32.totalorder %s93, 0
    %p261 = por %p259, %p260
    %p262 = scmp.ne.s32.totalorder %s250, %s251
    %p263 = scmp.eq.s32.totalorder %s94, 1
    %p264 = por %p262, %p263
    %p266 = scmp.ne.s32.totalorder %s251, %s265
    %p267 = scmp.eq.s32.totalorder %s94, 0
    %p268 = por %p266, %p267
    %s270 = sadd.s32 %s269, 1
    %p273 = scmp.eq.s32.totalorder %s88, 1
    %p274 = scmp.ne.s32.totalorder %s269, %s271
    %p275 = scmp.eq.s32.totalorder %s88, 0
    %p276 = por %p274, %p275
    %p277 = scmp.ne.s32.totalorder %s269, %s271
    %p278 = scmp.eq.s32.totalorder %s93, 1
    %p279 = por %p277, %p278
    %p280 = scmp.ne.s32.totalorder %s271, %s272
    %p281 = scmp.eq.s32.totalorder %s93, 0
    %p282 = por %p280, %p281
    %p283 = scmp.ne.s32.totalorder %s271, %s272
    %p284 = scmp.eq.s32.totalorder %s94, 1
    %p285 = por %p283, %p284
    %p287 = scmp.ne.s32.totalorder %s272, %s286
    %p288 = scmp.eq.s32.totalorder %s94, 0
    %p289 = por %p287, %p288
    %s291 = sadd.s32 %s290, 1
    %p294 = scmp.eq.s32.totalorder %s88, 1
    %p295 = scmp.ne.s32.totalorder %s290, %s292
    %p296 = scmp.eq.s32.totalorder %s88, 0
    %p297 = por %p295, %p296
    %p298 = scmp.ne.s32.totalorder %s290, %s292
    %p299 = scmp.eq.s32.totalorder %s93, 1
    %p300 = por %p298, %p299
    %p301 = scmp.ne.s32.totalorder %s292, %s293
    %p302 = scmp.eq.s32.totalorder %s93, 0
    %p303 = por %p301, %p302
    %p304 = scmp.ne.s32.totalorder %s292, %s293
    %p305 = scmp.eq.s32.totalorder %s94, 1
    %p306 = por %p304, %p305
    %p308 = scmp.ne.s32.totalorder %s293, %s307
    %p309 = scmp.eq.s32.totalorder %s94, 0
    %p310 = por %p308, %p309
    %s312 = sadd.s32 %s311, 1
    %p315 = scmp.eq.s32.totalorder %s88, 1
    %p316 = scmp.ne.s32.totalorder %s311, %s313
    %p317 = scmp.eq.s32.totalorder %s88, 0
    %p318 = por %p316, %p317
    %p319 = scmp.ne.s32.totalorder %s311, %s313
    %p320 = scmp.eq.s32.totalorder %s93, 1
    %p321 = por %p319, %p320
    %p322 = scmp.ne.s32.totalorder %s313, %s314
    %p323 = scmp.eq.s32.totalorder %s93, 0
    %p324 = por %p322, %p323
    %p325 = scmp.ne.s32.totalorder %s313, %s314
    %p326 = scmp.eq.s32.totalorder %s94, 1
    %p327 = por %p325, %p326
    %p329 = scmp.ne.s32.totalorder %s314, %s328
    %p330 = scmp.eq.s32.totalorder %s94, 0
    %p331 = por %p329, %p330
    %s333 = sadd.s32 %s332, 1
    %p336 = scmp.eq.s32.totalorder %s88, 1
    %p337 = scmp.ne.s32.totalorder %s332, %s334
    %p338 = scmp.eq.s32.totalorder %s88, 0
    %p339 = por %p337, %p338
    %p340 = scmp.ne.s32.totalorder %s332, %s334
    %p341 = scmp.eq.s32.totalorder %s93, 1
    %p342 = por %p340, %p341
    %p343 = scmp.ne.s32.totalorder %s334, %s335
    %p344 = scmp.eq.s32.totalorder %s93, 0
    %p345 = por %p343, %p344
    %p346 = scmp.ne.s32.totalorder %s334, %s335
    %p347 = scmp.eq.s32.totalorder %s94, 1
    %p348 = por %p346, %p347
    %p350 = scmp.ne.s32.totalorder %s335, %s349
    %p351 = scmp.eq.s32.totalorder %s94, 0
    %p352 = por %p350, %p351
    %s354 = sadd.s32 %s353, 1
    %p357 = scmp.eq.s32.totalorder %s88, 1
    %p358 = scmp.ne.s32.totalorder %s353, %s355
    %p359 = scmp.eq.s32.totalorder %s88, 0
    %p360 = por %p358, %p359
    %p361 = scmp.ne.s32.totalorder %s353, %s355
    %p362 = scmp.eq.s32.totalorder %s93, 1
    %p363 = por %p361, %p362
    %p364 = scmp.ne.s32.totalorder %s355, %s356
    %p365 = scmp.eq.s32.totalorder %s93, 0
    %p366 = por %p364, %p365
    %p367 = scmp.ne.s32.totalorder %s355, %s356
    %p368 = scmp.eq.s32.totalorder %s94, 1
    %p369 = por %p367, %p368
    %p371 = scmp.ne.s32.totalorder %s356, %s370
    %p372 = scmp.eq.s32.totalorder %s94, 0
    %p373 = por %p371, %p372
    %s375 = sadd.s32 %s374, 1
    %p378 = scmp.eq.s32.totalorder %s88, 1
    %p379 = scmp.ne.s32.totalorder %s374, %s376
    %p380 = scmp.eq.s32.totalorder %s88, 0
    %p381 = por %p379, %p380
    %p382 = scmp.ne.s32.totalorder %s374, %s376
    %p383 = scmp.eq.s32.totalorder %s93, 1
    %p384 = por %p382, %p383
    %p385 = scmp.ne.s32.totalorder %s376, %s377
    %p386 = scmp.eq.s32.totalorder %s93, 0
    %p387 = por %p385, %p386
    %p388 = scmp.ne.s32.totalorder %s376, %s377
    %p389 = scmp.eq.s32.totalorder %s94, 1
    %p390 = por %p388, %p389
    %p392 = scmp.ne.s32.totalorder %s377, %s391
    %p393 = scmp.eq.s32.totalorder %s94, 0
    %p394 = por %p392, %p393
    %s396 = sadd.s32 %s395, 1
    %p399 = scmp.eq.s32.totalorder %s88, 1
    %p400 = scmp.ne.s32.totalorder %s395, %s397
    %p401 = scmp.eq.s32.totalorder %s88, 0
    %p402 = por %p400, %p401
    %p403 = scmp.ne.s32.totalorder %s395, %s397
    %p404 = scmp.eq.s32.totalorder %s93, 1
    %p405 = por %p403, %p404
    %p406 = scmp.ne.s32.totalorder %s397, %s398
    %p407 = scmp.eq.s32.totalorder %s93, 0
    %p408 = por %p406, %p407
    %p409 = scmp.ne.s32.totalorder %s397, %s398
    %p410 = scmp.eq.s32.totalorder %s94, 1
    %p411 = por %p409, %p410
    %p413 = scmp.ne.s32.totalorder %s398, %s412
    %p414 = scmp.eq.s32.totalorder %s94, 0
    %p415 = por %p413, %p414
    %s417 = sadd.s32 %s416, 1
    %p420 = scmp.eq.s32.totalorder %s88, 1
    %p421 = scmp.ne.s32.totalorder %s416, %s418
    %p422 = scmp.eq.s32.totalorder %s88, 0
    %p423 = por %p421, %p422
    %p424 = scmp.ne.s32.totalorder %s416, %s418
    %p425 = scmp.eq.s32.totalorder %s93, 1
    %p426 = por %p424, %p425
    %p427 = scmp.ne.s32.totalorder %s418, %s419
    %p428 = scmp.eq.s32.totalorder %s93, 0
    %p429 = por %p427, %p428
    %p430 = scmp.ne.s32.totalorder %s418, %s419
    %p431 = scmp.eq.s32.totalorder %s94, 1
    %p432 = por %p430, %p431
    %p434 = scmp.ne.s32.totalorder %s419, %s433
    %p435 = scmp.eq.s32.totalorder %s94, 0
    %p436 = por %p434, %p435
    %s438 = sadd.s32 %s437, 1
    %p441 = scmp.eq.s32.totalorder %s88, 1
    %p442 = scmp.ne.s32.totalorder %s437, %s439
    %p443 = scmp.eq.s32.totalorder %s88, 0
    %p444 = por %p442, %p443
    %p445 = scmp.ne.s32.totalorder %s437, %s439
    %p446 = scmp.eq.s32.totalorder %s93, 1
    %p447 = por %p445, %p446
    %p448 = scmp.ne.s32.totalorder %s439, %s440
    %p449 = scmp.eq.s32.totalorder %s93, 0
    %p450 = por %p448, %p449
    %p451 = scmp.ne.s32.totalorder %s439, %s440
    %p452 = scmp.eq.s32.totalorder %s94, 1
    %p453 = por %p451, %p452
    %p455 = scmp.ne.s32.totalorder %s440, %s454
    %p456 = scmp.eq.s32.totalorder %s94, 0
    %p457 = por %p455, %p456
    %s459 = sadd.s32 %s458, 1
    %p462 = scmp.eq.s32.totalorder %s88, 1
    %p463 = scmp.ne.s32.totalorder %s458, %s460
    %p464 = scmp.eq.s32.totalorder %s88, 0
    %p465 = por %p463, %p464
    %p466 = scmp.ne.s32.totalorder %s458, %s460
    %p467 = scmp.eq.s32.totalorder %s93, 1
    %p468 = por %p466, %p467
    %p469 = scmp.ne.s32.totalorder %s460, %s461
    %p470 = scmp.eq.s32.totalorder %s93, 0
    %p471 = por %p469, %p470
    %p472 = scmp.ne.s32.totalorder %s460, %s461
    %p473 = scmp.eq.s32.totalorder %s94, 1
    %p474 = por %p472, %p473
    %p476 = scmp.ne.s32.totalorder %s461, %s475
    %p477 = scmp.eq.s32.totalorder %s94, 0
    %p478 = por %p476, %p477
    %s480 = sadd.s32 %s479, 1
    %p483 = scmp.eq.s32.totalorder %s88, 1
    %p484 = scmp.ne.s32.totalorder %s479, %s481
    %p485 = scmp.eq.s32.totalorder %s88, 0
    %p486 = por %p484, %p485
    %p487 = scmp.ne.s32.totalorder %s479, %s481
    %p488 = scmp.eq.s32.totalorder %s93, 1
    %p489 = por %p487, %p488
    %p490 = scmp.ne.s32.totalorder %s481, %s482
    %p491 = scmp.eq.s32.totalorder %s93, 0
    %p492 = por %p490, %p491
    %p493 = scmp.ne.s32.totalorder %s481, %s482
    %p494 = scmp.eq.s32.totalorder %s94, 1
    %p495 = por %p493, %p494
    %p497 = scmp.ne.s32.totalorder %s482, %s496
    %p498 = scmp.eq.s32.totalorder %s94, 0
    %p499 = por %p497, %p498
    %s501 = sadd.s32 %s500, 1
    %p504 = scmp.eq.s32.totalorder %s88, 1
    %p505 = scmp.ne.s32.totalorder %s500, %s502
    %p506 = scmp.eq.s32.totalorder %s88, 0
    %p507 = por %p505, %p506
    %p508 = scmp.ne.s32.totalorder %s500, %s502
    %p509 = scmp.eq.s32.totalorder %s93, 1
    %p510 = por %p508, %p509
    %p511 = scmp.ne.s32.totalorder %s502, %s503
    %p512 = scmp.eq.s32.totalorder %s93, 0
    %p513 = por %p511, %p512
    %p514 = scmp.ne.s32.totalorder %s502, %s503
    %p515 = scmp.eq.s32.totalorder %s94, 1
    %p516 = por %p514, %p515
    %p518 = scmp.ne.s32.totalorder %s503, %s517
    %p519 = scmp.eq.s32.totalorder %s94, 0
    %p520 = por %p518, %p519
    %s522 = sadd.s32 %s521, 1
    %p525 = scmp.eq.s32.totalorder %s88, 1
    %p526 = scmp.ne.s32.totalorder %s521, %s523
    %p527 = scmp.eq.s32.totalorder %s88, 0
    %p528 = por %p526, %p527
    %p529 = scmp.ne.s32.totalorder %s521, %s523
    %p530 = scmp.eq.s32.totalorder %s93, 1
    %p531 = por %p529, %p530
    %p532 = scmp.ne.s32.totalorder %s523, %s524
    %p533 = scmp.eq.s32.totalorder %s93, 0
    %p534 = por %p532, %p533
    %p535 = scmp.ne.s32.totalorder %s523, %s524
    %p536 = scmp.eq.s32.totalorder %s94, 1
    %p537 = por %p535, %p536
    %p539 = scmp.ne.s32.totalorder %s524, %s538
    %p540 = scmp.eq.s32.totalorder %s94, 0
    %p541 = por %p539, %p540
    %s543 = sadd.s32 %s542, 1
    %p546 = scmp.eq.s32.totalorder %s88, 1
    %p547 = scmp.ne.s32.totalorder %s542, %s544
    %p548 = scmp.eq.s32.totalorder %s88, 0
    %p549 = por %p547, %p548
    %p550 = scmp.ne.s32.totalorder %s542, %s544
    %p551 = scmp.eq.s32.totalorder %s93, 1
    %p552 = por %p550, %p551
    %p553 = scmp.ne.s32.totalorder %s544, %s545
    %p554 = scmp.eq.s32.totalorder %s93, 0
    %p555 = por %p553, %p554
    %p556 = scmp.ne.s32.totalorder %s544, %s545
    %p557 = scmp.eq.s32.totalorder %s94, 1
    %p558 = por %p556, %p557
    %p560 = scmp.ne.s32.totalorder %s545, %s559
    %p561 = scmp.eq.s32.totalorder %s94, 0
    %p562 = por %p560, %p561
    %s564 = sadd.s32 %s563, 1
    %p567 = scmp.eq.s32.totalorder %s88, 1
    %p568 = scmp.ne.s32.totalorder %s563, %s565
    %p569 = scmp.eq.s32.totalorder %s88, 0
    %p570 = por %p568, %p569
    %p571 = scmp.ne.s32.totalorder %s563, %s565
    %p572 = scmp.eq.s32.totalorder %s93, 1
    %p573 = por %p571, %p572
    %p574 = scmp.ne.s32.totalorder %s565, %s566
    %p575 = scmp.eq.s32.totalorder %s93, 0
    %p576 = por %p574, %p575
    %p577 = scmp.ne.s32.totalorder %s565, %s566
    %p578 = scmp.eq.s32.totalorder %s94, 1
    %p579 = por %p577, %p578
    %p581 = scmp.ne.s32.totalorder %s566, %s580
    %p582 = scmp.eq.s32.totalorder %s94, 0
    %p583 = por %p581, %p582
    %s585 = sadd.s32 %s584, 1
    %p588 = scmp.eq.s32.totalorder %s88, 1
    %p589 = scmp.ne.s32.totalorder %s584, %s586
    %p590 = scmp.eq.s32.totalorder %s88, 0
    %p591 = por %p589, %p590
    %p592 = scmp.ne.s32.totalorder %s584, %s586
    %p593 = scmp.eq.s32.totalorder %s93, 1
    %p594 = por %p592, %p593
    %p595 = scmp.ne.s32.totalorder %s586, %s587
    %p596 = scmp.eq.s32.totalorder %s93, 0
    %p597 = por %p595, %p596
    %p598 = scmp.ne.s32.totalorder %s586, %s587
    %p599 = scmp.eq.s32.totalorder %s94, 1
    %p600 = por %p598, %p599
    %p602 = scmp.ne.s32.totalorder %s587, %s601
    %p603 = scmp.eq.s32.totalorder %s94, 0
    %p604 = por %p602, %p603
    %s606 = sadd.s32 %s605, 1
    %p609 = scmp.eq.s32.totalorder %s88, 1
    %p610 = scmp.ne.s32.totalorder %s605, %s607
    %p611 = scmp.eq.s32.totalorder %s88, 0
    %p612 = por %p610, %p611
    %p613 = scmp.ne.s32.totalorder %s605, %s607
    %p614 = scmp.eq.s32.totalorder %s93, 1
    %p615 = por %p613, %p614
    %p616 = scmp.ne.s32.totalorder %s607, %s608
    %p617 = scmp.eq.s32.totalorder %s93, 0
    %p618 = por %p616, %p617
    %p619 = scmp.ne.s32.totalorder %s607, %s608
    %p620 = scmp.eq.s32.totalorder %s94, 1
    %p621 = por %p619, %p620
    %p623 = scmp.ne.s32.totalorder %s608, %s622
    %p624 = scmp.eq.s32.totalorder %s94, 0
    %p625 = por %p623, %p624
    %s627 = sadd.s32 %s626, 1
    %p630 = scmp.eq.s32.totalorder %s88, 1
    %p631 = scmp.ne.s32.totalorder %s626, %s628
    %p632 = scmp.eq.s32.totalorder %s88, 0
    %p633 = por %p631, %p632
    %p634 = scmp.ne.s32.totalorder %s626, %s628
    %p635 = scmp.eq.s32.totalorder %s93, 1
    %p636 = por %p634, %p635
    %p637 = scmp.ne.s32.totalorder %s628, %s629
    %p638 = scmp.eq.s32.totalorder %s93, 0
    %p639 = por %p637, %p638
    %p640 = scmp.ne.s32.totalorder %s628, %s629
    %p641 = scmp.eq.s32.totalorder %s94, 1
    %p642 = por %p640, %p641
    %p644 = scmp.ne.s32.totalorder %s629, %s643
    %p645 = scmp.eq.s32.totalorder %s94, 0
    %p646 = por %p644, %p645
    %s648 = sadd.s32 %s647, 1
    %p651 = scmp.eq.s32.totalorder %s88, 1
    %p652 = scmp.ne.s32.totalorder %s647, %s649
    %p653 = scmp.eq.s32.totalorder %s88, 0
    %p654 = por %p652, %p653
    %p655 = scmp.ne.s32.totalorder %s647, %s649
    %p656 = scmp.eq.s32.totalorder %s93, 1
    %p657 = por %p655, %p656
    %p658 = scmp.ne.s32.totalorder %s649, %s650
    %p659 = scmp.eq.s32.totalorder %s93, 0
    %p660 = por %p658, %p659
    %p661 = scmp.ne.s32.totalorder %s649, %s650
    %p662 = scmp.eq.s32.totalorder %s94, 1
    %p663 = por %p661, %p662
    %p665 = scmp.ne.s32.totalorder %s650, %s664
    %p666 = scmp.eq.s32.totalorder %s94, 0
    %p667 = por %p665, %p666
    %s669 = sadd.s32 %s668, 1
    %p672 = scmp.eq.s32.totalorder %s88, 1
    %p673 = scmp.ne.s32.totalorder %s668, %s670
    %p674 = scmp.eq.s32.totalorder %s88, 0
    %p675 = por %p673, %p674
    %p676 = scmp.ne.s32.totalorder %s668, %s670
    %p677 = scmp.eq.s32.totalorder %s93, 1
    %p678 = por %p676, %p677
    %p679 = scmp.ne.s32.totalorder %s670, %s671
    %p680 = scmp.eq.s32.totalorder %s93, 0
    %p681 = por %p679, %p680
    %p682 = scmp.ne.s32.totalorder %s670, %s671
    %p683 = scmp.eq.s32.totalorder %s94, 1
    %p684 = por %p682, %p683
    %p686 = scmp.ne.s32.totalorder %s671, %s685
    %p687 = scmp.eq.s32.totalorder %s94, 0
    %p688 = por %p686, %p687
    %s690 = sadd.s32 %s689, 1
    %p693 = scmp.eq.s32.totalorder %s88, 1
    %p694 = scmp.ne.s32.totalorder %s689, %s691
    %p695 = scmp.eq.s32.totalorder %s88, 0
    %p696 = por %p694, %p695
    %p697 = scmp.ne.s32.totalorder %s689, %s691
    %p698 = scmp.eq.s32.totalorder %s93, 1
    %p699 = por %p697, %p698
    %p700 = scmp.ne.s32.totalorder %s691, %s692
    %p701 = scmp.eq.s32.totalorder %s93, 0
    %p702 = por %p700, %p701
    %p703 = scmp.ne.s32.totalorder %s691, %s692
    %p704 = scmp.eq.s32.totalorder %s94, 1
    %p705 = por %p703, %p704
    %p707 = scmp.ne.s32.totalorder %s692, %s706
    %p708 = scmp.eq.s32.totalorder %s94, 0
    %p709 = por %p707, %p708
    %s711 = sadd.s32 %s710, 1
    %p714 = scmp.eq.s32.totalorder %s88, 1
    %p715 = scmp.ne.s32.totalorder %s710, %s712
    %p716 = scmp.eq.s32.totalorder %s88, 0
    %p717 = por %p715, %p716
    %p718 = scmp.ne.s32.totalorder %s710, %s712
    %p719 = scmp.eq.s32.totalorder %s93, 1
    %p720 = por %p718, %p719
    %p721 = scmp.ne.s32.totalorder %s712, %s713
    %p722 = scmp.eq.s32.totalorder %s93, 0
    %p723 = por %p721, %p722
    %p724 = scmp.ne.s32.totalorder %s712, %s713
    %p725 = scmp.eq.s32.totalorder %s94, 1
    %p726 = por %p724, %p725
    %p728 = scmp.ne.s32.totalorder %s713, %s727
    %p729 = scmp.eq.s32.totalorder %s94, 0
    %p730 = por %p728, %p729
    %s732 = sadd.s32 %s731, 1
    %p735 = scmp.eq.s32.totalorder %s88, 1
    %p736 = scmp.ne.s32.totalorder %s731, %s733
    %p737 = scmp.eq.s32.totalorder %s88, 0
    %p738 = por %p736, %p737
    %p739 = scmp.ne.s32.totalorder %s731, %s733
    %p740 = scmp.eq.s32.totalorder %s93, 1
    %p741 = por %p739, %p740
    %p742 = scmp.ne.s32.totalorder %s733, %s734
    %p743 = scmp.eq.s32.totalorder %s93, 0
    %p744 = por %p742, %p743
    %p745 = scmp.ne.s32.totalorder %s733, %s734
    %p746 = scmp.eq.s32.totalorder %s94, 1
    %p747 = por %p745, %p746
    %p749 = scmp.ne.s32.totalorder %s734, %s748
    %p750 = scmp.eq.s32.totalorder %s94, 0
    %p751 = por %p749, %p750
    %s753 = sadd.s32 %s752, 1
    %p756 = scmp.eq.s32.totalorder %s88, 1
    %p757 = scmp.ne.s32.totalorder %s752, %s754
    %p758 = scmp.eq.s32.totalorder %s88, 0
    %p759 = por %p757, %p758
    %p760 = scmp.ne.s32.totalorder %s752, %s754
    %p761 = scmp.eq.s32.totalorder %s93, 1
    %p762 = por %p760, %p761
    %p763 = scmp.ne.s32.totalorder %s754, %s755
    %p764 = scmp.eq.s32.totalorder %s93, 0
    %p765 = por %p763, %p764
    %p766 = scmp.ne.s32.totalorder %s754, %s755
    %p767 = scmp.eq.s32.totalorder %s94, 1
    %p768 = por %p766, %p767
    %p770 = scmp.ne.s32.totalorder %s755, %s769
    %p771 = scmp.eq.s32.totalorder %s94, 0
    %p772 = por %p770, %p771
    %s774 = sadd.s32 %s773, 1
    %p777 = scmp.eq.s32.totalorder %s88, 1
    %p778 = scmp.ne.s32.totalorder %s773, %s775
    %p779 = scmp.eq.s32.totalorder %s88, 0
    %p780 = por %p778, %p779
    %p781 = scmp.ne.s32.totalorder %s773, %s775
    %p782 = scmp.eq.s32.totalorder %s93, 1
    %p783 = por %p781, %p782
    %p784 = scmp.ne.s32.totalorder %s775, %s776
    %p785 = scmp.eq.s32.totalorder %s93, 0
    %p786 = por %p784, %p785
    %p787 = scmp.ne.s32.totalorder %s775, %s776
    %p788 = scmp.eq.s32.totalorder %s94, 1
    %p789 = por %p787, %p788
    %p791 = scmp.ne.s32.totalorder %s776, %s790
    %p792 = scmp.eq.s32.totalorder %s94, 0
    %p793 = por %p791, %p792
    %s795 = sadd.s32 %s794, 1
    %p798 = scmp.eq.s32.totalorder %s88, 1
    %p799 = scmp.ne.s32.totalorder %s794, %s796
    %p800 = scmp.eq.s32.totalorder %s88, 0
    %p801 = por %p799, %p800
    %p802 = scmp.ne.s32.totalorder %s794, %s796
    %p803 = scmp.eq.s32.totalorder %s93, 1
    %p804 = por %p802, %p803
    %p805 = scmp.ne.s32.totalorder %s796, %s797
    %p806 = scmp.eq.s32.totalorder %s93, 0
    %p807 = por %p805, %p806
    %p808 = scmp.ne.s32.totalorder %s796, %s797
    %p809 = scmp.eq.s32.totalorder %s94, 1
    %p810 = por %p808, %p809
    %p812 = scmp.ne.s32.totalorder %s797, %s811
    %p813 = scmp.eq.s32.totalorder %s94, 0
    %p814 = por %p812, %p813
    %s816 = sadd.s32 %s815, 1
    %p819 = scmp.eq.s32.totalorder %s88, 1
    %p820 = scmp.ne.s32.totalorder %s815, %s817
    %p821 = scmp.eq.s32.totalorder %s88, 0
    %p822 = por %p820, %p821
    %p823 = scmp.ne.s32.totalorder %s815, %s817
    %p824 = scmp.eq.s32.totalorder %s93, 1
    %p825 = por %p823, %p824
    %p826 = scmp.ne.s32.totalorder %s817, %s818
    %p827 = scmp.eq.s32.totalorder %s93, 0
    %p828 = por %p826, %p827
    %p829 = scmp.ne.s32.totalorder %s817, %s818
    %p830 = scmp.eq.s32.totalorder %s94, 1
    %p831 = por %p829, %p830
    %p833 = scmp.ne.s32.totalorder %s818, %s832
    %p834 = scmp.eq.s32.totalorder %s94, 0
    %p835 = por %p833, %p834
    %s837 = sadd.s32 %s836, 1
    %p840 = scmp.eq.s32.totalorder %s88, 1
    %p841 = scmp.ne.s32.totalorder %s836, %s838
    %p842 = scmp.eq.s32.totalorder %s88, 0
    %p843 = por %p841, %p842
    %p844 = scmp.ne.s32.totalorder %s836, %s838
    %p845 = scmp.eq.s32.totalorder %s93, 1
    %p846 = por %p844, %p845
    %p847 = scmp.ne.s32.totalorder %s838, %s839
    %p848 = scmp.eq.s32.totalorder %s93, 0
    %p849 = por %p847, %p848
    %p850 = scmp.ne.s32.totalorder %s838, %s839
    %p851 = scmp.eq.s32.totalorder %s94, 1
    %p852 = por %p850, %p851
    %p854 = scmp.ne.s32.totalorder %s839, %s853
    %p855 = scmp.eq.s32.totalorder %s94, 0
    %p856 = por %p854, %p855
    %s858 = sadd.s32 %s857, 1
    %p861 = scmp.eq.s32.totalorder %s88, 1
    %p862 = scmp.ne.s32.totalorder %s857, %s859
    %p863 = scmp.eq.s32.totalorder %s88, 0
    %p864 = por %p862, %p863
    %p865 = scmp.ne.s32.totalorder %s857, %s859
    %p866 = scmp.eq.s32.totalorder %s93, 1
    %p867 = por %p865, %p866
    %p868 = scmp.ne.s32.totalorder %s859, %s860
    %p869 = scmp.eq.s32.totalorder %s93, 0
    %p870 = por %p868, %p869
    %p871 = scmp.ne.s32.totalorder %s859, %s860
    %p872 = scmp.eq.s32.totalorder %s94, 1
    %p873 = por %p871, %p872
    %p875 = scmp.ne.s32.totalorder %s860, %s874
    %p876 = scmp.eq.s32.totalorder %s94, 0
    %p877 = por %p875, %p876
    %s879 = sadd.s32 %s878, 1
    %p882 = scmp.eq.s32.totalorder %s88, 1
    %p883 = scmp.ne.s32.totalorder %s878, %s880
    %p884 = scmp.eq.s32.totalorder %s88, 0
    %p885 = por %p883, %p884
    %p886 = scmp.ne.s32.totalorder %s878, %s880
    %p887 = scmp.eq.s32.totalorder %s93, 1
    %p888 = por %p886, %p887
    %p889 = scmp.ne.s32.totalorder %s880, %s881
    %p890 = scmp.eq.s32.totalorder %s93, 0
    %p891 = por %p889, %p890
    %p892 = scmp.ne.s32.totalorder %s880, %s881
    %p893 = scmp.eq.s32.totalorder %s94, 1
    %p894 = por %p892, %p893
    %p896 = scmp.ne.s32.totalorder %s881, %s895
    %p897 = scmp.eq.s32.totalorder %s94, 0
    %p898 = por %p896, %p897
    %s900 = sadd.s32 %s899, 1
    %p903 = scmp.eq.s32.totalorder %s88, 1
    %p904 = scmp.ne.s32.totalorder %s899, %s901
    %p905 = scmp.eq.s32.totalorder %s88, 0
    %p906 = por %p904, %p905
    %p907 = scmp.ne.s32.totalorder %s899, %s901
    %p908 = scmp.eq.s32.totalorder %s93, 1
    %p909 = por %p907, %p908
    %p910 = scmp.ne.s32.totalorder %s901, %s902
    %p911 = scmp.eq.s32.totalorder %s93, 0
    %p912 = por %p910, %p911
    %p913 = scmp.ne.s32.totalorder %s901, %s902
    %p914 = scmp.eq.s32.totalorder %s94, 1
    %p915 = por %p913, %p914
    %p917 = scmp.ne.s32.totalorder %s902, %s916
    %p918 = scmp.eq.s32.totalorder %s94, 0
    %p919 = por %p917, %p918
    %s920 = ssub.s32 %s88, %s95
    %p921 = scmp.eq.s32.totalorder %s920, 0
    %s923 = sadd.s32 %s922, 1
    %s924 = scalar_select %p921, %s922, %s923
    %p927 = pneg %p921
    %p928 = scmp.eq.s32.totalorder %s88, 1
    %p929 = por %p927, %p928
    %p930 = scmp.ne.s32.totalorder %s922, %s925
    %p931 = scmp.eq.s32.totalorder %s88, 0
    %p932 = por %p930, %p931
    %p933 = scmp.ne.s32.totalorder %s922, %s925
    %p934 = scmp.eq.s32.totalorder %s93, 1
    %p935 = por %p933, %p934
    %p936 = scmp.ne.s32.totalorder %s925, %s926
    %p937 = scmp.eq.s32.totalorder %s93, 0
    %p938 = por %p936, %p937
    %p939 = scmp.ne.s32.totalorder %s925, %s926
    %p940 = scmp.eq.s32.totalorder %s94, 1
    %p941 = por %p939, %p940
    %p943 = scmp.ne.s32.totalorder %s926, %s942
    %p944 = scmp.eq.s32.totalorder %s94, 0
    %p945 = por %p943, %p944
    %p946 = scmp.le.s32.totalorder 1, %s88
    %p947 = scmp.lt.s32.totalorder %s88, 3
    %p948 = pnand %p946, %p947
    %p949 = pneg %p948
    // Predicated region
    $region9: #{vgg_discriminator_forward.1} parent=5 // pred_check
      _
    $region10: #{vgg_discriminator_forward.1} parent=5 // pred_check_branch
      %951 = sbr.rel (%p948) target = $region12
    $region11: #{vgg_discriminator_forward.1} parent=5 // pred_region
      %s952 = ssub.s32 %s88, 1
      // Predicated region
      $region13: #{vgg_discriminator_forward.1} parent=11 // pred_check
        %p953 = pneg %p135
      $region14: #{vgg_discriminator_forward.1} parent=11 // pred_check_branch
        %955 = sbr.rel (%p953) target = $region16
      $region15: #{vgg_discriminator_forward.1} parent=11 // pred_region
        _
      $region16: #{vgg_discriminator_forward.1} parent=11 // pred_fallthru
        _
      // Predicated region
      $region17: #{vgg_discriminator_forward.1} parent=11 // pred_check
        %p956 = pneg %p156
      $region18: #{vgg_discriminator_forward.1} parent=11 // pred_check_branch
        %958 = sbr.rel (%p956) target = $region20
      $region19: #{vgg_discriminator_forward.1} parent=11 // pred_region
        _
      $region20: #{vgg_discriminator_forward.1} parent=11 // pred_fallthru
        _
      // Predicated region
      $region21: #{vgg_discriminator_forward.1} parent=11 // pred_check
        %p959 = pneg %p177
      $region22: #{vgg_discriminator_forward.1} parent=11 // pred_check_branch
        %961 = sbr.rel (%p959) target = $region24
      $region23: #{vgg_discriminator_forward.1} parent=11 // pred_region
        _
      $region24: #{vgg_discriminator_forward.1} parent=11 // pred_fallthru
        _
      // Predicated region
      $region25: #{vgg_discriminator_forward.1} parent=11 // pred_check
        %p962 = pneg %p198
      $region26: #{vgg_discriminator_forward.1} parent=11 // pred_check_branch
        %964 = sbr.rel (%p962) target = $region28
      $region27: #{vgg_discriminator_forward.1} parent=11 // pred_region
        _
      $region28: #{vgg_discriminator_forward.1} parent=11 // pred_fallthru
        _
      // Predicated region
      $region29: #{vgg_discriminator_forward.1} parent=11 // pred_check
        %p965 = pneg %p219
      $region30: #{vgg_discriminator_forward.1} parent=11 // pred_check_branch
        %967 = sbr.rel (%p965) target = $region32
      $region31: #{vgg_discriminator_forward.1} parent=11 // pred_region
        _
      $region32: #{vgg_discriminator_forward.1} parent=11 // pred_fallthru
        _
      // Predicated region
      $region33: #{vgg_discriminator_forward.1} parent=11 // pred_check
        %p968 = pneg %p240
      $region34: #{vgg_discriminator_forward.1} parent=11 // pred_check_branch
        %970 = sbr.rel (%p968) target = $region36
      $region35: #{vgg_discriminator_forward.1} parent=11 // pred_region
        _
      $region36: #{vgg_discriminator_forward.1} parent=11 // pred_fallthru
        _
      // Predicated region
      $region37: #{vgg_discriminator_forward.1} parent=11 // pred_check
        %p971 = pneg %p261
      $region38: #{vgg_discriminator_forward.1} parent=11 // pred_check_branch
        %973 = sbr.rel (%p971) target = $region40
      $region39: #{vgg_discriminator_forward.1} parent=11 // pred_region
        _
      $region40: #{vgg_discriminator_forward.1} parent=11 // pred_fallthru
        _
      // Predicated region
      $region41: #{vgg_discriminator_forward.1} parent=11 // pred_check
        %p974 = pneg %p282
      $region42: #{vgg_discriminator_forward.1} parent=11 // pred_check_branch
        %976 = sbr.rel (%p974) target = $region44
      $region43: #{vgg_discriminator_forward.1} parent=11 // pred_region
        _
      $region44: #{vgg_discriminator_forward.1} parent=11 // pred_fallthru
        _
      // Predicated region
      $region45: #{vgg_discriminator_forward.1} parent=11 // pred_check
        %p977 = pneg %p303
      $region46: #{vgg_discriminator_forward.1} parent=11 // pred_check_branch
        %979 = sbr.rel (%p977) target = $region48
      $region47: #{vgg_discriminator_forward.1} parent=11 // pred_region
        _
      $region48: #{vgg_discriminator_forward.1} parent=11 // pred_fallthru
        _
      // Predicated region
      $region49: #{vgg_discriminator_forward.1} parent=11 // pred_check
        %p980 = pneg %p324
      $region50: #{vgg_discriminator_forward.1} parent=11 // pred_check_branch
        %982 = sbr.rel (%p980) target = $region52
      $region51: #{vgg_discriminator_forward.1} parent=11 // pred_region
        _
      $region52: #{vgg_discriminator_forward.1} parent=11 // pred_fallthru
        _
      // Predicated region
      $region53: #{vgg_discriminator_forward.1} parent=11 // pred_check
        %p983 = pneg %p345
      $region54: #{vgg_discriminator_forward.1} parent=11 // pred_check_branch
        %985 = sbr.rel (%p983) target = $region56
      $region55: #{vgg_discriminator_forward.1} parent=11 // pred_region
        _
      $region56: #{vgg_discriminator_forward.1} parent=11 // pred_fallthru
        _
      // Predicated region
      $region57: #{vgg_discriminator_forward.1} parent=11 // pred_check
        %p986 = pneg %p366
      $region58: #{vgg_discriminator_forward.1} parent=11 // pred_check_branch
        %988 = sbr.rel (%p986) target = $region60
      $region59: #{vgg_discriminator_forward.1} parent=11 // pred_region
        _
      $region60: #{vgg_discriminator_forward.1} parent=11 // pred_fallthru
        _
      // Predicated region
      $region61: #{vgg_discriminator_forward.1} parent=11 // pred_check
        %p989 = pneg %p387
      $region62: #{vgg_discriminator_forward.1} parent=11 // pred_check_branch
        %991 = sbr.rel (%p989) target = $region64
      $region63: #{vgg_discriminator_forward.1} parent=11 // pred_region
        _
      $region64: #{vgg_discriminator_forward.1} parent=11 // pred_fallthru
        _
      // Predicated region
      $region65: #{vgg_discriminator_forward.1} parent=11 // pred_check
        %p992 = pneg %p408
      $region66: #{vgg_discriminator_forward.1} parent=11 // pred_check_branch
        %994 = sbr.rel (%p992) target = $region68
      $region67: #{vgg_discriminator_forward.1} parent=11 // pred_region
        _
      $region68: #{vgg_discriminator_forward.1} parent=11 // pred_fallthru
        _
      // Predicated region
      $region69: #{vgg_discriminator_forward.1} parent=11 // pred_check
        %p995 = pneg %p429
      $region70: #{vgg_discriminator_forward.1} parent=11 // pred_check_branch
        %997 = sbr.rel (%p995) target = $region72
      $region71: #{vgg_discriminator_forward.1} parent=11 // pred_region
        _
      $region72: #{vgg_discriminator_forward.1} parent=11 // pred_fallthru
        _
      // Predicated region
      $region73: #{vgg_discriminator_forward.1} parent=11 // pred_check
        %p998 = pneg %p450
      $region74: #{vgg_discriminator_forward.1} parent=11 // pred_check_branch
        %1000 = sbr.rel (%p998) target = $region76
      $region75: #{vgg_discriminator_forward.1} parent=11 // pred_region
        _
      $region76: #{vgg_discriminator_forward.1} parent=11 // pred_fallthru
        _
      // Predicated region
      $region77: #{vgg_discriminator_forward.1} parent=11 // pred_check
        %p1001 = pneg %p471
      $region78: #{vgg_discriminator_forward.1} parent=11 // pred_check_branch
        %1003 = sbr.rel (%p1001) target = $region80
      $region79: #{vgg_discriminator_forward.1} parent=11 // pred_region
        _
      $region80: #{vgg_discriminator_forward.1} parent=11 // pred_fallthru
        _
      // Predicated region
      $region81: #{vgg_discriminator_forward.1} parent=11 // pred_check
        %p1004 = pneg %p492
      $region82: #{vgg_discriminator_forward.1} parent=11 // pred_check_branch
        %1006 = sbr.rel (%p1004) target = $region84
      $region83: #{vgg_discriminator_forward.1} parent=11 // pred_region
        _
      $region84: #{vgg_discriminator_forward.1} parent=11 // pred_fallthru
        _
      // Predicated region
      $region85: #{vgg_discriminator_forward.1} parent=11 // pred_check
        %p1007 = pneg %p513
      $region86: #{vgg_discriminator_forward.1} parent=11 // pred_check_branch
        %1009 = sbr.rel (%p1007) target = $region88
      $region87: #{vgg_discriminator_forward.1} parent=11 // pred_region
        _
      $region88: #{vgg_discriminator_forward.1} parent=11 // pred_fallthru
        _
      // Predicated region
      $region89: #{vgg_discriminator_forward.1} parent=11 // pred_check
        %p1010 = pneg %p534
      $region90: #{vgg_discriminator_forward.1} parent=11 // pred_check_branch
        %1012 = sbr.rel (%p1010) target = $region92
      $region91: #{vgg_discriminator_forward.1} parent=11 // pred_region
        _
      $region92: #{vgg_discriminator_forward.1} parent=11 // pred_fallthru
        _
      // Predicated region
      $region93: #{vgg_discriminator_forward.1} parent=11 // pred_check
        %p1013 = pneg %p555
      $region94: #{vgg_discriminator_forward.1} parent=11 // pred_check_branch
        %1015 = sbr.rel (%p1013) target = $region96
      $region95: #{vgg_discriminator_forward.1} parent=11 // pred_region
        _
      $region96: #{vgg_discriminator_forward.1} parent=11 // pred_fallthru
        _
      // Predicated region
      $region97: #{vgg_discriminator_forward.1} parent=11 // pred_check
        %p1016 = pneg %p576
      $region98: #{vgg_discriminator_forward.1} parent=11 // pred_check_branch
        %1018 = sbr.rel (%p1016) target = $region100
      $region99: #{vgg_discriminator_forward.1} parent=11 // pred_region
        _
      $region100: #{vgg_discriminator_forward.1} parent=11 // pred_fallthru
        _
      // Predicated region
      $region101: #{vgg_discriminator_forward.1} parent=11 // pred_check
        %p1019 = pneg %p597
      $region102: #{vgg_discriminator_forward.1} parent=11 // pred_check_branch
        %1021 = sbr.rel (%p1019) target = $region104
      $region103: #{vgg_discriminator_forward.1} parent=11 // pred_region
        _
      $region104: #{vgg_discriminator_forward.1} parent=11 // pred_fallthru
        _
      // Predicated region
      $region105: #{vgg_discriminator_forward.1} parent=11 // pred_check
        %p1022 = pneg %p618
      $region106: #{vgg_discriminator_forward.1} parent=11 // pred_check_branch
        %1024 = sbr.rel (%p1022) target = $region108
      $region107: #{vgg_discriminator_forward.1} parent=11 // pred_region
        _
      $region108: #{vgg_discriminator_forward.1} parent=11 // pred_fallthru
        _
      // Predicated region
      $region109: #{vgg_discriminator_forward.1} parent=11 // pred_check
        %p1025 = pneg %p639
      $region110: #{vgg_discriminator_forward.1} parent=11 // pred_check_branch
        %1027 = sbr.rel (%p1025) target = $region112
      $region111: #{vgg_discriminator_forward.1} parent=11 // pred_region
        _
      $region112: #{vgg_discriminator_forward.1} parent=11 // pred_fallthru
        _
      // Predicated region
      $region113: #{vgg_discriminator_forward.1} parent=11 // pred_check
        %p1028 = pneg %p660
      $region114: #{vgg_discriminator_forward.1} parent=11 // pred_check_branch
        %1030 = sbr.rel (%p1028) target = $region116
      $region115: #{vgg_discriminator_forward.1} parent=11 // pred_region
        _
      $region116: #{vgg_discriminator_forward.1} parent=11 // pred_fallthru
        _
      // Predicated region
      $region117: #{vgg_discriminator_forward.1} parent=11 // pred_check
        %p1031 = pneg %p681
      $region118: #{vgg_discriminator_forward.1} parent=11 // pred_check_branch
        %1033 = sbr.rel (%p1031) target = $region120
      $region119: #{vgg_discriminator_forward.1} parent=11 // pred_region
        _
      $region120: #{vgg_discriminator_forward.1} parent=11 // pred_fallthru
        _
      // Predicated region
      $region121: #{vgg_discriminator_forward.1} parent=11 // pred_check
        %p1034 = pneg %p702
      $region122: #{vgg_discriminator_forward.1} parent=11 // pred_check_branch
        %1036 = sbr.rel (%p1034) target = $region124
      $region123: #{vgg_discriminator_forward.1} parent=11 // pred_region
        _
      $region124: #{vgg_discriminator_forward.1} parent=11 // pred_fallthru
        _
      // Predicated region
      $region125: #{vgg_discriminator_forward.1} parent=11 // pred_check
        %p1037 = pneg %p723
      $region126: #{vgg_discriminator_forward.1} parent=11 // pred_check_branch
        %1039 = sbr.rel (%p1037) target = $region128
      $region127: #{vgg_discriminator_forward.1} parent=11 // pred_region
        _
      $region128: #{vgg_discriminator_forward.1} parent=11 // pred_fallthru
        _
      // Predicated region
      $region129: #{vgg_discriminator_forward.1} parent=11 // pred_check
        %p1040 = pneg %p744
      $region130: #{vgg_discriminator_forward.1} parent=11 // pred_check_branch
        %1042 = sbr.rel (%p1040) target = $region132
      $region131: #{vgg_discriminator_forward.1} parent=11 // pred_region
        _
      $region132: #{vgg_discriminator_forward.1} parent=11 // pred_fallthru
        _
      // Predicated region
      $region133: #{vgg_discriminator_forward.1} parent=11 // pred_check
        %p1043 = pneg %p765
      $region134: #{vgg_discriminator_forward.1} parent=11 // pred_check_branch
        %1045 = sbr.rel (%p1043) target = $region136
      $region135: #{vgg_discriminator_forward.1} parent=11 // pred_region
        _
      $region136: #{vgg_discriminator_forward.1} parent=11 // pred_fallthru
        _
      // Predicated region
      $region137: #{vgg_discriminator_forward.1} parent=11 // pred_check
        %p1046 = pneg %p786
      $region138: #{vgg_discriminator_forward.1} parent=11 // pred_check_branch
        %1048 = sbr.rel (%p1046) target = $region140
      $region139: #{vgg_discriminator_forward.1} parent=11 // pred_region
        _
      $region140: #{vgg_discriminator_forward.1} parent=11 // pred_fallthru
        _
      // Predicated region
      $region141: #{vgg_discriminator_forward.1} parent=11 // pred_check
        %p1049 = pneg %p807
      $region142: #{vgg_discriminator_forward.1} parent=11 // pred_check_branch
        %1051 = sbr.rel (%p1049) target = $region144
      $region143: #{vgg_discriminator_forward.1} parent=11 // pred_region
        _
      $region144: #{vgg_discriminator_forward.1} parent=11 // pred_fallthru
        _
      // Predicated region
      $region145: #{vgg_discriminator_forward.1} parent=11 // pred_check
        %p1052 = pneg %p828
      $region146: #{vgg_discriminator_forward.1} parent=11 // pred_check_branch
        %1054 = sbr.rel (%p1052) target = $region148
      $region147: #{vgg_discriminator_forward.1} parent=11 // pred_region
        _
      $region148: #{vgg_discriminator_forward.1} parent=11 // pred_fallthru
        _
      // Predicated region
      $region149: #{vgg_discriminator_forward.1} parent=11 // pred_check
        %p1055 = pneg %p849
      $region150: #{vgg_discriminator_forward.1} parent=11 // pred_check_branch
        %1057 = sbr.rel (%p1055) target = $region152
      $region151: #{vgg_discriminator_forward.1} parent=11 // pred_region
        _
      $region152: #{vgg_discriminator_forward.1} parent=11 // pred_fallthru
        _
      // Predicated region
      $region153: #{vgg_discriminator_forward.1} parent=11 // pred_check
        %p1058 = pneg %p870
      $region154: #{vgg_discriminator_forward.1} parent=11 // pred_check_branch
        %1060 = sbr.rel (%p1058) target = $region156
      $region155: #{vgg_discriminator_forward.1} parent=11 // pred_region
        _
      $region156: #{vgg_discriminator_forward.1} parent=11 // pred_fallthru
        _
      // Predicated region
      $region157: #{vgg_discriminator_forward.1} parent=11 // pred_check
        %p1061 = pneg %p891
      $region158: #{vgg_discriminator_forward.1} parent=11 // pred_check_branch
        %1063 = sbr.rel (%p1061) target = $region160
      $region159: #{vgg_discriminator_forward.1} parent=11 // pred_region
        _
      $region160: #{vgg_discriminator_forward.1} parent=11 // pred_fallthru
        _
      // Predicated region
      $region161: #{vgg_discriminator_forward.1} parent=11 // pred_check
        %p1064 = pneg %p912
      $region162: #{vgg_discriminator_forward.1} parent=11 // pred_check_branch
        %1066 = sbr.rel (%p1064) target = $region164
      $region163: #{vgg_discriminator_forward.1} parent=11 // pred_region
        _
      $region164: #{vgg_discriminator_forward.1} parent=11 // pred_fallthru
        _
    $region12: #{vgg_discriminator_forward.1} parent=5 // pred_fallthru
      _
    %p1067 = scmp.lt.s32.totalorder %s88, 2
    // Predicated region
    $region165: #{vgg_discriminator_forward.1} parent=5 // pred_check
      %p1068 = pneg %p1067
    $region166: #{vgg_discriminator_forward.1} parent=5 // pred_check_branch
      %1070 = sbr.rel (%p1068) target = $region168
    $region167: #{vgg_discriminator_forward.1} parent=5 // pred_region
      // Predicated region
      $region169: #{vgg_discriminator_forward.1} parent=167 // pred_check
        %p1071 = pneg %p108
      $region170: #{vgg_discriminator_forward.1} parent=167 // pred_check_branch
        %1073 = sbr.rel (%p1071) target = $region172
      $region171: #{vgg_discriminator_forward.1} parent=167 // pred_region
        %p1074 = scmp.lt.s32.totalorder %s88, 1
        %s1075 = scalar_select %p1074, %s88, 1
        %s1076 = smul.addr %s1075, 4
        %s1077 = smul.addr %s1076, 8
        %s1078 = scalar_lea.vmem %s1, %s1077
      $region172: #{vgg_discriminator_forward.1} parent=167 // pred_fallthru
        _
    $region168: #{vgg_discriminator_forward.1} parent=5 // pred_fallthru
      _
    %p1079 = scmp.le.s32.totalorder 1, %s88
    %p1080 = scmp.lt.s32.totalorder %s88, 3
    %p1081 = pnand %p1079, %p1080
    %p1082 = pneg %p1081
    // Predicated region
    $region173: #{vgg_discriminator_forward.1} parent=5 // pred_check
      _
    $region174: #{vgg_discriminator_forward.1} parent=5 // pred_check_branch
      %1084 = sbr.rel (%p1081) target = $region176
    $region175: #{vgg_discriminator_forward.1} parent=5 // pred_region
      %s1085 = ssub.s32 %s88, 1
      %p1086 = scmp.lt.s32.totalorder %s93, 1
      %s1087 = scalar_select %p1086, %s93, 1
      %s1088 = smul.addr %s1087, 4
      %s1089 = smul.addr %s1088, 8
      %s1090 = scalar_lea.vmem %s1, %s1089
      %p1091 = pneg %p114
      %p1092 = pneg %p111
      %p1093 = pneg %p135
      %p1094 = pneg %p132
      %p1095 = pneg %p156
      %p1096 = pneg %p153
      %p1097 = pneg %p177
      %p1098 = pneg %p174
      %p1099 = pneg %p198
      %p1100 = pneg %p195
      %p1101 = pneg %p219
      %p1102 = pneg %p216
      %p1103 = pneg %p240
      %p1104 = pneg %p237
      %p1105 = pneg %p261
      %p1106 = pneg %p258
      %p1107 = pneg %p282
      %p1108 = pneg %p279
      %p1109 = pneg %p303
      %p1110 = pneg %p300
      %p1111 = pneg %p324
      %p1112 = pneg %p321
      %p1113 = pneg %p345
      %p1114 = pneg %p342
      %p1115 = pneg %p366
      %p1116 = pneg %p363
      %p1117 = pneg %p387
      %p1118 = pneg %p384
      %p1119 = pneg %p408
      %p1120 = pneg %p405
      %p1121 = pneg %p429
      %p1122 = pneg %p426
      %p1123 = pneg %p450
      %p1124 = pneg %p447
      %p1125 = pneg %p471
      %p1126 = pneg %p468
      %p1127 = pneg %p492
      %p1128 = pneg %p489
      %p1129 = pneg %p513
      %p1130 = pneg %p510
      %p1131 = pneg %p534
      %p1132 = pneg %p531
      %p1133 = pneg %p555
      %p1134 = pneg %p552
      %p1135 = pneg %p576
      %p1136 = pneg %p573
      %p1137 = pneg %p597
      %p1138 = pneg %p594
      %p1139 = pneg %p618
      %p1140 = pneg %p615
      %p1141 = pneg %p639
      %p1142 = pneg %p636
      %p1143 = pneg %p660
      %p1144 = pneg %p657
      %p1145 = pneg %p681
      %p1146 = pneg %p678
      %p1147 = pneg %p702
      %p1148 = pneg %p699
      %p1149 = pneg %p723
      %p1150 = pneg %p720
      %p1151 = pneg %p744
      %p1152 = pneg %p741
      %p1153 = pneg %p765
      %p1154 = pneg %p762
      %p1155 = pneg %p786
      %p1156 = pneg %p783
      %p1157 = pneg %p807
      %p1158 = pneg %p804
      %p1159 = pneg %p828
      %p1160 = pneg %p825
      %p1161 = pneg %p849
      %p1162 = pneg %p846
      %p1163 = pneg %p870
      %p1164 = pneg %p867
      %p1165 = pneg %p891
      %p1166 = pneg %p888
      %p1167 = pneg %p912
      %p1168 = pneg %p909
      %p1169 = pneg %p938
      %p1170 = pneg %p935
      %p1171 = scmp.lt.s32.totalorder %s93, 1
      %s1172 = scalar_select %p1171, %s93, 1
      %s1173 = scalar_lea.vmem %s79, %s1172
      %p1174 = scmp.lt.s32.totalorder %s93, 1
      %s1175 = scalar_select %p1174, %s93, 1
      %s1176 = smul.addr %s1175, 4
      %s1177 = smul.addr %s1176, 8
      %s1178 = scalar_lea.vmem %s1, %s1177
      %p1179 = scmp.lt.s32.totalorder %s93, 1
      %s1180 = scalar_select %p1179, %s93, 1
      %s1181 = scalar_lea.vmem %s79, %s1180
      %v1183 = vld [vmem:[%s1178] sm:$0xff]
      %v1184 = vld [vmem:[%s1178 + $0x8] sm:$0xff]
      %v1185 = vld [vmem:[%s1178 + $0x10] sm:$0xff]
      %v1186 = vld [vmem:[%s1178 + $0x18] sm:$0xff]
      %vm1187 = vcmask 827392
      %vm1188 = vsmask.f32 256
      %vm1189 = vmand %vm1187, %vm1188
      %v1190 = vld [vmem:[#allocation2] sm:$0x1]
      %v1191 = vsel %vm1189, 0, %v1190
      %1192 = vst [vmem:[#allocation2] sm:$0x1] %v1191
      %vm1193 = vsmask.f32 7938
      %vm1194 = vmand %vm1187, %vm1193
      %v1195 = vld [vmem:[#allocation2 + $0x10] sm:$0x1]
      %v1196 = vsel %vm1194, 0, %v1195
      %1197 = vst [vmem:[#allocation2 + $0x10] sm:$0x1] %v1196
      %vm1198 = vcmask 19456
      %vm1199 = vmand %vm1198, %vm1193
      %v1200 = vld [vmem:[#allocation2] sm:$0xf]
      %v1201 = vsel %vm1199, 0, %v1200
      %1202 = vst [vmem:[#allocation2] sm:$0xf] %v1201
      %vm1203 = vcmask 19456
      %1204 = vst.msk [vmem:[#allocation2 + $0x4] sm:$0xf] %vm1203, 0
      %1205 = vst.msk [vmem:[#allocation2 + $0x8] sm:$0xf] %vm1203, 0
      %1206 = vst.msk [vmem:[#allocation2 + $0xc] sm:$0xf] %vm1203, 0
      %vm1207 = vcmask 16384
      %vm1208 = vmand %vm1207, %vm1188
      %v1209 = vld [vmem:[#allocation2 + $0x10] sm:$0x1]
      %v1210 = vsel %vm1208, 0, %v1209
      %1211 = vst [vmem:[#allocation2 + $0x10] sm:$0x1] %v1210
      %vm1212 = vcmask 831256
      %vm1213 = vmand %vm1212, %vm1193
      %v1214 = vld [vmem:[#allocation2] sm:$0xf]
      %v1215 = vsel %vm1213, 0, %v1214
      %1216 = vst [vmem:[#allocation2] sm:$0xf] %v1215
      %vm1217 = vcmask 831256
      %1218 = vst.msk [vmem:[#allocation2 + $0x4] sm:$0xf] %vm1217, 0
      %1219 = vst.msk [vmem:[#allocation2 + $0x8] sm:$0xf] %vm1217, 0
      %1220 = vst.msk [vmem:[#allocation2 + $0xc] sm:$0xf] %vm1217, 0
      %vm1221 = vcmask 828184
      %vm1222 = vmand %vm1221, %vm1188
      %v1223 = vld [vmem:[#allocation2 + $0x10] sm:$0x1]
      %v1224 = vsel %vm1222, 0, %v1223
      %1225 = vst [vmem:[#allocation2 + $0x10] sm:$0x1] %v1224
      %v1226 = vpack.c.bf16 %v1184, %v1183
      %v1227 = vpack.c.bf16 %v1186, %v1185
      %v1230 = vunpack.c.l.b16 %v1226
      %v1231 = vunpack.c.h.b16 %v1226
      %v1232 = vunpack.c.l.b16 %v1227
      %v1233 = vunpack.c.h.b16 %v1227
      %v1234 = vpack.c.b16 %v1230, %v1230
      %v1235 = vpack.c.b16 %v1231, %v1231
      %v1236 = vpack.c.b16 %v1232, %v1232
      %v1237 = vpack.c.b16 %v1233, %v1233
      %vm1238 = vsmask.f32 4368
      %vm1239 = vmor %vm1188, %vm1238
      %v1241 = vshrl.u32 %v1234, 16
      %v1243 = vrot.slane %v1241, 7
      %v1244 = vshll.u32 %v1234, 16
      %v1246 = vor.u32 %v1243, %v1244
      %v1247 = vrot.slane %v1243, 4
      %v1249 = vshrl.u32 %v1235, 16
      %v1251 = vrot.slane %v1249, 7
      %v1252 = vshll.u32 %v1235, 16
      %v1254 = vor.u32 %v1251, %v1252
      %v1255 = vsel %vm1239, %v1247, %v1254
      %v1256 = vrot.slane %v1251, 4
      %v1258 = vshrl.u32 %v1236, 16
      %v1260 = vrot.slane %v1258, 7
      %v1261 = vshll.u32 %v1236, 16
      %v1263 = vor.u32 %v1260, %v1261
      %v1264 = vsel %vm1239, %v1256, %v1263
      %v1265 = vrot.slane %v1260, 4
      %v1267 = vshrl.u32 %v1237, 16
      %v1269 = vrot.slane %v1267, 7
      %v1270 = vshll.u32 %v1237, 16
      %v1272 = vor.u32 %v1269, %v1270
      %v1273 = vsel %vm1239, %v1265, %v1272
      %v1274 = vrot.slane %v1269, 4
      %1275 = vrot.lane.b32.xlu0 %v1246, 3
      %v1276 = vpop.permute.xlu0 %1275
      %1277 = vrot.lane.b32.xlu0 %v1255, 3
      %v1278 = vpop.permute.xlu0 %1277
      %1279 = vrot.lane.b32.xlu0 %v1264, 3
      %v1280 = vpop.permute.xlu0 %1279
      %1281 = vrot.lane.b32.xlu0 %v1273, 3
      %v1282 = vpop.permute.xlu0 %1281
      %1283 = vrot.lane.b32.xlu0 %v1274, 3
      %v1284 = vpop.permute.xlu0 %1283
      %vm1290 = vcmask 805912
      %vm1291 = vmand %vm1290, %vm1193
      %v1292 = vld [vmem:[#allocation2] sm:$0xf]
      %v1293 = vsel %vm1291, %v1276, %v1292
      %1294 = vst [vmem:[#allocation2] sm:$0xf] %v1293
      %vm1295 = vcmask 805912
      %1296 = vst.msk [vmem:[#allocation2 + $0x4] sm:$0xf] %vm1295, %v1278
      %1297 = vst.msk [vmem:[#allocation2 + $0x8] sm:$0xf] %vm1295, %v1280
      %1298 = vst.msk [vmem:[#allocation2 + $0xc] sm:$0xf] %vm1295, %v1282
      %vm1299 = vcmask 802840
      %vm1300 = vmand %vm1299, %vm1188
      %v1301 = vld [vmem:[#allocation2 + $0x10] sm:$0x1]
      %v1302 = vsel %vm1300, %v1284, %v1301
      %1303 = vst [vmem:[#allocation2 + $0x10] sm:$0x1] %v1302
      %v1304 = vld [vmem:[#allocation2] sm:$0xf]
      %v1305 = vld [vmem:[#allocation2 + $0x4] sm:$0xf]
      %v1306 = vld [vmem:[#allocation2 + $0x8] sm:$0xf]
      %v1307 = vld [vmem:[#allocation2 + $0xc] sm:$0xf]
      %v1308 = vld [vmem:[%s3] sm:$0xf]
      %v1309 = vld [vmem:[%s3 + $0x4] sm:$0xf]
      %v1310 = vld [vmem:[%s3 + $0x8] sm:$0xf]
      %v1311 = vld [vmem:[%s3 + $0xc] sm:$0xf]
      %v1312 = vld [vmem:[%s3 + $0x10] sm:$0xf]
      %v1313 = vld [vmem:[%s3 + $0x14] sm:$0xf]
      %v1314 = vld [vmem:[%s3 + $0x18] sm:$0xf]
      %v1315 = vld [vmem:[%s3 + $0x1c] sm:$0xf]
      %v1316 = vld [vmem:[%s3 + $0x20] sm:$0xf]
      %v1317 = vld [vmem:[%s3 + $0x24] sm:$0xf]
      %v1318 = vld [vmem:[%s3 + $0x28] sm:$0xf]
      %v1319 = vld [vmem:[%s3 + $0x2c] sm:$0xf]
      %v1320 = vld [vmem:[%s3 + $0x30] sm:$0x7]
      %v1321 = vld [vmem:[#allocation2 + $0x10] sm:$0x1]
      %s1322 = scalar_lea.vmem %s3, 52
      %v1323 = vld [vmem:[%s1322] sm:$0xf]
      %v1324 = vld [vmem:[%s1322 + $0x4] sm:$0xf]
      %v1325 = vld [vmem:[%s1322 + $0x8] sm:$0xf]
      %v1326 = vld [vmem:[%s1322 + $0xc] sm:$0xf]
      %v1327 = vld [vmem:[%s1322 + $0x10] sm:$0xf]
      %v1328 = vld [vmem:[%s1322 + $0x14] sm:$0xf]
      %v1329 = vld [vmem:[%s1322 + $0x18] sm:$0xf]
      %v1330 = vld [vmem:[%s1322 + $0x1c] sm:$0xf]
      %v1331 = vld [vmem:[%s1322 + $0x20] sm:$0xf]
      %v1332 = vld [vmem:[%s1322 + $0x24] sm:$0xf]
      %v1333 = vld [vmem:[%s1322 + $0x28] sm:$0xf]
      %v1334 = vld [vmem:[%s1322 + $0x2c] sm:$0xf]
      %v1335 = vld [vmem:[%s1322 + $0x30] sm:$0x7]
      %v1341 = vunpack.c.l.b16 %v1304
      %v1342 = vunpack.c.l.b16 %v1305
      %v1343 = vunpack.c.l.b16 %v1306
      %v1344 = vunpack.c.l.b16 %v1307
      %v1345 = vunpack.c.l.b16 %v1321
      %v1346 = vpack.c.b16 %v1342, %v1341
      %v1347 = vpack.c.b16 %v1344, %v1343
      %v1348 = vpack.c.b16 %v1345, %v1345
      %vm1349 = vsmask.f32 7424
      %v1351 = vshrl.u32 %v1346, 16
      %v1353 = vshll.u32 %v1346, 16
      %v1355 = vrot.slane %v1353, 1
      %v1356 = vor.u32 %v1351, %v1355
      %v1358 = vshll.u32 %v1347, 16
      %v1360 = vrot.slane %v1358, 1
      %v1361 = vsel %vm1349, %v1356, %v1360
      %v1362 = vshrl.u32 %v1347, 16
      %v1364 = vor.u32 %v1362, %v1360
      %v1366 = vshll.u32 %v1348, 16
      %v1368 = vrot.slane %v1366, 1
      %v1369 = vsel %vm1349, %v1364, %v1368
      %v1383 = vunpack.c.l.b16 %v1323
      %v1384 = vunpack.c.l.b16 %v1324
      %v1385 = vunpack.c.l.b16 %v1325
      %v1386 = vunpack.c.l.b16 %v1326
      %v1387 = vunpack.c.l.b16 %v1327
      %v1388 = vunpack.c.l.b16 %v1328
      %v1389 = vunpack.c.l.b16 %v1329
      %v1390 = vunpack.c.l.b16 %v1330
      %v1391 = vunpack.c.l.b16 %v1331
      %v1392 = vunpack.c.l.b16 %v1332
      %v1393 = vunpack.c.l.b16 %v1333
      %v1394 = vunpack.c.l.b16 %v1334
      %v1395 = vunpack.c.l.b16 %v1335
      %v1396 = vpack.c.b16 %v1384, %v1383
      %v1397 = vpack.c.b16 %v1386, %v1385
      %v1398 = vpack.c.b16 %v1388, %v1387
      %v1399 = vpack.c.b16 %v1390, %v1389
      %v1400 = vpack.c.b16 %v1392, %v1391
      %v1401 = vpack.c.b16 %v1394, %v1393
      %v1402 = vpack.c.b16 %v1395, %v1395
      %vm1409 = vcmask 834560
      %v1411 = vsel %vm1409, %v1361, 0
      %v1414 = vsel %vm1409, %v1369, 0
      %vm1416 = vcmask 1042432
      %v1418 = vsel %vm1416, %v1402, 0
      %1420 = vmatprep.subr.bf16.mxu0 0
      %1421 = vmatpush1.bf16.msra.mxu0 %v1396
      %1422 = vmatprep.subr.bf16.mxu0 0
      %1423 = vmatpush1.bf16.msra.mxu0 %v1397
      %1424 = vmatprep.subr.bf16.mxu0 0
      %1425 = vmatpush1.bf16.msra.mxu0 %v1398
      %1426 = vmatprep.subr.bf16.mxu0 0
      %1427 = vmatpush1.bf16.msra.mxu0 %v1399
      %1428 = vmatprep.subr.bf16.mxu0 0
      %1429 = vmatpush1.bf16.msra.mxu0 %v1400
      %1430 = vmatprep.subr.bf16.mxu0 0
      %1431 = vmatpush1.bf16.msra.mxu0 %v1401
      %1432 = vmatprep.subr.bf16.mxu0 0
      %1433 = vmatpush1.bf16.msra.mxu0 %v1418
      %1434 = vmatprep.subr.bf16.mxu0 0
      %1435 = vmatpush1.bf16.msra.mxu0 0
      %1436 = vmatprep.subr.bf16.mxu0 0
      %1437 = vmatpush1.bf16.msra.mxu0 0
      %1438 = vmatprep.subr.bf16.mxu0 0
      %1439 = vmatpush1.bf16.msra.mxu0 0
      %1440 = vmatprep.subr.bf16.mxu0 0
      %1441 = vmatpush1.bf16.msra.mxu0 0
      %1442 = vmatprep.subr.bf16.mxu0 0
      %1443 = vmatpush1.bf16.msra.mxu0 0
      %1444 = vmatprep.subr.bf16.mxu0 0
      %1445 = vmatpush1.bf16.msra.mxu0 0
      %1446 = vmatprep.subr.bf16.mxu0 0
      %1447 = vmatpush1.bf16.msra.mxu0 0
      %1448 = vmatprep.subr.bf16.mxu0 0
      %1449 = vmatpush1.bf16.msra.mxu0 0
      %1450 = vmatprep.subr.bf16.mxu0 0
      %1451 = vmatpush1.bf16.msra.mxu0 0
      %1452 = vmatprep.mubr.bf16.mxu0 0
      %1453 = vmatmul.mubr.bf16.gmra.mrb[0].mxu0 %v1411
      %v1454 = vpop.f32.mrb[0].mxu0
      %v1455 = vadd.f32 0.0, %v1454
      %v1456 = vpop.f32.mrb[0].mxu0
      %v1457 = vpop.f32.mrb[0].mxu0
      %v1458 = vadd.f32 0.0, %v1457
      %v1459 = vpop.f32.mrb[0].mxu0
      %1460 = vmatprep.mubr.bf16.mxu0 0
      %1461 = vmatmul.mubr.bf16.gmra.mrb[0].mxu0 %v1414
      %v1462 = vpop.f32.mrb[0].mxu0
      %v1463 = vadd.f32 0.0, %v1462
      %v1464 = vpop.f32.mrb[0].mxu0
      %v1465 = vpop.f32.mrb[0].mxu0
      %v1466 = vadd.f32 0.0, %v1465
      %v1467 = vpop.f32.mrb[0].mxu0
      %1468 = vdwg.mxu0
      %v1482 = vunpack.c.l.b16 %v1308
      %v1483 = vunpack.c.l.b16 %v1309
      %v1484 = vunpack.c.l.b16 %v1310
      %v1485 = vunpack.c.l.b16 %v1311
      %v1486 = vunpack.c.l.b16 %v1312
      %v1487 = vunpack.c.l.b16 %v1313
      %v1488 = vunpack.c.l.b16 %v1314
      %v1489 = vunpack.c.l.b16 %v1315
      %v1490 = vunpack.c.l.b16 %v1316
      %v1491 = vunpack.c.l.b16 %v1317
      %v1492 = vunpack.c.l.b16 %v1318
      %v1493 = vunpack.c.l.b16 %v1319
      %v1494 = vunpack.c.l.b16 %v1320
      %v1495 = vpack.c.b16 %v1483, %v1482
      %v1496 = vpack.c.b16 %v1485, %v1484
      %v1497 = vpack.c.b16 %v1487, %v1486
      %v1498 = vpack.c.b16 %v1489, %v1488
      %v1499 = vpack.c.b16 %v1491, %v1490
      %v1500 = vpack.c.b16 %v1493, %v1492
      %v1501 = vpack.c.b16 %v1494, %v1494
      %v1508 = vsel %vm1409, %v1346, 0
      %v1510 = vsel %vm1409, %v1347, 0
      %v1513 = vsel %vm1416, %v1501, 0
      %1515 = vmatprep.subr.bf16.mxu0 0
      %1516 = vmatpush1.bf16.msra.mxu0 %v1495
      %1517 = vmatprep.subr.bf16.mxu0 0
      %1518 = vmatpush1.bf16.msra.mxu0 %v1496
      %1519 = vmatprep.subr.bf16.mxu0 0
      %1520 = vmatpush1.bf16.msra.mxu0 %v1497
      %1521 = vmatprep.subr.bf16.mxu0 0
      %1522 = vmatpush1.bf16.msra.mxu0 %v1498
      %1523 = vmatprep.subr.bf16.mxu0 0
      %1524 = vmatpush1.bf16.msra.mxu0 %v1499
      %1525 = vmatprep.subr.bf16.mxu0 0
      %1526 = vmatpush1.bf16.msra.mxu0 %v1500
      %1527 = vmatprep.subr.bf16.mxu0 0
      %1528 = vmatpush1.bf16.msra.mxu0 %v1513
      %1529 = vmatprep.subr.bf16.mxu0 0
      %1530 = vmatpush1.bf16.msra.mxu0 0
      %1531 = vmatprep.subr.bf16.mxu0 0
      %1532 = vmatpush1.bf16.msra.mxu0 0
      %1533 = vmatprep.subr.bf16.mxu0 0
      %1534 = vmatpush1.bf16.msra.mxu0 0
      %1535 = vmatprep.subr.bf16.mxu0 0
      %1536 = vmatpush1.bf16.msra.mxu0 0
      %1537 = vmatprep.subr.bf16.mxu0 0
      %1538 = vmatpush1.bf16.msra.mxu0 0
      %1539 = vmatprep.subr.bf16.mxu0 0
      %1540 = vmatpush1.bf16.msra.mxu0 0
      %1541 = vmatprep.subr.bf16.mxu0 0
      %1542 = vmatpush1.bf16.msra.mxu0 0
      %1543 = vmatprep.subr.bf16.mxu0 0
      %1544 = vmatpush1.bf16.msra.mxu0 0
      %1545 = vmatprep.subr.bf16.mxu0 0
      %1546 = vmatpush1.bf16.msra.mxu0 0
      %1547 = vmatprep.mubr.bf16.mxu0 0
      %1548 = vmatmul.mubr.bf16.gmra.mrb[0].mxu0 %v1508
      %v1549 = vpop.f32.mrb[0].mxu0
      %v1550 = vadd.f32 %v1455, %v1549
      %v1551 = vpop.f32.mrb[0].mxu0
      %v1552 = vpop.f32.mrb[0].mxu0
      %v1553 = vadd.f32 %v1458, %v1552
      %v1554 = vpop.f32.mrb[0].mxu0
      %1555 = vmatprep.mubr.bf16.mxu0 0
      %1556 = vmatmul.mubr.bf16.gmra.mrb[0].mxu0 %v1510
      %v1557 = vpop.f32.mrb[0].mxu0
      %v1558 = vadd.f32 %v1463, %v1557
      %v1559 = vpop.f32.mrb[0].mxu0
      %v1560 = vpop.f32.mrb[0].mxu0
      %v1561 = vadd.f32 %v1466, %v1560
      %v1562 = vpop.f32.mrb[0].mxu0
      %1563 = vdwg.mxu0
      %v1564 = vld [vmem:[#allocation2] sm:$0xe]
      %s1565 = scalar_lea.vmem %s3, 104
      %v1566 = vld [vmem:[%s1565] sm:$0xf]
      %v1567 = vld [vmem:[%s1565 + $0x4] sm:$0xf]
      %v1568 = vld [vmem:[%s1565 + $0x8] sm:$0xf]
      %v1569 = vld [vmem:[%s1565 + $0xc] sm:$0xf]
      %v1570 = vld [vmem:[%s1565 + $0x10] sm:$0xf]
      %v1571 = vld [vmem:[%s1565 + $0x14] sm:$0xf]
      %v1572 = vld [vmem:[%s1565 + $0x18] sm:$0xf]
      %v1573 = vld [vmem:[%s1565 + $0x1c] sm:$0xf]
      %v1574 = vld [vmem:[%s1565 + $0x20] sm:$0xf]
      %v1575 = vld [vmem:[%s1565 + $0x24] sm:$0xf]
      %v1576 = vld [vmem:[%s1565 + $0x28] sm:$0xf]
      %v1577 = vld [vmem:[%s1565 + $0x2c] sm:$0xf]
      %v1578 = vld [vmem:[%s1565 + $0x30] sm:$0x7]
      %v1580 = vunpack.c.l.b16 %v1564
      %v1581 = vpack.c.b16 %v1342, %v1580
      %vm1582 = vcmask 1046528
      %v1583 = vrot.slane %v1581, 1
      %v1584 = vrot.slane %v1347, 1
      %v1585 = vsel %vm1582, %v1583, %v1584
      %v1586 = vrot.slane %v1348, 1
      %v1587 = vsel %vm1582, %v1584, %v1586
      %v1601 = vunpack.c.l.b16 %v1566
      %v1602 = vunpack.c.l.b16 %v1567
      %v1603 = vunpack.c.l.b16 %v1568
      %v1604 = vunpack.c.l.b16 %v1569
      %v1605 = vunpack.c.l.b16 %v1570
      %v1606 = vunpack.c.l.b16 %v1571
      %v1607 = vunpack.c.l.b16 %v1572
      %v1608 = vunpack.c.l.b16 %v1573
      %v1609 = vunpack.c.l.b16 %v1574
      %v1610 = vunpack.c.l.b16 %v1575
      %v1611 = vunpack.c.l.b16 %v1576
      %v1612 = vunpack.c.l.b16 %v1577
      %v1613 = vunpack.c.l.b16 %v1578
      %v1614 = vpack.c.b16 %v1602, %v1601
      %v1615 = vpack.c.b16 %v1604, %v1603
      %v1616 = vpack.c.b16 %v1606, %v1605
      %v1617 = vpack.c.b16 %v1608, %v1607
      %v1618 = vpack.c.b16 %v1610, %v1609
      %v1619 = vpack.c.b16 %v1612, %v1611
      %v1620 = vpack.c.b16 %v1613, %v1613
      %v1628 = vsel %vm1409, %v1585, 0
      %v1631 = vsel %vm1409, %v1587, 0
      %v1634 = vsel %vm1416, %v1620, 0
      %1636 = vmatprep.subr.bf16.mxu0 0
      %1637 = vmatpush1.bf16.msra.mxu0 %v1614
      %1638 = vmatprep.subr.bf16.mxu0 0
      %1639 = vmatpush1.bf16.msra.mxu0 %v1615
      %1640 = vmatprep.subr.bf16.mxu0 0
      %1641 = vmatpush1.bf16.msra.mxu0 %v1616
      %1642 = vmatprep.subr.bf16.mxu0 0
      %1643 = vmatpush1.bf16.msra.mxu0 %v1617
      %1644 = vmatprep.subr.bf16.mxu0 0
      %1645 = vmatpush1.bf16.msra.mxu0 %v1618
      %1646 = vmatprep.subr.bf16.mxu0 0
      %1647 = vmatpush1.bf16.msra.mxu0 %v1619
      %1648 = vmatprep.subr.bf16.mxu0 0
      %1649 = vmatpush1.bf16.msra.mxu0 %v1634
      %1650 = vmatprep.subr.bf16.mxu0 0
      %1651 = vmatpush1.bf16.msra.mxu0 0
      %1652 = vmatprep.subr.bf16.mxu0 0
      %1653 = vmatpush1.bf16.msra.mxu0 0
      %1654 = vmatprep.subr.bf16.mxu0 0
      %1655 = vmatpush1.bf16.msra.mxu0 0
      %1656 = vmatprep.subr.bf16.mxu0 0
      %1657 = vmatpush1.bf16.msra.mxu0 0
      %1658 = vmatprep.subr.bf16.mxu0 0
      %1659 = vmatpush1.bf16.msra.mxu0 0
      %1660 = vmatprep.subr.bf16.mxu0 0
      %1661 = vmatpush1.bf16.msra.mxu0 0
      %1662 = vmatprep.subr.bf16.mxu0 0
      %1663 = vmatpush1.bf16.msra.mxu0 0
      %1664 = vmatprep.subr.bf16.mxu0 0
      %1665 = vmatpush1.bf16.msra.mxu0 0
      %1666 = vmatprep.subr.bf16.mxu0 0
      %1667 = vmatpush1.bf16.msra.mxu0 0
      %1668 = vmatprep.mubr.bf16.mxu0 0
      %1669 = vmatmul.mubr.bf16.gmra.mrb[0].mxu0 %v1628
      %v1670 = vpop.f32.mrb[0].mxu0
      %v1671 = vadd.f32 0.0, %v1670
      %v1672 = vpop.f32.mrb[0].mxu0
      %v1673 = vpop.f32.mrb[0].mxu0
      %v1674 = vadd.f32 0.0, %v1673
      %v1675 = vpop.f32.mrb[0].mxu0
      %1676 = vmatprep.mubr.bf16.mxu0 0
      %1677 = vmatmul.mubr.bf16.gmra.mrb[0].mxu0 %v1631
      %v1678 = vpop.f32.mrb[0].mxu0
      %v1679 = vadd.f32 0.0, %v1678
      %v1680 = vpop.f32.mrb[0].mxu0
      %v1681 = vpop.f32.mrb[0].mxu0
      %v1682 = vadd.f32 0.0, %v1681
      %v1683 = vpop.f32.mrb[0].mxu0
      %1684 = vdwg.mxu0
      %v1685 = vadd.f32 %v1550, %v1671
      %v1686 = vadd.f32 %v1553, %v1674
      %v1687 = vadd.f32 %v1558, %v1679
      %v1688 = vadd.f32 %v1561, %v1682
      %v1689 = vld [vmem:[%s5] sm:$0x1]
      %v1691 = vlaneseq
      %v1692 = vshrl.u32 %v1691, 7
      %v1693 = vsub.s32 0, %v1692
      %v1694 = vrot.slane %v1689, %v1693
      %v1696 = vadd.f32 %v1685, %v1694
      %v1697 = vadd.f32 %v1686, %v1694
      %v1698 = vadd.f32 %v1687, %v1694
      %v1699 = vadd.f32 %v1688, %v1694
      %vm1700 = vcmask 1040384
      %vm1701 = vmand %vm1700, %vm1188
      %vm1702 = vcmask 61444
      %vm1703 = vsmask.f32 4352
      %vm1704 = vmand %vm1702, %vm1703
      %vm1705 = vmor %vm1704, %vm1701
      %v1706 = vld [vmem:[#allocation3] sm:$0x11]
      %v1707 = vsel %vm1705, 0, %v1706
      %1708 = vst [vmem:[#allocation3] sm:$0x11] %v1707
      %vm1709 = vmand %vm1700, %vm1193
      %vm1710 = vsmask.f32 7954
      %vm1711 = vmand %vm1702, %vm1710
      %vm1712 = vmor %vm1711, %vm1709
      %v1713 = vld [vmem:[#allocation3 + $0x20] sm:$0x11]
      %v1714 = vsel %vm1712, 0, %v1713
      %1715 = vst [vmem:[#allocation3 + $0x20] sm:$0x11] %v1714
      %vm1716 = vcmask 27648
      %vm1717 = vmand %vm1716, %vm1193
      %v1718 = vld [vmem:[#allocation3] sm:$0xf]
      %v1719 = vsel %vm1717, 0, %v1718
      %1720 = vst [vmem:[#allocation3] sm:$0xf] %v1719
      %vm1721 = vcmask 27648
      %1722 = vst.msk [vmem:[#allocation3 + $0x8] sm:$0xf] %vm1721, 0
      %1723 = vst.msk [vmem:[#allocation3 + $0x10] sm:$0xf] %vm1721, 0
      %1724 = vst.msk [vmem:[#allocation3 + $0x18] sm:$0xf] %vm1721, 0
      %vm1725 = vcmask 24576
      %vm1726 = vmand %vm1725, %vm1188
      %v1727 = vld [vmem:[#allocation3 + $0x20] sm:$0x1]
      %v1728 = vsel %vm1726, 0, %v1727
      %1729 = vst [vmem:[#allocation3 + $0x20] sm:$0x1] %v1728
      %vm1730 = vcmask 60448
      %vm1731 = vmand %vm1730, %vm1193
      %v1732 = vld [vmem:[#allocation3 + $0x4] sm:$0xf]
      %v1733 = vsel %vm1731, 0, %v1732
      %1734 = vst [vmem:[#allocation3 + $0x4] sm:$0xf] %v1733
      %vm1735 = vcmask 60448
      %1736 = vst.msk [vmem:[#allocation3 + $0xc] sm:$0xf] %vm1735, 0
      %1737 = vst.msk [vmem:[#allocation3 + $0x14] sm:$0xf] %vm1735, 0
      %1738 = vst.msk [vmem:[#allocation3 + $0x1c] sm:$0xf] %vm1735, 0
      %vm1739 = vcmask 57376
      %vm1740 = vmand %vm1739, %vm1188
      %v1741 = vld [vmem:[#allocation3 + $0x24] sm:$0x1]
      %v1742 = vsel %vm1740, 0, %v1741
      %1743 = vst [vmem:[#allocation3 + $0x24] sm:$0x1] %v1742
      %v1744 = vmax.f32 %v1696, 0.0
      %v1745 = vmax.f32 %v1697, 0.0
      %v1746 = vmax.f32 %v1698, 0.0
      %v1747 = vmax.f32 %v1699, 0.0
      %v1748 = vpack.c.bf16 %v1745, %v1744
      %v1749 = vpack.c.bf16 %v1747, %v1746
      %v1752 = vunpack.c.l.b16 %v1748
      %v1753 = vunpack.c.h.b16 %v1748
      %v1754 = vunpack.c.l.b16 %v1749
      %v1755 = vunpack.c.h.b16 %v1749
      %v1756 = vpack.c.b16 %v1752, %v1752
      %v1757 = vpack.c.b16 %v1753, %v1753
      %v1758 = vpack.c.b16 %v1754, %v1754
      %v1759 = vpack.c.b16 %v1755, %v1755
      %v1761 = vshrl.u32 %v1756, 16
      %v1763 = vrot.slane %v1761, 7
      %v1764 = vshll.u32 %v1756, 16
      %v1766 = vor.u32 %v1763, %v1764
      %v1767 = vrot.slane %v1763, 4
      %v1769 = vshrl.u32 %v1757, 16
      %v1771 = vrot.slane %v1769, 7
      %v1772 = vshll.u32 %v1757, 16
      %v1774 = vor.u32 %v1771, %v1772
      %v1775 = vsel %vm1239, %v1767, %v1774
      %v1776 = vrot.slane %v1771, 4
      %v1778 = vshrl.u32 %v1758, 16
      %v1780 = vrot.slane %v1778, 7
      %v1781 = vshll.u32 %v1758, 16
      %v1783 = vor.u32 %v1780, %v1781
      %v1784 = vsel %vm1239, %v1776, %v1783
      %v1785 = vrot.slane %v1780, 4
      %v1787 = vshrl.u32 %v1759, 16
      %v1789 = vrot.slane %v1787, 7
      %v1790 = vshll.u32 %v1759, 16
      %v1792 = vor.u32 %v1789, %v1790
      %v1793 = vsel %vm1239, %v1785, %v1792
      %v1794 = vrot.slane %v1789, 4
      %1795 = vrot.lane.b32.xlu0 %v1766, 4
      %v1796 = vpop.permute.xlu0 %1795
      %1797 = vrot.lane.b32.xlu0 %v1775, 4
      %v1798 = vpop.permute.xlu0 %1797
      %1799 = vrot.lane.b32.xlu0 %v1784, 4
      %v1800 = vpop.permute.xlu0 %1799
      %1801 = vrot.lane.b32.xlu0 %v1793, 4
      %v1802 = vpop.permute.xlu0 %1801
      %1803 = vrot.lane.b32.xlu0 %v1794, 4
      %v1804 = vpop.permute.xlu0 %1803
      %v1805 = vrot.slane %v1796, 4
      %v1806 = vrot.slane %v1798, 4
      %v1807 = vrot.slane %v1800, 4
      %v1808 = vrot.slane %v1802, 4
      %v1809 = vrot.slane %v1804, 4
      %vm1810 = vcmask 31744
      %v1811 = vsel %vm1810, %v1805, %v1796
      %v1812 = vsel %vm1810, %v1806, %v1798
      %v1813 = vsel %vm1810, %v1807, %v1800
      %v1814 = vsel %vm1810, %v1808, %v1802
      %v1815 = vsel %vm1810, %v1809, %v1804
      %vm1821 = vcmask 1043488
      %vm1822 = vmand %vm1821, %vm1193
      %vm1823 = vcmask 31748
      %vm1824 = vmand %vm1823, %vm1710
      %vm1825 = vmor %vm1824, %vm1822
      %v1826 = vld [vmem:[#allocation3] sm:$0xff]
      %v1827 = vsel %vm1825, %v1811, %v1826
      %1828 = vst [vmem:[#allocation3] sm:$0xff] %v1827
      %vm1829 = vcmask 1043488
      %vm1830 = vcmask 31748
      %vm1831 = vmor %vm1830, %vm1829
      %1832 = vst.msk [vmem:[#allocation3 + $0x8] sm:$0xff] %vm1831, %v1812
      %1833 = vst.msk [vmem:[#allocation3 + $0x10] sm:$0xff] %vm1831, %v1813
      %1834 = vst.msk [vmem:[#allocation3 + $0x18] sm:$0xff] %vm1831, %v1814
      %vm1835 = vcmask 1040416
      %vm1836 = vmand %vm1835, %vm1188
      %vm1837 = vcmask 28676
      %vm1838 = vmand %vm1837, %vm1703
      %vm1839 = vmor %vm1838, %vm1836
      %v1840 = vld [vmem:[#allocation3 + $0x20] sm:$0x11]
      %v1841 = vsel %vm1839, %v1815, %v1840
      %1842 = vst [vmem:[#allocation3 + $0x20] sm:$0x11] %v1841
      %v1843 = vld [vmem:[#allocation3] sm:$0xff]
      %v1844 = vld [vmem:[#allocation3 + $0x8] sm:$0xff]
      %v1845 = vld [vmem:[#allocation3 + $0x10] sm:$0xff]
      %v1846 = vld [vmem:[#allocation3 + $0x18] sm:$0xff]
      %v1847 = vld [vmem:[%s7] sm:$0xf]
      %v1848 = vld [vmem:[%s7 + $0x4] sm:$0xf]
      %v1849 = vld [vmem:[%s7 + $0x8] sm:$0xf]
      %v1850 = vld [vmem:[%s7 + $0xc] sm:$0xf]
      %v1851 = vld [vmem:[%s7 + $0x10] sm:$0xf]
      %v1852 = vld [vmem:[%s7 + $0x14] sm:$0xf]
      %v1853 = vld [vmem:[%s7 + $0x18] sm:$0xf]
      %v1854 = vld [vmem:[%s7 + $0x1c] sm:$0xf]
      %v1855 = vld [vmem:[%s7 + $0x20] sm:$0xf]
      %v1856 = vld [vmem:[%s7 + $0x24] sm:$0xf]
      %v1857 = vld [vmem:[%s7 + $0x28] sm:$0xf]
      %v1858 = vld [vmem:[%s7 + $0x2c] sm:$0xf]
      %v1859 = vld [vmem:[%s7 + $0x30] sm:$0xf]
      %v1860 = vld [vmem:[%s7 + $0x34] sm:$0xf]
      %v1861 = vld [vmem:[%s7 + $0x38] sm:$0xf]
      %v1862 = vld [vmem:[%s7 + $0x3c] sm:$0xf]
      %v1863 = vld [vmem:[%s7 + $0x40] sm:$0xf]
      %v1864 = vld [vmem:[#allocation3 + $0x20] sm:$0x11]
      %s1865 = scalar_lea.vmem %s7, 68
      %v1866 = vld [vmem:[%s1865] sm:$0xf]
      %v1867 = vld [vmem:[%s1865 + $0x4] sm:$0xf]
      %v1868 = vld [vmem:[%s1865 + $0x8] sm:$0xf]
      %v1869 = vld [vmem:[%s1865 + $0xc] sm:$0xf]
      %v1870 = vld [vmem:[%s1865 + $0x10] sm:$0xf]
      %v1871 = vld [vmem:[%s1865 + $0x14] sm:$0xf]
      %v1872 = vld [vmem:[%s1865 + $0x18] sm:$0xf]
      %v1873 = vld [vmem:[%s1865 + $0x1c] sm:$0xf]
      %v1874 = vld [vmem:[%s1865 + $0x20] sm:$0xf]
      %v1875 = vld [vmem:[%s1865 + $0x24] sm:$0xf]
      %v1876 = vld [vmem:[%s1865 + $0x28] sm:$0xf]
      %v1877 = vld [vmem:[%s1865 + $0x2c] sm:$0xf]
      %v1878 = vld [vmem:[%s1865 + $0x30] sm:$0xf]
      %v1879 = vld [vmem:[%s1865 + $0x34] sm:$0xf]
      %v1880 = vld [vmem:[%s1865 + $0x38] sm:$0xf]
      %v1881 = vld [vmem:[%s1865 + $0x3c] sm:$0xf]
      %v1882 = vld [vmem:[%s1865 + $0x40] sm:$0xf]
      %v1888 = vunpack.c.l.b16 %v1843
      %v1889 = vunpack.c.h.b16 %v1843
      %v1890 = vunpack.c.l.b16 %v1844
      %v1891 = vunpack.c.h.b16 %v1844
      %v1892 = vunpack.c.l.b16 %v1845
      %v1893 = vunpack.c.h.b16 %v1845
      %v1894 = vunpack.c.l.b16 %v1846
      %v1895 = vunpack.c.h.b16 %v1846
      %v1896 = vunpack.c.l.b16 %v1864
      %v1897 = vunpack.c.h.b16 %v1864
      %v1898 = vpack.c.b16 %v1890, %v1888
      %v1899 = vpack.c.b16 %v1891, %v1889
      %v1900 = vpack.c.b16 %v1894, %v1892
      %v1901 = vpack.c.b16 %v1895, %v1893
      %v1902 = vpack.c.b16 %v1896, %v1896
      %v1903 = vpack.c.b16 %v1897, %v1897
      %v1905 = vshrl.u32 %v1898, 16
      %v1907 = vshll.u32 %v1898, 16
      %v1909 = vrot.slane %v1907, 1
      %v1910 = vor.u32 %v1905, %v1909
      %v1912 = vshll.u32 %v1900, 16
      %v1914 = vrot.slane %v1912, 1
      %v1915 = vsel %vm1349, %v1910, %v1914
      %v1917 = vshrl.u32 %v1899, 16
      %v1919 = vshll.u32 %v1899, 16
      %v1921 = vrot.slane %v1919, 1
      %v1922 = vor.u32 %v1917, %v1921
      %v1924 = vshll.u32 %v1901, 16
      %v1926 = vrot.slane %v1924, 1
      %v1927 = vsel %vm1349, %v1922, %v1926
      %v1928 = vshrl.u32 %v1900, 16
      %v1930 = vor.u32 %v1928, %v1914
      %v1932 = vshll.u32 %v1902, 16
      %v1934 = vrot.slane %v1932, 1
      %v1935 = vsel %vm1349, %v1930, %v1934
      %v1936 = vshrl.u32 %v1901, 16
      %v1938 = vor.u32 %v1936, %v1926
      %v1940 = vshll.u32 %v1903, 16
      %v1942 = vrot.slane %v1940, 1
      %v1943 = vsel %vm1349, %v1938, %v1942
      %v1963 = vunpack.c.l.b16 %v1866
      %v1964 = vunpack.c.l.b16 %v1867
      %v1965 = vunpack.c.l.b16 %v1868
      %v1966 = vunpack.c.l.b16 %v1869
      %v1967 = vunpack.c.l.b16 %v1870
      %v1968 = vunpack.c.l.b16 %v1871
      %v1969 = vunpack.c.l.b16 %v1872
      %v1970 = vunpack.c.l.b16 %v1873
      %v1971 = vunpack.c.l.b16 %v1874
      %v1972 = vunpack.c.l.b16 %v1875
      %v1973 = vunpack.c.l.b16 %v1876
      %v1974 = vunpack.c.l.b16 %v1877
      %v1975 = vunpack.c.l.b16 %v1878
      %v1976 = vunpack.c.l.b16 %v1879
      %v1977 = vunpack.c.l.b16 %v1880
      %v1978 = vunpack.c.l.b16 %v1881
      %v1979 = vunpack.c.l.b16 %v1882
      %v1980 = vpack.c.b16 %v1964, %v1963
      %v1981 = vpack.c.b16 %v1966, %v1965
      %v1982 = vpack.c.b16 %v1968, %v1967
      %v1983 = vpack.c.b16 %v1970, %v1969
      %v1984 = vpack.c.b16 %v1972, %v1971
      %v1985 = vpack.c.b16 %v1974, %v1973
      %v1986 = vpack.c.b16 %v1976, %v1975
      %v1987 = vpack.c.b16 %v1978, %v1977
      %v1988 = vpack.c.b16 %v1979, %v1979
      %vm1997 = vcmask 64512
      %v1999 = vsel %vm1997, %v1927, 0
      %v2002 = vsel %vm1997, %v1943, 0
      %vm2004 = vcmask 1043456
      %v2006 = vsel %vm2004, %v1988, 0
      %2008 = vmatprep.subr.bf16.mxu0 0
      %2009 = vmatpush1.bf16.msra.mxu0 %v1980
      %2010 = vmatprep.subr.bf16.mxu0 0
      %2011 = vmatpush1.bf16.msra.mxu0 %v1981
      %2012 = vmatprep.subr.bf16.mxu0 0
      %2013 = vmatpush1.bf16.msra.mxu0 %v1982
      %2014 = vmatprep.subr.bf16.mxu0 0
      %2015 = vmatpush1.bf16.msra.mxu0 %v1983
      %2016 = vmatprep.subr.bf16.mxu0 0
      %2017 = vmatpush1.bf16.msra.mxu0 %v1984
      %2018 = vmatprep.subr.bf16.mxu0 0
      %2019 = vmatpush1.bf16.msra.mxu0 %v1985
      %2020 = vmatprep.subr.bf16.mxu0 0
      %2021 = vmatpush1.bf16.msra.mxu0 %v1986
      %2022 = vmatprep.subr.bf16.mxu0 0
      %2023 = vmatpush1.bf16.msra.mxu0 %v1987
      %2024 = vmatprep.subr.bf16.mxu0 0
      %2025 = vmatpush1.bf16.msra.mxu0 %v2006
      %2026 = vmatprep.subr.bf16.mxu0 0
      %2027 = vmatpush1.bf16.msra.mxu0 0
      %2028 = vmatprep.subr.bf16.mxu0 0
      %2029 = vmatpush1.bf16.msra.mxu0 0
      %2030 = vmatprep.subr.bf16.mxu0 0
      %2031 = vmatpush1.bf16.msra.mxu0 0
      %2032 = vmatprep.subr.bf16.mxu0 0
      %2033 = vmatpush1.bf16.msra.mxu0 0
      %2034 = vmatprep.subr.bf16.mxu0 0
      %2035 = vmatpush1.bf16.msra.mxu0 0
      %2036 = vmatprep.subr.bf16.mxu0 0
      %2037 = vmatpush1.bf16.msra.mxu0 0
      %2038 = vmatprep.subr.bf16.mxu0 0
      %2039 = vmatpush1.bf16.msra.mxu0 0
      %2040 = vmatprep.mubr.bf16.mxu0 %v1999
      %2041 = vmatmul.mubr.bf16.gmra.mrb[0].mxu0 %v1915
      %v2042 = vpop.f32.mrb[0].mxu0
      %v2043 = vadd.f32 0.0, %v2042
      %v2044 = vpop.f32.mrb[0].mxu0
      %v2045 = vpop.f32.mrb[0].mxu0
      %v2046 = vadd.f32 0.0, %v2045
      %v2047 = vpop.f32.mrb[0].mxu0
      %2048 = vmatprep.mubr.bf16.mxu0 %v2002
      %2049 = vmatmul.mubr.bf16.gmra.mrb[0].mxu0 %v1935
      %v2050 = vpop.f32.mrb[0].mxu0
      %v2051 = vadd.f32 0.0, %v2050
      %v2052 = vpop.f32.mrb[0].mxu0
      %v2053 = vpop.f32.mrb[0].mxu0
      %v2054 = vadd.f32 0.0, %v2053
      %v2055 = vpop.f32.mrb[0].mxu0
      %2056 = vdwg.mxu0
      %v2076 = vunpack.c.l.b16 %v1847
      %v2077 = vunpack.c.l.b16 %v1848
      %v2078 = vunpack.c.l.b16 %v1849
      %v2079 = vunpack.c.l.b16 %v1850
      %v2080 = vunpack.c.l.b16 %v1851
      %v2081 = vunpack.c.l.b16 %v1852
      %v2082 = vunpack.c.l.b16 %v1853
      %v2083 = vunpack.c.l.b16 %v1854
      %v2084 = vunpack.c.l.b16 %v1855
      %v2085 = vunpack.c.l.b16 %v1856
      %v2086 = vunpack.c.l.b16 %v1857
      %v2087 = vunpack.c.l.b16 %v1858
      %v2088 = vunpack.c.l.b16 %v1859
      %v2089 = vunpack.c.l.b16 %v1860
      %v2090 = vunpack.c.l.b16 %v1861
      %v2091 = vunpack.c.l.b16 %v1862
      %v2092 = vunpack.c.l.b16 %v1863
      %v2093 = vpack.c.b16 %v2077, %v2076
      %v2094 = vpack.c.b16 %v2079, %v2078
      %v2095 = vpack.c.b16 %v2081, %v2080
      %v2096 = vpack.c.b16 %v2083, %v2082
      %v2097 = vpack.c.b16 %v2085, %v2084
      %v2098 = vpack.c.b16 %v2087, %v2086
      %v2099 = vpack.c.b16 %v2089, %v2088
      %v2100 = vpack.c.b16 %v2091, %v2090
      %v2101 = vpack.c.b16 %v2092, %v2092
      %v2110 = vsel %vm1997, %v1899, 0
      %v2112 = vsel %vm1997, %v1901, 0
      %v2115 = vsel %vm2004, %v2101, 0
      %2117 = vmatprep.subr.bf16.mxu0 0
      %2118 = vmatpush1.bf16.msra.mxu0 %v2093
      %2119 = vmatprep.subr.bf16.mxu0 0
      %2120 = vmatpush1.bf16.msra.mxu0 %v2094
      %2121 = vmatprep.subr.bf16.mxu0 0
      %2122 = vmatpush1.bf16.msra.mxu0 %v2095
      %2123 = vmatprep.subr.bf16.mxu0 0
      %2124 = vmatpush1.bf16.msra.mxu0 %v2096
      %2125 = vmatprep.subr.bf16.mxu0 0
      %2126 = vmatpush1.bf16.msra.mxu0 %v2097
      %2127 = vmatprep.subr.bf16.mxu0 0
      %2128 = vmatpush1.bf16.msra.mxu0 %v2098
      %2129 = vmatprep.subr.bf16.mxu0 0
      %2130 = vmatpush1.bf16.msra.mxu0 %v2099
      %2131 = vmatprep.subr.bf16.mxu0 0
      %2132 = vmatpush1.bf16.msra.mxu0 %v2100
      %2133 = vmatprep.subr.bf16.mxu0 0
      %2134 = vmatpush1.bf16.msra.mxu0 %v2115
      %2135 = vmatprep.subr.bf16.mxu0 0
      %2136 = vmatpush1.bf16.msra.mxu0 0
      %2137 = vmatprep.subr.bf16.mxu0 0
      %2138 = vmatpush1.bf16.msra.mxu0 0
      %2139 = vmatprep.subr.bf16.mxu0 0
      %2140 = vmatpush1.bf16.msra.mxu0 0
      %2141 = vmatprep.subr.bf16.mxu0 0
      %2142 = vmatpush1.bf16.msra.mxu0 0
      %2143 = vmatprep.subr.bf16.mxu0 0
      %2144 = vmatpush1.bf16.msra.mxu0 0
      %2145 = vmatprep.subr.bf16.mxu0 0
      %2146 = vmatpush1.bf16.msra.mxu0 0
      %2147 = vmatprep.subr.bf16.mxu0 0
      %2148 = vmatpush1.bf16.msra.mxu0 0
      %2149 = vmatprep.mubr.bf16.mxu0 %v2110
      %2150 = vmatmul.mubr.bf16.gmra.mrb[0].mxu0 %v1898
      %v2151 = vpop.f32.mrb[0].mxu0
      %v2152 = vadd.f32 %v2043, %v2151
      %v2153 = vpop.f32.mrb[0].mxu0
      %v2154 = vpop.f32.mrb[0].mxu0
      %v2155 = vadd.f32 %v2046, %v2154
      %v2156 = vpop.f32.mrb[0].mxu0
      %2157 = vmatprep.mubr.bf16.mxu0 %v2112
      %2158 = vmatmul.mubr.bf16.gmra.mrb[0].mxu0 %v1900
      %v2159 = vpop.f32.mrb[0].mxu0
      %v2160 = vadd.f32 %v2051, %v2159
      %v2161 = vpop.f32.mrb[0].mxu0
      %v2162 = vpop.f32.mrb[0].mxu0
      %v2163 = vadd.f32 %v2054, %v2162
      %v2164 = vpop.f32.mrb[0].mxu0
      %2165 = vdwg.mxu0
      %v2166 = vld [vmem:[#allocation3] sm:$0xee]
      %s2167 = scalar_lea.vmem %s7, 136
      %v2168 = vld [vmem:[%s2167] sm:$0xf]
      %v2169 = vld [vmem:[%s2167 + $0x4] sm:$0xf]
      %v2170 = vld [vmem:[%s2167 + $0x8] sm:$0xf]
      %v2171 = vld [vmem:[%s2167 + $0xc] sm:$0xf]
      %v2172 = vld [vmem:[%s2167 + $0x10] sm:$0xf]
      %v2173 = vld [vmem:[%s2167 + $0x14] sm:$0xf]
      %v2174 = vld [vmem:[%s2167 + $0x18] sm:$0xf]
      %v2175 = vld [vmem:[%s2167 + $0x1c] sm:$0xf]
      %v2176 = vld [vmem:[%s2167 + $0x20] sm:$0xf]
      %v2177 = vld [vmem:[%s2167 + $0x24] sm:$0xf]
      %v2178 = vld [vmem:[%s2167 + $0x28] sm:$0xf]
      %v2179 = vld [vmem:[%s2167 + $0x2c] sm:$0xf]
      %v2180 = vld [vmem:[%s2167 + $0x30] sm:$0xf]
      %v2181 = vld [vmem:[%s2167 + $0x34] sm:$0xf]
      %v2182 = vld [vmem:[%s2167 + $0x38] sm:$0xf]
      %v2183 = vld [vmem:[%s2167 + $0x3c] sm:$0xf]
      %v2184 = vld [vmem:[%s2167 + $0x40] sm:$0xf]
      %v2186 = vunpack.c.l.b16 %v2166
      %v2187 = vunpack.c.h.b16 %v2166
      %v2188 = vpack.c.b16 %v1890, %v2186
      %v2189 = vpack.c.b16 %v1891, %v2187
      %v2190 = vrot.slane %v2188, 1
      %v2191 = vrot.slane %v1900, 1
      %v2192 = vsel %vm1582, %v2190, %v2191
      %v2193 = vrot.slane %v2189, 1
      %v2194 = vrot.slane %v1901, 1
      %v2195 = vsel %vm1582, %v2193, %v2194
      %v2196 = vrot.slane %v1902, 1
      %v2197 = vsel %vm1582, %v2191, %v2196
      %v2198 = vrot.slane %v1903, 1
      %v2199 = vsel %vm1582, %v2194, %v2198
      %v2219 = vunpack.c.l.b16 %v2168
      %v2220 = vunpack.c.l.b16 %v2169
      %v2221 = vunpack.c.l.b16 %v2170
      %v2222 = vunpack.c.l.b16 %v2171
      %v2223 = vunpack.c.l.b16 %v2172
      %v2224 = vunpack.c.l.b16 %v2173
      %v2225 = vunpack.c.l.b16 %v2174
      %v2226 = vunpack.c.l.b16 %v2175
      %v2227 = vunpack.c.l.b16 %v2176
      %v2228 = vunpack.c.l.b16 %v2177
      %v2229 = vunpack.c.l.b16 %v2178
      %v2230 = vunpack.c.l.b16 %v2179
      %v2231 = vunpack.c.l.b16 %v2180
      %v2232 = vunpack.c.l.b16 %v2181
      %v2233 = vunpack.c.l.b16 %v2182
      %v2234 = vunpack.c.l.b16 %v2183
      %v2235 = vunpack.c.l.b16 %v2184
      %v2236 = vpack.c.b16 %v2220, %v2219
      %v2237 = vpack.c.b16 %v2222, %v2221
      %v2238 = vpack.c.b16 %v2224, %v2223
      %v2239 = vpack.c.b16 %v2226, %v2225
      %v2240 = vpack.c.b16 %v2228, %v2227
      %v2241 = vpack.c.b16 %v2230, %v2229
      %v2242 = vpack.c.b16 %v2232, %v2231
      %v2243 = vpack.c.b16 %v2234, %v2233
      %v2244 = vpack.c.b16 %v2235, %v2235
      %v2254 = vsel %vm1997, %v2195, 0
      %v2257 = vsel %vm1997, %v2199, 0
      %v2260 = vsel %vm2004, %v2244, 0
      %2262 = vmatprep.subr.bf16.mxu0 0
      %2263 = vmatpush1.bf16.msra.mxu0 %v2236
      %2264 = vmatprep.subr.bf16.mxu0 0
      %2265 = vmatpush1.bf16.msra.mxu0 %v2237
      %2266 = vmatprep.subr.bf16.mxu0 0
      %2267 = vmatpush1.bf16.msra.mxu0 %v2238
      %2268 = vmatprep.subr.bf16.mxu0 0
      %2269 = vmatpush1.bf16.msra.mxu0 %v2239
      %2270 = vmatprep.subr.bf16.mxu0 0
      %2271 = vmatpush1.bf16.msra.mxu0 %v2240
      %2272 = vmatprep.subr.bf16.mxu0 0
      %2273 = vmatpush1.bf16.msra.mxu0 %v2241
      %2274 = vmatprep.subr.bf16.mxu0 0
      %2275 = vmatpush1.bf16.msra.mxu0 %v2242
      %2276 = vmatprep.subr.bf16.mxu0 0
      %2277 = vmatpush1.bf16.msra.mxu0 %v2243
      %2278 = vmatprep.subr.bf16.mxu0 0
      %2279 = vmatpush1.bf16.msra.mxu0 %v2260
      %2280 = vmatprep.subr.bf16.mxu0 0
      %2281 = vmatpush1.bf16.msra.mxu0 0
      %2282 = vmatprep.subr.bf16.mxu0 0
      %2283 = vmatpush1.bf16.msra.mxu0 0
      %2284 = vmatprep.subr.bf16.mxu0 0
      %2285 = vmatpush1.bf16.msra.mxu0 0
      %2286 = vmatprep.subr.bf16.mxu0 0
      %2287 = vmatpush1.bf16.msra.mxu0 0
      %2288 = vmatprep.subr.bf16.mxu0 0
      %2289 = vmatpush1.bf16.msra.mxu0 0
      %2290 = vmatprep.subr.bf16.mxu0 0
      %2291 = vmatpush1.bf16.msra.mxu0 0
      %2292 = vmatprep.subr.bf16.mxu0 0
      %2293 = vmatpush1.bf16.msra.mxu0 0
      %2294 = vmatprep.mubr.bf16.mxu0 %v2254
      %2295 = vmatmul.mubr.bf16.gmra.mrb[0].mxu0 %v2192
      %v2296 = vpop.f32.mrb[0].mxu0
      %v2297 = vadd.f32 0.0, %v2296
      %v2298 = vpop.f32.mrb[0].mxu0
      %v2299 = vpop.f32.mrb[0].mxu0
      %v2300 = vadd.f32 0.0, %v2299
      %v2301 = vpop.f32.mrb[0].mxu0
      %2302 = vmatprep.mubr.bf16.mxu0 %v2257
      %2303 = vmatmul.mubr.bf16.gmra.mrb[0].mxu0 %v2197
      %v2304 = vpop.f32.mrb[0].mxu0
      %v2305 = vadd.f32 0.0, %v2304
      %v2306 = vpop.f32.mrb[0].mxu0
      %v2307 = vpop.f32.mrb[0].mxu0
      %v2308 = vadd.f32 0.0, %v2307
      %v2309 = vpop.f32.mrb[0].mxu0
      %2310 = vdwg.mxu0
      %v2311 = vadd.f32 %v2152, %v2297
      %v2312 = vadd.f32 %v2155, %v2300
      %v2313 = vadd.f32 %v2160, %v2305
      %v2314 = vadd.f32 %v2163, %v2308
      %v2315 = vld [vmem:[%s9] sm:$0xf]
      %v2316 = vld [vmem:[%s9 + $0x4] sm:$0xf]
      %v2317 = vld [vmem:[%s9 + $0x8] sm:$0xf]
      %v2318 = vld [vmem:[%s9 + $0xc] sm:$0xf]
      %v2319 = vld [vmem:[%s9 + $0x10] sm:$0xf]
      %v2320 = vld [vmem:[%s9 + $0x14] sm:$0xf]
      %v2321 = vld [vmem:[%s9 + $0x18] sm:$0xf]
      %v2322 = vld [vmem:[%s9 + $0x1c] sm:$0xf]
      %v2323 = vld [vmem:[%s9 + $0x20] sm:$0xf]
      %v2324 = vld [vmem:[%s9 + $0x24] sm:$0xf]
      %v2325 = vld [vmem:[%s9 + $0x28] sm:$0xf]
      %v2326 = vld [vmem:[%s9 + $0x2c] sm:$0xf]
      %v2339 = vunpack.c.l.b16 %v2315
      %v2340 = vunpack.c.l.b16 %v2316
      %v2341 = vunpack.c.l.b16 %v2317
      %v2342 = vunpack.c.l.b16 %v2318
      %v2343 = vunpack.c.l.b16 %v2319
      %v2344 = vunpack.c.l.b16 %v2320
      %v2345 = vunpack.c.l.b16 %v2321
      %v2346 = vunpack.c.l.b16 %v2322
      %v2347 = vunpack.c.l.b16 %v2323
      %v2348 = vunpack.c.l.b16 %v2324
      %v2349 = vunpack.c.l.b16 %v2325
      %v2350 = vunpack.c.l.b16 %v2326
      %v2351 = vpack.c.b16 %v2340, %v2339
      %v2352 = vpack.c.b16 %v2342, %v2341
      %v2353 = vpack.c.b16 %v2344, %v2343
      %v2354 = vpack.c.b16 %v2346, %v2345
      %v2355 = vpack.c.b16 %v2348, %v2347
      %v2356 = vpack.c.b16 %v2350, %v2349
      %vm2363 = vcmask 785408
      %v2365 = vsel %vm2363, %v1226, 0
      %v2368 = vsel %vm2363, %v1227, 0
      %2370 = vmatprep.subr.bf16.mxu0 0
      %2371 = vmatpush1.bf16.msra.mxu0 %v2351
      %2372 = vmatprep.subr.bf16.mxu0 0
      %2373 = vmatpush1.bf16.msra.mxu0 %v2352
      %2374 = vmatprep.subr.bf16.mxu0 0
      %2375 = vmatpush1.bf16.msra.mxu0 %v2353
      %2376 = vmatprep.subr.bf16.mxu0 0
      %2377 = vmatpush1.bf16.msra.mxu0 %v2354
      %2378 = vmatprep.subr.bf16.mxu0 0
      %2379 = vmatpush1.bf16.msra.mxu0 %v2355
      %2380 = vmatprep.subr.bf16.mxu0 0
      %2381 = vmatpush1.bf16.msra.mxu0 %v2356
      %2382 = vmatprep.subr.bf16.mxu0 0
      %2383 = vmatpush1.bf16.msra.mxu0 0
      %2384 = vmatprep.subr.bf16.mxu0 0
      %2385 = vmatpush1.bf16.msra.mxu0 0
      %2386 = vmatprep.subr.bf16.mxu0 0
      %2387 = vmatpush1.bf16.msra.mxu0 0
      %2388 = vmatprep.subr.bf16.mxu0 0
      %2389 = vmatpush1.bf16.msra.mxu0 0
      %2390 = vmatprep.subr.bf16.mxu0 0
      %2391 = vmatpush1.bf16.msra.mxu0 0
      %2392 = vmatprep.subr.bf16.mxu0 0
      %2393 = vmatpush1.bf16.msra.mxu0 0
      %2394 = vmatprep.subr.bf16.mxu0 0
      %2395 = vmatpush1.bf16.msra.mxu0 0
      %2396 = vmatprep.subr.bf16.mxu0 0
      %2397 = vmatpush1.bf16.msra.mxu0 0
      %2398 = vmatprep.subr.bf16.mxu0 0
      %2399 = vmatpush1.bf16.msra.mxu0 0
      %2400 = vmatprep.subr.bf16.mxu0 0
      %2401 = vmatpush1.bf16.msra.mxu0 0
      %2402 = vmatprep.mubr.bf16.mxu0 0
      %2403 = vmatmul.mubr.bf16.gmra.mrb[0].mxu0 %v2365
      %v2404 = vpop.f32.mrb[0].mxu0
      %v2405 = vadd.f32 0.0, %v2404
      %v2406 = vpop.f32.mrb[0].mxu0
      %v2407 = vpop.f32.mrb[0].mxu0
      %v2408 = vadd.f32 0.0, %v2407
      %v2409 = vpop.f32.mrb[0].mxu0
      %2410 = vmatprep.mubr.bf16.mxu0 0
      %2411 = vmatmul.mubr.bf16.gmra.mrb[0].mxu0 %v2368
      %v2412 = vpop.f32.mrb[0].mxu0
      %v2413 = vadd.f32 0.0, %v2412
      %v2414 = vpop.f32.mrb[0].mxu0
      %v2415 = vpop.f32.mrb[0].mxu0
      %v2416 = vadd.f32 0.0, %v2415
      %v2417 = vpop.f32.mrb[0].mxu0
      %2418 = vdwg.mxu0
      %v2419 = vld [vmem:[%s11] sm:$0xff]
      %v2420 = vld [vmem:[%s11 + $0x8] sm:$0xff]
      %v2421 = vadd.f32 %v2311, %v2405
      %v2422 = vadd.f32 %v2312, %v2408
      %v2423 = vadd.f32 %v2313, %v2413
      %v2424 = vadd.f32 %v2314, %v2416
      %v2425 = vld [vmem:[%s13] sm:$0x1]
      %v2427 = vlaneseq
      %v2428 = vshrl.u32 %v2427, 7
      %v2429 = vsub.s32 0, %v2428
      %v2430 = vrot.slane %v2425, %v2429
      %vm2432 = vcmask 261120
      %v2434 = vsel %vm2432, %v2419, 0
      %v2437 = vsel %vm2432, %v2420, 0
      %2439 = vmatprep.subr.mxu0 0.0
      %2440 = vmatpush1.msra.mxu0 %v2421
      %2441 = vmatprep.subr.mxu0 0.0
      %2442 = vmatpush1.msra.mxu0 %v2422
      %2443 = vmatprep.subr.mxu0 0.0
      %2444 = vmatpush1.msra.mxu0 %v2423
      %2445 = vmatprep.subr.mxu0 0.0
      %2446 = vmatpush1.msra.mxu0 %v2424
      %2447 = vmatprep.subr.mxu0 0.0
      %2448 = vmatpush1.msra.mxu0 0.0
      %2449 = vmatprep.subr.mxu0 0.0
      %2450 = vmatpush1.msra.mxu0 0.0
      %2451 = vmatprep.subr.mxu0 0.0
      %2452 = vmatpush1.msra.mxu0 0.0
      %2453 = vmatprep.subr.mxu0 0.0
      %2454 = vmatpush1.msra.mxu0 0.0
      %2455 = vmatprep.subr.mxu0 0.0
      %2456 = vmatpush1.msra.mxu0 0.0
      %2457 = vmatprep.subr.mxu0 0.0
      %2458 = vmatpush1.msra.mxu0 0.0
      %2459 = vmatprep.subr.mxu0 0.0
      %2460 = vmatpush1.msra.mxu0 0.0
      %2461 = vmatprep.subr.mxu0 0.0
      %2462 = vmatpush1.msra.mxu0 0.0
      %2463 = vmatprep.subr.mxu0 0.0
      %2464 = vmatpush1.msra.mxu0 0.0
      %2465 = vmatprep.subr.mxu0 0.0
      %2466 = vmatpush1.msra.mxu0 0.0
      %2467 = vmatprep.subr.mxu0 0.0
      %2468 = vmatpush1.msra.mxu0 0.0
      %2469 = vmatprep.subr.mxu0 0.0
      %2470 = vmatpush1.msra.mxu0 0.0
      %2471 = vmatprep.subr.mxu0 0.0
      %2472 = vmatpush1.msra.mxu0 0.0
      %2473 = vmatprep.subr.mxu0 0.0
      %2474 = vmatpush1.msra.mxu0 0.0
      %2475 = vmatprep.subr.mxu0 0.0
      %2476 = vmatpush1.msra.mxu0 0.0
      %2477 = vmatprep.subr.mxu0 0.0
      %2478 = vmatpush1.msra.mxu0 0.0
      %2479 = vmatprep.subr.mxu0 0.0
      %2480 = vmatpush1.msra.mxu0 0.0
      %2481 = vmatprep.subr.mxu0 0.0
      %2482 = vmatpush1.msra.mxu0 0.0
      %2483 = vmatprep.subr.mxu0 0.0
      %2484 = vmatpush1.msra.mxu0 0.0
      %2485 = vmatprep.subr.mxu0 0.0
      %2486 = vmatpush1.msra.mxu0 0.0
      %2487 = vmatprep.subr.mxu0 0.0
      %2488 = vmatpush1.msra.mxu0 0.0
      %2489 = vmatprep.subr.mxu0 0.0
      %2490 = vmatpush1.msra.mxu0 0.0
      %2491 = vmatprep.subr.mxu0 0.0
      %2492 = vmatpush1.msra.mxu0 0.0
      %2493 = vmatprep.subr.mxu0 0.0
      %2494 = vmatpush1.msra.mxu0 0.0
      %2495 = vmatprep.subr.mxu0 0.0
      %2496 = vmatpush1.msra.mxu0 0.0
      %2497 = vmatprep.subr.mxu0 0.0
      %2498 = vmatpush1.msra.mxu0 0.0
      %2499 = vmatprep.subr.mxu0 0.0
      %2500 = vmatpush1.msra.mxu0 0.0
      %2501 = vmatprep.subr.mxu0 0.0
      %2502 = vmatpush1.msra.mxu0 0.0
      %2503 = vmatprep.mubr.f32.mxu0 0.0
      %2504 = vmatmul.mubr.f32.gmra.mrb[0].mxu0 %v2434
      %v2505 = vpop.f32.mrb[0].mxu0
      %v2506 = vadd.f32 %v2430, %v2505
      %v2507 = vpop.f32.mrb[0].mxu0
      %2508 = vmatprep.mubr.f32.mxu0 0.0
      %2509 = vmatmul.mubr.f32.gmra.mrb[0].mxu0 %v2437
      %v2510 = vpop.f32.mrb[0].mxu0
      %v2511 = vadd.f32 %v2430, %v2510
      %v2512 = vpop.f32.mrb[0].mxu0
      %2513 = vdwg.mxu0
      %vm2514 = vcmask 581632
      %vm2515 = vmand %vm2514, %vm1188
      %v2516 = vld [vmem:[#allocation2] sm:$0x1]
      %v2517 = vsel %vm2515, 0, %v2516
      %2518 = vst [vmem:[#allocation2] sm:$0x1] %v2517
      %vm2519 = vmand %vm2514, %vm1193
      %v2520 = vld [vmem:[#allocation2 + $0x8] sm:$0x1]
      %v2521 = vsel %vm2519, 0, %v2520
      %2522 = vst [vmem:[#allocation2 + $0x8] sm:$0x1] %v2521
      %v2523 = vld [vmem:[#allocation2] sm:$0xf]
      %v2524 = vsel %vm1717, 0, %v2523
      %2525 = vst [vmem:[#allocation2] sm:$0xf] %v2524
      %2526 = vst.msk [vmem:[#allocation2 + $0x4] sm:$0xf] %vm1721, 0
      %v2527 = vld [vmem:[#allocation2 + $0x8] sm:$0x1]
      %v2528 = vsel %vm1726, 0, %v2527
      %2529 = vst [vmem:[#allocation2 + $0x8] sm:$0x1] %v2528
      %vm2530 = vcmask 585248
      %vm2531 = vmand %vm2530, %vm1193
      %v2532 = vld [vmem:[#allocation2] sm:$0xf]
      %v2533 = vsel %vm2531, 0, %v2532
      %2534 = vst [vmem:[#allocation2] sm:$0xf] %v2533
      %vm2535 = vcmask 585248
      %2536 = vst.msk [vmem:[#allocation2 + $0x4] sm:$0xf] %vm2535, 0
      %vm2537 = vcmask 582176
      %vm2538 = vmand %vm2537, %vm1188
      %v2539 = vld [vmem:[#allocation2 + $0x8] sm:$0x1]
      %v2540 = vsel %vm2538, 0, %v2539
      %2541 = vst [vmem:[#allocation2 + $0x8] sm:$0x1] %v2540
      %v2542 = vmax.f32 %v2506, 0.0
      %v2543 = vmax.f32 %v2511, 0.0
      %v2544 = vpack.c.bf16 %v2543, %v2542
      %v2546 = vunpack.c.l.b16 %v2544
      %v2547 = vunpack.c.h.b16 %v2544
      %v2548 = vpack.c.b16 %v2546, %v2546
      %v2549 = vpack.c.b16 %v2547, %v2547
      %v2551 = vshrl.u32 %v2548, 16
      %v2553 = vrot.slane %v2551, 7
      %v2554 = vshll.u32 %v2548, 16
      %v2556 = vor.u32 %v2553, %v2554
      %v2557 = vrot.slane %v2553, 4
      %v2559 = vshrl.u32 %v2549, 16
      %v2561 = vrot.slane %v2559, 7
      %v2562 = vshll.u32 %v2549, 16
      %v2564 = vor.u32 %v2561, %v2562
      %v2565 = vsel %vm1239, %v2557, %v2564
      %v2566 = vrot.slane %v2561, 4
      %2567 = vrot.lane.b32.xlu0 %v2556, 4
      %v2568 = vpop.permute.xlu0 %2567
      %2569 = vrot.lane.b32.xlu0 %v2565, 4
      %v2570 = vpop.permute.xlu0 %2569
      %2571 = vrot.lane.b32.xlu0 %v2566, 4
      %v2572 = vpop.permute.xlu0 %2571
      %vm2576 = vcmask 551968
      %vm2577 = vmand %vm2576, %vm1193
      %v2578 = vld [vmem:[#allocation2] sm:$0xf]
      %v2579 = vsel %vm2577, %v2568, %v2578
      %2580 = vst [vmem:[#allocation2] sm:$0xf] %v2579
      %vm2581 = vcmask 551968
      %2582 = vst.msk [vmem:[#allocation2 + $0x4] sm:$0xf] %vm2581, %v2570
      %vm2583 = vcmask 548896
      %vm2584 = vmand %vm2583, %vm1188
      %v2585 = vld [vmem:[#allocation2 + $0x8] sm:$0x1]
      %v2586 = vsel %vm2584, %v2572, %v2585
      %2587 = vst [vmem:[#allocation2 + $0x8] sm:$0x1] %v2586
      %v2588 = vld [vmem:[#allocation2] sm:$0xf]
      %v2589 = vld [vmem:[#allocation2 + $0x4] sm:$0xf]
      %v2590 = vld [vmem:[%s15] sm:$0xf]
      %v2591 = vld [vmem:[%s15 + $0x4] sm:$0xf]
      %v2592 = vld [vmem:[%s15 + $0x8] sm:$0xf]
      %v2593 = vld [vmem:[%s15 + $0xc] sm:$0xf]
      %v2594 = vld [vmem:[%s15 + $0x10] sm:$0xf]
      %v2595 = vld [vmem:[%s15 + $0x14] sm:$0xf]
      %v2596 = vld [vmem:[%s15 + $0x18] sm:$0xf]
      %v2597 = vld [vmem:[%s15 + $0x1c] sm:$0xf]
      %v2598 = vld [vmem:[%s15 + $0x20] sm:$0xf]
      %v2599 = vld [vmem:[#allocation2 + $0x8] sm:$0x1]
      %s2600 = scalar_lea.vmem %s15, 36
      %v2601 = vld [vmem:[%s2600] sm:$0xf]
      %v2602 = vld [vmem:[%s2600 + $0x4] sm:$0xf]
      %v2603 = vld [vmem:[%s2600 + $0x8] sm:$0xf]
      %v2604 = vld [vmem:[%s2600 + $0xc] sm:$0xf]
      %v2605 = vld [vmem:[%s2600 + $0x10] sm:$0xf]
      %v2606 = vld [vmem:[%s2600 + $0x14] sm:$0xf]
      %v2607 = vld [vmem:[%s2600 + $0x18] sm:$0xf]
      %v2608 = vld [vmem:[%s2600 + $0x1c] sm:$0xf]
      %v2609 = vld [vmem:[%s2600 + $0x20] sm:$0xf]
      %v2613 = vunpack.c.l.b16 %v2588
      %v2614 = vunpack.c.l.b16 %v2589
      %v2615 = vunpack.c.l.b16 %v2599
      %v2616 = vpack.c.b16 %v2614, %v2613
      %v2617 = vpack.c.b16 %v2615, %v2615
      %v2619 = vshrl.u32 %v2616, 16
      %v2621 = vshll.u32 %v2616, 16
      %v2623 = vrot.slane %v2621, 1
      %v2624 = vor.u32 %v2619, %v2623
      %v2626 = vshll.u32 %v2617, 16
      %v2628 = vrot.slane %v2626, 1
      %v2629 = vsel %vm1349, %v2624, %v2628
      %v2639 = vunpack.c.l.b16 %v2601
      %v2640 = vunpack.c.l.b16 %v2602
      %v2641 = vunpack.c.l.b16 %v2603
      %v2642 = vunpack.c.l.b16 %v2604
      %v2643 = vunpack.c.l.b16 %v2605
      %v2644 = vunpack.c.l.b16 %v2606
      %v2645 = vunpack.c.l.b16 %v2607
      %v2646 = vunpack.c.l.b16 %v2608
      %v2647 = vunpack.c.l.b16 %v2609
      %v2648 = vpack.c.b16 %v2640, %v2639
      %v2649 = vpack.c.b16 %v2642, %v2641
      %v2650 = vpack.c.b16 %v2644, %v2643
      %v2651 = vpack.c.b16 %v2646, %v2645
      %v2652 = vpack.c.b16 %v2647, %v2647
      %vm2657 = vcmask 588800
      %v2659 = vsel %vm2657, %v2629, 0
      %v2662 = vsel %vm2004, %v2652, 0
      %2664 = vmatprep.subr.bf16.mxu0 0
      %2665 = vmatpush1.bf16.msra.mxu0 %v2648
      %2666 = vmatprep.subr.bf16.mxu0 0
      %2667 = vmatpush1.bf16.msra.mxu0 %v2649
      %2668 = vmatprep.subr.bf16.mxu0 0
      %2669 = vmatpush1.bf16.msra.mxu0 %v2650
      %2670 = vmatprep.subr.bf16.mxu0 0
      %2671 = vmatpush1.bf16.msra.mxu0 %v2651
      %2672 = vmatprep.subr.bf16.mxu0 0
      %2673 = vmatpush1.bf16.msra.mxu0 %v2662
      %2674 = vmatprep.subr.bf16.mxu0 0
      %2675 = vmatpush1.bf16.msra.mxu0 0
      %2676 = vmatprep.subr.bf16.mxu0 0
      %2677 = vmatpush1.bf16.msra.mxu0 0
      %2678 = vmatprep.subr.bf16.mxu0 0
      %2679 = vmatpush1.bf16.msra.mxu0 0
      %2680 = vmatprep.subr.bf16.mxu0 0
      %2681 = vmatpush1.bf16.msra.mxu0 0
      %2682 = vmatprep.subr.bf16.mxu0 0
      %2683 = vmatpush1.bf16.msra.mxu0 0
      %2684 = vmatprep.subr.bf16.mxu0 0
      %2685 = vmatpush1.bf16.msra.mxu0 0
      %2686 = vmatprep.subr.bf16.mxu0 0
      %2687 = vmatpush1.bf16.msra.mxu0 0
      %2688 = vmatprep.subr.bf16.mxu0 0
      %2689 = vmatpush1.bf16.msra.mxu0 0
      %2690 = vmatprep.subr.bf16.mxu0 0
      %2691 = vmatpush1.bf16.msra.mxu0 0
      %2692 = vmatprep.subr.bf16.mxu0 0
      %2693 = vmatpush1.bf16.msra.mxu0 0
      %2694 = vmatprep.subr.bf16.mxu0 0
      %2695 = vmatpush1.bf16.msra.mxu0 0
      %2696 = vmatprep.mubr.bf16.mxu0 0
      %2697 = vmatmul.mubr.bf16.gmra.mrb[0].mxu0 %v2659
      %v2698 = vpop.f32.mrb[0].mxu0
      %v2699 = vadd.f32 0.0, %v2698
      %v2700 = vpop.f32.mrb[0].mxu0
      %v2701 = vpop.f32.mrb[0].mxu0
      %v2702 = vadd.f32 0.0, %v2701
      %v2703 = vpop.f32.mrb[0].mxu0
      %2704 = vdwg.mxu0
      %v2714 = vunpack.c.l.b16 %v2590
      %v2715 = vunpack.c.l.b16 %v2591
      %v2716 = vunpack.c.l.b16 %v2592
      %v2717 = vunpack.c.l.b16 %v2593
      %v2718 = vunpack.c.l.b16 %v2594
      %v2719 = vunpack.c.l.b16 %v2595
      %v2720 = vunpack.c.l.b16 %v2596
      %v2721 = vunpack.c.l.b16 %v2597
      %v2722 = vunpack.c.l.b16 %v2598
      %v2723 = vpack.c.b16 %v2715, %v2714
      %v2724 = vpack.c.b16 %v2717, %v2716
      %v2725 = vpack.c.b16 %v2719, %v2718
      %v2726 = vpack.c.b16 %v2721, %v2720
      %v2727 = vpack.c.b16 %v2722, %v2722
      %v2732 = vsel %vm2657, %v2616, 0
      %v2735 = vsel %vm2004, %v2727, 0
      %2737 = vmatprep.subr.bf16.mxu0 0
      %2738 = vmatpush1.bf16.msra.mxu0 %v2723
      %2739 = vmatprep.subr.bf16.mxu0 0
      %2740 = vmatpush1.bf16.msra.mxu0 %v2724
      %2741 = vmatprep.subr.bf16.mxu0 0
      %2742 = vmatpush1.bf16.msra.mxu0 %v2725
      %2743 = vmatprep.subr.bf16.mxu0 0
      %2744 = vmatpush1.bf16.msra.mxu0 %v2726
      %2745 = vmatprep.subr.bf16.mxu0 0
      %2746 = vmatpush1.bf16.msra.mxu0 %v2735
      %2747 = vmatprep.subr.bf16.mxu0 0
      %2748 = vmatpush1.bf16.msra.mxu0 0
      %2749 = vmatprep.subr.bf16.mxu0 0
      %2750 = vmatpush1.bf16.msra.mxu0 0
      %2751 = vmatprep.subr.bf16.mxu0 0
      %2752 = vmatpush1.bf16.msra.mxu0 0
      %2753 = vmatprep.subr.bf16.mxu0 0
      %2754 = vmatpush1.bf16.msra.mxu0 0
      %2755 = vmatprep.subr.bf16.mxu0 0
      %2756 = vmatpush1.bf16.msra.mxu0 0
      %2757 = vmatprep.subr.bf16.mxu0 0
      %2758 = vmatpush1.bf16.msra.mxu0 0
      %2759 = vmatprep.subr.bf16.mxu0 0
      %2760 = vmatpush1.bf16.msra.mxu0 0
      %2761 = vmatprep.subr.bf16.mxu0 0
      %2762 = vmatpush1.bf16.msra.mxu0 0
      %2763 = vmatprep.subr.bf16.mxu0 0
      %2764 = vmatpush1.bf16.msra.mxu0 0
      %2765 = vmatprep.subr.bf16.mxu0 0
      %2766 = vmatpush1.bf16.msra.mxu0 0
      %2767 = vmatprep.subr.bf16.mxu0 0
      %2768 = vmatpush1.bf16.msra.mxu0 0
      %2769 = vmatprep.mubr.bf16.mxu0 0
      %2770 = vmatmul.mubr.bf16.gmra.mrb[0].mxu0 %v2732
      %v2771 = vpop.f32.mrb[0].mxu0
      %v2772 = vadd.f32 %v2699, %v2771
      %v2773 = vpop.f32.mrb[0].mxu0
      %v2774 = vpop.f32.mrb[0].mxu0
      %v2775 = vadd.f32 %v2702, %v2774
      %v2776 = vpop.f32.mrb[0].mxu0
      %2777 = vdwg.mxu0
      %v2778 = vld [vmem:[#allocation2] sm:$0xe]
      %s2779 = scalar_lea.vmem %s15, 72
      %v2780 = vld [vmem:[%s2779] sm:$0xf]
      %v2781 = vld [vmem:[%s2779 + $0x4] sm:$0xf]
      %v2782 = vld [vmem:[%s2779 + $0x8] sm:$0xf]
      %v2783 = vld [vmem:[%s2779 + $0xc] sm:$0xf]
      %v2784 = vld [vmem:[%s2779 + $0x10] sm:$0xf]
      %v2785 = vld [vmem:[%s2779 + $0x14] sm:$0xf]
      %v2786 = vld [vmem:[%s2779 + $0x18] sm:$0xf]
      %v2787 = vld [vmem:[%s2779 + $0x1c] sm:$0xf]
      %v2788 = vld [vmem:[%s2779 + $0x20] sm:$0xf]
      %v2790 = vunpack.c.l.b16 %v2778
      %v2791 = vpack.c.b16 %v2614, %v2790
      %v2792 = vrot.slane %v2791, 1
      %v2793 = vrot.slane %v2617, 1
      %v2794 = vsel %vm1582, %v2792, %v2793
      %v2804 = vunpack.c.l.b16 %v2780
      %v2805 = vunpack.c.l.b16 %v2781
      %v2806 = vunpack.c.l.b16 %v2782
      %v2807 = vunpack.c.l.b16 %v2783
      %v2808 = vunpack.c.l.b16 %v2784
      %v2809 = vunpack.c.l.b16 %v2785
      %v2810 = vunpack.c.l.b16 %v2786
      %v2811 = vunpack.c.l.b16 %v2787
      %v2812 = vunpack.c.l.b16 %v2788
      %v2813 = vpack.c.b16 %v2805, %v2804
      %v2814 = vpack.c.b16 %v2807, %v2806
      %v2815 = vpack.c.b16 %v2809, %v2808
      %v2816 = vpack.c.b16 %v2811, %v2810
      %v2817 = vpack.c.b16 %v2812, %v2812
      %v2823 = vsel %vm2657, %v2794, 0
      %v2826 = vsel %vm2004, %v2817, 0
      %2828 = vmatprep.subr.bf16.mxu0 0
      %2829 = vmatpush1.bf16.msra.mxu0 %v2813
      %2830 = vmatprep.subr.bf16.mxu0 0
      %2831 = vmatpush1.bf16.msra.mxu0 %v2814
      %2832 = vmatprep.subr.bf16.mxu0 0
      %2833 = vmatpush1.bf16.msra.mxu0 %v2815
      %2834 = vmatprep.subr.bf16.mxu0 0
      %2835 = vmatpush1.bf16.msra.mxu0 %v2816
      %2836 = vmatprep.subr.bf16.mxu0 0
      %2837 = vmatpush1.bf16.msra.mxu0 %v2826
      %2838 = vmatprep.subr.bf16.mxu0 0
      %2839 = vmatpush1.bf16.msra.mxu0 0
      %2840 = vmatprep.subr.bf16.mxu0 0
      %2841 = vmatpush1.bf16.msra.mxu0 0
      %2842 = vmatprep.subr.bf16.mxu0 0
      %2843 = vmatpush1.bf16.msra.mxu0 0
      %2844 = vmatprep.subr.bf16.mxu0 0
      %2845 = vmatpush1.bf16.msra.mxu0 0
      %2846 = vmatprep.subr.bf16.mxu0 0
      %2847 = vmatpush1.bf16.msra.mxu0 0
      %2848 = vmatprep.subr.bf16.mxu0 0
      %2849 = vmatpush1.bf16.msra.mxu0 0
      %2850 = vmatprep.subr.bf16.mxu0 0
      %2851 = vmatpush1.bf16.msra.mxu0 0
      %2852 = vmatprep.subr.bf16.mxu0 0
      %2853 = vmatpush1.bf16.msra.mxu0 0
      %2854 = vmatprep.subr.bf16.mxu0 0
      %2855 = vmatpush1.bf16.msra.mxu0 0
      %2856 = vmatprep.subr.bf16.mxu0 0
      %2857 = vmatpush1.bf16.msra.mxu0 0
      %2858 = vmatprep.subr.bf16.mxu0 0
      %2859 = vmatpush1.bf16.msra.mxu0 0
      %2860 = vmatprep.mubr.bf16.mxu0 0
      %2861 = vmatmul.mubr.bf16.gmra.mrb[0].mxu0 %v2823
      %v2862 = vpop.f32.mrb[0].mxu0
      %v2863 = vadd.f32 0.0, %v2862
      %v2864 = vpop.f32.mrb[0].mxu0
      %v2865 = vpop.f32.mrb[0].mxu0
      %v2866 = vadd.f32 0.0, %v2865
      %v2867 = vpop.f32.mrb[0].mxu0
      %2868 = vdwg.mxu0
      %v2869 = vadd.f32 %v2772, %v2863
      %v2870 = vadd.f32 %v2775, %v2866
      %v2871 = vld [vmem:[%s17] sm:$0x1]
      %v2873 = vlaneseq
      %v2874 = vshrl.u32 %v2873, 7
      %v2875 = vsub.s32 0, %v2874
      %v2876 = vrot.slane %v2871, %v2875
      %v2878 = vadd.f32 %v2869, %v2876
      %v2879 = vadd.f32 %v2870, %v2876
      %v2880 = vld [vmem:[#allocation3] sm:$0x1]
      %v2881 = vsel %vm2515, 0, %v2880
      %2882 = vst [vmem:[#allocation3] sm:$0x1] %v2881
      %v2883 = vld [vmem:[#allocation3 + $0x10] sm:$0x1]
      %v2884 = vsel %vm2519, 0, %v2883
      %2885 = vst [vmem:[#allocation3 + $0x10] sm:$0x1] %v2884
      %v2886 = vld [vmem:[#allocation3] sm:$0xf]
      %v2887 = vsel %vm1717, 0, %v2886
      %2888 = vst [vmem:[#allocation3] sm:$0xf] %v2887
      %2889 = vst.msk [vmem:[#allocation3 + $0x8] sm:$0xf] %vm1721, 0
      %v2890 = vld [vmem:[#allocation3 + $0x10] sm:$0x1]
      %v2891 = vsel %vm1726, 0, %v2890
      %2892 = vst [vmem:[#allocation3 + $0x10] sm:$0x1] %v2891
      %v2893 = vld [vmem:[#allocation3] sm:$0xf]
      %v2894 = vsel %vm2531, 0, %v2893
      %2895 = vst [vmem:[#allocation3] sm:$0xf] %v2894
      %2896 = vst.msk [vmem:[#allocation3 + $0x8] sm:$0xf] %vm2535, 0
      %v2897 = vld [vmem:[#allocation3 + $0x10] sm:$0x1]
      %v2898 = vsel %vm2538, 0, %v2897
      %2899 = vst [vmem:[#allocation3 + $0x10] sm:$0x1] %v2898
      %v2900 = vmax.f32 %v2878, 0.0
      %v2901 = vmax.f32 %v2879, 0.0
      %v2902 = vpack.c.bf16 %v2901, %v2900
      %v2904 = vunpack.c.l.b16 %v2902
      %v2905 = vunpack.c.h.b16 %v2902
      %v2906 = vpack.c.b16 %v2904, %v2904
      %v2907 = vpack.c.b16 %v2905, %v2905
      %v2909 = vshrl.u32 %v2906, 16
      %v2911 = vrot.slane %v2909, 7
      %v2912 = vshll.u32 %v2906, 16
      %v2914 = vor.u32 %v2911, %v2912
      %v2915 = vrot.slane %v2911, 4
      %v2917 = vshrl.u32 %v2907, 16
      %v2919 = vrot.slane %v2917, 7
      %v2920 = vshll.u32 %v2907, 16
      %v2922 = vor.u32 %v2919, %v2920
      %v2923 = vsel %vm1239, %v2915, %v2922
      %v2924 = vrot.slane %v2919, 4
      %2925 = vrot.lane.b32.xlu0 %v2914, 4
      %v2926 = vpop.permute.xlu0 %2925
      %2927 = vrot.lane.b32.xlu0 %v2923, 4
      %v2928 = vpop.permute.xlu0 %2927
      %2929 = vrot.lane.b32.xlu0 %v2924, 4
      %v2930 = vpop.permute.xlu0 %2929
      %v2934 = vld [vmem:[#allocation3] sm:$0xf]
      %v2935 = vsel %vm2577, %v2926, %v2934
      %2936 = vst [vmem:[#allocation3] sm:$0xf] %v2935
      %2937 = vst.msk [vmem:[#allocation3 + $0x8] sm:$0xf] %vm2581, %v2928
      %v2938 = vld [vmem:[#allocation3 + $0x10] sm:$0x1]
      %v2939 = vsel %vm2584, %v2930, %v2938
      %2940 = vst [vmem:[#allocation3 + $0x10] sm:$0x1] %v2939
      %v2941 = vld [vmem:[#allocation3] sm:$0xf]
      %v2942 = vld [vmem:[#allocation3 + $0x8] sm:$0xf]
      %v2943 = vld [vmem:[%s19] sm:$0xf]
      %v2944 = vld [vmem:[%s19 + $0x4] sm:$0xf]
      %v2945 = vld [vmem:[%s19 + $0x8] sm:$0xf]
      %v2946 = vld [vmem:[%s19 + $0xc] sm:$0xf]
      %v2947 = vld [vmem:[%s19 + $0x10] sm:$0xf]
      %v2948 = vld [vmem:[%s19 + $0x14] sm:$0xf]
      %v2949 = vld [vmem:[%s19 + $0x18] sm:$0xf]
      %v2950 = vld [vmem:[%s19 + $0x1c] sm:$0xf]
      %v2951 = vld [vmem:[%s19 + $0x20] sm:$0xf]
      %v2952 = vld [vmem:[#allocation3 + $0x10] sm:$0x1]
      %s2953 = scalar_lea.vmem %s19, 36
      %v2954 = vld [vmem:[%s2953] sm:$0xf]
      %v2955 = vld [vmem:[%s2953 + $0x4] sm:$0xf]
      %v2956 = vld [vmem:[%s2953 + $0x8] sm:$0xf]
      %v2957 = vld [vmem:[%s2953 + $0xc] sm:$0xf]
      %v2958 = vld [vmem:[%s2953 + $0x10] sm:$0xf]
      %v2959 = vld [vmem:[%s2953 + $0x14] sm:$0xf]
      %v2960 = vld [vmem:[%s2953 + $0x18] sm:$0xf]
      %v2961 = vld [vmem:[%s2953 + $0x1c] sm:$0xf]
      %v2962 = vld [vmem:[%s2953 + $0x20] sm:$0xf]
      %v2966 = vunpack.c.l.b16 %v2941
      %v2967 = vunpack.c.l.b16 %v2942
      %v2968 = vunpack.c.l.b16 %v2952
      %v2969 = vpack.c.b16 %v2967, %v2966
      %v2970 = vpack.c.b16 %v2968, %v2968
      %v2972 = vshrl.u32 %v2969, 16
      %v2974 = vshll.u32 %v2969, 16
      %v2976 = vrot.slane %v2974, 1
      %v2977 = vor.u32 %v2972, %v2976
      %v2979 = vshll.u32 %v2970, 16
      %v2981 = vrot.slane %v2979, 1
      %v2982 = vsel %vm1349, %v2977, %v2981
      %v2992 = vunpack.c.l.b16 %v2954
      %v2993 = vunpack.c.l.b16 %v2955
      %v2994 = vunpack.c.l.b16 %v2956
      %v2995 = vunpack.c.l.b16 %v2957
      %v2996 = vunpack.c.l.b16 %v2958
      %v2997 = vunpack.c.l.b16 %v2959
      %v2998 = vunpack.c.l.b16 %v2960
      %v2999 = vunpack.c.l.b16 %v2961
      %v3000 = vunpack.c.l.b16 %v2962
      %v3001 = vpack.c.b16 %v2993, %v2992
      %v3002 = vpack.c.b16 %v2995, %v2994
      %v3003 = vpack.c.b16 %v2997, %v2996
      %v3004 = vpack.c.b16 %v2999, %v2998
      %v3005 = vpack.c.b16 %v3000, %v3000
      %v3011 = vsel %vm2657, %v2982, 0
      %v3014 = vsel %vm2004, %v3005, 0
      %3016 = vmatprep.subr.bf16.mxu0 0
      %3017 = vmatpush1.bf16.msra.mxu0 %v3001
      %3018 = vmatprep.subr.bf16.mxu0 0
      %3019 = vmatpush1.bf16.msra.mxu0 %v3002
      %3020 = vmatprep.subr.bf16.mxu0 0
      %3021 = vmatpush1.bf16.msra.mxu0 %v3003
      %3022 = vmatprep.subr.bf16.mxu0 0
      %3023 = vmatpush1.bf16.msra.mxu0 %v3004
      %3024 = vmatprep.subr.bf16.mxu0 0
      %3025 = vmatpush1.bf16.msra.mxu0 %v3014
      %3026 = vmatprep.subr.bf16.mxu0 0
      %3027 = vmatpush1.bf16.msra.mxu0 0
      %3028 = vmatprep.subr.bf16.mxu0 0
      %3029 = vmatpush1.bf16.msra.mxu0 0
      %3030 = vmatprep.subr.bf16.mxu0 0
      %3031 = vmatpush1.bf16.msra.mxu0 0
      %3032 = vmatprep.subr.bf16.mxu0 0
      %3033 = vmatpush1.bf16.msra.mxu0 0
      %3034 = vmatprep.subr.bf16.mxu0 0
      %3035 = vmatpush1.bf16.msra.mxu0 0
      %3036 = vmatprep.subr.bf16.mxu0 0
      %3037 = vmatpush1.bf16.msra.mxu0 0
      %3038 = vmatprep.subr.bf16.mxu0 0
      %3039 = vmatpush1.bf16.msra.mxu0 0
      %3040 = vmatprep.subr.bf16.mxu0 0
      %3041 = vmatpush1.bf16.msra.mxu0 0
      %3042 = vmatprep.subr.bf16.mxu0 0
      %3043 = vmatpush1.bf16.msra.mxu0 0
      %3044 = vmatprep.subr.bf16.mxu0 0
      %3045 = vmatpush1.bf16.msra.mxu0 0
      %3046 = vmatprep.subr.bf16.mxu0 0
      %3047 = vmatpush1.bf16.msra.mxu0 0
      %3048 = vmatprep.mubr.bf16.mxu0 0
      %3049 = vmatmul.mubr.bf16.gmra.mrb[0].mxu0 %v3011
      %v3050 = vpop.f32.mrb[0].mxu0
      %v3051 = vadd.f32 0.0, %v3050
      %v3052 = vpop.f32.mrb[0].mxu0
      %v3053 = vpop.f32.mrb[0].mxu0
      %v3054 = vadd.f32 0.0, %v3053
      %v3055 = vpop.f32.mrb[0].mxu0
      %3056 = vdwg.mxu0
      %v3066 = vunpack.c.l.b16 %v2943
      %v3067 = vunpack.c.l.b16 %v2944
      %v3068 = vunpack.c.l.b16 %v2945
      %v3069 = vunpack.c.l.b16 %v2946
      %v3070 = vunpack.c.l.b16 %v2947
      %v3071 = vunpack.c.l.b16 %v2948
      %v3072 = vunpack.c.l.b16 %v2949
      %v3073 = vunpack.c.l.b16 %v2950
      %v3074 = vunpack.c.l.b16 %v2951
      %v3075 = vpack.c.b16 %v3067, %v3066
      %v3076 = vpack.c.b16 %v3069, %v3068
      %v3077 = vpack.c.b16 %v3071, %v3070
      %v3078 = vpack.c.b16 %v3073, %v3072
      %v3079 = vpack.c.b16 %v3074, %v3074
      %v3084 = vsel %vm2657, %v2969, 0
      %v3087 = vsel %vm2004, %v3079, 0
      %3089 = vmatprep.subr.bf16.mxu0 0
      %3090 = vmatpush1.bf16.msra.mxu0 %v3075
      %3091 = vmatprep.subr.bf16.mxu0 0
      %3092 = vmatpush1.bf16.msra.mxu0 %v3076
      %3093 = vmatprep.subr.bf16.mxu0 0
      %3094 = vmatpush1.bf16.msra.mxu0 %v3077
      %3095 = vmatprep.subr.bf16.mxu0 0
      %3096 = vmatpush1.bf16.msra.mxu0 %v3078
      %3097 = vmatprep.subr.bf16.mxu0 0
      %3098 = vmatpush1.bf16.msra.mxu0 %v3087
      %3099 = vmatprep.subr.bf16.mxu0 0
      %3100 = vmatpush1.bf16.msra.mxu0 0
      %3101 = vmatprep.subr.bf16.mxu0 0
      %3102 = vmatpush1.bf16.msra.mxu0 0
      %3103 = vmatprep.subr.bf16.mxu0 0
      %3104 = vmatpush1.bf16.msra.mxu0 0
      %3105 = vmatprep.subr.bf16.mxu0 0
      %3106 = vmatpush1.bf16.msra.mxu0 0
      %3107 = vmatprep.subr.bf16.mxu0 0
      %3108 = vmatpush1.bf16.msra.mxu0 0
      %3109 = vmatprep.subr.bf16.mxu0 0
      %3110 = vmatpush1.bf16.msra.mxu0 0
      %3111 = vmatprep.subr.bf16.mxu0 0
      %3112 = vmatpush1.bf16.msra.mxu0 0
      %3113 = vmatprep.subr.bf16.mxu0 0
      %3114 = vmatpush1.bf16.msra.mxu0 0
      %3115 = vmatprep.subr.bf16.mxu0 0
      %3116 = vmatpush1.bf16.msra.mxu0 0
      %3117 = vmatprep.subr.bf16.mxu0 0
      %3118 = vmatpush1.bf16.msra.mxu0 0
      %3119 = vmatprep.subr.bf16.mxu0 0
      %3120 = vmatpush1.bf16.msra.mxu0 0
      %3121 = vmatprep.mubr.bf16.mxu0 0
      %3122 = vmatmul.mubr.bf16.gmra.mrb[0].mxu0 %v3084
      %v3123 = vpop.f32.mrb[0].mxu0
      %v3124 = vadd.f32 %v3051, %v3123
      %v3125 = vpop.f32.mrb[0].mxu0
      %v3126 = vpop.f32.mrb[0].mxu0
      %v3127 = vadd.f32 %v3054, %v3126
      %v3128 = vpop.f32.mrb[0].mxu0
      %3129 = vdwg.mxu0
      %v3130 = vld [vmem:[#allocation3] sm:$0xe]
      %s3131 = scalar_lea.vmem %s19, 72
      %v3132 = vld [vmem:[%s3131] sm:$0xf]
      %v3133 = vld [vmem:[%s3131 + $0x4] sm:$0xf]
      %v3134 = vld [vmem:[%s3131 + $0x8] sm:$0xf]
      %v3135 = vld [vmem:[%s3131 + $0xc] sm:$0xf]
      %v3136 = vld [vmem:[%s3131 + $0x10] sm:$0xf]
      %v3137 = vld [vmem:[%s3131 + $0x14] sm:$0xf]
      %v3138 = vld [vmem:[%s3131 + $0x18] sm:$0xf]
      %v3139 = vld [vmem:[%s3131 + $0x1c] sm:$0xf]
      %v3140 = vld [vmem:[%s3131 + $0x20] sm:$0xf]
      %v3142 = vunpack.c.l.b16 %v3130
      %v3143 = vpack.c.b16 %v2967, %v3142
      %v3144 = vrot.slane %v3143, 1
      %v3145 = vrot.slane %v2970, 1
      %v3146 = vsel %vm1582, %v3144, %v3145
      %v3156 = vunpack.c.l.b16 %v3132
      %v3157 = vunpack.c.l.b16 %v3133
      %v3158 = vunpack.c.l.b16 %v3134
      %v3159 = vunpack.c.l.b16 %v3135
      %v3160 = vunpack.c.l.b16 %v3136
      %v3161 = vunpack.c.l.b16 %v3137
      %v3162 = vunpack.c.l.b16 %v3138
      %v3163 = vunpack.c.l.b16 %v3139
      %v3164 = vunpack.c.l.b16 %v3140
      %v3165 = vpack.c.b16 %v3157, %v3156
      %v3166 = vpack.c.b16 %v3159, %v3158
      %v3167 = vpack.c.b16 %v3161, %v3160
      %v3168 = vpack.c.b16 %v3163, %v3162
      %v3169 = vpack.c.b16 %v3164, %v3164
      %v3175 = vsel %vm2657, %v3146, 0
      %v3178 = vsel %vm2004, %v3169, 0
      %3180 = vmatprep.subr.bf16.mxu0 0
      %3181 = vmatpush1.bf16.msra.mxu0 %v3165
      %3182 = vmatprep.subr.bf16.mxu0 0
      %3183 = vmatpush1.bf16.msra.mxu0 %v3166
      %3184 = vmatprep.subr.bf16.mxu0 0
      %3185 = vmatpush1.bf16.msra.mxu0 %v3167
      %3186 = vmatprep.subr.bf16.mxu0 0
      %3187 = vmatpush1.bf16.msra.mxu0 %v3168
      %3188 = vmatprep.subr.bf16.mxu0 0
      %3189 = vmatpush1.bf16.msra.mxu0 %v3178
      %3190 = vmatprep.subr.bf16.mxu0 0
      %3191 = vmatpush1.bf16.msra.mxu0 0
      %3192 = vmatprep.subr.bf16.mxu0 0
      %3193 = vmatpush1.bf16.msra.mxu0 0
      %3194 = vmatprep.subr.bf16.mxu0 0
      %3195 = vmatpush1.bf16.msra.mxu0 0
      %3196 = vmatprep.subr.bf16.mxu0 0
      %3197 = vmatpush1.bf16.msra.mxu0 0
      %3198 = vmatprep.subr.bf16.mxu0 0
      %3199 = vmatpush1.bf16.msra.mxu0 0
      %3200 = vmatprep.subr.bf16.mxu0 0
      %3201 = vmatpush1.bf16.msra.mxu0 0
      %3202 = vmatprep.subr.bf16.mxu0 0
      %3203 = vmatpush1.bf16.msra.mxu0 0
      %3204 = vmatprep.subr.bf16.mxu0 0
      %3205 = vmatpush1.bf16.msra.mxu0 0
      %3206 = vmatprep.subr.bf16.mxu0 0
      %3207 = vmatpush1.bf16.msra.mxu0 0
      %3208 = vmatprep.subr.bf16.mxu0 0
      %3209 = vmatpush1.bf16.msra.mxu0 0
      %3210 = vmatprep.subr.bf16.mxu0 0
      %3211 = vmatpush1.bf16.msra.mxu0 0
      %3212 = vmatprep.mubr.bf16.mxu0 0
      %3213 = vmatmul.mubr.bf16.gmra.mrb[0].mxu0 %v3175
      %v3214 = vpop.f32.mrb[0].mxu0
      %v3215 = vadd.f32 0.0, %v3214
      %v3216 = vpop.f32.mrb[0].mxu0
      %v3217 = vpop.f32.mrb[0].mxu0
      %v3218 = vadd.f32 0.0, %v3217
      %v3219 = vpop.f32.mrb[0].mxu0
      %3220 = vdwg.mxu0
      %v3221 = vadd.f32 %v3124, %v3215
      %v3222 = vadd.f32 %v3127, %v3218
      %v3223 = vpack.c.bf16 %v2511, %v2506
      %v3224 = vld [vmem:[%s21] sm:$0xf]
      %v3225 = vld [vmem:[%s21 + $0x4] sm:$0xf]
      %v3226 = vld [vmem:[%s21 + $0x8] sm:$0xf]
      %v3227 = vld [vmem:[%s21 + $0xc] sm:$0xf]
      %v3228 = vld [vmem:[%s21 + $0x10] sm:$0xf]
      %v3229 = vld [vmem:[%s21 + $0x14] sm:$0xf]
      %v3230 = vld [vmem:[%s21 + $0x18] sm:$0xf]
      %v3231 = vld [vmem:[%s21 + $0x1c] sm:$0xf]
      %v3240 = vunpack.c.l.b16 %v3224
      %v3241 = vunpack.c.l.b16 %v3225
      %v3242 = vunpack.c.l.b16 %v3226
      %v3243 = vunpack.c.l.b16 %v3227
      %v3244 = vunpack.c.l.b16 %v3228
      %v3245 = vunpack.c.l.b16 %v3229
      %v3246 = vunpack.c.l.b16 %v3230
      %v3247 = vunpack.c.l.b16 %v3231
      %v3248 = vpack.c.b16 %v3241, %v3240
      %v3249 = vpack.c.b16 %v3243, %v3242
      %v3250 = vpack.c.b16 %v3245, %v3244
      %v3251 = vpack.c.b16 %v3247, %v3246
      %vm3256 = vcmask 523264
      %v3258 = vsel %vm3256, %v3223, 0
      %3260 = vmatprep.subr.bf16.mxu0 0
      %3261 = vmatpush1.bf16.msra.mxu0 %v3248
      %3262 = vmatprep.subr.bf16.mxu0 0
      %3263 = vmatpush1.bf16.msra.mxu0 %v3249
      %3264 = vmatprep.subr.bf16.mxu0 0
      %3265 = vmatpush1.bf16.msra.mxu0 %v3250
      %3266 = vmatprep.subr.bf16.mxu0 0
      %3267 = vmatpush1.bf16.msra.mxu0 %v3251
      %3268 = vmatprep.subr.bf16.mxu0 0
      %3269 = vmatpush1.bf16.msra.mxu0 0
      %3270 = vmatprep.subr.bf16.mxu0 0
      %3271 = vmatpush1.bf16.msra.mxu0 0
      %3272 = vmatprep.subr.bf16.mxu0 0
      %3273 = vmatpush1.bf16.msra.mxu0 0
      %3274 = vmatprep.subr.bf16.mxu0 0
      %3275 = vmatpush1.bf16.msra.mxu0 0
      %3276 = vmatprep.subr.bf16.mxu0 0
      %3277 = vmatpush1.bf16.msra.mxu0 0
      %3278 = vmatprep.subr.bf16.mxu0 0
      %3279 = vmatpush1.bf16.msra.mxu0 0
      %3280 = vmatprep.subr.bf16.mxu0 0
      %3281 = vmatpush1.bf16.msra.mxu0 0
      %3282 = vmatprep.subr.bf16.mxu0 0
      %3283 = vmatpush1.bf16.msra.mxu0 0
      %3284 = vmatprep.subr.bf16.mxu0 0
      %3285 = vmatpush1.bf16.msra.mxu0 0
      %3286 = vmatprep.subr.bf16.mxu0 0
      %3287 = vmatpush1.bf16.msra.mxu0 0
      %3288 = vmatprep.subr.bf16.mxu0 0
      %3289 = vmatpush1.bf16.msra.mxu0 0
      %3290 = vmatprep.subr.bf16.mxu0 0
      %3291 = vmatpush1.bf16.msra.mxu0 0
      %3292 = vmatprep.mubr.bf16.mxu0 0
      %3293 = vmatmul.mubr.bf16.gmra.mrb[0].mxu0 %v3258
      %v3294 = vpop.f32.mrb[0].mxu0
      %v3295 = vadd.f32 0.0, %v3294
      %v3296 = vpop.f32.mrb[0].mxu0
      %v3297 = vpop.f32.mrb[0].mxu0
      %v3298 = vadd.f32 0.0, %v3297
      %v3299 = vpop.f32.mrb[0].mxu0
      %3300 = vdwg.mxu0
      %v3301 = vld [vmem:[%s23] sm:$0xff]
      %v3302 = vadd.f32 %v3221, %v3295
      %v3303 = vadd.f32 %v3222, %v3298
      %v3304 = vld [vmem:[%s25] sm:$0x1]
      %v3306 = vlaneseq
      %v3307 = vshrl.u32 %v3306, 7
      %v3308 = vsub.s32 0, %v3307
      %v3309 = vrot.slane %v3304, %v3308
      %vm3311 = vcmask 130048
      %v3313 = vsel %vm3311, %v3301, 0
      %3315 = vmatprep.subr.mxu0 0.0
      %3316 = vmatpush1.msra.mxu0 %v3302
      %3317 = vmatprep.subr.mxu0 0.0
      %3318 = vmatpush1.msra.mxu0 %v3303
      %3319 = vmatprep.subr.mxu0 0.0
      %3320 = vmatpush1.msra.mxu0 0.0
      %3321 = vmatprep.subr.mxu0 0.0
      %3322 = vmatpush1.msra.mxu0 0.0
      %3323 = vmatprep.subr.mxu0 0.0
      %3324 = vmatpush1.msra.mxu0 0.0
      %3325 = vmatprep.subr.mxu0 0.0
      %3326 = vmatpush1.msra.mxu0 0.0
      %3327 = vmatprep.subr.mxu0 0.0
      %3328 = vmatpush1.msra.mxu0 0.0
      %3329 = vmatprep.subr.mxu0 0.0
      %3330 = vmatpush1.msra.mxu0 0.0
      %3331 = vmatprep.subr.mxu0 0.0
      %3332 = vmatpush1.msra.mxu0 0.0
      %3333 = vmatprep.subr.mxu0 0.0
      %3334 = vmatpush1.msra.mxu0 0.0
      %3335 = vmatprep.subr.mxu0 0.0
      %3336 = vmatpush1.msra.mxu0 0.0
      %3337 = vmatprep.subr.mxu0 0.0
      %3338 = vmatpush1.msra.mxu0 0.0
      %3339 = vmatprep.subr.mxu0 0.0
      %3340 = vmatpush1.msra.mxu0 0.0
      %3341 = vmatprep.subr.mxu0 0.0
      %3342 = vmatpush1.msra.mxu0 0.0
      %3343 = vmatprep.subr.mxu0 0.0
      %3344 = vmatpush1.msra.mxu0 0.0
      %3345 = vmatprep.subr.mxu0 0.0
      %3346 = vmatpush1.msra.mxu0 0.0
      %3347 = vmatprep.subr.mxu0 0.0
      %3348 = vmatpush1.msra.mxu0 0.0
      %3349 = vmatprep.subr.mxu0 0.0
      %3350 = vmatpush1.msra.mxu0 0.0
      %3351 = vmatprep.subr.mxu0 0.0
      %3352 = vmatpush1.msra.mxu0 0.0
      %3353 = vmatprep.subr.mxu0 0.0
      %3354 = vmatpush1.msra.mxu0 0.0
      %3355 = vmatprep.subr.mxu0 0.0
      %3356 = vmatpush1.msra.mxu0 0.0
      %3357 = vmatprep.subr.mxu0 0.0
      %3358 = vmatpush1.msra.mxu0 0.0
      %3359 = vmatprep.subr.mxu0 0.0
      %3360 = vmatpush1.msra.mxu0 0.0
      %3361 = vmatprep.subr.mxu0 0.0
      %3362 = vmatpush1.msra.mxu0 0.0
      %3363 = vmatprep.subr.mxu0 0.0
      %3364 = vmatpush1.msra.mxu0 0.0
      %3365 = vmatprep.subr.mxu0 0.0
      %3366 = vmatpush1.msra.mxu0 0.0
      %3367 = vmatprep.subr.mxu0 0.0
      %3368 = vmatpush1.msra.mxu0 0.0
      %3369 = vmatprep.subr.mxu0 0.0
      %3370 = vmatpush1.msra.mxu0 0.0
      %3371 = vmatprep.subr.mxu0 0.0
      %3372 = vmatpush1.msra.mxu0 0.0
      %3373 = vmatprep.subr.mxu0 0.0
      %3374 = vmatpush1.msra.mxu0 0.0
      %3375 = vmatprep.subr.mxu0 0.0
      %3376 = vmatpush1.msra.mxu0 0.0
      %3377 = vmatprep.subr.mxu0 0.0
      %3378 = vmatpush1.msra.mxu0 0.0
      %3379 = vmatprep.mubr.f32.mxu0 0.0
      %3380 = vmatmul.mubr.f32.gmra.mrb[0].mxu0 %v3313
      %v3381 = vpop.f32.mrb[0].mxu0
      %v3382 = vadd.f32 %v3309, %v3381
      %v3383 = vpop.f32.mrb[0].mxu0
      %3384 = vdwg.mxu0
      %vm3385 = vcmask 647168
      %vm3386 = vmand %vm3385, %vm1188
      %v3387 = vld [vmem:[#allocation2] sm:$0x1]
      %v3388 = vsel %vm3386, 0, %v3387
      %3389 = vst [vmem:[#allocation2] sm:$0x1] %v3388
      %vm3390 = vmand %vm3385, %vm1193
      %v3391 = vld [vmem:[#allocation2 + $0x4] sm:$0x1]
      %v3392 = vsel %vm3390, 0, %v3391
      %3393 = vst [vmem:[#allocation2 + $0x4] sm:$0x1] %v3392
      %vm3394 = vcmask 60416
      %vm3395 = vmand %vm3394, %vm1193
      %v3396 = vld [vmem:[#allocation2] sm:$0xf]
      %v3397 = vsel %vm3395, 0, %v3396
      %3398 = vst [vmem:[#allocation2] sm:$0xf] %v3397
      %vm3399 = vcmask 57344
      %vm3400 = vmand %vm3399, %vm1188
      %v3401 = vld [vmem:[#allocation2 + $0x4] sm:$0x1]
      %v3402 = vsel %vm3400, 0, %v3401
      %3403 = vst [vmem:[#allocation2 + $0x4] sm:$0x1] %v3402
      %vm3404 = vcmask 650816
      %vm3405 = vmand %vm3404, %vm1193
      %v3406 = vld [vmem:[#allocation2] sm:$0xf]
      %v3407 = vsel %vm3405, 0, %v3406
      %3408 = vst [vmem:[#allocation2] sm:$0xf] %v3407
      %vm3409 = vcmask 647744
      %vm3410 = vmand %vm3409, %vm1188
      %v3411 = vld [vmem:[#allocation2 + $0x4] sm:$0x1]
      %v3412 = vsel %vm3410, 0, %v3411
      %3413 = vst [vmem:[#allocation2 + $0x4] sm:$0x1] %v3412
      %v3414 = vmax.f32 %v3382, 0.0
      %v3415 = vpack.c.bf16 %v3414, %v3414
      %v3417 = vunpack.c.l.b16 %v3415
      %v3418 = vpack.c.b16 %v3417, %v3417
      %v3420 = vshrl.u32 %v3418, 16
      %v3422 = vrot.slane %v3420, 7
      %v3423 = vshll.u32 %v3418, 16
      %v3425 = vor.u32 %v3422, %v3423
      %v3426 = vrot.slane %v3422, 4
      %3427 = vrot.lane.b32.xlu0 %v3425, 8
      %v3428 = vpop.permute.xlu0 %3427
      %3429 = vrot.lane.b32.xlu0 %v3426, 8
      %v3430 = vpop.permute.xlu0 %3429
      %vm3433 = vcmask 584768
      %vm3434 = vmand %vm3433, %vm1193
      %v3435 = vld [vmem:[#allocation2] sm:$0xf]
      %v3436 = vsel %vm3434, %v3428, %v3435
      %3437 = vst [vmem:[#allocation2] sm:$0xf] %v3436
      %vm3438 = vcmask 581696
      %vm3439 = vmand %vm3438, %vm1188
      %v3440 = vld [vmem:[#allocation2 + $0x4] sm:$0x1]
      %v3441 = vsel %vm3439, %v3430, %v3440
      %3442 = vst [vmem:[#allocation2 + $0x4] sm:$0x1] %v3441
      %v3443 = vld [vmem:[#allocation2] sm:$0xf]
      %v3444 = vld [vmem:[%s27] sm:$0xf]
      %v3445 = vld [vmem:[%s27 + $0x4] sm:$0xf]
      %v3446 = vld [vmem:[%s27 + $0x8] sm:$0xf]
      %v3447 = vld [vmem:[%s27 + $0xc] sm:$0xf]
      %v3448 = vld [vmem:[%s27 + $0x10] sm:$0xf]
      %v3449 = vld [vmem:[%s27 + $0x14] sm:$0xf]
      %v3450 = vld [vmem:[%s27 + $0x18] sm:$0xf]
      %v3451 = vld [vmem:[%s27 + $0x1c] sm:$0xf]
      %v3452 = vld [vmem:[%s27 + $0x20] sm:$0xf]
      %v3453 = vld [vmem:[%s27 + $0x24] sm:$0xf]
      %v3454 = vld [vmem:[#allocation2 + $0x4] sm:$0x1]
      %s3455 = scalar_lea.vmem %s27, 40
      %v3456 = vld [vmem:[%s3455] sm:$0xf]
      %v3457 = vld [vmem:[%s3455 + $0x4] sm:$0xf]
      %v3458 = vld [vmem:[%s3455 + $0x8] sm:$0xf]
      %v3459 = vld [vmem:[%s3455 + $0xc] sm:$0xf]
      %v3460 = vld [vmem:[%s3455 + $0x10] sm:$0xf]
      %v3461 = vld [vmem:[%s3455 + $0x14] sm:$0xf]
      %v3462 = vld [vmem:[%s3455 + $0x18] sm:$0xf]
      %v3463 = vld [vmem:[%s3455 + $0x1c] sm:$0xf]
      %v3464 = vld [vmem:[%s3455 + $0x20] sm:$0xf]
      %v3465 = vld [vmem:[%s3455 + $0x24] sm:$0xf]
      %v3468 = vunpack.c.l.b16 %v3443
      %v3469 = vunpack.c.l.b16 %v3454
      %v3470 = vpack.c.b16 %v3469, %v3468
      %v3472 = vshrl.u32 %v3470, 16
      %v3474 = vshll.u32 %v3470, 16
      %v3476 = vrot.slane %v3474, 1
      %v3477 = vor.u32 %v3472, %v3476
      %v3488 = vunpack.c.l.b16 %v3456
      %v3489 = vunpack.c.l.b16 %v3457
      %v3490 = vunpack.c.l.b16 %v3458
      %v3491 = vunpack.c.l.b16 %v3459
      %v3492 = vunpack.c.l.b16 %v3460
      %v3493 = vunpack.c.l.b16 %v3461
      %v3494 = vunpack.c.l.b16 %v3462
      %v3495 = vunpack.c.l.b16 %v3463
      %v3496 = vunpack.c.l.b16 %v3464
      %v3497 = vunpack.c.l.b16 %v3465
      %v3498 = vpack.c.b16 %v3489, %v3488
      %v3499 = vpack.c.b16 %v3491, %v3490
      %v3500 = vpack.c.b16 %v3493, %v3492
      %v3501 = vpack.c.b16 %v3495, %v3494
      %v3502 = vpack.c.b16 %v3497, %v3496
      %vm3508 = vcmask 654336
      %v3510 = vsel %vm3508, %v3477, 0
      %3512 = vmatprep.subr.bf16.mxu0 0
      %3513 = vmatpush1.bf16.msra.mxu0 %v3498
      %3514 = vmatprep.subr.bf16.mxu0 0
      %3515 = vmatpush1.bf16.msra.mxu0 %v3499
      %3516 = vmatprep.subr.bf16.mxu0 0
      %3517 = vmatpush1.bf16.msra.mxu0 %v3500
      %3518 = vmatprep.subr.bf16.mxu0 0
      %3519 = vmatpush1.bf16.msra.mxu0 %v3501
      %3520 = vmatprep.subr.bf16.mxu0 0
      %3521 = vmatpush1.bf16.msra.mxu0 %v3502
      %3522 = vmatprep.subr.bf16.mxu0 0
      %3523 = vmatpush1.bf16.msra.mxu0 0
      %3524 = vmatprep.subr.bf16.mxu0 0
      %3525 = vmatpush1.bf16.msra.mxu0 0
      %3526 = vmatprep.subr.bf16.mxu0 0
      %3527 = vmatpush1.bf16.msra.mxu0 0
      %3528 = vmatprep.subr.bf16.mxu0 0
      %3529 = vmatpush1.bf16.msra.mxu0 0
      %3530 = vmatprep.subr.bf16.mxu0 0
      %3531 = vmatpush1.bf16.msra.mxu0 0
      %3532 = vmatprep.subr.bf16.mxu0 0
      %3533 = vmatpush1.bf16.msra.mxu0 0
      %3534 = vmatprep.subr.bf16.mxu0 0
      %3535 = vmatpush1.bf16.msra.mxu0 0
      %3536 = vmatprep.subr.bf16.mxu0 0
      %3537 = vmatpush1.bf16.msra.mxu0 0
      %3538 = vmatprep.subr.bf16.mxu0 0
      %3539 = vmatpush1.bf16.msra.mxu0 0
      %3540 = vmatprep.subr.bf16.mxu0 0
      %3541 = vmatpush1.bf16.msra.mxu0 0
      %3542 = vmatprep.subr.bf16.mxu0 0
      %3543 = vmatpush1.bf16.msra.mxu0 0
      %3544 = vmatprep.mubr.bf16.mxu0 0
      %3545 = vmatmul.mubr.bf16.gmra.mrb[0].mxu0 %v3510
      %v3546 = vpop.f32.mrb[0].mxu0
      %v3547 = vadd.f32 0.0, %v3546
      %v3548 = vpop.f32.mrb[0].mxu0
      %v3549 = vpop.f32.mrb[0].mxu0
      %v3550 = vpop.f32.mrb[0].mxu0
      %3551 = vdwg.mxu0
      %v3562 = vunpack.c.l.b16 %v3444
      %v3563 = vunpack.c.l.b16 %v3445
      %v3564 = vunpack.c.l.b16 %v3446
      %v3565 = vunpack.c.l.b16 %v3447
      %v3566 = vunpack.c.l.b16 %v3448
      %v3567 = vunpack.c.l.b16 %v3449
      %v3568 = vunpack.c.l.b16 %v3450
      %v3569 = vunpack.c.l.b16 %v3451
      %v3570 = vunpack.c.l.b16 %v3452
      %v3571 = vunpack.c.l.b16 %v3453
      %v3572 = vpack.c.b16 %v3563, %v3562
      %v3573 = vpack.c.b16 %v3565, %v3564
      %v3574 = vpack.c.b16 %v3567, %v3566
      %v3575 = vpack.c.b16 %v3569, %v3568
      %v3576 = vpack.c.b16 %v3571, %v3570
      %v3583 = vsel %vm3508, %v3443, 0
      %3585 = vmatprep.subr.bf16.mxu0 0
      %3586 = vmatpush1.bf16.msra.mxu0 %v3572
      %3587 = vmatprep.subr.bf16.mxu0 0
      %3588 = vmatpush1.bf16.msra.mxu0 %v3573
      %3589 = vmatprep.subr.bf16.mxu0 0
      %3590 = vmatpush1.bf16.msra.mxu0 %v3574
      %3591 = vmatprep.subr.bf16.mxu0 0
      %3592 = vmatpush1.bf16.msra.mxu0 %v3575
      %3593 = vmatprep.subr.bf16.mxu0 0
      %3594 = vmatpush1.bf16.msra.mxu0 %v3576
      %3595 = vmatprep.subr.bf16.mxu0 0
      %3596 = vmatpush1.bf16.msra.mxu0 0
      %3597 = vmatprep.subr.bf16.mxu0 0
      %3598 = vmatpush1.bf16.msra.mxu0 0
      %3599 = vmatprep.subr.bf16.mxu0 0
      %3600 = vmatpush1.bf16.msra.mxu0 0
      %3601 = vmatprep.subr.bf16.mxu0 0
      %3602 = vmatpush1.bf16.msra.mxu0 0
      %3603 = vmatprep.subr.bf16.mxu0 0
      %3604 = vmatpush1.bf16.msra.mxu0 0
      %3605 = vmatprep.subr.bf16.mxu0 0
      %3606 = vmatpush1.bf16.msra.mxu0 0
      %3607 = vmatprep.subr.bf16.mxu0 0
      %3608 = vmatpush1.bf16.msra.mxu0 0
      %3609 = vmatprep.subr.bf16.mxu0 0
      %3610 = vmatpush1.bf16.msra.mxu0 0
      %3611 = vmatprep.subr.bf16.mxu0 0
      %3612 = vmatpush1.bf16.msra.mxu0 0
      %3613 = vmatprep.subr.bf16.mxu0 0
      %3614 = vmatpush1.bf16.msra.mxu0 0
      %3615 = vmatprep.subr.bf16.mxu0 0
      %3616 = vmatpush1.bf16.msra.mxu0 0
      %3617 = vmatprep.mubr.bf16.mxu0 0
      %3618 = vmatmul.mubr.bf16.gmra.mrb[0].mxu0 %v3583
      %v3619 = vpop.f32.mrb[0].mxu0
      %v3620 = vadd.f32 %v3547, %v3619
      %v3621 = vpop.f32.mrb[0].mxu0
      %v3622 = vpop.f32.mrb[0].mxu0
      %v3623 = vpop.f32.mrb[0].mxu0
      %3624 = vdwg.mxu0
      %v3625 = vld [vmem:[#allocation2] sm:$0xe]
      %s3626 = scalar_lea.vmem %s27, 80
      %v3627 = vld [vmem:[%s3626] sm:$0xf]
      %v3628 = vld [vmem:[%s3626 + $0x4] sm:$0xf]
      %v3629 = vld [vmem:[%s3626 + $0x8] sm:$0xf]
      %v3630 = vld [vmem:[%s3626 + $0xc] sm:$0xf]
      %v3631 = vld [vmem:[%s3626 + $0x10] sm:$0xf]
      %v3632 = vld [vmem:[%s3626 + $0x14] sm:$0xf]
      %v3633 = vld [vmem:[%s3626 + $0x18] sm:$0xf]
      %v3634 = vld [vmem:[%s3626 + $0x1c] sm:$0xf]
      %v3635 = vld [vmem:[%s3626 + $0x20] sm:$0xf]
      %v3636 = vld [vmem:[%s3626 + $0x24] sm:$0xf]
      %v3638 = vunpack.c.l.b16 %v3625
      %v3639 = vpack.c.b16 %v3469, %v3638
      %v3640 = vrot.slane %v3639, 1
      %v3651 = vunpack.c.l.b16 %v3627
      %v3652 = vunpack.c.l.b16 %v3628
      %v3653 = vunpack.c.l.b16 %v3629
      %v3654 = vunpack.c.l.b16 %v3630
      %v3655 = vunpack.c.l.b16 %v3631
      %v3656 = vunpack.c.l.b16 %v3632
      %v3657 = vunpack.c.l.b16 %v3633
      %v3658 = vunpack.c.l.b16 %v3634
      %v3659 = vunpack.c.l.b16 %v3635
      %v3660 = vunpack.c.l.b16 %v3636
      %v3661 = vpack.c.b16 %v3652, %v3651
      %v3662 = vpack.c.b16 %v3654, %v3653
      %v3663 = vpack.c.b16 %v3656, %v3655
      %v3664 = vpack.c.b16 %v3658, %v3657
      %v3665 = vpack.c.b16 %v3660, %v3659
      %v3672 = vsel %vm3508, %v3640, 0
      %3674 = vmatprep.subr.bf16.mxu0 0
      %3675 = vmatpush1.bf16.msra.mxu0 %v3661
      %3676 = vmatprep.subr.bf16.mxu0 0
      %3677 = vmatpush1.bf16.msra.mxu0 %v3662
      %3678 = vmatprep.subr.bf16.mxu0 0
      %3679 = vmatpush1.bf16.msra.mxu0 %v3663
      %3680 = vmatprep.subr.bf16.mxu0 0
      %3681 = vmatpush1.bf16.msra.mxu0 %v3664
      %3682 = vmatprep.subr.bf16.mxu0 0
      %3683 = vmatpush1.bf16.msra.mxu0 %v3665
      %3684 = vmatprep.subr.bf16.mxu0 0
      %3685 = vmatpush1.bf16.msra.mxu0 0
      %3686 = vmatprep.subr.bf16.mxu0 0
      %3687 = vmatpush1.bf16.msra.mxu0 0
      %3688 = vmatprep.subr.bf16.mxu0 0
      %3689 = vmatpush1.bf16.msra.mxu0 0
      %3690 = vmatprep.subr.bf16.mxu0 0
      %3691 = vmatpush1.bf16.msra.mxu0 0
      %3692 = vmatprep.subr.bf16.mxu0 0
      %3693 = vmatpush1.bf16.msra.mxu0 0
      %3694 = vmatprep.subr.bf16.mxu0 0
      %3695 = vmatpush1.bf16.msra.mxu0 0
      %3696 = vmatprep.subr.bf16.mxu0 0
      %3697 = vmatpush1.bf16.msra.mxu0 0
      %3698 = vmatprep.subr.bf16.mxu0 0
      %3699 = vmatpush1.bf16.msra.mxu0 0
      %3700 = vmatprep.subr.bf16.mxu0 0
      %3701 = vmatpush1.bf16.msra.mxu0 0
      %3702 = vmatprep.subr.bf16.mxu0 0
      %3703 = vmatpush1.bf16.msra.mxu0 0
      %3704 = vmatprep.subr.bf16.mxu0 0
      %3705 = vmatpush1.bf16.msra.mxu0 0
      %3706 = vmatprep.mubr.bf16.mxu0 0
      %3707 = vmatmul.mubr.bf16.gmra.mrb[0].mxu0 %v3672
      %v3708 = vpop.f32.mrb[0].mxu0
      %v3709 = vadd.f32 0.0, %v3708
      %v3710 = vpop.f32.mrb[0].mxu0
      %v3711 = vpop.f32.mrb[0].mxu0
      %v3712 = vpop.f32.mrb[0].mxu0
      %3713 = vdwg.mxu0
      %v3714 = vadd.f32 %v3620, %v3709
      %v3715 = vld [vmem:[%s29] sm:$0x1]
      %v3717 = vlaneseq
      %v3718 = vshrl.u32 %v3717, 7
      %v3719 = vsub.s32 0, %v3718
      %v3720 = vrot.slane %v3715, %v3719
      %v3722 = vadd.f32 %v3714, %v3720
      %v3723 = vld [vmem:[#allocation3] sm:$0x1]
      %v3724 = vsel %vm3386, 0, %v3723
      %3725 = vst [vmem:[#allocation3] sm:$0x1] %v3724
      %v3726 = vld [vmem:[#allocation3 + $0x8] sm:$0x1]
      %v3727 = vsel %vm3390, 0, %v3726
      %3728 = vst [vmem:[#allocation3 + $0x8] sm:$0x1] %v3727
      %v3729 = vld [vmem:[#allocation3] sm:$0xf]
      %v3730 = vsel %vm3395, 0, %v3729
      %3731 = vst [vmem:[#allocation3] sm:$0xf] %v3730
      %v3732 = vld [vmem:[#allocation3 + $0x8] sm:$0x1]
      %v3733 = vsel %vm3400, 0, %v3732
      %3734 = vst [vmem:[#allocation3 + $0x8] sm:$0x1] %v3733
      %v3735 = vld [vmem:[#allocation3] sm:$0xf]
      %v3736 = vsel %vm3405, 0, %v3735
      %3737 = vst [vmem:[#allocation3] sm:$0xf] %v3736
      %v3738 = vld [vmem:[#allocation3 + $0x8] sm:$0x1]
      %v3739 = vsel %vm3410, 0, %v3738
      %3740 = vst [vmem:[#allocation3 + $0x8] sm:$0x1] %v3739
      %v3741 = vmax.f32 %v3722, 0.0
      %v3742 = vpack.c.bf16 %v3741, %v3741
      %v3744 = vunpack.c.l.b16 %v3742
      %v3745 = vpack.c.b16 %v3744, %v3744
      %v3747 = vshrl.u32 %v3745, 16
      %v3749 = vrot.slane %v3747, 7
      %v3750 = vshll.u32 %v3745, 16
      %v3752 = vor.u32 %v3749, %v3750
      %v3753 = vrot.slane %v3749, 4
      %3754 = vrot.lane.b32.xlu0 %v3752, 8
      %v3755 = vpop.permute.xlu0 %3754
      %3756 = vrot.lane.b32.xlu0 %v3753, 8
      %v3757 = vpop.permute.xlu0 %3756
      %v3760 = vld [vmem:[#allocation3] sm:$0xf]
      %v3761 = vsel %vm3434, %v3755, %v3760
      %3762 = vst [vmem:[#allocation3] sm:$0xf] %v3761
      %v3763 = vld [vmem:[#allocation3 + $0x8] sm:$0x1]
      %v3764 = vsel %vm3439, %v3757, %v3763
      %3765 = vst [vmem:[#allocation3 + $0x8] sm:$0x1] %v3764
      %v3766 = vld [vmem:[#allocation3] sm:$0xf]
      %v3767 = vld [vmem:[%s31] sm:$0xf]
      %v3768 = vld [vmem:[%s31 + $0x4] sm:$0xf]
      %v3769 = vld [vmem:[%s31 + $0x8] sm:$0xf]
      %v3770 = vld [vmem:[%s31 + $0xc] sm:$0xf]
      %v3771 = vld [vmem:[%s31 + $0x10] sm:$0xf]
      %v3772 = vld [vmem:[%s31 + $0x14] sm:$0xf]
      %v3773 = vld [vmem:[%s31 + $0x18] sm:$0xf]
      %v3774 = vld [vmem:[%s31 + $0x1c] sm:$0xf]
      %v3775 = vld [vmem:[%s31 + $0x20] sm:$0xf]
      %v3776 = vld [vmem:[%s31 + $0x24] sm:$0xf]
      %v3777 = vld [vmem:[#allocation3 + $0x8] sm:$0x1]
      %s3778 = scalar_lea.vmem %s31, 40
      %v3779 = vld [vmem:[%s3778] sm:$0xf]
      %v3780 = vld [vmem:[%s3778 + $0x4] sm:$0xf]
      %v3781 = vld [vmem:[%s3778 + $0x8] sm:$0xf]
      %v3782 = vld [vmem:[%s3778 + $0xc] sm:$0xf]
      %v3783 = vld [vmem:[%s3778 + $0x10] sm:$0xf]
      %v3784 = vld [vmem:[%s3778 + $0x14] sm:$0xf]
      %v3785 = vld [vmem:[%s3778 + $0x18] sm:$0xf]
      %v3786 = vld [vmem:[%s3778 + $0x1c] sm:$0xf]
      %v3787 = vld [vmem:[%s3778 + $0x20] sm:$0xf]
      %v3788 = vld [vmem:[%s3778 + $0x24] sm:$0xf]
      %v3791 = vunpack.c.l.b16 %v3766
      %v3792 = vunpack.c.l.b16 %v3777
      %v3793 = vpack.c.b16 %v3792, %v3791
      %v3795 = vshrl.u32 %v3793, 16
      %v3797 = vshll.u32 %v3793, 16
      %v3799 = vrot.slane %v3797, 1
      %v3800 = vor.u32 %v3795, %v3799
      %v3811 = vunpack.c.l.b16 %v3779
      %v3812 = vunpack.c.l.b16 %v3780
      %v3813 = vunpack.c.l.b16 %v3781
      %v3814 = vunpack.c.l.b16 %v3782
      %v3815 = vunpack.c.l.b16 %v3783
      %v3816 = vunpack.c.l.b16 %v3784
      %v3817 = vunpack.c.l.b16 %v3785
      %v3818 = vunpack.c.l.b16 %v3786
      %v3819 = vunpack.c.l.b16 %v3787
      %v3820 = vunpack.c.l.b16 %v3788
      %v3821 = vpack.c.b16 %v3812, %v3811
      %v3822 = vpack.c.b16 %v3814, %v3813
      %v3823 = vpack.c.b16 %v3816, %v3815
      %v3824 = vpack.c.b16 %v3818, %v3817
      %v3825 = vpack.c.b16 %v3820, %v3819
      %v3832 = vsel %vm3508, %v3800, 0
      %3834 = vmatprep.subr.bf16.mxu0 0
      %3835 = vmatpush1.bf16.msra.mxu0 %v3821
      %3836 = vmatprep.subr.bf16.mxu0 0
      %3837 = vmatpush1.bf16.msra.mxu0 %v3822
      %3838 = vmatprep.subr.bf16.mxu0 0
      %3839 = vmatpush1.bf16.msra.mxu0 %v3823
      %3840 = vmatprep.subr.bf16.mxu0 0
      %3841 = vmatpush1.bf16.msra.mxu0 %v3824
      %3842 = vmatprep.subr.bf16.mxu0 0
      %3843 = vmatpush1.bf16.msra.mxu0 %v3825
      %3844 = vmatprep.subr.bf16.mxu0 0
      %3845 = vmatpush1.bf16.msra.mxu0 0
      %3846 = vmatprep.subr.bf16.mxu0 0
      %3847 = vmatpush1.bf16.msra.mxu0 0
      %3848 = vmatprep.subr.bf16.mxu0 0
      %3849 = vmatpush1.bf16.msra.mxu0 0
      %3850 = vmatprep.subr.bf16.mxu0 0
      %3851 = vmatpush1.bf16.msra.mxu0 0
      %3852 = vmatprep.subr.bf16.mxu0 0
      %3853 = vmatpush1.bf16.msra.mxu0 0
      %3854 = vmatprep.subr.bf16.mxu0 0
      %3855 = vmatpush1.bf16.msra.mxu0 0
      %3856 = vmatprep.subr.bf16.mxu0 0
      %3857 = vmatpush1.bf16.msra.mxu0 0
      %3858 = vmatprep.subr.bf16.mxu0 0
      %3859 = vmatpush1.bf16.msra.mxu0 0
      %3860 = vmatprep.subr.bf16.mxu0 0
      %3861 = vmatpush1.bf16.msra.mxu0 0
      %3862 = vmatprep.subr.bf16.mxu0 0
      %3863 = vmatpush1.bf16.msra.mxu0 0
      %3864 = vmatprep.subr.bf16.mxu0 0
      %3865 = vmatpush1.bf16.msra.mxu0 0
      %3866 = vmatprep.mubr.bf16.mxu0 0
      %3867 = vmatmul.mubr.bf16.gmra.mrb[0].mxu0 %v3832
      %v3868 = vpop.f32.mrb[0].mxu0
      %v3869 = vadd.f32 0.0, %v3868
      %v3870 = vpop.f32.mrb[0].mxu0
      %v3871 = vpop.f32.mrb[0].mxu0
      %v3872 = vpop.f32.mrb[0].mxu0
      %3873 = vdwg.mxu0
      %v3884 = vunpack.c.l.b16 %v3767
      %v3885 = vunpack.c.l.b16 %v3768
      %v3886 = vunpack.c.l.b16 %v3769
      %v3887 = vunpack.c.l.b16 %v3770
      %v3888 = vunpack.c.l.b16 %v3771
      %v3889 = vunpack.c.l.b16 %v3772
      %v3890 = vunpack.c.l.b16 %v3773
      %v3891 = vunpack.c.l.b16 %v3774
      %v3892 = vunpack.c.l.b16 %v3775
      %v3893 = vunpack.c.l.b16 %v3776
      %v3894 = vpack.c.b16 %v3885, %v3884
      %v3895 = vpack.c.b16 %v3887, %v3886
      %v3896 = vpack.c.b16 %v3889, %v3888
      %v3897 = vpack.c.b16 %v3891, %v3890
      %v3898 = vpack.c.b16 %v3893, %v3892
      %v3905 = vsel %vm3508, %v3766, 0
      %3907 = vmatprep.subr.bf16.mxu0 0
      %3908 = vmatpush1.bf16.msra.mxu0 %v3894
      %3909 = vmatprep.subr.bf16.mxu0 0
      %3910 = vmatpush1.bf16.msra.mxu0 %v3895
      %3911 = vmatprep.subr.bf16.mxu0 0
      %3912 = vmatpush1.bf16.msra.mxu0 %v3896
      %3913 = vmatprep.subr.bf16.mxu0 0
      %3914 = vmatpush1.bf16.msra.mxu0 %v3897
      %3915 = vmatprep.subr.bf16.mxu0 0
      %3916 = vmatpush1.bf16.msra.mxu0 %v3898
      %3917 = vmatprep.subr.bf16.mxu0 0
      %3918 = vmatpush1.bf16.msra.mxu0 0
      %3919 = vmatprep.subr.bf16.mxu0 0
      %3920 = vmatpush1.bf16.msra.mxu0 0
      %3921 = vmatprep.subr.bf16.mxu0 0
      %3922 = vmatpush1.bf16.msra.mxu0 0
      %3923 = vmatprep.subr.bf16.mxu0 0
      %3924 = vmatpush1.bf16.msra.mxu0 0
      %3925 = vmatprep.subr.bf16.mxu0 0
      %3926 = vmatpush1.bf16.msra.mxu0 0
      %3927 = vmatprep.subr.bf16.mxu0 0
      %3928 = vmatpush1.bf16.msra.mxu0 0
      %3929 = vmatprep.subr.bf16.mxu0 0
      %3930 = vmatpush1.bf16.msra.mxu0 0
      %3931 = vmatprep.subr.bf16.mxu0 0
      %3932 = vmatpush1.bf16.msra.mxu0 0
      %3933 = vmatprep.subr.bf16.mxu0 0
      %3934 = vmatpush1.bf16.msra.mxu0 0
      %3935 = vmatprep.subr.bf16.mxu0 0
      %3936 = vmatpush1.bf16.msra.mxu0 0
      %3937 = vmatprep.subr.bf16.mxu0 0
      %3938 = vmatpush1.bf16.msra.mxu0 0
      %3939 = vmatprep.mubr.bf16.mxu0 0
      %3940 = vmatmul.mubr.bf16.gmra.mrb[0].mxu0 %v3905
      %v3941 = vpop.f32.mrb[0].mxu0
      %v3942 = vadd.f32 %v3869, %v3941
      %v3943 = vpop.f32.mrb[0].mxu0
      %v3944 = vpop.f32.mrb[0].mxu0
      %v3945 = vpop.f32.mrb[0].mxu0
      %3946 = vdwg.mxu0
      %v3947 = vld [vmem:[#allocation3] sm:$0xe]
      %s3948 = scalar_lea.vmem %s31, 80
      %v3949 = vld [vmem:[%s3948] sm:$0xf]
      %v3950 = vld [vmem:[%s3948 + $0x4] sm:$0xf]
      %v3951 = vld [vmem:[%s3948 + $0x8] sm:$0xf]
      %v3952 = vld [vmem:[%s3948 + $0xc] sm:$0xf]
      %v3953 = vld [vmem:[%s3948 + $0x10] sm:$0xf]
      %v3954 = vld [vmem:[%s3948 + $0x14] sm:$0xf]
      %v3955 = vld [vmem:[%s3948 + $0x18] sm:$0xf]
      %v3956 = vld [vmem:[%s3948 + $0x1c] sm:$0xf]
      %v3957 = vld [vmem:[%s3948 + $0x20] sm:$0xf]
      %v3958 = vld [vmem:[%s3948 + $0x24] sm:$0xf]
      %v3960 = vunpack.c.l.b16 %v3947
      %v3961 = vpack.c.b16 %v3792, %v3960
      %v3962 = vrot.slane %v3961, 1
      %v3973 = vunpack.c.l.b16 %v3949
      %v3974 = vunpack.c.l.b16 %v3950
      %v3975 = vunpack.c.l.b16 %v3951
      %v3976 = vunpack.c.l.b16 %v3952
      %v3977 = vunpack.c.l.b16 %v3953
      %v3978 = vunpack.c.l.b16 %v3954
      %v3979 = vunpack.c.l.b16 %v3955
      %v3980 = vunpack.c.l.b16 %v3956
      %v3981 = vunpack.c.l.b16 %v3957
      %v3982 = vunpack.c.l.b16 %v3958
      %v3983 = vpack.c.b16 %v3974, %v3973
      %v3984 = vpack.c.b16 %v3976, %v3975
      %v3985 = vpack.c.b16 %v3978, %v3977
      %v3986 = vpack.c.b16 %v3980, %v3979
      %v3987 = vpack.c.b16 %v3982, %v3981
      %v3994 = vsel %vm3508, %v3962, 0
      %3996 = vmatprep.subr.bf16.mxu0 0
      %3997 = vmatpush1.bf16.msra.mxu0 %v3983
      %3998 = vmatprep.subr.bf16.mxu0 0
      %3999 = vmatpush1.bf16.msra.mxu0 %v3984
      %4000 = vmatprep.subr.bf16.mxu0 0
      %4001 = vmatpush1.bf16.msra.mxu0 %v3985
      %4002 = vmatprep.subr.bf16.mxu0 0
      %4003 = vmatpush1.bf16.msra.mxu0 %v3986
      %4004 = vmatprep.subr.bf16.mxu0 0
      %4005 = vmatpush1.bf16.msra.mxu0 %v3987
      %4006 = vmatprep.subr.bf16.mxu0 0
      %4007 = vmatpush1.bf16.msra.mxu0 0
      %4008 = vmatprep.subr.bf16.mxu0 0
      %4009 = vmatpush1.bf16.msra.mxu0 0
      %4010 = vmatprep.subr.bf16.mxu0 0
      %4011 = vmatpush1.bf16.msra.mxu0 0
      %4012 = vmatprep.subr.bf16.mxu0 0
      %4013 = vmatpush1.bf16.msra.mxu0 0
      %4014 = vmatprep.subr.bf16.mxu0 0
      %4015 = vmatpush1.bf16.msra.mxu0 0
      %4016 = vmatprep.subr.bf16.mxu0 0
      %4017 = vmatpush1.bf16.msra.mxu0 0
      %4018 = vmatprep.subr.bf16.mxu0 0
      %4019 = vmatpush1.bf16.msra.mxu0 0
      %4020 = vmatprep.subr.bf16.mxu0 0
      %4021 = vmatpush1.bf16.msra.mxu0 0
      %4022 = vmatprep.subr.bf16.mxu0 0
      %4023 = vmatpush1.bf16.msra.mxu0 0
      %4024 = vmatprep.subr.bf16.mxu0 0
      %4025 = vmatpush1.bf16.msra.mxu0 0
      %4026 = vmatprep.subr.bf16.mxu0 0
      %4027 = vmatpush1.bf16.msra.mxu0 0
      %4028 = vmatprep.mubr.bf16.mxu0 0
      %4029 = vmatmul.mubr.bf16.gmra.mrb[0].mxu0 %v3994
      %v4030 = vpop.f32.mrb[0].mxu0
      %v4031 = vadd.f32 0.0, %v4030
      %v4032 = vpop.f32.mrb[0].mxu0
      %v4033 = vpop.f32.mrb[0].mxu0
      %v4034 = vpop.f32.mrb[0].mxu0
      %4035 = vdwg.mxu0
      %v4036 = vadd.f32 %v3942, %v4031
      %v4037 = vpack.c.bf16 %v3382, %v3382
      %v4038 = vld [vmem:[%s33] sm:$0xf]
      %v4039 = vld [vmem:[%s33 + $0x4] sm:$0xf]
      %v4040 = vld [vmem:[%s33 + $0x8] sm:$0xf]
      %v4041 = vld [vmem:[%s33 + $0xc] sm:$0xf]
      %v4042 = vld [vmem:[%s33 + $0x10] sm:$0xf]
      %v4043 = vld [vmem:[%s33 + $0x14] sm:$0xf]
      %v4044 = vld [vmem:[%s33 + $0x18] sm:$0xf]
      %v4045 = vld [vmem:[%s33 + $0x1c] sm:$0xf]
      %v4054 = vunpack.c.l.b16 %v4038
      %v4055 = vunpack.c.l.b16 %v4039
      %v4056 = vunpack.c.l.b16 %v4040
      %v4057 = vunpack.c.l.b16 %v4041
      %v4058 = vunpack.c.l.b16 %v4042
      %v4059 = vunpack.c.l.b16 %v4043
      %v4060 = vunpack.c.l.b16 %v4044
      %v4061 = vunpack.c.l.b16 %v4045
      %v4062 = vpack.c.b16 %v4055, %v4054
      %v4063 = vpack.c.b16 %v4057, %v4056
      %v4064 = vpack.c.b16 %v4059, %v4058
      %v4065 = vpack.c.b16 %v4061, %v4060
      %v4071 = vsel %vm3256, %v4037, 0
      %4073 = vmatprep.subr.bf16.mxu0 0
      %4074 = vmatpush1.bf16.msra.mxu0 %v4062
      %4075 = vmatprep.subr.bf16.mxu0 0
      %4076 = vmatpush1.bf16.msra.mxu0 %v4063
      %4077 = vmatprep.subr.bf16.mxu0 0
      %4078 = vmatpush1.bf16.msra.mxu0 %v4064
      %4079 = vmatprep.subr.bf16.mxu0 0
      %4080 = vmatpush1.bf16.msra.mxu0 %v4065
      %4081 = vmatprep.subr.bf16.mxu0 0
      %4082 = vmatpush1.bf16.msra.mxu0 0
      %4083 = vmatprep.subr.bf16.mxu0 0
      %4084 = vmatpush1.bf16.msra.mxu0 0
      %4085 = vmatprep.subr.bf16.mxu0 0
      %4086 = vmatpush1.bf16.msra.mxu0 0
      %4087 = vmatprep.subr.bf16.mxu0 0
      %4088 = vmatpush1.bf16.msra.mxu0 0
      %4089 = vmatprep.subr.bf16.mxu0 0
      %4090 = vmatpush1.bf16.msra.mxu0 0
      %4091 = vmatprep.subr.bf16.mxu0 0
      %4092 = vmatpush1.bf16.msra.mxu0 0
      %4093 = vmatprep.subr.bf16.mxu0 0
      %4094 = vmatpush1.bf16.msra.mxu0 0
      %4095 = vmatprep.subr.bf16.mxu0 0
      %4096 = vmatpush1.bf16.msra.mxu0 0
      %4097 = vmatprep.subr.bf16.mxu0 0
      %4098 = vmatpush1.bf16.msra.mxu0 0
      %4099 = vmatprep.subr.bf16.mxu0 0
      %4100 = vmatpush1.bf16.msra.mxu0 0
      %4101 = vmatprep.subr.bf16.mxu0 0
      %4102 = vmatpush1.bf16.msra.mxu0 0
      %4103 = vmatprep.subr.bf16.mxu0 0
      %4104 = vmatpush1.bf16.msra.mxu0 0
      %4105 = vmatprep.mubr.bf16.mxu0 0
      %4106 = vmatmul.mubr.bf16.gmra.mrb[0].mxu0 %v4071
      %v4107 = vpop.f32.mrb[0].mxu0
      %v4108 = vadd.f32 0.0, %v4107
      %v4109 = vpop.f32.mrb[0].mxu0
      %v4110 = vpop.f32.mrb[0].mxu0
      %v4111 = vpop.f32.mrb[0].mxu0
      %4112 = vdwg.mxu0
      %v4113 = vld [vmem:[%s35] sm:$0xf]
      %v4114 = vadd.f32 %v4036, %v4108
      %v4115 = vld [vmem:[%s37] sm:$0x1]
      %v4117 = vlaneseq
      %v4118 = vshrl.u32 %v4117, 7
      %v4119 = vsub.s32 0, %v4118
      %v4120 = vrot.slane %v4115, %v4119
      %v4123 = vsel %vm1997, %v4113, 0
      %4125 = vmatprep.subr.mxu0 0.0
      %4126 = vmatpush1.msra.mxu0 %v4114
      %4127 = vmatprep.subr.mxu0 0.0
      %4128 = vmatpush1.msra.mxu0 0.0
      %4129 = vmatprep.subr.mxu0 0.0
      %4130 = vmatpush1.msra.mxu0 0.0
      %4131 = vmatprep.subr.mxu0 0.0
      %4132 = vmatpush1.msra.mxu0 0.0
      %4133 = vmatprep.subr.mxu0 0.0
      %4134 = vmatpush1.msra.mxu0 0.0
      %4135 = vmatprep.subr.mxu0 0.0
      %4136 = vmatpush1.msra.mxu0 0.0
      %4137 = vmatprep.subr.mxu0 0.0
      %4138 = vmatpush1.msra.mxu0 0.0
      %4139 = vmatprep.subr.mxu0 0.0
      %4140 = vmatpush1.msra.mxu0 0.0
      %4141 = vmatprep.subr.mxu0 0.0
      %4142 = vmatpush1.msra.mxu0 0.0
      %4143 = vmatprep.subr.mxu0 0.0
      %4144 = vmatpush1.msra.mxu0 0.0
      %4145 = vmatprep.subr.mxu0 0.0
      %4146 = vmatpush1.msra.mxu0 0.0
      %4147 = vmatprep.subr.mxu0 0.0
      %4148 = vmatpush1.msra.mxu0 0.0
      %4149 = vmatprep.subr.mxu0 0.0
      %4150 = vmatpush1.msra.mxu0 0.0
      %4151 = vmatprep.subr.mxu0 0.0
      %4152 = vmatpush1.msra.mxu0 0.0
      %4153 = vmatprep.subr.mxu0 0.0
      %4154 = vmatpush1.msra.mxu0 0.0
      %4155 = vmatprep.subr.mxu0 0.0
      %4156 = vmatpush1.msra.mxu0 0.0
      %4157 = vmatprep.subr.mxu0 0.0
      %4158 = vmatpush1.msra.mxu0 0.0
      %4159 = vmatprep.subr.mxu0 0.0
      %4160 = vmatpush1.msra.mxu0 0.0
      %4161 = vmatprep.subr.mxu0 0.0
      %4162 = vmatpush1.msra.mxu0 0.0
      %4163 = vmatprep.subr.mxu0 0.0
      %4164 = vmatpush1.msra.mxu0 0.0
      %4165 = vmatprep.subr.mxu0 0.0
      %4166 = vmatpush1.msra.mxu0 0.0
      %4167 = vmatprep.subr.mxu0 0.0
      %4168 = vmatpush1.msra.mxu0 0.0
      %4169 = vmatprep.subr.mxu0 0.0
      %4170 = vmatpush1.msra.mxu0 0.0
      %4171 = vmatprep.subr.mxu0 0.0
      %4172 = vmatpush1.msra.mxu0 0.0
      %4173 = vmatprep.subr.mxu0 0.0
      %4174 = vmatpush1.msra.mxu0 0.0
      %4175 = vmatprep.subr.mxu0 0.0
      %4176 = vmatpush1.msra.mxu0 0.0
      %4177 = vmatprep.subr.mxu0 0.0
      %4178 = vmatpush1.msra.mxu0 0.0
      %4179 = vmatprep.subr.mxu0 0.0
      %4180 = vmatpush1.msra.mxu0 0.0
      %4181 = vmatprep.subr.mxu0 0.0
      %4182 = vmatpush1.msra.mxu0 0.0
      %4183 = vmatprep.subr.mxu0 0.0
      %4184 = vmatpush1.msra.mxu0 0.0
      %4185 = vmatprep.subr.mxu0 0.0
      %4186 = vmatpush1.msra.mxu0 0.0
      %4187 = vmatprep.subr.mxu0 0.0
      %4188 = vmatpush1.msra.mxu0 0.0
      %4189 = vmatprep.mubr.f32.mxu0 0.0
      %4190 = vmatmul.mubr.f32.gmra.mrb[0].mxu0 %v4123
      %v4191 = vpop.f32.mrb[0].mxu0
      %v4192 = vadd.f32 %v4120, %v4191
      %v4193 = vpop.f32.mrb[0].mxu0
      %4194 = vdwg.mxu0
      %vm4195 = vcmask 778240
      %vm4196 = vmand %vm4195, %vm1188
      %v4197 = vld [vmem:[#allocation2] sm:$0x1]
      %v4198 = vsel %vm4196, 0, %v4197
      %4199 = vst [vmem:[#allocation2] sm:$0x1] %v4198
      %vm4200 = vcmask 780290
      %vm4201 = vsmask.f32 7946
      %vm4202 = vmand %vm4200, %vm4201
      %v4203 = vld [vmem:[#allocation2] sm:$0x4]
      %v4204 = vsel %vm4202, 0, %v4203
      %4205 = vst [vmem:[#allocation2] sm:$0x4] %v4204
      %vm4206 = vcmask 124928
      %vm4207 = vsmask.f32 2306
      %vm4208 = vmand %vm4206, %vm4207
      %v4209 = vld [vmem:[#allocation2] sm:$0x7]
      %v4210 = vsel %vm4208, 0, %v4209
      %4211 = vst [vmem:[#allocation2] sm:$0x7] %v4210
      %vm4212 = vcmask 780928
      %vm4213 = vmand %vm4212, %vm4207
      %v4214 = vld [vmem:[#allocation2] sm:$0x7]
      %v4215 = vsel %vm4213, 0, %v4214
      %4216 = vst [vmem:[#allocation2] sm:$0x7] %v4215
      %v4217 = vmax.f32 %v4192, 0.0
      %v4218 = vpack.c.bf16 %v4217, %v4217
      %v4220 = vunpack.c.l.b16 %v4218
      %v4221 = vpack.c.b16 %v4220, %v4220
      %v4223 = vshrl.u32 %v4221, 16
      %v4225 = vrot.slane %v4223, 7
      %v4226 = vshll.u32 %v4221, 16
      %v4228 = vor.u32 %v4225, %v4226
      %4229 = vrot.lane.b32.xlu0 %v4228, 16
      %v4230 = vpop.permute.xlu0 %4229
      %vm4232 = vcmask 649344
      %vm4233 = vmand %vm4232, %vm4207
      %v4234 = vld [vmem:[#allocation2] sm:$0x7]
      %v4235 = vsel %vm4233, %v4230, %v4234
      %4236 = vst [vmem:[#allocation2] sm:$0x7] %v4235
      %v4237 = vld [vmem:[#allocation2] sm:$0x3]
      %v4238 = vld [vmem:[%s39] sm:$0xf]
      %v4239 = vld [vmem:[%s39 + $0x4] sm:$0xf]
      %v4240 = vld [vmem:[%s39 + $0x8] sm:$0xf]
      %v4241 = vld [vmem:[%s39 + $0xc] sm:$0xf]
      %v4242 = vld [vmem:[%s39 + $0x10] sm:$0xf]
      %v4243 = vld [vmem:[%s39 + $0x14] sm:$0xf]
      %v4244 = vld [vmem:[%s39 + $0x18] sm:$0xf]
      %v4245 = vld [vmem:[%s39 + $0x1c] sm:$0xf]
      %v4246 = vld [vmem:[%s39 + $0x20] sm:$0xf]
      %v4247 = vld [vmem:[%s39 + $0x24] sm:$0xf]
      %v4248 = vld [vmem:[%s39 + $0x28] sm:$0xf]
      %v4249 = vld [vmem:[%s39 + $0x2c] sm:$0xf]
      %v4250 = vld [vmem:[#allocation2] sm:$0x7]
      %s4251 = scalar_lea.vmem %s39, 48
      %v4252 = vld [vmem:[%s4251] sm:$0xf]
      %v4253 = vld [vmem:[%s4251 + $0x4] sm:$0xf]
      %v4254 = vld [vmem:[%s4251 + $0x8] sm:$0xf]
      %v4255 = vld [vmem:[%s4251 + $0xc] sm:$0xf]
      %v4256 = vld [vmem:[%s4251 + $0x10] sm:$0xf]
      %v4257 = vld [vmem:[%s4251 + $0x14] sm:$0xf]
      %v4258 = vld [vmem:[%s4251 + $0x18] sm:$0xf]
      %v4259 = vld [vmem:[%s4251 + $0x1c] sm:$0xf]
      %v4260 = vld [vmem:[%s4251 + $0x20] sm:$0xf]
      %v4261 = vld [vmem:[%s4251 + $0x24] sm:$0xf]
      %v4262 = vld [vmem:[%s4251 + $0x28] sm:$0xf]
      %v4263 = vld [vmem:[%s4251 + $0x2c] sm:$0xf]
      %v4265 = vunpack.c.l.b16 %v4250
      %v4266 = vpack.c.b16 %v4265, %v4265
      %v4268 = vshrl.u32 %v4266, 16
      %v4270 = vshll.u32 %v4266, 16
      %v4272 = vrot.slane %v4270, 1
      %v4273 = vor.u32 %v4268, %v4272
      %v4286 = vunpack.c.l.b16 %v4252
      %v4287 = vunpack.c.l.b16 %v4253
      %v4288 = vunpack.c.l.b16 %v4254
      %v4289 = vunpack.c.l.b16 %v4255
      %v4290 = vunpack.c.l.b16 %v4256
      %v4291 = vunpack.c.l.b16 %v4257
      %v4292 = vunpack.c.l.b16 %v4258
      %v4293 = vunpack.c.l.b16 %v4259
      %v4294 = vunpack.c.l.b16 %v4260
      %v4295 = vunpack.c.l.b16 %v4261
      %v4296 = vunpack.c.l.b16 %v4262
      %v4297 = vunpack.c.l.b16 %v4263
      %v4298 = vpack.c.b16 %v4287, %v4286
      %v4299 = vpack.c.b16 %v4289, %v4288
      %v4300 = vpack.c.b16 %v4291, %v4290
      %v4301 = vpack.c.b16 %v4293, %v4292
      %v4302 = vpack.c.b16 %v4295, %v4294
      %v4303 = vpack.c.b16 %v4297, %v4296
      %v4311 = vsel %vm2363, %v4273, 0
      %4313 = vmatprep.subr.bf16.mxu0 0
      %4314 = vmatpush1.bf16.msra.mxu0 %v4298
      %4315 = vmatprep.subr.bf16.mxu0 0
      %4316 = vmatpush1.bf16.msra.mxu0 %v4299
      %4317 = vmatprep.subr.bf16.mxu0 0
      %4318 = vmatpush1.bf16.msra.mxu0 %v4300
      %4319 = vmatprep.subr.bf16.mxu0 0
      %4320 = vmatpush1.bf16.msra.mxu0 %v4301
      %4321 = vmatprep.subr.bf16.mxu0 0
      %4322 = vmatpush1.bf16.msra.mxu0 %v4302
      %4323 = vmatprep.subr.bf16.mxu0 0
      %4324 = vmatpush1.bf16.msra.mxu0 %v4303
      %4325 = vmatprep.subr.bf16.mxu0 0
      %4326 = vmatpush1.bf16.msra.mxu0 0
      %4327 = vmatprep.subr.bf16.mxu0 0
      %4328 = vmatpush1.bf16.msra.mxu0 0
      %4329 = vmatprep.subr.bf16.mxu0 0
      %4330 = vmatpush1.bf16.msra.mxu0 0
      %4331 = vmatprep.subr.bf16.mxu0 0
      %4332 = vmatpush1.bf16.msra.mxu0 0
      %4333 = vmatprep.subr.bf16.mxu0 0
      %4334 = vmatpush1.bf16.msra.mxu0 0
      %4335 = vmatprep.subr.bf16.mxu0 0
      %4336 = vmatpush1.bf16.msra.mxu0 0
      %4337 = vmatprep.subr.bf16.mxu0 0
      %4338 = vmatpush1.bf16.msra.mxu0 0
      %4339 = vmatprep.subr.bf16.mxu0 0
      %4340 = vmatpush1.bf16.msra.mxu0 0
      %4341 = vmatprep.subr.bf16.mxu0 0
      %4342 = vmatpush1.bf16.msra.mxu0 0
      %4343 = vmatprep.subr.bf16.mxu0 0
      %4344 = vmatpush1.bf16.msra.mxu0 0
      %4345 = vmatprep.mubr.bf16.mxu0 0
      %4346 = vmatmul.mubr.bf16.gmra.mrb[0].mxu0 %v4311
      %v4347 = vpop.f32.mrb[0].mxu0
      %v4348 = vadd.f32 0.0, %v4347
      %v4349 = vpop.f32.mrb[0].mxu0
      %v4350 = vpop.f32.mrb[0].mxu0
      %v4351 = vpop.f32.mrb[0].mxu0
      %4352 = vdwg.mxu0
      %v4365 = vunpack.c.l.b16 %v4238
      %v4366 = vunpack.c.l.b16 %v4239
      %v4367 = vunpack.c.l.b16 %v4240
      %v4368 = vunpack.c.l.b16 %v4241
      %v4369 = vunpack.c.l.b16 %v4242
      %v4370 = vunpack.c.l.b16 %v4243
      %v4371 = vunpack.c.l.b16 %v4244
      %v4372 = vunpack.c.l.b16 %v4245
      %v4373 = vunpack.c.l.b16 %v4246
      %v4374 = vunpack.c.l.b16 %v4247
      %v4375 = vunpack.c.l.b16 %v4248
      %v4376 = vunpack.c.l.b16 %v4249
      %v4377 = vpack.c.b16 %v4366, %v4365
      %v4378 = vpack.c.b16 %v4368, %v4367
      %v4379 = vpack.c.b16 %v4370, %v4369
      %v4380 = vpack.c.b16 %v4372, %v4371
      %v4381 = vpack.c.b16 %v4374, %v4373
      %v4382 = vpack.c.b16 %v4376, %v4375
      %v4390 = vsel %vm2363, %v4237, 0
      %4392 = vmatprep.subr.bf16.mxu0 0
      %4393 = vmatpush1.bf16.msra.mxu0 %v4377
      %4394 = vmatprep.subr.bf16.mxu0 0
      %4395 = vmatpush1.bf16.msra.mxu0 %v4378
      %4396 = vmatprep.subr.bf16.mxu0 0
      %4397 = vmatpush1.bf16.msra.mxu0 %v4379
      %4398 = vmatprep.subr.bf16.mxu0 0
      %4399 = vmatpush1.bf16.msra.mxu0 %v4380
      %4400 = vmatprep.subr.bf16.mxu0 0
      %4401 = vmatpush1.bf16.msra.mxu0 %v4381
      %4402 = vmatprep.subr.bf16.mxu0 0
      %4403 = vmatpush1.bf16.msra.mxu0 %v4382
      %4404 = vmatprep.subr.bf16.mxu0 0
      %4405 = vmatpush1.bf16.msra.mxu0 0
      %4406 = vmatprep.subr.bf16.mxu0 0
      %4407 = vmatpush1.bf16.msra.mxu0 0
      %4408 = vmatprep.subr.bf16.mxu0 0
      %4409 = vmatpush1.bf16.msra.mxu0 0
      %4410 = vmatprep.subr.bf16.mxu0 0
      %4411 = vmatpush1.bf16.msra.mxu0 0
      %4412 = vmatprep.subr.bf16.mxu0 0
      %4413 = vmatpush1.bf16.msra.mxu0 0
      %4414 = vmatprep.subr.bf16.mxu0 0
      %4415 = vmatpush1.bf16.msra.mxu0 0
      %4416 = vmatprep.subr.bf16.mxu0 0
      %4417 = vmatpush1.bf16.msra.mxu0 0
      %4418 = vmatprep.subr.bf16.mxu0 0
      %4419 = vmatpush1.bf16.msra.mxu0 0
      %4420 = vmatprep.subr.bf16.mxu0 0
      %4421 = vmatpush1.bf16.msra.mxu0 0
      %4422 = vmatprep.subr.bf16.mxu0 0
      %4423 = vmatpush1.bf16.msra.mxu0 0
      %4424 = vmatprep.mubr.bf16.mxu0 0
      %4425 = vmatmul.mubr.bf16.gmra.mrb[0].mxu0 %v4390
      %v4426 = vpop.f32.mrb[0].mxu0
      %v4427 = vadd.f32 %v4348, %v4426
      %v4428 = vpop.f32.mrb[0].mxu0
      %v4429 = vpop.f32.mrb[0].mxu0
      %v4430 = vpop.f32.mrb[0].mxu0
      %4431 = vdwg.mxu0
      %v4432 = vld [vmem:[#allocation2] sm:$0x6]
      %s4433 = scalar_lea.vmem %s39, 96
      %v4434 = vld [vmem:[%s4433] sm:$0xf]
      %v4435 = vld [vmem:[%s4433 + $0x4] sm:$0xf]
      %v4436 = vld [vmem:[%s4433 + $0x8] sm:$0xf]
      %v4437 = vld [vmem:[%s4433 + $0xc] sm:$0xf]
      %v4438 = vld [vmem:[%s4433 + $0x10] sm:$0xf]
      %v4439 = vld [vmem:[%s4433 + $0x14] sm:$0xf]
      %v4440 = vld [vmem:[%s4433 + $0x18] sm:$0xf]
      %v4441 = vld [vmem:[%s4433 + $0x1c] sm:$0xf]
      %v4442 = vld [vmem:[%s4433 + $0x20] sm:$0xf]
      %v4443 = vld [vmem:[%s4433 + $0x24] sm:$0xf]
      %v4444 = vld [vmem:[%s4433 + $0x28] sm:$0xf]
      %v4445 = vld [vmem:[%s4433 + $0x2c] sm:$0xf]
      %v4447 = vunpack.c.l.b16 %v4432
      %v4448 = vpack.c.b16 %v4447, %v4447
      %v4449 = vrot.slane %v4448, 1
      %v4462 = vunpack.c.l.b16 %v4434
      %v4463 = vunpack.c.l.b16 %v4435
      %v4464 = vunpack.c.l.b16 %v4436
      %v4465 = vunpack.c.l.b16 %v4437
      %v4466 = vunpack.c.l.b16 %v4438
      %v4467 = vunpack.c.l.b16 %v4439
      %v4468 = vunpack.c.l.b16 %v4440
      %v4469 = vunpack.c.l.b16 %v4441
      %v4470 = vunpack.c.l.b16 %v4442
      %v4471 = vunpack.c.l.b16 %v4443
      %v4472 = vunpack.c.l.b16 %v4444
      %v4473 = vunpack.c.l.b16 %v4445
      %v4474 = vpack.c.b16 %v4463, %v4462
      %v4475 = vpack.c.b16 %v4465, %v4464
      %v4476 = vpack.c.b16 %v4467, %v4466
      %v4477 = vpack.c.b16 %v4469, %v4468
      %v4478 = vpack.c.b16 %v4471, %v4470
      %v4479 = vpack.c.b16 %v4473, %v4472
      %v4487 = vsel %vm2363, %v4449, 0
      %4489 = vmatprep.subr.bf16.mxu0 0
      %4490 = vmatpush1.bf16.msra.mxu0 %v4474
      %4491 = vmatprep.subr.bf16.mxu0 0
      %4492 = vmatpush1.bf16.msra.mxu0 %v4475
      %4493 = vmatprep.subr.bf16.mxu0 0
      %4494 = vmatpush1.bf16.msra.mxu0 %v4476
      %4495 = vmatprep.subr.bf16.mxu0 0
      %4496 = vmatpush1.bf16.msra.mxu0 %v4477
      %4497 = vmatprep.subr.bf16.mxu0 0
      %4498 = vmatpush1.bf16.msra.mxu0 %v4478
      %4499 = vmatprep.subr.bf16.mxu0 0
      %4500 = vmatpush1.bf16.msra.mxu0 %v4479
      %4501 = vmatprep.subr.bf16.mxu0 0
      %4502 = vmatpush1.bf16.msra.mxu0 0
      %4503 = vmatprep.subr.bf16.mxu0 0
      %4504 = vmatpush1.bf16.msra.mxu0 0
      %4505 = vmatprep.subr.bf16.mxu0 0
      %4506 = vmatpush1.bf16.msra.mxu0 0
      %4507 = vmatprep.subr.bf16.mxu0 0
      %4508 = vmatpush1.bf16.msra.mxu0 0
      %4509 = vmatprep.subr.bf16.mxu0 0
      %4510 = vmatpush1.bf16.msra.mxu0 0
      %4511 = vmatprep.subr.bf16.mxu0 0
      %4512 = vmatpush1.bf16.msra.mxu0 0
      %4513 = vmatprep.subr.bf16.mxu0 0
      %4514 = vmatpush1.bf16.msra.mxu0 0
      %4515 = vmatprep.subr.bf16.mxu0 0
      %4516 = vmatpush1.bf16.msra.mxu0 0
      %4517 = vmatprep.subr.bf16.mxu0 0
      %4518 = vmatpush1.bf16.msra.mxu0 0
      %4519 = vmatprep.subr.bf16.mxu0 0
      %4520 = vmatpush1.bf16.msra.mxu0 0
      %4521 = vmatprep.mubr.bf16.mxu0 0
      %4522 = vmatmul.mubr.bf16.gmra.mrb[0].mxu0 %v4487
      %v4523 = vpop.f32.mrb[0].mxu0
      %v4524 = vadd.f32 0.0, %v4523
      %v4525 = vpop.f32.mrb[0].mxu0
      %v4526 = vpop.f32.mrb[0].mxu0
      %v4527 = vpop.f32.mrb[0].mxu0
      %4528 = vdwg.mxu0
      %v4529 = vadd.f32 %v4427, %v4524
      %v4530 = vld [vmem:[%s41] sm:$0x1]
      %v4532 = vlaneseq
      %v4533 = vshrl.u32 %v4532, 7
      %v4534 = vsub.s32 0, %v4533
      %v4535 = vrot.slane %v4530, %v4534
      %v4537 = vadd.f32 %v4529, %v4535
      %v4538 = vld [vmem:[#allocation3] sm:$0x1]
      %v4539 = vsel %vm4196, 0, %v4538
      %4540 = vst [vmem:[#allocation3] sm:$0x1] %v4539
      %v4541 = vld [vmem:[#allocation3] sm:$0x4]
      %v4542 = vsel %vm4202, 0, %v4541
      %4543 = vst [vmem:[#allocation3] sm:$0x4] %v4542
      %v4544 = vld [vmem:[#allocation3] sm:$0x7]
      %v4545 = vsel %vm4208, 0, %v4544
      %4546 = vst [vmem:[#allocation3] sm:$0x7] %v4545
      %v4547 = vld [vmem:[#allocation3] sm:$0x7]
      %v4548 = vsel %vm4213, 0, %v4547
      %4549 = vst [vmem:[#allocation3] sm:$0x7] %v4548
      %v4550 = vmax.f32 %v4537, 0.0
      %v4551 = vpack.c.bf16 %v4550, %v4550
      %v4553 = vunpack.c.l.b16 %v4551
      %v4554 = vpack.c.b16 %v4553, %v4553
      %v4556 = vshrl.u32 %v4554, 16
      %v4558 = vrot.slane %v4556, 7
      %v4559 = vshll.u32 %v4554, 16
      %v4561 = vor.u32 %v4558, %v4559
      %4562 = vrot.lane.b32.xlu0 %v4561, 16
      %v4563 = vpop.permute.xlu0 %4562
      %v4565 = vld [vmem:[#allocation3] sm:$0x7]
      %v4566 = vsel %vm4233, %v4563, %v4565
      %4567 = vst [vmem:[#allocation3] sm:$0x7] %v4566
      %v4568 = vld [vmem:[#allocation3] sm:$0x3]
      %v4569 = vld [vmem:[%s43] sm:$0xf]
      %v4570 = vld [vmem:[%s43 + $0x4] sm:$0xf]
      %v4571 = vld [vmem:[%s43 + $0x8] sm:$0xf]
      %v4572 = vld [vmem:[%s43 + $0xc] sm:$0xf]
      %v4573 = vld [vmem:[%s43 + $0x10] sm:$0xf]
      %v4574 = vld [vmem:[%s43 + $0x14] sm:$0xf]
      %v4575 = vld [vmem:[%s43 + $0x18] sm:$0xf]
      %v4576 = vld [vmem:[%s43 + $0x1c] sm:$0xf]
      %v4577 = vld [vmem:[%s43 + $0x20] sm:$0xf]
      %v4578 = vld [vmem:[%s43 + $0x24] sm:$0xf]
      %v4579 = vld [vmem:[%s43 + $0x28] sm:$0xf]
      %v4580 = vld [vmem:[%s43 + $0x2c] sm:$0xf]
      %v4581 = vld [vmem:[#allocation3] sm:$0x7]
      %s4582 = scalar_lea.vmem %s43, 48
      %v4583 = vld [vmem:[%s4582] sm:$0xf]
      %v4584 = vld [vmem:[%s4582 + $0x4] sm:$0xf]
      %v4585 = vld [vmem:[%s4582 + $0x8] sm:$0xf]
      %v4586 = vld [vmem:[%s4582 + $0xc] sm:$0xf]
      %v4587 = vld [vmem:[%s4582 + $0x10] sm:$0xf]
      %v4588 = vld [vmem:[%s4582 + $0x14] sm:$0xf]
      %v4589 = vld [vmem:[%s4582 + $0x18] sm:$0xf]
      %v4590 = vld [vmem:[%s4582 + $0x1c] sm:$0xf]
      %v4591 = vld [vmem:[%s4582 + $0x20] sm:$0xf]
      %v4592 = vld [vmem:[%s4582 + $0x24] sm:$0xf]
      %v4593 = vld [vmem:[%s4582 + $0x28] sm:$0xf]
      %v4594 = vld [vmem:[%s4582 + $0x2c] sm:$0xf]
      %v4596 = vunpack.c.l.b16 %v4581
      %v4597 = vpack.c.b16 %v4596, %v4596
      %v4599 = vshrl.u32 %v4597, 16
      %v4601 = vshll.u32 %v4597, 16
      %v4603 = vrot.slane %v4601, 1
      %v4604 = vor.u32 %v4599, %v4603
      %v4617 = vunpack.c.l.b16 %v4583
      %v4618 = vunpack.c.l.b16 %v4584
      %v4619 = vunpack.c.l.b16 %v4585
      %v4620 = vunpack.c.l.b16 %v4586
      %v4621 = vunpack.c.l.b16 %v4587
      %v4622 = vunpack.c.l.b16 %v4588
      %v4623 = vunpack.c.l.b16 %v4589
      %v4624 = vunpack.c.l.b16 %v4590
      %v4625 = vunpack.c.l.b16 %v4591
      %v4626 = vunpack.c.l.b16 %v4592
      %v4627 = vunpack.c.l.b16 %v4593
      %v4628 = vunpack.c.l.b16 %v4594
      %v4629 = vpack.c.b16 %v4618, %v4617
      %v4630 = vpack.c.b16 %v4620, %v4619
      %v4631 = vpack.c.b16 %v4622, %v4621
      %v4632 = vpack.c.b16 %v4624, %v4623
      %v4633 = vpack.c.b16 %v4626, %v4625
      %v4634 = vpack.c.b16 %v4628, %v4627
      %v4642 = vsel %vm2363, %v4604, 0
      %4644 = vmatprep.subr.bf16.mxu0 0
      %4645 = vmatpush1.bf16.msra.mxu0 %v4629
      %4646 = vmatprep.subr.bf16.mxu0 0
      %4647 = vmatpush1.bf16.msra.mxu0 %v4630
      %4648 = vmatprep.subr.bf16.mxu0 0
      %4649 = vmatpush1.bf16.msra.mxu0 %v4631
      %4650 = vmatprep.subr.bf16.mxu0 0
      %4651 = vmatpush1.bf16.msra.mxu0 %v4632
      %4652 = vmatprep.subr.bf16.mxu0 0
      %4653 = vmatpush1.bf16.msra.mxu0 %v4633
      %4654 = vmatprep.subr.bf16.mxu0 0
      %4655 = vmatpush1.bf16.msra.mxu0 %v4634
      %4656 = vmatprep.subr.bf16.mxu0 0
      %4657 = vmatpush1.bf16.msra.mxu0 0
      %4658 = vmatprep.subr.bf16.mxu0 0
      %4659 = vmatpush1.bf16.msra.mxu0 0
      %4660 = vmatprep.subr.bf16.mxu0 0
      %4661 = vmatpush1.bf16.msra.mxu0 0
      %4662 = vmatprep.subr.bf16.mxu0 0
      %4663 = vmatpush1.bf16.msra.mxu0 0
      %4664 = vmatprep.subr.bf16.mxu0 0
      %4665 = vmatpush1.bf16.msra.mxu0 0
      %4666 = vmatprep.subr.bf16.mxu0 0
      %4667 = vmatpush1.bf16.msra.mxu0 0
      %4668 = vmatprep.subr.bf16.mxu0 0
      %4669 = vmatpush1.bf16.msra.mxu0 0
      %4670 = vmatprep.subr.bf16.mxu0 0
      %4671 = vmatpush1.bf16.msra.mxu0 0
      %4672 = vmatprep.subr.bf16.mxu0 0
      %4673 = vmatpush1.bf16.msra.mxu0 0
      %4674 = vmatprep.subr.bf16.mxu0 0
      %4675 = vmatpush1.bf16.msra.mxu0 0
      %4676 = vmatprep.mubr.bf16.mxu0 0
      %4677 = vmatmul.mubr.bf16.gmra.mrb[0].mxu0 %v4642
      %v4678 = vpop.f32.mrb[0].mxu0
      %v4679 = vadd.f32 0.0, %v4678
      %v4680 = vpop.f32.mrb[0].mxu0
      %v4681 = vpop.f32.mrb[0].mxu0
      %v4682 = vpop.f32.mrb[0].mxu0
      %4683 = vdwg.mxu0
      %v4696 = vunpack.c.l.b16 %v4569
      %v4697 = vunpack.c.l.b16 %v4570
      %v4698 = vunpack.c.l.b16 %v4571
      %v4699 = vunpack.c.l.b16 %v4572
      %v4700 = vunpack.c.l.b16 %v4573
      %v4701 = vunpack.c.l.b16 %v4574
      %v4702 = vunpack.c.l.b16 %v4575
      %v4703 = vunpack.c.l.b16 %v4576
      %v4704 = vunpack.c.l.b16 %v4577
      %v4705 = vunpack.c.l.b16 %v4578
      %v4706 = vunpack.c.l.b16 %v4579
      %v4707 = vunpack.c.l.b16 %v4580
      %v4708 = vpack.c.b16 %v4697, %v4696
      %v4709 = vpack.c.b16 %v4699, %v4698
      %v4710 = vpack.c.b16 %v4701, %v4700
      %v4711 = vpack.c.b16 %v4703, %v4702
      %v4712 = vpack.c.b16 %v4705, %v4704
      %v4713 = vpack.c.b16 %v4707, %v4706
      %v4721 = vsel %vm2363, %v4568, 0
      %4723 = vmatprep.subr.bf16.mxu0 0
      %4724 = vmatpush1.bf16.msra.mxu0 %v4708
      %4725 = vmatprep.subr.bf16.mxu0 0
      %4726 = vmatpush1.bf16.msra.mxu0 %v4709
      %4727 = vmatprep.subr.bf16.mxu0 0
      %4728 = vmatpush1.bf16.msra.mxu0 %v4710
      %4729 = vmatprep.subr.bf16.mxu0 0
      %4730 = vmatpush1.bf16.msra.mxu0 %v4711
      %4731 = vmatprep.subr.bf16.mxu0 0
      %4732 = vmatpush1.bf16.msra.mxu0 %v4712
      %4733 = vmatprep.subr.bf16.mxu0 0
      %4734 = vmatpush1.bf16.msra.mxu0 %v4713
      %4735 = vmatprep.subr.bf16.mxu0 0
      %4736 = vmatpush1.bf16.msra.mxu0 0
      %4737 = vmatprep.subr.bf16.mxu0 0
      %4738 = vmatpush1.bf16.msra.mxu0 0
      %4739 = vmatprep.subr.bf16.mxu0 0
      %4740 = vmatpush1.bf16.msra.mxu0 0
      %4741 = vmatprep.subr.bf16.mxu0 0
      %4742 = vmatpush1.bf16.msra.mxu0 0
      %4743 = vmatprep.subr.bf16.mxu0 0
      %4744 = vmatpush1.bf16.msra.mxu0 0
      %4745 = vmatprep.subr.bf16.mxu0 0
      %4746 = vmatpush1.bf16.msra.mxu0 0
      %4747 = vmatprep.subr.bf16.mxu0 0
      %4748 = vmatpush1.bf16.msra.mxu0 0
      %4749 = vmatprep.subr.bf16.mxu0 0
      %4750 = vmatpush1.bf16.msra.mxu0 0
      %4751 = vmatprep.subr.bf16.mxu0 0
      %4752 = vmatpush1.bf16.msra.mxu0 0
      %4753 = vmatprep.subr.bf16.mxu0 0
      %4754 = vmatpush1.bf16.msra.mxu0 0
      %4755 = vmatprep.mubr.bf16.mxu0 0
      %4756 = vmatmul.mubr.bf16.gmra.mrb[0].mxu0 %v4721
      %v4757 = vpop.f32.mrb[0].mxu0
      %v4758 = vadd.f32 %v4679, %v4757
      %v4759 = vpop.f32.mrb[0].mxu0
      %v4760 = vpop.f32.mrb[0].mxu0
      %v4761 = vpop.f32.mrb[0].mxu0
      %4762 = vdwg.mxu0
      %v4763 = vld [vmem:[#allocation3] sm:$0x6]
      %s4764 = scalar_lea.vmem %s43, 96
      %v4765 = vld [vmem:[%s4764] sm:$0xf]
      %v4766 = vld [vmem:[%s4764 + $0x4] sm:$0xf]
      %v4767 = vld [vmem:[%s4764 + $0x8] sm:$0xf]
      %v4768 = vld [vmem:[%s4764 + $0xc] sm:$0xf]
      %v4769 = vld [vmem:[%s4764 + $0x10] sm:$0xf]
      %v4770 = vld [vmem:[%s4764 + $0x14] sm:$0xf]
      %v4771 = vld [vmem:[%s4764 + $0x18] sm:$0xf]
      %v4772 = vld [vmem:[%s4764 + $0x1c] sm:$0xf]
      %v4773 = vld [vmem:[%s4764 + $0x20] sm:$0xf]
      %v4774 = vld [vmem:[%s4764 + $0x24] sm:$0xf]
      %v4775 = vld [vmem:[%s4764 + $0x28] sm:$0xf]
      %v4776 = vld [vmem:[%s4764 + $0x2c] sm:$0xf]
      %v4778 = vunpack.c.l.b16 %v4763
      %v4779 = vpack.c.b16 %v4778, %v4778
      %v4780 = vrot.slane %v4779, 1
      %v4793 = vunpack.c.l.b16 %v4765
      %v4794 = vunpack.c.l.b16 %v4766
      %v4795 = vunpack.c.l.b16 %v4767
      %v4796 = vunpack.c.l.b16 %v4768
      %v4797 = vunpack.c.l.b16 %v4769
      %v4798 = vunpack.c.l.b16 %v4770
      %v4799 = vunpack.c.l.b16 %v4771
      %v4800 = vunpack.c.l.b16 %v4772
      %v4801 = vunpack.c.l.b16 %v4773
      %v4802 = vunpack.c.l.b16 %v4774
      %v4803 = vunpack.c.l.b16 %v4775
      %v4804 = vunpack.c.l.b16 %v4776
      %v4805 = vpack.c.b16 %v4794, %v4793
      %v4806 = vpack.c.b16 %v4796, %v4795
      %v4807 = vpack.c.b16 %v4798, %v4797
      %v4808 = vpack.c.b16 %v4800, %v4799
      %v4809 = vpack.c.b16 %v4802, %v4801
      %v4810 = vpack.c.b16 %v4804, %v4803
      %v4818 = vsel %vm2363, %v4780, 0
      %4820 = vmatprep.subr.bf16.mxu0 0
      %4821 = vmatpush1.bf16.msra.mxu0 %v4805
      %4822 = vmatprep.subr.bf16.mxu0 0
      %4823 = vmatpush1.bf16.msra.mxu0 %v4806
      %4824 = vmatprep.subr.bf16.mxu0 0
      %4825 = vmatpush1.bf16.msra.mxu0 %v4807
      %4826 = vmatprep.subr.bf16.mxu0 0
      %4827 = vmatpush1.bf16.msra.mxu0 %v4808
      %4828 = vmatprep.subr.bf16.mxu0 0
      %4829 = vmatpush1.bf16.msra.mxu0 %v4809
      %4830 = vmatprep.subr.bf16.mxu0 0
      %4831 = vmatpush1.bf16.msra.mxu0 %v4810
      %4832 = vmatprep.subr.bf16.mxu0 0
      %4833 = vmatpush1.bf16.msra.mxu0 0
      %4834 = vmatprep.subr.bf16.mxu0 0
      %4835 = vmatpush1.bf16.msra.mxu0 0
      %4836 = vmatprep.subr.bf16.mxu0 0
      %4837 = vmatpush1.bf16.msra.mxu0 0
      %4838 = vmatprep.subr.bf16.mxu0 0
      %4839 = vmatpush1.bf16.msra.mxu0 0
      %4840 = vmatprep.subr.bf16.mxu0 0
      %4841 = vmatpush1.bf16.msra.mxu0 0
      %4842 = vmatprep.subr.bf16.mxu0 0
      %4843 = vmatpush1.bf16.msra.mxu0 0
      %4844 = vmatprep.subr.bf16.mxu0 0
      %4845 = vmatpush1.bf16.msra.mxu0 0
      %4846 = vmatprep.subr.bf16.mxu0 0
      %4847 = vmatpush1.bf16.msra.mxu0 0
      %4848 = vmatprep.subr.bf16.mxu0 0
      %4849 = vmatpush1.bf16.msra.mxu0 0
      %4850 = vmatprep.subr.bf16.mxu0 0
      %4851 = vmatpush1.bf16.msra.mxu0 0
      %4852 = vmatprep.mubr.bf16.mxu0 0
      %4853 = vmatmul.mubr.bf16.gmra.mrb[0].mxu0 %v4818
      %v4854 = vpop.f32.mrb[0].mxu0
      %v4855 = vadd.f32 0.0, %v4854
      %v4856 = vpop.f32.mrb[0].mxu0
      %v4857 = vpop.f32.mrb[0].mxu0
      %v4858 = vpop.f32.mrb[0].mxu0
      %4859 = vdwg.mxu0
      %v4860 = vadd.f32 %v4758, %v4855
      %v4861 = vpack.c.bf16 %v4192, %v4192
      %v4862 = vld [vmem:[%s45] sm:$0xf]
      %v4863 = vld [vmem:[%s45 + $0x4] sm:$0xf]
      %v4864 = vld [vmem:[%s45 + $0x8] sm:$0xf]
      %v4865 = vld [vmem:[%s45 + $0xc] sm:$0xf]
      %v4866 = vld [vmem:[%s45 + $0x10] sm:$0xf]
      %v4867 = vld [vmem:[%s45 + $0x14] sm:$0xf]
      %v4868 = vld [vmem:[%s45 + $0x18] sm:$0xf]
      %v4869 = vld [vmem:[%s45 + $0x1c] sm:$0xf]
      %v4878 = vunpack.c.l.b16 %v4862
      %v4879 = vunpack.c.l.b16 %v4863
      %v4880 = vunpack.c.l.b16 %v4864
      %v4881 = vunpack.c.l.b16 %v4865
      %v4882 = vunpack.c.l.b16 %v4866
      %v4883 = vunpack.c.l.b16 %v4867
      %v4884 = vunpack.c.l.b16 %v4868
      %v4885 = vunpack.c.l.b16 %v4869
      %v4886 = vpack.c.b16 %v4879, %v4878
      %v4887 = vpack.c.b16 %v4881, %v4880
      %v4888 = vpack.c.b16 %v4883, %v4882
      %v4889 = vpack.c.b16 %v4885, %v4884
      %v4895 = vsel %vm3256, %v4861, 0
      %4897 = vmatprep.subr.bf16.mxu0 0
      %4898 = vmatpush1.bf16.msra.mxu0 %v4886
      %4899 = vmatprep.subr.bf16.mxu0 0
      %4900 = vmatpush1.bf16.msra.mxu0 %v4887
      %4901 = vmatprep.subr.bf16.mxu0 0
      %4902 = vmatpush1.bf16.msra.mxu0 %v4888
      %4903 = vmatprep.subr.bf16.mxu0 0
      %4904 = vmatpush1.bf16.msra.mxu0 %v4889
      %4905 = vmatprep.subr.bf16.mxu0 0
      %4906 = vmatpush1.bf16.msra.mxu0 0
      %4907 = vmatprep.subr.bf16.mxu0 0
      %4908 = vmatpush1.bf16.msra.mxu0 0
      %4909 = vmatprep.subr.bf16.mxu0 0
      %4910 = vmatpush1.bf16.msra.mxu0 0
      %4911 = vmatprep.subr.bf16.mxu0 0
      %4912 = vmatpush1.bf16.msra.mxu0 0
      %4913 = vmatprep.subr.bf16.mxu0 0
      %4914 = vmatpush1.bf16.msra.mxu0 0
      %4915 = vmatprep.subr.bf16.mxu0 0
      %4916 = vmatpush1.bf16.msra.mxu0 0
      %4917 = vmatprep.subr.bf16.mxu0 0
      %4918 = vmatpush1.bf16.msra.mxu0 0
      %4919 = vmatprep.subr.bf16.mxu0 0
      %4920 = vmatpush1.bf16.msra.mxu0 0
      %4921 = vmatprep.subr.bf16.mxu0 0
      %4922 = vmatpush1.bf16.msra.mxu0 0
      %4923 = vmatprep.subr.bf16.mxu0 0
      %4924 = vmatpush1.bf16.msra.mxu0 0
      %4925 = vmatprep.subr.bf16.mxu0 0
      %4926 = vmatpush1.bf16.msra.mxu0 0
      %4927 = vmatprep.subr.bf16.mxu0 0
      %4928 = vmatpush1.bf16.msra.mxu0 0
      %4929 = vmatprep.mubr.bf16.mxu0 0
      %4930 = vmatmul.mubr.bf16.gmra.mrb[0].mxu0 %v4895
      %v4931 = vpop.f32.mrb[0].mxu0
      %v4932 = vadd.f32 0.0, %v4931
      %v4933 = vpop.f32.mrb[0].mxu0
      %v4934 = vpop.f32.mrb[0].mxu0
      %v4935 = vpop.f32.mrb[0].mxu0
      %4936 = vdwg.mxu0
      %v4937 = vld [vmem:[%s47] sm:$0x3]
      %v4938 = vadd.f32 %v4860, %v4932
      %v4939 = vld [vmem:[%s49] sm:$0x1]
      %v4941 = vlaneseq
      %v4942 = vshrl.u32 %v4941, 7
      %v4943 = vsub.s32 0, %v4942
      %v4944 = vrot.slane %v4939, %v4943
      %vm4946 = vcmask 31744
      %v4948 = vsel %vm4946, %v4937, 0
      %v4951 = vsel %vm2004, %v4938, 0
      %4953 = vmatprep.subr.mxu0 0.0
      %4954 = vmatpush1.msra.mxu0 %v4951
      %4955 = vmatprep.subr.mxu0 0.0
      %4956 = vmatpush1.msra.mxu0 0.0
      %4957 = vmatprep.subr.mxu0 0.0
      %4958 = vmatpush1.msra.mxu0 0.0
      %4959 = vmatprep.subr.mxu0 0.0
      %4960 = vmatpush1.msra.mxu0 0.0
      %4961 = vmatprep.subr.mxu0 0.0
      %4962 = vmatpush1.msra.mxu0 0.0
      %4963 = vmatprep.subr.mxu0 0.0
      %4964 = vmatpush1.msra.mxu0 0.0
      %4965 = vmatprep.subr.mxu0 0.0
      %4966 = vmatpush1.msra.mxu0 0.0
      %4967 = vmatprep.subr.mxu0 0.0
      %4968 = vmatpush1.msra.mxu0 0.0
      %4969 = vmatprep.subr.mxu0 0.0
      %4970 = vmatpush1.msra.mxu0 0.0
      %4971 = vmatprep.subr.mxu0 0.0
      %4972 = vmatpush1.msra.mxu0 0.0
      %4973 = vmatprep.subr.mxu0 0.0
      %4974 = vmatpush1.msra.mxu0 0.0
      %4975 = vmatprep.subr.mxu0 0.0
      %4976 = vmatpush1.msra.mxu0 0.0
      %4977 = vmatprep.subr.mxu0 0.0
      %4978 = vmatpush1.msra.mxu0 0.0
      %4979 = vmatprep.subr.mxu0 0.0
      %4980 = vmatpush1.msra.mxu0 0.0
      %4981 = vmatprep.subr.mxu0 0.0
      %4982 = vmatpush1.msra.mxu0 0.0
      %4983 = vmatprep.subr.mxu0 0.0
      %4984 = vmatpush1.msra.mxu0 0.0
      %4985 = vmatprep.subr.mxu0 0.0
      %4986 = vmatpush1.msra.mxu0 0.0
      %4987 = vmatprep.subr.mxu0 0.0
      %4988 = vmatpush1.msra.mxu0 0.0
      %4989 = vmatprep.subr.mxu0 0.0
      %4990 = vmatpush1.msra.mxu0 0.0
      %4991 = vmatprep.subr.mxu0 0.0
      %4992 = vmatpush1.msra.mxu0 0.0
      %4993 = vmatprep.subr.mxu0 0.0
      %4994 = vmatpush1.msra.mxu0 0.0
      %4995 = vmatprep.subr.mxu0 0.0
      %4996 = vmatpush1.msra.mxu0 0.0
      %4997 = vmatprep.subr.mxu0 0.0
      %4998 = vmatpush1.msra.mxu0 0.0
      %4999 = vmatprep.subr.mxu0 0.0
      %5000 = vmatpush1.msra.mxu0 0.0
      %5001 = vmatprep.subr.mxu0 0.0
      %5002 = vmatpush1.msra.mxu0 0.0
      %5003 = vmatprep.subr.mxu0 0.0
      %5004 = vmatpush1.msra.mxu0 0.0
      %5005 = vmatprep.subr.mxu0 0.0
      %5006 = vmatpush1.msra.mxu0 0.0
      %5007 = vmatprep.subr.mxu0 0.0
      %5008 = vmatpush1.msra.mxu0 0.0
      %5009 = vmatprep.subr.mxu0 0.0
      %5010 = vmatpush1.msra.mxu0 0.0
      %5011 = vmatprep.subr.mxu0 0.0
      %5012 = vmatpush1.msra.mxu0 0.0
      %5013 = vmatprep.subr.mxu0 0.0
      %5014 = vmatpush1.msra.mxu0 0.0
      %5015 = vmatprep.subr.mxu0 0.0
      %5016 = vmatpush1.msra.mxu0 0.0
      %5017 = vmatprep.mubr.f32.mxu0 0.0
      %5018 = vmatmul.mubr.f32.gmra.mrb[0].mxu0 %v4948
      %v5019 = vpop.f32.mrb[0].mxu0
      %v5020 = vadd.f32 %v4944, %v5019
      %v5021 = vpop.f32.mrb[0].mxu0
      %5022 = vdwg.mxu0
      %v5024 = vrot.slane %v5020, 6
      %5025 = vrot.lane.b32.xlu0 %v5024, 96
      %v5026 = vpop.permute.xlu0 %5025
      %vm5028 = vcmask 1041408
      %v5029 = vsel %vm5028, %v5020, %v5026
      %v5030 = vpack.c.bf16 %v5029, %v5029
      %v5031 = vld [vmem:[%s51] sm:$0xf]
      %v5032 = vld [vmem:[%s51 + $0x4] sm:$0xf]
      %v5033 = vld [vmem:[%s51 + $0x8] sm:$0xf]
      %v5034 = vld [vmem:[%s51 + $0xc] sm:$0xf]
      %v5035 = vld [vmem:[%s53] sm:$0x1]
      %v5037 = vlaneseq
      %v5038 = vshrl.u32 %v5037, 7
      %v5039 = vsub.s32 0, %v5038
      %v5040 = vrot.slane %v5035, %v5039
      %v5046 = vunpack.c.l.b16 %v5031
      %v5047 = vunpack.c.l.b16 %v5032
      %v5048 = vunpack.c.l.b16 %v5033
      %v5049 = vunpack.c.l.b16 %v5034
      %v5050 = vpack.c.b16 %v5047, %v5046
      %v5051 = vpack.c.b16 %v5049, %v5048
      %v5055 = vsel %vm2432, %v5030, 0
      %5057 = vmatprep.subr.bf16.mxu0 0
      %5058 = vmatpush1.bf16.msra.mxu0 %v5050
      %5059 = vmatprep.subr.bf16.mxu0 0
      %5060 = vmatpush1.bf16.msra.mxu0 %v5051
      %5061 = vmatprep.subr.bf16.mxu0 0
      %5062 = vmatpush1.bf16.msra.mxu0 0
      %5063 = vmatprep.subr.bf16.mxu0 0
      %5064 = vmatpush1.bf16.msra.mxu0 0
      %5065 = vmatprep.subr.bf16.mxu0 0
      %5066 = vmatpush1.bf16.msra.mxu0 0
      %5067 = vmatprep.subr.bf16.mxu0 0
      %5068 = vmatpush1.bf16.msra.mxu0 0
      %5069 = vmatprep.subr.bf16.mxu0 0
      %5070 = vmatpush1.bf16.msra.mxu0 0
      %5071 = vmatprep.subr.bf16.mxu0 0
      %5072 = vmatpush1.bf16.msra.mxu0 0
      %5073 = vmatprep.subr.bf16.mxu0 0
      %5074 = vmatpush1.bf16.msra.mxu0 0
      %5075 = vmatprep.subr.bf16.mxu0 0
      %5076 = vmatpush1.bf16.msra.mxu0 0
      %5077 = vmatprep.subr.bf16.mxu0 0
      %5078 = vmatpush1.bf16.msra.mxu0 0
      %5079 = vmatprep.subr.bf16.mxu0 0
      %5080 = vmatpush1.bf16.msra.mxu0 0
      %5081 = vmatprep.subr.bf16.mxu0 0
      %5082 = vmatpush1.bf16.msra.mxu0 0
      %5083 = vmatprep.subr.bf16.mxu0 0
      %5084 = vmatpush1.bf16.msra.mxu0 0
      %5085 = vmatprep.subr.bf16.mxu0 0
      %5086 = vmatpush1.bf16.msra.mxu0 0
      %5087 = vmatprep.subr.bf16.mxu0 0
      %5088 = vmatpush1.bf16.msra.mxu0 0
      %5089 = vmatprep.mubr.bf16.mxu0 0
      %5090 = vmatmul.mubr.bf16.gmra.mrb[0].mxu0 %v5055
      %v5091 = vpop.f32.mrb[0].mxu0
      %v5092 = vadd.f32 %v5040, %v5091
      %v5093 = vpop.f32.mrb[0].mxu0
      %v5094 = vpop.f32.mrb[0].mxu0
      %v5095 = vpop.f32.mrb[0].mxu0
      %5096 = vdwg.mxu0
      %5098 = vrot.lane.b32.xlu0 %v5092, 124
      %v5099 = vpop.permute.xlu0 %5098
      %v5100 = vsel %vm4946, %v5092, 0
      %v5102 = vsel %vm4946, %v5099, 0
      %5104 = vmatprep.subr.mxu0 0.0
      %5105 = vmatpush1.xpose.msra.mxu0 %v5102
      %5106 = vmatprep.subr.mxu0 0.0
      %5107 = vmatpush1.xpose.msra.mxu0 0.0
      %5108 = vmatprep.subr.mxu0 0.0
      %5109 = vmatpush1.xpose.msra.mxu0 0.0
      %5110 = vmatprep.subr.mxu0 0.0
      %5111 = vmatpush1.xpose.msra.mxu0 0.0
      %5112 = vmatprep.subr.mxu0 0.0
      %5113 = vmatpush1.xpose.msra.mxu0 0.0
      %5114 = vmatprep.subr.mxu0 0.0
      %5115 = vmatpush1.xpose.msra.mxu0 0.0
      %5116 = vmatprep.subr.mxu0 0.0
      %5117 = vmatpush1.xpose.msra.mxu0 0.0
      %5118 = vmatprep.subr.mxu0 0.0
      %5119 = vmatpush1.xpose.msra.mxu0 0.0
      %5120 = vmatprep.subr.mxu0 0.0
      %5121 = vmatpush1.xpose.msra.mxu0 0.0
      %5122 = vmatprep.subr.mxu0 0.0
      %5123 = vmatpush1.xpose.msra.mxu0 0.0
      %5124 = vmatprep.subr.mxu0 0.0
      %5125 = vmatpush1.xpose.msra.mxu0 0.0
      %5126 = vmatprep.subr.mxu0 0.0
      %5127 = vmatpush1.xpose.msra.mxu0 0.0
      %5128 = vmatprep.subr.mxu0 0.0
      %5129 = vmatpush1.xpose.msra.mxu0 0.0
      %5130 = vmatprep.subr.mxu0 0.0
      %5131 = vmatpush1.xpose.msra.mxu0 0.0
      %5132 = vmatprep.subr.mxu0 0.0
      %5133 = vmatpush1.xpose.msra.mxu0 0.0
      %5134 = vmatprep.subr.mxu0 0.0
      %5135 = vmatpush1.xpose.msra.mxu0 0.0
      %5136 = vmatprep.subr.mxu0 0.0
      %5137 = vmatpush1.xpose.msra.mxu0 0.0
      %5138 = vmatprep.subr.mxu0 0.0
      %5139 = vmatpush1.xpose.msra.mxu0 0.0
      %5140 = vmatprep.subr.mxu0 0.0
      %5141 = vmatpush1.xpose.msra.mxu0 0.0
      %5142 = vmatprep.subr.mxu0 0.0
      %5143 = vmatpush1.xpose.msra.mxu0 0.0
      %5144 = vmatprep.subr.mxu0 0.0
      %5145 = vmatpush1.xpose.msra.mxu0 0.0
      %5146 = vmatprep.subr.mxu0 0.0
      %5147 = vmatpush1.xpose.msra.mxu0 0.0
      %5148 = vmatprep.subr.mxu0 0.0
      %5149 = vmatpush1.xpose.msra.mxu0 0.0
      %5150 = vmatprep.subr.mxu0 0.0
      %5151 = vmatpush1.xpose.msra.mxu0 0.0
      %5152 = vmatprep.subr.mxu0 0.0
      %5153 = vmatpush1.xpose.msra.mxu0 0.0
      %5154 = vmatprep.subr.mxu0 0.0
      %5155 = vmatpush1.xpose.msra.mxu0 0.0
      %5156 = vmatprep.subr.mxu0 0.0
      %5157 = vmatpush1.xpose.msra.mxu0 0.0
      %5158 = vmatprep.subr.mxu0 0.0
      %5159 = vmatpush1.xpose.msra.mxu0 0.0
      %5160 = vmatprep.subr.mxu0 0.0
      %5161 = vmatpush1.xpose.msra.mxu0 0.0
      %5162 = vmatprep.subr.mxu0 0.0
      %5163 = vmatpush1.xpose.msra.mxu0 0.0
      %5164 = vmatprep.subr.mxu0 0.0
      %5165 = vmatpush1.xpose.msra.mxu0 0.0
      %5166 = vmatprep.subr.mxu0 0.0
      %5167 = vmatpush1.xpose.msra.mxu0 0.0
      %5168 = vmatprep.mubr.f32.mxu0 0.0
      %5169 = vmatmul.mubr.f32.gmra.mrb[0].mxu0 %v5100
      %v5170 = vpop.f32.mrb[0].mxu0
      %v5171 = vadd.f32 0.0, %v5170
      %v5172 = vpop.f32.mrb[0].mxu0
      %5173 = vdwg.mxu0
      %v5174 = vsel %vm1721, %v5171, -inf
      %5175 = vmax.xlane.f32.xlu0 %v5174
      %v5176 = vpop.xlane.xlu0 %5175
      %v5177 = vsub.f32 %v5171, %v5176
      %v5178 = vmul.f32 %v5177, 1.442695
      %v5179 = vpow.pop %v5178
      %v5180 = vsel %vm1721, %v5179, 0.0
      %5181 = vadd.xlane.f32.xlu0 %v5180
      %v5182 = vpop.xlane.xlu0 %5181
      %v5183 = vrcp.pop %v5182
      %v5184 = vmul.f32 %v5179, %v5183
      %5185 = vrot.lane.b32.xlu0 %v5092, 120
      %v5186 = vpop.permute.xlu0 %5185
      %v5188 = vsel %vm4946, %v5184, 0
      %v5190 = vsel %vm2004, %v5186, 0
      %5192 = vmatprep.subr.mxu0 0.0
      %5193 = vmatpush1.msra.mxu0 %v5190
      %5194 = vmatprep.subr.mxu0 0.0
      %5195 = vmatpush1.msra.mxu0 0.0
      %5196 = vmatprep.subr.mxu0 0.0
      %5197 = vmatpush1.msra.mxu0 0.0
      %5198 = vmatprep.subr.mxu0 0.0
      %5199 = vmatpush1.msra.mxu0 0.0
      %5200 = vmatprep.subr.mxu0 0.0
      %5201 = vmatpush1.msra.mxu0 0.0
      %5202 = vmatprep.subr.mxu0 0.0
      %5203 = vmatpush1.msra.mxu0 0.0
      %5204 = vmatprep.subr.mxu0 0.0
      %5205 = vmatpush1.msra.mxu0 0.0
      %5206 = vmatprep.subr.mxu0 0.0
      %5207 = vmatpush1.msra.mxu0 0.0
      %5208 = vmatprep.subr.mxu0 0.0
      %5209 = vmatpush1.msra.mxu0 0.0
      %5210 = vmatprep.subr.mxu0 0.0
      %5211 = vmatpush1.msra.mxu0 0.0
      %5212 = vmatprep.subr.mxu0 0.0
      %5213 = vmatpush1.msra.mxu0 0.0
      %5214 = vmatprep.subr.mxu0 0.0
      %5215 = vmatpush1.msra.mxu0 0.0
      %5216 = vmatprep.subr.mxu0 0.0
      %5217 = vmatpush1.msra.mxu0 0.0
      %5218 = vmatprep.subr.mxu0 0.0
      %5219 = vmatpush1.msra.mxu0 0.0
      %5220 = vmatprep.subr.mxu0 0.0
      %5221 = vmatpush1.msra.mxu0 0.0
      %5222 = vmatprep.subr.mxu0 0.0
      %5223 = vmatpush1.msra.mxu0 0.0
      %5224 = vmatprep.subr.mxu0 0.0
      %5225 = vmatpush1.msra.mxu0 0.0
      %5226 = vmatprep.subr.mxu0 0.0
      %5227 = vmatpush1.msra.mxu0 0.0
      %5228 = vmatprep.subr.mxu0 0.0
      %5229 = vmatpush1.msra.mxu0 0.0
      %5230 = vmatprep.subr.mxu0 0.0
      %5231 = vmatpush1.msra.mxu0 0.0
      %5232 = vmatprep.subr.mxu0 0.0
      %5233 = vmatpush1.msra.mxu0 0.0
      %5234 = vmatprep.subr.mxu0 0.0
      %5235 = vmatpush1.msra.mxu0 0.0
      %5236 = vmatprep.subr.mxu0 0.0
      %5237 = vmatpush1.msra.mxu0 0.0
      %5238 = vmatprep.subr.mxu0 0.0
      %5239 = vmatpush1.msra.mxu0 0.0
      %5240 = vmatprep.subr.mxu0 0.0
      %5241 = vmatpush1.msra.mxu0 0.0
      %5242 = vmatprep.subr.mxu0 0.0
      %5243 = vmatpush1.msra.mxu0 0.0
      %5244 = vmatprep.subr.mxu0 0.0
      %5245 = vmatpush1.msra.mxu0 0.0
      %5246 = vmatprep.subr.mxu0 0.0
      %5247 = vmatpush1.msra.mxu0 0.0
      %5248 = vmatprep.subr.mxu0 0.0
      %5249 = vmatpush1.msra.mxu0 0.0
      %5250 = vmatprep.subr.mxu0 0.0
      %5251 = vmatpush1.msra.mxu0 0.0
      %5252 = vmatprep.subr.mxu0 0.0
      %5253 = vmatpush1.msra.mxu0 0.0
      %5254 = vmatprep.subr.mxu0 0.0
      %5255 = vmatpush1.msra.mxu0 0.0
      %5256 = vmatprep.mubr.f32.mxu0 0.0
      %5257 = vmatmul.mubr.f32.gmra.mrb[0].mxu0 %v5188
      %v5258 = vpop.f32.mrb[0].mxu0
      %v5259 = vadd.f32 0.0, %v5258
      %v5260 = vpop.f32.mrb[0].mxu0
      %5261 = vdwg.mxu0
      %s5262 = sld [smem:[#allocation4]]
      %v5263 = vstv %s5262
      %v5264 = vmul.f32 %v5263, %v5259
      %v5265 = vadd.f32 %v5264, %v5029
      %v5267 = vrot.slane %v5265, 2
      %5268 = vrot.lane.b32.xlu0 %v5267, 32
      %v5269 = vpop.permute.xlu0 %5268
      %v5271 = vsel %vm2432, %v5265, %v5269
      %v5272 = vld [vmem:[#allocation2] sm:$0x1]
      %v5273 = vsel %vm1701, 0, %v5272
      %5274 = vst [vmem:[#allocation2] sm:$0x1] %v5273
      %vm5275 = vcmask 1041409
      %vm5276 = vsmask.f32 7942
      %vm5277 = vmand %vm5275, %vm5276
      %v5278 = vld [vmem:[#allocation2] sm:$0x2]
      %v5279 = vsel %vm5277, 0, %v5278
      %5280 = vst [vmem:[#allocation2] sm:$0x2] %v5279
      %vm5281 = vcmask 254976
      %vm5282 = vsmask.f32 1282
      %vm5283 = vmand %vm5281, %vm5282
      %v5284 = vld [vmem:[#allocation2] sm:$0x3]
      %v5285 = vsel %vm5283, 0, %v5284
      %5286 = vst [vmem:[#allocation2] sm:$0x3] %v5285
      %vm5287 = vcmask 1042176
      %vm5288 = vmand %vm5287, %vm5282
      %v5289 = vld [vmem:[#allocation2] sm:$0x3]
      %v5290 = vsel %vm5288, 0, %v5289
      %5291 = vst [vmem:[#allocation2] sm:$0x3] %v5290
      %v5292 = vmax.f32 %v5271, 0.0
      %v5293 = vpack.c.bf16 %v5292, %v5292
      %v5295 = vunpack.c.l.b16 %v5293
      %v5296 = vpack.c.b16 %v5295, %v5295
      %v5298 = vshrl.u32 %v5296, 16
      %v5300 = vrot.slane %v5298, 7
      %v5301 = vshll.u32 %v5296, 16
      %v5303 = vor.u32 %v5300, %v5301
      %5304 = vrot.lane.b32.xlu0 %v5303, 32
      %v5305 = vpop.permute.xlu0 %5304
      %vm5307 = vcmask 779520
      %vm5308 = vmand %vm5307, %vm5282
      %v5309 = vld [vmem:[#allocation2] sm:$0x3]
      %v5310 = vsel %vm5308, %v5305, %v5309
      %5311 = vst [vmem:[#allocation2] sm:$0x3] %v5310
      %v5312 = vld [vmem:[#allocation2] sm:$0x1]
      %v5313 = vld [vmem:[%s57] sm:$0xf]
      %v5314 = vld [vmem:[%s57 + $0x4] sm:$0xf]
      %v5315 = vld [vmem:[%s57 + $0x8] sm:$0xf]
      %v5316 = vld [vmem:[%s57 + $0xc] sm:$0xf]
      %v5317 = vld [vmem:[%s57 + $0x10] sm:$0xf]
      %v5318 = vld [vmem:[%s57 + $0x14] sm:$0xf]
      %v5319 = vld [vmem:[%s57 + $0x18] sm:$0xf]
      %v5320 = vld [vmem:[%s57 + $0x1c] sm:$0xf]
      %v5321 = vld [vmem:[%s57 + $0x20] sm:$0xf]
      %v5322 = vld [vmem:[%s57 + $0x24] sm:$0xf]
      %v5323 = vld [vmem:[%s57 + $0x28] sm:$0xf]
      %v5324 = vld [vmem:[%s57 + $0x2c] sm:$0xf]
      %v5325 = vld [vmem:[%s57 + $0x30] sm:$0xf]
      %v5326 = vld [vmem:[%s57 + $0x34] sm:$0xf]
      %v5327 = vld [vmem:[%s57 + $0x38] sm:$0xf]
      %v5328 = vld [vmem:[%s57 + $0x3c] sm:$0xf]
      %v5329 = vld [vmem:[#allocation2] sm:$0x3]
      %s5330 = scalar_lea.vmem %s57, 64
      %v5331 = vld [vmem:[%s5330] sm:$0xf]
      %v5332 = vld [vmem:[%s5330 + $0x4] sm:$0xf]
      %v5333 = vld [vmem:[%s5330 + $0x8] sm:$0xf]
      %v5334 = vld [vmem:[%s5330 + $0xc] sm:$0xf]
      %v5335 = vld [vmem:[%s5330 + $0x10] sm:$0xf]
      %v5336 = vld [vmem:[%s5330 + $0x14] sm:$0xf]
      %v5337 = vld [vmem:[%s5330 + $0x18] sm:$0xf]
      %v5338 = vld [vmem:[%s5330 + $0x1c] sm:$0xf]
      %v5339 = vld [vmem:[%s5330 + $0x20] sm:$0xf]
      %v5340 = vld [vmem:[%s5330 + $0x24] sm:$0xf]
      %v5341 = vld [vmem:[%s5330 + $0x28] sm:$0xf]
      %v5342 = vld [vmem:[%s5330 + $0x2c] sm:$0xf]
      %v5343 = vld [vmem:[%s5330 + $0x30] sm:$0xf]
      %v5344 = vld [vmem:[%s5330 + $0x34] sm:$0xf]
      %v5345 = vld [vmem:[%s5330 + $0x38] sm:$0xf]
      %v5346 = vld [vmem:[%s5330 + $0x3c] sm:$0xf]
      %v5348 = vunpack.c.l.b16 %v5329
      %v5349 = vpack.c.b16 %v5348, %v5348
      %v5351 = vshrl.u32 %v5349, 16
      %v5353 = vshll.u32 %v5349, 16
      %v5355 = vrot.slane %v5353, 1
      %v5356 = vor.u32 %v5351, %v5355
      %v5374 = vunpack.c.l.b16 %v5331
      %v5375 = vunpack.c.l.b16 %v5332
      %v5376 = vunpack.c.l.b16 %v5333
      %v5377 = vunpack.c.l.b16 %v5334
      %v5378 = vunpack.c.l.b16 %v5335
      %v5379 = vunpack.c.l.b16 %v5336
      %v5380 = vunpack.c.l.b16 %v5337
      %v5381 = vunpack.c.l.b16 %v5338
      %v5382 = vunpack.c.l.b16 %v5339
      %v5383 = vunpack.c.l.b16 %v5340
      %v5384 = vunpack.c.l.b16 %v5341
      %v5385 = vunpack.c.l.b16 %v5342
      %v5386 = vunpack.c.l.b16 %v5343
      %v5387 = vunpack.c.l.b16 %v5344
      %v5388 = vunpack.c.l.b16 %v5345
      %v5389 = vunpack.c.l.b16 %v5346
      %v5390 = vpack.c.b16 %v5375, %v5374
      %v5391 = vpack.c.b16 %v5377, %v5376
      %v5392 = vpack.c.b16 %v5379, %v5378
      %v5393 = vpack.c.b16 %v5381, %v5380
      %v5394 = vpack.c.b16 %v5383, %v5382
      %v5395 = vpack.c.b16 %v5385, %v5384
      %v5396 = vpack.c.b16 %v5387, %v5386
      %v5397 = vpack.c.b16 %v5389, %v5388
      %5406 = vmatprep.subr.bf16.mxu0 0
      %5407 = vmatpush1.bf16.msra.mxu0 %v5390
      %5408 = vmatprep.subr.bf16.mxu0 0
      %5409 = vmatpush1.bf16.msra.mxu0 %v5391
      %5410 = vmatprep.subr.bf16.mxu0 0
      %5411 = vmatpush1.bf16.msra.mxu0 %v5392
      %5412 = vmatprep.subr.bf16.mxu0 0
      %5413 = vmatpush1.bf16.msra.mxu0 %v5393
      %5414 = vmatprep.subr.bf16.mxu0 0
      %5415 = vmatpush1.bf16.msra.mxu0 %v5394
      %5416 = vmatprep.subr.bf16.mxu0 0
      %5417 = vmatpush1.bf16.msra.mxu0 %v5395
      %5418 = vmatprep.subr.bf16.mxu0 0
      %5419 = vmatpush1.bf16.msra.mxu0 %v5396
      %5420 = vmatprep.subr.bf16.mxu0 0
      %5421 = vmatpush1.bf16.msra.mxu0 %v5397
      %5422 = vmatprep.subr.bf16.mxu0 0
      %5423 = vmatpush1.bf16.msra.mxu0 0
      %5424 = vmatprep.subr.bf16.mxu0 0
      %5425 = vmatpush1.bf16.msra.mxu0 0
      %5426 = vmatprep.subr.bf16.mxu0 0
      %5427 = vmatpush1.bf16.msra.mxu0 0
      %5428 = vmatprep.subr.bf16.mxu0 0
      %5429 = vmatpush1.bf16.msra.mxu0 0
      %5430 = vmatprep.subr.bf16.mxu0 0
      %5431 = vmatpush1.bf16.msra.mxu0 0
      %5432 = vmatprep.subr.bf16.mxu0 0
      %5433 = vmatpush1.bf16.msra.mxu0 0
      %5434 = vmatprep.subr.bf16.mxu0 0
      %5435 = vmatpush1.bf16.msra.mxu0 0
      %5436 = vmatprep.subr.bf16.mxu0 0
      %5437 = vmatpush1.bf16.msra.mxu0 0
      %5438 = vmatprep.mubr.bf16.mxu0 0
      %5439 = vmatmul.mubr.bf16.gmra.mrb[0].mxu0 %v5356
      %v5440 = vpop.f32.mrb[0].mxu0
      %v5441 = vadd.f32 0.0, %v5440
      %v5442 = vpop.f32.mrb[0].mxu0
      %v5443 = vpop.f32.mrb[0].mxu0
      %v5444 = vpop.f32.mrb[0].mxu0
      %5445 = vdwg.mxu0
      %v5462 = vunpack.c.l.b16 %v5313
      %v5463 = vunpack.c.l.b16 %v5314
      %v5464 = vunpack.c.l.b16 %v5315
      %v5465 = vunpack.c.l.b16 %v5316
      %v5466 = vunpack.c.l.b16 %v5317
      %v5467 = vunpack.c.l.b16 %v5318
      %v5468 = vunpack.c.l.b16 %v5319
      %v5469 = vunpack.c.l.b16 %v5320
      %v5470 = vunpack.c.l.b16 %v5321
      %v5471 = vunpack.c.l.b16 %v5322
      %v5472 = vunpack.c.l.b16 %v5323
      %v5473 = vunpack.c.l.b16 %v5324
      %v5474 = vunpack.c.l.b16 %v5325
      %v5475 = vunpack.c.l.b16 %v5326
      %v5476 = vunpack.c.l.b16 %v5327
      %v5477 = vunpack.c.l.b16 %v5328
      %v5478 = vpack.c.b16 %v5463, %v5462
      %v5479 = vpack.c.b16 %v5465, %v5464
      %v5480 = vpack.c.b16 %v5467, %v5466
      %v5481 = vpack.c.b16 %v5469, %v5468
      %v5482 = vpack.c.b16 %v5471, %v5470
      %v5483 = vpack.c.b16 %v5473, %v5472
      %v5484 = vpack.c.b16 %v5475, %v5474
      %v5485 = vpack.c.b16 %v5477, %v5476
      %5494 = vmatprep.subr.bf16.mxu0 0
      %5495 = vmatpush1.bf16.msra.mxu0 %v5478
      %5496 = vmatprep.subr.bf16.mxu0 0
      %5497 = vmatpush1.bf16.msra.mxu0 %v5479
      %5498 = vmatprep.subr.bf16.mxu0 0
      %5499 = vmatpush1.bf16.msra.mxu0 %v5480
      %5500 = vmatprep.subr.bf16.mxu0 0
      %5501 = vmatpush1.bf16.msra.mxu0 %v5481
      %5502 = vmatprep.subr.bf16.mxu0 0
      %5503 = vmatpush1.bf16.msra.mxu0 %v5482
      %5504 = vmatprep.subr.bf16.mxu0 0
      %5505 = vmatpush1.bf16.msra.mxu0 %v5483
      %5506 = vmatprep.subr.bf16.mxu0 0
      %5507 = vmatpush1.bf16.msra.mxu0 %v5484
      %5508 = vmatprep.subr.bf16.mxu0 0
      %5509 = vmatpush1.bf16.msra.mxu0 %v5485
      %5510 = vmatprep.subr.bf16.mxu0 0
      %5511 = vmatpush1.bf16.msra.mxu0 0
      %5512 = vmatprep.subr.bf16.mxu0 0
      %5513 = vmatpush1.bf16.msra.mxu0 0
      %5514 = vmatprep.subr.bf16.mxu0 0
      %5515 = vmatpush1.bf16.msra.mxu0 0
      %5516 = vmatprep.subr.bf16.mxu0 0
      %5517 = vmatpush1.bf16.msra.mxu0 0
      %5518 = vmatprep.subr.bf16.mxu0 0
      %5519 = vmatpush1.bf16.msra.mxu0 0
      %5520 = vmatprep.subr.bf16.mxu0 0
      %5521 = vmatpush1.bf16.msra.mxu0 0
      %5522 = vmatprep.subr.bf16.mxu0 0
      %5523 = vmatpush1.bf16.msra.mxu0 0
      %5524 = vmatprep.subr.bf16.mxu0 0
      %5525 = vmatpush1.bf16.msra.mxu0 0
      %5526 = vmatprep.mubr.bf16.mxu0 0
      %5527 = vmatmul.mubr.bf16.gmra.mrb[0].mxu0 %v5312
      %v5528 = vpop.f32.mrb[0].mxu0
      %v5529 = vadd.f32 %v5441, %v5528
      %v5530 = vpop.f32.mrb[0].mxu0
      %v5531 = vpop.f32.mrb[0].mxu0
      %v5532 = vpop.f32.mrb[0].mxu0
      %5533 = vdwg.mxu0
      %v5534 = vld [vmem:[#allocation2] sm:$0x2]
      %s5535 = scalar_lea.vmem %s57, 128
      %v5536 = vld [vmem:[%s5535] sm:$0xf]
      %v5537 = vld [vmem:[%s5535 + $0x4] sm:$0xf]
      %v5538 = vld [vmem:[%s5535 + $0x8] sm:$0xf]
      %v5539 = vld [vmem:[%s5535 + $0xc] sm:$0xf]
      %v5540 = vld [vmem:[%s5535 + $0x10] sm:$0xf]
      %v5541 = vld [vmem:[%s5535 + $0x14] sm:$0xf]
      %v5542 = vld [vmem:[%s5535 + $0x18] sm:$0xf]
      %v5543 = vld [vmem:[%s5535 + $0x1c] sm:$0xf]
      %v5544 = vld [vmem:[%s5535 + $0x20] sm:$0xf]
      %v5545 = vld [vmem:[%s5535 + $0x24] sm:$0xf]
      %v5546 = vld [vmem:[%s5535 + $0x28] sm:$0xf]
      %v5547 = vld [vmem:[%s5535 + $0x2c] sm:$0xf]
      %v5548 = vld [vmem:[%s5535 + $0x30] sm:$0xf]
      %v5549 = vld [vmem:[%s5535 + $0x34] sm:$0xf]
      %v5550 = vld [vmem:[%s5535 + $0x38] sm:$0xf]
      %v5551 = vld [vmem:[%s5535 + $0x3c] sm:$0xf]
      %v5553 = vunpack.c.l.b16 %v5534
      %v5554 = vpack.c.b16 %v5553, %v5553
      %v5555 = vrot.slane %v5554, 1
      %v5573 = vunpack.c.l.b16 %v5536
      %v5574 = vunpack.c.l.b16 %v5537
      %v5575 = vunpack.c.l.b16 %v5538
      %v5576 = vunpack.c.l.b16 %v5539
      %v5577 = vunpack.c.l.b16 %v5540
      %v5578 = vunpack.c.l.b16 %v5541
      %v5579 = vunpack.c.l.b16 %v5542
      %v5580 = vunpack.c.l.b16 %v5543
      %v5581 = vunpack.c.l.b16 %v5544
      %v5582 = vunpack.c.l.b16 %v5545
      %v5583 = vunpack.c.l.b16 %v5546
      %v5584 = vunpack.c.l.b16 %v5547
      %v5585 = vunpack.c.l.b16 %v5548
      %v5586 = vunpack.c.l.b16 %v5549
      %v5587 = vunpack.c.l.b16 %v5550
      %v5588 = vunpack.c.l.b16 %v5551
      %v5589 = vpack.c.b16 %v5574, %v5573
      %v5590 = vpack.c.b16 %v5576, %v5575
      %v5591 = vpack.c.b16 %v5578, %v5577
      %v5592 = vpack.c.b16 %v5580, %v5579
      %v5593 = vpack.c.b16 %v5582, %v5581
      %v5594 = vpack.c.b16 %v5584, %v5583
      %v5595 = vpack.c.b16 %v5586, %v5585
      %v5596 = vpack.c.b16 %v5588, %v5587
      %5605 = vmatprep.subr.bf16.mxu0 0
      %5606 = vmatpush1.bf16.msra.mxu0 %v5589
      %5607 = vmatprep.subr.bf16.mxu0 0
      %5608 = vmatpush1.bf16.msra.mxu0 %v5590
      %5609 = vmatprep.subr.bf16.mxu0 0
      %5610 = vmatpush1.bf16.msra.mxu0 %v5591
      %5611 = vmatprep.subr.bf16.mxu0 0
      %5612 = vmatpush1.bf16.msra.mxu0 %v5592
      %5613 = vmatprep.subr.bf16.mxu0 0
      %5614 = vmatpush1.bf16.msra.mxu0 %v5593
      %5615 = vmatprep.subr.bf16.mxu0 0
      %5616 = vmatpush1.bf16.msra.mxu0 %v5594
      %5617 = vmatprep.subr.bf16.mxu0 0
      %5618 = vmatpush1.bf16.msra.mxu0 %v5595
      %5619 = vmatprep.subr.bf16.mxu0 0
      %5620 = vmatpush1.bf16.msra.mxu0 %v5596
      %5621 = vmatprep.subr.bf16.mxu0 0
      %5622 = vmatpush1.bf16.msra.mxu0 0
      %5623 = vmatprep.subr.bf16.mxu0 0
      %5624 = vmatpush1.bf16.msra.mxu0 0
      %5625 = vmatprep.subr.bf16.mxu0 0
      %5626 = vmatpush1.bf16.msra.mxu0 0
      %5627 = vmatprep.subr.bf16.mxu0 0
      %5628 = vmatpush1.bf16.msra.mxu0 0
      %5629 = vmatprep.subr.bf16.mxu0 0
      %5630 = vmatpush1.bf16.msra.mxu0 0
      %5631 = vmatprep.subr.bf16.mxu0 0
      %5632 = vmatpush1.bf16.msra.mxu0 0
      %5633 = vmatprep.subr.bf16.mxu0 0
      %5634 = vmatpush1.bf16.msra.mxu0 0
      %5635 = vmatprep.subr.bf16.mxu0 0
      %5636 = vmatpush1.bf16.msra.mxu0 0
      %5637 = vmatprep.mubr.bf16.mxu0 0
      %5638 = vmatmul.mubr.bf16.gmra.mrb[0].mxu0 %v5555
      %v5639 = vpop.f32.mrb[0].mxu0
      %v5640 = vadd.f32 0.0, %v5639
      %v5641 = vpop.f32.mrb[0].mxu0
      %v5642 = vpop.f32.mrb[0].mxu0
      %v5643 = vpop.f32.mrb[0].mxu0
      %5644 = vdwg.mxu0
      %v5645 = vadd.f32 %v5529, %v5640
      %v5646 = vld [vmem:[%s59] sm:$0x1]
      %v5648 = vlaneseq
      %v5649 = vshrl.u32 %v5648, 7
      %v5650 = vsub.s32 0, %v5649
      %v5651 = vrot.slane %v5646, %v5650
      %v5653 = vadd.f32 %v5645, %v5651
      %v5654 = vld [vmem:[#allocation3] sm:$0x1]
      %v5655 = vsel %vm1701, 0, %v5654
      %5656 = vst [vmem:[#allocation3] sm:$0x1] %v5655
      %v5657 = vld [vmem:[#allocation3] sm:$0x2]
      %v5658 = vsel %vm5277, 0, %v5657
      %5659 = vst [vmem:[#allocation3] sm:$0x2] %v5658
      %v5660 = vld [vmem:[#allocation3] sm:$0x3]
      %v5661 = vsel %vm5283, 0, %v5660
      %5662 = vst [vmem:[#allocation3] sm:$0x3] %v5661
      %v5663 = vld [vmem:[#allocation3] sm:$0x3]
      %v5664 = vsel %vm5288, 0, %v5663
      %5665 = vst [vmem:[#allocation3] sm:$0x3] %v5664
      %v5666 = vmax.f32 %v5653, 0.0
      %v5667 = vpack.c.bf16 %v5666, %v5666
      %v5669 = vunpack.c.l.b16 %v5667
      %v5670 = vpack.c.b16 %v5669, %v5669
      %v5672 = vshrl.u32 %v5670, 16
      %v5674 = vrot.slane %v5672, 7
      %v5675 = vshll.u32 %v5670, 16
      %v5677 = vor.u32 %v5674, %v5675
      %5678 = vrot.lane.b32.xlu0 %v5677, 32
      %v5679 = vpop.permute.xlu0 %5678
      %v5681 = vld [vmem:[#allocation3] sm:$0x3]
      %v5682 = vsel %vm5308, %v5679, %v5681
      %5683 = vst [vmem:[#allocation3] sm:$0x3] %v5682
      %v5684 = vld [vmem:[#allocation3] sm:$0x1]
      %v5685 = vld [vmem:[%s61] sm:$0xf]
      %v5686 = vld [vmem:[%s61 + $0x4] sm:$0xf]
      %v5687 = vld [vmem:[%s61 + $0x8] sm:$0xf]
      %v5688 = vld [vmem:[%s61 + $0xc] sm:$0xf]
      %v5689 = vld [vmem:[%s61 + $0x10] sm:$0xf]
      %v5690 = vld [vmem:[%s61 + $0x14] sm:$0xf]
      %v5691 = vld [vmem:[%s61 + $0x18] sm:$0xf]
      %v5692 = vld [vmem:[%s61 + $0x1c] sm:$0xf]
      %v5693 = vld [vmem:[%s61 + $0x20] sm:$0xf]
      %v5694 = vld [vmem:[%s61 + $0x24] sm:$0xf]
      %v5695 = vld [vmem:[%s61 + $0x28] sm:$0xf]
      %v5696 = vld [vmem:[%s61 + $0x2c] sm:$0xf]
      %v5697 = vld [vmem:[%s61 + $0x30] sm:$0xf]
      %v5698 = vld [vmem:[%s61 + $0x34] sm:$0xf]
      %v5699 = vld [vmem:[%s61 + $0x38] sm:$0xf]
      %v5700 = vld [vmem:[%s61 + $0x3c] sm:$0xf]
      %v5701 = vld [vmem:[#allocation3] sm:$0x3]
      %s5702 = scalar_lea.vmem %s61, 64
      %v5703 = vld [vmem:[%s5702] sm:$0xf]
      %v5704 = vld [vmem:[%s5702 + $0x4] sm:$0xf]
      %v5705 = vld [vmem:[%s5702 + $0x8] sm:$0xf]
      %v5706 = vld [vmem:[%s5702 + $0xc] sm:$0xf]
      %v5707 = vld [vmem:[%s5702 + $0x10] sm:$0xf]
      %v5708 = vld [vmem:[%s5702 + $0x14] sm:$0xf]
      %v5709 = vld [vmem:[%s5702 + $0x18] sm:$0xf]
      %v5710 = vld [vmem:[%s5702 + $0x1c] sm:$0xf]
      %v5711 = vld [vmem:[%s5702 + $0x20] sm:$0xf]
      %v5712 = vld [vmem:[%s5702 + $0x24] sm:$0xf]
      %v5713 = vld [vmem:[%s5702 + $0x28] sm:$0xf]
      %v5714 = vld [vmem:[%s5702 + $0x2c] sm:$0xf]
      %v5715 = vld [vmem:[%s5702 + $0x30] sm:$0xf]
      %v5716 = vld [vmem:[%s5702 + $0x34] sm:$0xf]
      %v5717 = vld [vmem:[%s5702 + $0x38] sm:$0xf]
      %v5718 = vld [vmem:[%s5702 + $0x3c] sm:$0xf]
      %v5720 = vunpack.c.l.b16 %v5701
      %v5721 = vpack.c.b16 %v5720, %v5720
      %v5723 = vshrl.u32 %v5721, 16
      %v5725 = vshll.u32 %v5721, 16
      %v5727 = vrot.slane %v5725, 1
      %v5728 = vor.u32 %v5723, %v5727
      %v5746 = vunpack.c.l.b16 %v5703
      %v5747 = vunpack.c.l.b16 %v5704
      %v5748 = vunpack.c.l.b16 %v5705
      %v5749 = vunpack.c.l.b16 %v5706
      %v5750 = vunpack.c.l.b16 %v5707
      %v5751 = vunpack.c.l.b16 %v5708
      %v5752 = vunpack.c.l.b16 %v5709
      %v5753 = vunpack.c.l.b16 %v5710
      %v5754 = vunpack.c.l.b16 %v5711
      %v5755 = vunpack.c.l.b16 %v5712
      %v5756 = vunpack.c.l.b16 %v5713
      %v5757 = vunpack.c.l.b16 %v5714
      %v5758 = vunpack.c.l.b16 %v5715
      %v5759 = vunpack.c.l.b16 %v5716
      %v5760 = vunpack.c.l.b16 %v5717
      %v5761 = vunpack.c.l.b16 %v5718
      %v5762 = vpack.c.b16 %v5747, %v5746
      %v5763 = vpack.c.b16 %v5749, %v5748
      %v5764 = vpack.c.b16 %v5751, %v5750
      %v5765 = vpack.c.b16 %v5753, %v5752
      %v5766 = vpack.c.b16 %v5755, %v5754
      %v5767 = vpack.c.b16 %v5757, %v5756
      %v5768 = vpack.c.b16 %v5759, %v5758
      %v5769 = vpack.c.b16 %v5761, %v5760
      %5778 = vmatprep.subr.bf16.mxu0 0
      %5779 = vmatpush1.bf16.msra.mxu0 %v5762
      %5780 = vmatprep.subr.bf16.mxu0 0
      %5781 = vmatpush1.bf16.msra.mxu0 %v5763
      %5782 = vmatprep.subr.bf16.mxu0 0
      %5783 = vmatpush1.bf16.msra.mxu0 %v5764
      %5784 = vmatprep.subr.bf16.mxu0 0
      %5785 = vmatpush1.bf16.msra.mxu0 %v5765
      %5786 = vmatprep.subr.bf16.mxu0 0
      %5787 = vmatpush1.bf16.msra.mxu0 %v5766
      %5788 = vmatprep.subr.bf16.mxu0 0
      %5789 = vmatpush1.bf16.msra.mxu0 %v5767
      %5790 = vmatprep.subr.bf16.mxu0 0
      %5791 = vmatpush1.bf16.msra.mxu0 %v5768
      %5792 = vmatprep.subr.bf16.mxu0 0
      %5793 = vmatpush1.bf16.msra.mxu0 %v5769
      %5794 = vmatprep.subr.bf16.mxu0 0
      %5795 = vmatpush1.bf16.msra.mxu0 0
      %5796 = vmatprep.subr.bf16.mxu0 0
      %5797 = vmatpush1.bf16.msra.mxu0 0
      %5798 = vmatprep.subr.bf16.mxu0 0
      %5799 = vmatpush1.bf16.msra.mxu0 0
      %5800 = vmatprep.subr.bf16.mxu0 0
      %5801 = vmatpush1.bf16.msra.mxu0 0
      %5802 = vmatprep.subr.bf16.mxu0 0
      %5803 = vmatpush1.bf16.msra.mxu0 0
      %5804 = vmatprep.subr.bf16.mxu0 0
      %5805 = vmatpush1.bf16.msra.mxu0 0
      %5806 = vmatprep.subr.bf16.mxu0 0
      %5807 = vmatpush1.bf16.msra.mxu0 0
      %5808 = vmatprep.subr.bf16.mxu0 0
      %5809 = vmatpush1.bf16.msra.mxu0 0
      %5810 = vmatprep.mubr.bf16.mxu0 0
      %5811 = vmatmul.mubr.bf16.gmra.mrb[0].mxu0 %v5728
      %v5812 = vpop.f32.mrb[0].mxu0
      %v5813 = vadd.f32 0.0, %v5812
      %v5814 = vpop.f32.mrb[0].mxu0
      %v5815 = vpop.f32.mrb[0].mxu0
      %v5816 = vpop.f32.mrb[0].mxu0
      %5817 = vdwg.mxu0
      %v5834 = vunpack.c.l.b16 %v5685
      %v5835 = vunpack.c.l.b16 %v5686
      %v5836 = vunpack.c.l.b16 %v5687
      %v5837 = vunpack.c.l.b16 %v5688
      %v5838 = vunpack.c.l.b16 %v5689
      %v5839 = vunpack.c.l.b16 %v5690
      %v5840 = vunpack.c.l.b16 %v5691
      %v5841 = vunpack.c.l.b16 %v5692
      %v5842 = vunpack.c.l.b16 %v5693
      %v5843 = vunpack.c.l.b16 %v5694
      %v5844 = vunpack.c.l.b16 %v5695
      %v5845 = vunpack.c.l.b16 %v5696
      %v5846 = vunpack.c.l.b16 %v5697
      %v5847 = vunpack.c.l.b16 %v5698
      %v5848 = vunpack.c.l.b16 %v5699
      %v5849 = vunpack.c.l.b16 %v5700
      %v5850 = vpack.c.b16 %v5835, %v5834
      %v5851 = vpack.c.b16 %v5837, %v5836
      %v5852 = vpack.c.b16 %v5839, %v5838
      %v5853 = vpack.c.b16 %v5841, %v5840
      %v5854 = vpack.c.b16 %v5843, %v5842
      %v5855 = vpack.c.b16 %v5845, %v5844
      %v5856 = vpack.c.b16 %v5847, %v5846
      %v5857 = vpack.c.b16 %v5849, %v5848
      %5866 = vmatprep.subr.bf16.mxu0 0
      %5867 = vmatpush1.bf16.msra.mxu0 %v5850
      %5868 = vmatprep.subr.bf16.mxu0 0
      %5869 = vmatpush1.bf16.msra.mxu0 %v5851
      %5870 = vmatprep.subr.bf16.mxu0 0
      %5871 = vmatpush1.bf16.msra.mxu0 %v5852
      %5872 = vmatprep.subr.bf16.mxu0 0
      %5873 = vmatpush1.bf16.msra.mxu0 %v5853
      %5874 = vmatprep.subr.bf16.mxu0 0
      %5875 = vmatpush1.bf16.msra.mxu0 %v5854
      %5876 = vmatprep.subr.bf16.mxu0 0
      %5877 = vmatpush1.bf16.msra.mxu0 %v5855
      %5878 = vmatprep.subr.bf16.mxu0 0
      %5879 = vmatpush1.bf16.msra.mxu0 %v5856
      %5880 = vmatprep.subr.bf16.mxu0 0
      %5881 = vmatpush1.bf16.msra.mxu0 %v5857
      %5882 = vmatprep.subr.bf16.mxu0 0
      %5883 = vmatpush1.bf16.msra.mxu0 0
      %5884 = vmatprep.subr.bf16.mxu0 0
      %5885 = vmatpush1.bf16.msra.mxu0 0
      %5886 = vmatprep.subr.bf16.mxu0 0
      %5887 = vmatpush1.bf16.msra.mxu0 0
      %5888 = vmatprep.subr.bf16.mxu0 0
      %5889 = vmatpush1.bf16.msra.mxu0 0
      %5890 = vmatprep.subr.bf16.mxu0 0
      %5891 = vmatpush1.bf16.msra.mxu0 0
      %5892 = vmatprep.subr.bf16.mxu0 0
      %5893 = vmatpush1.bf16.msra.mxu0 0
      %5894 = vmatprep.subr.bf16.mxu0 0
      %5895 = vmatpush1.bf16.msra.mxu0 0
      %5896 = vmatprep.subr.bf16.mxu0 0
      %5897 = vmatpush1.bf16.msra.mxu0 0
      %5898 = vmatprep.mubr.bf16.mxu0 0
      %5899 = vmatmul.mubr.bf16.gmra.mrb[0].mxu0 %v5684
      %v5900 = vpop.f32.mrb[0].mxu0
      %v5901 = vadd.f32 %v5813, %v5900
      %v5902 = vpop.f32.mrb[0].mxu0
      %v5903 = vpop.f32.mrb[0].mxu0
      %v5904 = vpop.f32.mrb[0].mxu0
      %5905 = vdwg.mxu0
      %v5906 = vld [vmem:[#allocation3] sm:$0x2]
      %s5907 = scalar_lea.vmem %s61, 128
      %v5908 = vld [vmem:[%s5907] sm:$0xf]
      %v5909 = vld [vmem:[%s5907 + $0x4] sm:$0xf]
      %v5910 = vld [vmem:[%s5907 + $0x8] sm:$0xf]
      %v5911 = vld [vmem:[%s5907 + $0xc] sm:$0xf]
      %v5912 = vld [vmem:[%s5907 + $0x10] sm:$0xf]
      %v5913 = vld [vmem:[%s5907 + $0x14] sm:$0xf]
      %v5914 = vld [vmem:[%s5907 + $0x18] sm:$0xf]
      %v5915 = vld [vmem:[%s5907 + $0x1c] sm:$0xf]
      %v5916 = vld [vmem:[%s5907 + $0x20] sm:$0xf]
      %v5917 = vld [vmem:[%s5907 + $0x24] sm:$0xf]
      %v5918 = vld [vmem:[%s5907 + $0x28] sm:$0xf]
      %v5919 = vld [vmem:[%s5907 + $0x2c] sm:$0xf]
      %v5920 = vld [vmem:[%s5907 + $0x30] sm:$0xf]
      %v5921 = vld [vmem:[%s5907 + $0x34] sm:$0xf]
      %v5922 = vld [vmem:[%s5907 + $0x38] sm:$0xf]
      %v5923 = vld [vmem:[%s5907 + $0x3c] sm:$0xf]
      %v5925 = vunpack.c.l.b16 %v5906
      %v5926 = vpack.c.b16 %v5925, %v5925
      %v5927 = vrot.slane %v5926, 1
      %v5945 = vunpack.c.l.b16 %v5908
      %v5946 = vunpack.c.l.b16 %v5909
      %v5947 = vunpack.c.l.b16 %v5910
      %v5948 = vunpack.c.l.b16 %v5911
      %v5949 = vunpack.c.l.b16 %v5912
      %v5950 = vunpack.c.l.b16 %v5913
      %v5951 = vunpack.c.l.b16 %v5914
      %v5952 = vunpack.c.l.b16 %v5915
      %v5953 = vunpack.c.l.b16 %v5916
      %v5954 = vunpack.c.l.b16 %v5917
      %v5955 = vunpack.c.l.b16 %v5918
      %v5956 = vunpack.c.l.b16 %v5919
      %v5957 = vunpack.c.l.b16 %v5920
      %v5958 = vunpack.c.l.b16 %v5921
      %v5959 = vunpack.c.l.b16 %v5922
      %v5960 = vunpack.c.l.b16 %v5923
      %v5961 = vpack.c.b16 %v5946, %v5945
      %v5962 = vpack.c.b16 %v5948, %v5947
      %v5963 = vpack.c.b16 %v5950, %v5949
      %v5964 = vpack.c.b16 %v5952, %v5951
      %v5965 = vpack.c.b16 %v5954, %v5953
      %v5966 = vpack.c.b16 %v5956, %v5955
      %v5967 = vpack.c.b16 %v5958, %v5957
      %v5968 = vpack.c.b16 %v5960, %v5959
      %5977 = vmatprep.subr.bf16.mxu0 0
      %5978 = vmatpush1.bf16.msra.mxu0 %v5961
      %5979 = vmatprep.subr.bf16.mxu0 0
      %5980 = vmatpush1.bf16.msra.mxu0 %v5962
      %5981 = vmatprep.subr.bf16.mxu0 0
      %5982 = vmatpush1.bf16.msra.mxu0 %v5963
      %5983 = vmatprep.subr.bf16.mxu0 0
      %5984 = vmatpush1.bf16.msra.mxu0 %v5964
      %5985 = vmatprep.subr.bf16.mxu0 0
      %5986 = vmatpush1.bf16.msra.mxu0 %v5965
      %5987 = vmatprep.subr.bf16.mxu0 0
      %5988 = vmatpush1.bf16.msra.mxu0 %v5966
      %5989 = vmatprep.subr.bf16.mxu0 0
      %5990 = vmatpush1.bf16.msra.mxu0 %v5967
      %5991 = vmatprep.subr.bf16.mxu0 0
      %5992 = vmatpush1.bf16.msra.mxu0 %v5968
      %5993 = vmatprep.subr.bf16.mxu0 0
      %5994 = vmatpush1.bf16.msra.mxu0 0
      %5995 = vmatprep.subr.bf16.mxu0 0
      %5996 = vmatpush1.bf16.msra.mxu0 0
      %5997 = vmatprep.subr.bf16.mxu0 0
      %5998 = vmatpush1.bf16.msra.mxu0 0
      %5999 = vmatprep.subr.bf16.mxu0 0
      %6000 = vmatpush1.bf16.msra.mxu0 0
      %6001 = vmatprep.subr.bf16.mxu0 0
      %6002 = vmatpush1.bf16.msra.mxu0 0
      %6003 = vmatprep.subr.bf16.mxu0 0
      %6004 = vmatpush1.bf16.msra.mxu0 0
      %6005 = vmatprep.subr.bf16.mxu0 0
      %6006 = vmatpush1.bf16.msra.mxu0 0
      %6007 = vmatprep.subr.bf16.mxu0 0
      %6008 = vmatpush1.bf16.msra.mxu0 0
      %6009 = vmatprep.mubr.bf16.mxu0 0
      %6010 = vmatmul.mubr.bf16.gmra.mrb[0].mxu0 %v5927
      %v6011 = vpop.f32.mrb[0].mxu0
      %v6012 = vadd.f32 0.0, %v6011
      %v6013 = vpop.f32.mrb[0].mxu0
      %v6014 = vpop.f32.mrb[0].mxu0
      %v6015 = vpop.f32.mrb[0].mxu0
      %6016 = vdwg.mxu0
      %v6017 = vadd.f32 %v5901, %v6012
      %v6018 = vpack.c.bf16 %v5271, %v5271
      %v6019 = vld [vmem:[%s63] sm:$0xf]
      %v6020 = vld [vmem:[%s63 + $0x4] sm:$0xf]
      %v6021 = vld [vmem:[%s63 + $0x8] sm:$0xf]
      %v6022 = vld [vmem:[%s63 + $0xc] sm:$0xf]
      %v6023 = vld [vmem:[%s63 + $0x10] sm:$0xf]
      %v6024 = vld [vmem:[%s63 + $0x14] sm:$0xf]
      %v6025 = vld [vmem:[%s63 + $0x18] sm:$0xf]
      %v6026 = vld [vmem:[%s63 + $0x1c] sm:$0xf]
      %v6035 = vunpack.c.l.b16 %v6019
      %v6036 = vunpack.c.l.b16 %v6020
      %v6037 = vunpack.c.l.b16 %v6021
      %v6038 = vunpack.c.l.b16 %v6022
      %v6039 = vunpack.c.l.b16 %v6023
      %v6040 = vunpack.c.l.b16 %v6024
      %v6041 = vunpack.c.l.b16 %v6025
      %v6042 = vunpack.c.l.b16 %v6026
      %v6043 = vpack.c.b16 %v6036, %v6035
      %v6044 = vpack.c.b16 %v6038, %v6037
      %v6045 = vpack.c.b16 %v6040, %v6039
      %v6046 = vpack.c.b16 %v6042, %v6041
      %v6052 = vsel %vm3256, %v6018, 0
      %6054 = vmatprep.subr.bf16.mxu0 0
      %6055 = vmatpush1.bf16.msra.mxu0 %v6043
      %6056 = vmatprep.subr.bf16.mxu0 0
      %6057 = vmatpush1.bf16.msra.mxu0 %v6044
      %6058 = vmatprep.subr.bf16.mxu0 0
      %6059 = vmatpush1.bf16.msra.mxu0 %v6045
      %6060 = vmatprep.subr.bf16.mxu0 0
      %6061 = vmatpush1.bf16.msra.mxu0 %v6046
      %6062 = vmatprep.subr.bf16.mxu0 0
      %6063 = vmatpush1.bf16.msra.mxu0 0
      %6064 = vmatprep.subr.bf16.mxu0 0
      %6065 = vmatpush1.bf16.msra.mxu0 0
      %6066 = vmatprep.subr.bf16.mxu0 0
      %6067 = vmatpush1.bf16.msra.mxu0 0
      %6068 = vmatprep.subr.bf16.mxu0 0
      %6069 = vmatpush1.bf16.msra.mxu0 0
      %6070 = vmatprep.subr.bf16.mxu0 0
      %6071 = vmatpush1.bf16.msra.mxu0 0
      %6072 = vmatprep.subr.bf16.mxu0 0
      %6073 = vmatpush1.bf16.msra.mxu0 0
      %6074 = vmatprep.subr.bf16.mxu0 0
      %6075 = vmatpush1.bf16.msra.mxu0 0
      %6076 = vmatprep.subr.bf16.mxu0 0
      %6077 = vmatpush1.bf16.msra.mxu0 0
      %6078 = vmatprep.subr.bf16.mxu0 0
      %6079 = vmatpush1.bf16.msra.mxu0 0
      %6080 = vmatprep.subr.bf16.mxu0 0
      %6081 = vmatpush1.bf16.msra.mxu0 0
      %6082 = vmatprep.subr.bf16.mxu0 0
      %6083 = vmatpush1.bf16.msra.mxu0 0
      %6084 = vmatprep.subr.bf16.mxu0 0
      %6085 = vmatpush1.bf16.msra.mxu0 0
      %6086 = vmatprep.mubr.bf16.mxu0 0
      %6087 = vmatmul.mubr.bf16.gmra.mrb[0].mxu0 %v6052
      %v6088 = vpop.f32.mrb[0].mxu0
      %v6089 = vadd.f32 0.0, %v6088
      %v6090 = vpop.f32.mrb[0].mxu0
      %v6091 = vpop.f32.mrb[0].mxu0
      %v6092 = vpop.f32.mrb[0].mxu0
      %6093 = vdwg.mxu0
      %v6094 = vld [vmem:[%s65] sm:$0x1]
      %v6095 = vadd.f32 %v6017, %v6089
      %v6096 = vld [vmem:[%s67] sm:$0x1]
      %vm6097 = vcmask 15360
      %v6099 = vsel %vm6097, %v6094, 0
      %v6102 = vsel %vm5028, %v6095, 0
      %6104 = vmatprep.subr.mxu0 0.0
      %6105 = vmatpush1.msra.mxu0 %v6102
      %6106 = vmatprep.subr.mxu0 0.0
      %6107 = vmatpush1.msra.mxu0 0.0
      %6108 = vmatprep.subr.mxu0 0.0
      %6109 = vmatpush1.msra.mxu0 0.0
      %6110 = vmatprep.subr.mxu0 0.0
      %6111 = vmatpush1.msra.mxu0 0.0
      %6112 = vmatprep.subr.mxu0 0.0
      %6113 = vmatpush1.msra.mxu0 0.0
      %6114 = vmatprep.subr.mxu0 0.0
      %6115 = vmatpush1.msra.mxu0 0.0
      %6116 = vmatprep.subr.mxu0 0.0
      %6117 = vmatpush1.msra.mxu0 0.0
      %6118 = vmatprep.subr.mxu0 0.0
      %6119 = vmatpush1.msra.mxu0 0.0
      %6120 = vmatprep.subr.mxu0 0.0
      %6121 = vmatpush1.msra.mxu0 0.0
      %6122 = vmatprep.subr.mxu0 0.0
      %6123 = vmatpush1.msra.mxu0 0.0
      %6124 = vmatprep.subr.mxu0 0.0
      %6125 = vmatpush1.msra.mxu0 0.0
      %6126 = vmatprep.subr.mxu0 0.0
      %6127 = vmatpush1.msra.mxu0 0.0
      %6128 = vmatprep.subr.mxu0 0.0
      %6129 = vmatpush1.msra.mxu0 0.0
      %6130 = vmatprep.subr.mxu0 0.0
      %6131 = vmatpush1.msra.mxu0 0.0
      %6132 = vmatprep.subr.mxu0 0.0
      %6133 = vmatpush1.msra.mxu0 0.0
      %6134 = vmatprep.subr.mxu0 0.0
      %6135 = vmatpush1.msra.mxu0 0.0
      %6136 = vmatprep.subr.mxu0 0.0
      %6137 = vmatpush1.msra.mxu0 0.0
      %6138 = vmatprep.subr.mxu0 0.0
      %6139 = vmatpush1.msra.mxu0 0.0
      %6140 = vmatprep.subr.mxu0 0.0
      %6141 = vmatpush1.msra.mxu0 0.0
      %6142 = vmatprep.subr.mxu0 0.0
      %6143 = vmatpush1.msra.mxu0 0.0
      %6144 = vmatprep.subr.mxu0 0.0
      %6145 = vmatpush1.msra.mxu0 0.0
      %6146 = vmatprep.subr.mxu0 0.0
      %6147 = vmatpush1.msra.mxu0 0.0
      %6148 = vmatprep.subr.mxu0 0.0
      %6149 = vmatpush1.msra.mxu0 0.0
      %6150 = vmatprep.subr.mxu0 0.0
      %6151 = vmatpush1.msra.mxu0 0.0
      %6152 = vmatprep.subr.mxu0 0.0
      %6153 = vmatpush1.msra.mxu0 0.0
      %6154 = vmatprep.subr.mxu0 0.0
      %6155 = vmatpush1.msra.mxu0 0.0
      %6156 = vmatprep.subr.mxu0 0.0
      %6157 = vmatpush1.msra.mxu0 0.0
      %6158 = vmatprep.subr.mxu0 0.0
      %6159 = vmatpush1.msra.mxu0 0.0
      %6160 = vmatprep.subr.mxu0 0.0
      %6161 = vmatpush1.msra.mxu0 0.0
      %6162 = vmatprep.subr.mxu0 0.0
      %6163 = vmatpush1.msra.mxu0 0.0
      %6164 = vmatprep.subr.mxu0 0.0
      %6165 = vmatpush1.msra.mxu0 0.0
      %6166 = vmatprep.subr.mxu0 0.0
      %6167 = vmatpush1.msra.mxu0 0.0
      %6168 = vmatprep.mubr.f32.mxu0 0.0
      %6169 = vmatmul.mubr.f32.gmra.mrb[0].mxu0 %v6099
      %v6170 = vpop.f32.mrb[0].mxu0
      %v6171 = vadd.f32 %v6096, %v6170
      %v6172 = vpop.f32.mrb[0].mxu0
      %6173 = vdwg.mxu0
      %v6174 = vpack.c.bf16 %v6171, %v6171
      %v6175 = vld [vmem:[%s69] sm:$0xf]
      %v6176 = vld [vmem:[%s69 + $0x4] sm:$0xf]
      %v6177 = vld [vmem:[%s69 + $0x8] sm:$0xf]
      %v6178 = vld [vmem:[%s69 + $0xc] sm:$0xf]
      %v6179 = vld [vmem:[%s69 + $0x10] sm:$0xf]
      %v6180 = vld [vmem:[%s69 + $0x14] sm:$0xf]
      %v6181 = vld [vmem:[%s69 + $0x18] sm:$0xf]
      %v6182 = vld [vmem:[%s69 + $0x1c] sm:$0xf]
      %v6183 = vld [vmem:[%s71] sm:$0x1]
      %v6192 = vunpack.c.l.b16 %v6175
      %v6193 = vunpack.c.l.b16 %v6176
      %v6194 = vunpack.c.l.b16 %v6177
      %v6195 = vunpack.c.l.b16 %v6178
      %v6196 = vunpack.c.l.b16 %v6179
      %v6197 = vunpack.c.l.b16 %v6180
      %v6198 = vunpack.c.l.b16 %v6181
      %v6199 = vunpack.c.l.b16 %v6182
      %v6200 = vpack.c.b16 %v6193, %v6192
      %v6201 = vpack.c.b16 %v6195, %v6194
      %v6202 = vpack.c.b16 %v6197, %v6196
      %v6203 = vpack.c.b16 %v6199, %v6198
      %6204 = vrot.lane.b32.xlu0 %v6200, 112
      %v6205 = vpop.permute.xlu0 %6204
      %6206 = vrot.lane.b32.xlu0 %v6201, 112
      %v6207 = vpop.permute.xlu0 %6206
      %6208 = vrot.lane.b32.xlu0 %v6202, 112
      %v6209 = vpop.permute.xlu0 %6208
      %6210 = vrot.lane.b32.xlu0 %v6203, 112
      %v6211 = vpop.permute.xlu0 %6210
      %v6217 = vlaneseq
      %v6218 = vshrl.u32 %v6217, 7
      %v6219 = vsub.s32 0, %v6218
      %v6220 = vrot.slane %v6183, %v6219
      %6221 = vrot.lane.b32.xlu0 %v6220, 112
      %v6222 = vpop.permute.xlu0 %6221
      %v6225 = vsel %vm3256, %v6174, 0
      %6227 = vmatprep.subr.bf16.mxu0 0
      %6228 = vmatpush1.bf16.msra.mxu0 %v6205
      %6229 = vmatprep.subr.bf16.mxu0 0
      %6230 = vmatpush1.bf16.msra.mxu0 %v6207
      %6231 = vmatprep.subr.bf16.mxu0 0
      %6232 = vmatpush1.bf16.msra.mxu0 %v6209
      %6233 = vmatprep.subr.bf16.mxu0 0
      %6234 = vmatpush1.bf16.msra.mxu0 %v6211
      %6235 = vmatprep.subr.bf16.mxu0 0
      %6236 = vmatpush1.bf16.msra.mxu0 0
      %6237 = vmatprep.subr.bf16.mxu0 0
      %6238 = vmatpush1.bf16.msra.mxu0 0
      %6239 = vmatprep.subr.bf16.mxu0 0
      %6240 = vmatpush1.bf16.msra.mxu0 0
      %6241 = vmatprep.subr.bf16.mxu0 0
      %6242 = vmatpush1.bf16.msra.mxu0 0
      %6243 = vmatprep.subr.bf16.mxu0 0
      %6244 = vmatpush1.bf16.msra.mxu0 0
      %6245 = vmatprep.subr.bf16.mxu0 0
      %6246 = vmatpush1.bf16.msra.mxu0 0
      %6247 = vmatprep.subr.bf16.mxu0 0
      %6248 = vmatpush1.bf16.msra.mxu0 0
      %6249 = vmatprep.subr.bf16.mxu0 0
      %6250 = vmatpush1.bf16.msra.mxu0 0
      %6251 = vmatprep.subr.bf16.mxu0 0
      %6252 = vmatpush1.bf16.msra.mxu0 0
      %6253 = vmatprep.subr.bf16.mxu0 0
      %6254 = vmatpush1.bf16.msra.mxu0 0
      %6255 = vmatprep.subr.bf16.mxu0 0
      %6256 = vmatpush1.bf16.msra.mxu0 0
      %6257 = vmatprep.subr.bf16.mxu0 0
      %6258 = vmatpush1.bf16.msra.mxu0 0
      %6259 = vmatprep.mubr.bf16.mxu0 0
      %6260 = vmatmul.mubr.bf16.gmra.mrb[0].mxu0 %v6225
      %v6261 = vpop.f32.mrb[0].mxu0
      %v6262 = vadd.f32 %v6222, %v6261
      %v6263 = vpop.f32.mrb[0].mxu0
      %v6264 = vpop.f32.mrb[0].mxu0
      %v6265 = vpop.f32.mrb[0].mxu0
      %6266 = vdwg.mxu0
      %s6267 = sld [smem:[#allocation5]]
      %v6268 = vstv %s6267
      %v6269 = vmul.f32 %v6268, %v6262
      %v6270 = vadd.f32 %v6269, %v6171
      %v6271 = vmax.f32 %v6270, 0.0
      %v6272 = vadd.f32 %v6271, 0.0
      %v6273 = vld [vmem:[%s75] sm:$0xff]
      %v6274 = vld [vmem:[%s75 + $0x8] sm:$0xff]
      %v6275 = vld [vmem:[%s75 + $0x10] sm:$0xff]
      %v6276 = vld [vmem:[%s75 + $0x18] sm:$0xff]
      %v6277 = vld [vmem:[%s75 + $0x20] sm:$0xff]
      %v6278 = vld [vmem:[%s75 + $0x28] sm:$0xff]
      %v6279 = vld [vmem:[%s75 + $0x30] sm:$0xff]
      %v6280 = vld [vmem:[%s75 + $0x38] sm:$0xff]
      %s6281 = sld [smem:[#allocation6]]
      %v6282 = vstv %s6281
      %v6284 = vsel %vm3256, %v6272, 0
      %6286 = vmatprep.subr.mxu0 0.0
      %6287 = vmatpush1.msra.mxu0 %v6273
      %6288 = vmatprep.subr.mxu0 0.0
      %6289 = vmatpush1.msra.mxu0 %v6274
      %6290 = vmatprep.subr.mxu0 0.0
      %6291 = vmatpush1.msra.mxu0 %v6275
      %6292 = vmatprep.subr.mxu0 0.0
      %6293 = vmatpush1.msra.mxu0 %v6276
      %6294 = vmatprep.subr.mxu0 0.0
      %6295 = vmatpush1.msra.mxu0 %v6277
      %6296 = vmatprep.subr.mxu0 0.0
      %6297 = vmatpush1.msra.mxu0 %v6278
      %6298 = vmatprep.subr.mxu0 0.0
      %6299 = vmatpush1.msra.mxu0 %v6279
      %6300 = vmatprep.subr.mxu0 0.0
      %6301 = vmatpush1.msra.mxu0 %v6280
      %6302 = vmatprep.subr.mxu0 0.0
      %6303 = vmatpush1.msra.mxu0 0.0
      %6304 = vmatprep.subr.mxu0 0.0
      %6305 = vmatpush1.msra.mxu0 0.0
      %6306 = vmatprep.subr.mxu0 0.0
      %6307 = vmatpush1.msra.mxu0 0.0
      %6308 = vmatprep.subr.mxu0 0.0
      %6309 = vmatpush1.msra.mxu0 0.0
      %6310 = vmatprep.subr.mxu0 0.0
      %6311 = vmatpush1.msra.mxu0 0.0
      %6312 = vmatprep.subr.mxu0 0.0
      %6313 = vmatpush1.msra.mxu0 0.0
      %6314 = vmatprep.subr.mxu0 0.0
      %6315 = vmatpush1.msra.mxu0 0.0
      %6316 = vmatprep.subr.mxu0 0.0
      %6317 = vmatpush1.msra.mxu0 0.0
      %6318 = vmatprep.subr.mxu0 0.0
      %6319 = vmatpush1.msra.mxu0 0.0
      %6320 = vmatprep.subr.mxu0 0.0
      %6321 = vmatpush1.msra.mxu0 0.0
      %6322 = vmatprep.subr.mxu0 0.0
      %6323 = vmatpush1.msra.mxu0 0.0
      %6324 = vmatprep.subr.mxu0 0.0
      %6325 = vmatpush1.msra.mxu0 0.0
      %6326 = vmatprep.subr.mxu0 0.0
      %6327 = vmatpush1.msra.mxu0 0.0
      %6328 = vmatprep.subr.mxu0 0.0
      %6329 = vmatpush1.msra.mxu0 0.0
      %6330 = vmatprep.subr.mxu0 0.0
      %6331 = vmatpush1.msra.mxu0 0.0
      %6332 = vmatprep.subr.mxu0 0.0
      %6333 = vmatpush1.msra.mxu0 0.0
      %6334 = vmatprep.subr.mxu0 0.0
      %6335 = vmatpush1.msra.mxu0 0.0
      %6336 = vmatprep.subr.mxu0 0.0
      %6337 = vmatpush1.msra.mxu0 0.0
      %6338 = vmatprep.subr.mxu0 0.0
      %6339 = vmatpush1.msra.mxu0 0.0
      %6340 = vmatprep.subr.mxu0 0.0
      %6341 = vmatpush1.msra.mxu0 0.0
      %6342 = vmatprep.subr.mxu0 0.0
      %6343 = vmatpush1.msra.mxu0 0.0
      %6344 = vmatprep.subr.mxu0 0.0
      %6345 = vmatpush1.msra.mxu0 0.0
      %6346 = vmatprep.subr.mxu0 0.0
      %6347 = vmatpush1.msra.mxu0 0.0
      %6348 = vmatprep.subr.mxu0 0.0
      %6349 = vmatpush1.msra.mxu0 0.0
      %6350 = vmatprep.mubr.f32.mxu0 0.0
      %6351 = vmatmul.mubr.f32.gmra.mrb[0].mxu0 %v6284
      %v6352 = vpop.f32.mrb[0].mxu0
      %v6353 = vadd.f32 %v6282, %v6352
      %v6354 = vpop.f32.mrb[0].mxu0
      %6355 = vdwg.mxu0
      %vm6356 = vcmask 0
      %6357 = vst.msk [vmem:[%s1181] sm:$0x1] %vm6356, %v6353
      %p6358 = scmp.lt.s32.totalorder %s93, 1
      %s6359 = scalar_select %p6358, %s93, 1
      %s6360 = scalar_lea.vmem %s79, %s6359
      // Predicated region
      $region177: #{vgg_discriminator_forward.1} parent=175 // pred_check
        %p6361 = pneg %p935
      $region178: #{vgg_discriminator_forward.1} parent=175 // pred_check_branch
        %6363 = sbr.rel (%p6361) target = $region180
      $region179: #{vgg_discriminator_forward.1} parent=175 // pred_region
        _
      $region180: #{vgg_discriminator_forward.1} parent=175 // pred_fallthru
        _
    $region176: #{vgg_discriminator_forward.1} parent=5 // pred_fallthru
      _
    %p6364 = scmp.le.s32.totalorder 2, %s88
    // Predicated region
    $region181: #{vgg_discriminator_forward.1} parent=5 // pred_check
      %p6365 = pneg %p6364
    $region182: #{vgg_discriminator_forward.1} parent=5 // pred_check_branch
      %6367 = sbr.rel (%p6365) target = $region184
    $region183: #{vgg_discriminator_forward.1} parent=5 // pred_region
      %s6368 = ssub.s32 %s88, 2
      // Predicated region
      $region185: #{vgg_discriminator_forward.1} parent=183 // pred_check
        %p6369 = pneg %p941
      $region186: #{vgg_discriminator_forward.1} parent=183 // pred_check_branch
        %6371 = sbr.rel (%p6369) target = $region188
      $region187: #{vgg_discriminator_forward.1} parent=183 // pred_region
        %p6372 = scmp.lt.s32.totalorder %s94, 1
        %s6373 = scalar_select %p6372, %s94, 1
        %s6374 = scalar_lea.vmem %s79, %s6373
      $region188: #{vgg_discriminator_forward.1} parent=183 // pred_fallthru
        _
    $region184: #{vgg_discriminator_forward.1} parent=5 // pred_fallthru
      _
  $region6: #{vgg_discriminator_forward.1} parent=0 // loop_footer
    %s92 = sadd.s32 1, %s88
  $region7: #{vgg_discriminator_forward.1} parent=0 // loop_footer_branch
    %87 = sbr.rel target = $region3
  $region8: #{vgg_discriminator_forward.1} parent=0 // loop_exit
    _

</llo_original>
